<compile_context>
chip_gen: v5e
topology: v5e:2x2
jax: 0.10.0
libtpu: 0.0.40
codegen_flags: <defaults>
</compile_context>

<pallas_src>
import functools

import jax
import jax.numpy as jnp
from jax.experimental import pallas as pl
from jax.experimental.pallas import tpu as pltpu


def _round_up(x, m):
    return ((x + m - 1) // m) * m


# ---------------------------------------------------------------------------
# Fused Conv3x3 + BatchNorm(eval) + ReLU + MaxPool2x2  (bt images / grid step)
# ---------------------------------------------------------------------------
def _conv_bn_relu_pool_kernel(a_ref, w_ref, s_ref, b_ref, o_ref, *,
                              rows_chunk, n_chunks, cout):
    """a_ref: (bt*P, K)    bf16  pooled-window im2col rows, (b, oh, ow) order
       w_ref: (K, 4*cout)  bf16  conv weights, block-diagonal over pool phases
       s_ref: (1, 4*cout)  f32   folded BN scale, tiled over the 4 phases
       b_ref: (1, 4*cout)  f32   folded BN shift (incl. conv bias), tiled
       o_ref: (bt*P, cout) bf16  pooled output rows, (b, oh, ow) order
    """
    w = w_ref[...]
    s = s_ref[...]          # hoisted loads; broadcast happens inside the mul
    b = b_ref[...]
    # Chunked over images so per-chunk f32 intermediates stay ~<=128 KB
    # (keeps live vreg pressure low -- no huge partially-live accumulators).
    for c in range(n_chunks):
        r0 = c * rows_chunk
        acc = jnp.dot(a_ref[r0:r0 + rows_chunk, :], w,
                      preferred_element_type=jnp.float32)
        y = jnp.maximum(acc * s + b, 0.0)            # (rows_chunk, 4*cout)
        # 2x2 max-pool: the 4 pool candidates for channel c live in lanes
        # {c, c+cout, c+2*cout, c+3*cout}; fold them with two lane rotations
        # (XLU, free slot) + elementwise max (VPU), then take the prefix.
        y = jnp.maximum(y, pltpu.roll(y, shift=2 * cout, axis=1))
        y = jnp.maximum(y, pltpu.roll(y, shift=cout, axis=1))
        o_ref[r0:r0 + rows_chunk, :] = y[:, :cout].astype(o_ref.dtype)


def conv_bn_relu_pool(a, wq, s4, b4, *, rows_per_img, cout, batch_tile,
                      imgs_per_chunk):
    """a: (n_pad*rows_per_img, K) bf16 -> (n_pad*rows_per_img, cout) bf16."""
    total_rows, k = a.shape
    blk_rows = batch_tile * rows_per_img
    # Static layout invariants (review: make them explicit asserts).
    assert total_rows % blk_rows == 0
    assert batch_tile % imgs_per_chunk == 0
    assert blk_rows % 8 == 0 and (rows_per_img * imgs_per_chunk) % 2 == 0
    assert wq.shape == (k, 4 * cout) and s4.shape == (1, 4 * cout)
    kernel = functools.partial(
        _conv_bn_relu_pool_kernel,
        rows_chunk=rows_per_img * imgs_per_chunk,
        n_chunks=batch_tile // imgs_per_chunk,
        cout=cout)
    return pl.pallas_call(
        kernel,
        out_shape=jax.ShapeDtypeStruct((total_rows, cout), jnp.bfloat16),
        grid=(total_rows // blk_rows,),
        in_specs=[
            pl.BlockSpec((blk_rows, k), lambda i: (i, 0)),
            pl.BlockSpec(wq.shape, lambda i: (0, 0)),
            pl.BlockSpec(s4.shape, lambda i: (0, 0)),
            pl.BlockSpec(b4.shape, lambda i: (0, 0)),
        ],
        out_specs=pl.BlockSpec((blk_rows, cout), lambda i: (i, 0)),
        compiler_params=pltpu.CompilerParams(
            dimension_semantics=("parallel",)),
    )(a, wq, s4, b4)


# ---------------------------------------------------------------------------
# Fused fc1 -> (dropout: identity in eval) -> fc2 -> fc3 kernel
# ---------------------------------------------------------------------------
def _mlp_kernel(x_ref, w1_ref, b1_ref, w2_ref, b2_ref, w3_ref, b3_ref, o_ref):
    h = jnp.dot(x_ref[...], w1_ref[...],
                preferred_element_type=jnp.float32) + b1_ref[...]
    # TODO(synk): nn.Dropout2d(0.25) is identity in eval mode; training-mode
    # channel masking is not implemented.
    h = jnp.dot(h.astype(jnp.bfloat16), w2_ref[...],
                preferred_element_type=jnp.float32) + b2_ref[...]
    o = jnp.dot(h.astype(jnp.bfloat16), w3_ref[...],
                preferred_element_type=jnp.float32) + b3_ref[...]
    o_ref[...] = o


def fused_mlp(x, w1, b1, w2, b2, w3, b3):
    """x: (m, K) bf16; weights bf16 (lane-padded); biases f32 -> (m, N) f32."""
    m, k = x.shape
    tm = _round_up(m, 8) if m <= 512 else 256     # ragged batch: pad, no assert
    m_pad = _round_up(m, tm)
    if m_pad != m:
        x = jnp.pad(x, ((0, m_pad - m), (0, 0)))
    n_out = w3.shape[1]

    def full(arr):
        return pl.BlockSpec(arr.shape, lambda i: (0, 0))

    out = pl.pallas_call(
        _mlp_kernel,
        out_shape=jax.ShapeDtypeStruct((m_pad, n_out), jnp.float32),
        grid=(m_pad // tm,),
        in_specs=[pl.BlockSpec((tm, k), lambda i: (i, 0)),
                  full(w1), full(b1), full(w2), full(b2), full(w3), full(b3)],
        out_specs=pl.BlockSpec((tm, n_out), lambda i: (i, 0)),
        compiler_params=pltpu.CompilerParams(
            dimension_semantics=("parallel",)),
    )(x, w1, b1, w2, b2, w3, b3)
    return out[:m]


# ---------------------------------------------------------------------------
# Wrapper-side layout prep (plain JAX on tiny tensors): im2col, BN folding
# ---------------------------------------------------------------------------
def _pool_window_im2col(x, hp, wp):
    """x: (N, H, W, C) -> (N*hp*wp, 16*C).

    Row (n, oh, ow) holds the 4x4 input patch x[n, 2oh:2oh+4, 2ow:2ow+4, :]
    (the receptive field of one 2x2-pooled conv output), flattened (r, s, c).
    """
    n, _, _, c = x.shape
    pats = [x[:, r:r + 2 * hp - 1:2, s:s + 2 * wp - 1:2, :]
            for r in range(4) for s in range(4)]
    pats = jnp.stack(pats, axis=3)                   # (N, hp, wp, 16, C)
    return pats.reshape(n * hp * wp, 16 * c)


def _pool_window_weights(w):
    """w: (3, 3, Cin, Cout) -> (16*Cin, 4*Cout), block-diagonal over the 4
    pool phases: column block q = 2*dy + dx computes the conv output at
    (2*oh + dy, 2*ow + dx) from the 4x4 input patch."""
    cin, cout = w.shape[2], w.shape[3]
    wq = jnp.zeros((4, 4, cin, 4, cout), w.dtype)
    for dy in range(2):
        for dx in range(2):
            wq = wq.at[dy:dy + 3, dx:dx + 3, :, 2 * dy + dx, :].set(w)
    return wq.reshape(16 * cin, 4 * cout)


def _fold_bn(gamma, beta, mean, var, conv_bias, eps=1e-5):
    scale = gamma / jnp.sqrt(var + eps)
    shift = beta - mean * scale + conv_bias * scale
    # Tile over the 4 pool-phase lane blocks of the matmul result.
    return (jnp.tile(scale.reshape(1, -1), (1, 4)).astype(jnp.float32),
            jnp.tile(shift.reshape(1, -1), (1, 4)).astype(jnp.float32))


def fashion_cnn_forward(x_nchw, params):
    n = x_nchw.shape[0]
    # Even batch tile (keeps every block-row count a multiple of 8).  For
    # batches > bt the grid has >=2 "parallel" steps (feeds both v7x cores).
    bt = 8 if n > 8 else _round_up(max(n, 2), 2)
    n_pad = _round_up(n, bt)

    # ---- layer1: conv(1->32, k3, pad=1) + BN + ReLU + maxpool2 -------------
    x = jnp.transpose(x_nchw, (0, 2, 3, 1))                      # (N,28,28,1)
    x = jnp.pad(x, ((0, n_pad - n), (1, 1), (1, 1), (0, 0)))     # (Np,30,30,1)
    a1 = _pool_window_im2col(x, 14, 14).astype(jnp.bfloat16)     # (Np*196,16)
    w1q = _pool_window_weights(params["w1"]).astype(jnp.bfloat16)   # (16,128)
    s1, sh1 = _fold_bn(params["g1"], params["be1"], params["m1"],
                       params["v1"], params["b1"])
    pool1 = conv_bn_relu_pool(a1, w1q, s1, sh1, rows_per_img=196, cout=32,
                              batch_tile=bt, imgs_per_chunk=1)   # (Np*196,32)

    # ---- layer2: conv(32->64, k3, pad=0) + BN + ReLU + maxpool2 ------------
    p1 = pool1.reshape(n_pad, 14, 14, 32)                        # bf16
    a2 = _pool_window_im2col(p1, 6, 6)                           # (Np*36,512)
    w2q = _pool_window_weights(params["w2"]).astype(jnp.bfloat16)  # (512,256)
    s2, sh2 = _fold_bn(params["g2"], params["be2"], params["m2"],
                       params["v2"], params["b2"])
    pool2 = conv_bn_relu_pool(a2, w2q, s2, sh2, rows_per_img=36, cout=64,
                              batch_tile=bt, imgs_per_chunk=2)   # (Np*36,64)

    # ---- fc1 -> drop(eval) -> fc2 -> fc3, fused into one kernel ------------
    feat = pool2.reshape(n_pad, 6 * 6 * 64)        # bf16, rows (h*6+w)*64 + c
    # fc1 weight rows are stored in torch's NCHW-flatten order (c*36 + h*6+w);
    # permute once so rows match the (h*6+w)*64 + c feature order above, then
    # zero-pad every fc dim to a lane-aligned size (mathematically exact).
    fw1 = params["fw1"].reshape(64, 36, 600).transpose(1, 0, 2)
    fw1 = jnp.pad(fw1.reshape(2304, 600), ((0, 0), (0, 40)))     # (2304, 640)
    fb1 = jnp.pad(params["fb1"], (0, 40)).reshape(1, 640)
    fw2 = jnp.pad(params["fw2"], ((0, 40), (0, 8)))              # (640, 128)
    fb2 = jnp.pad(params["fb2"], (0, 8)).reshape(1, 128)
    fw3 = jnp.pad(params["fw3"], ((0, 8), (0, 118)))             # (128, 128)
    fb3 = jnp.pad(params["fb3"], (0, 118)).reshape(1, 128)
    logits = fused_mlp(feat,
                       fw1.astype(jnp.bfloat16), fb1,
                       fw2.astype(jnp.bfloat16), fb2,
                       fw3.astype(jnp.bfloat16), fb3)            # (Np,128) f32
    return logits[:n, :10]


def init_params(key):
    """Deterministic synthetic parameters (weights stored as (in, out) = torch W^T)."""
    ks = jax.random.split(key, 18)

    def nrm(k, shape, s=0.05):
        return s * jax.random.normal(k, shape, jnp.float32)

    return {
        # layer1: Conv2d(1, 32, 3, padding=1) + BatchNorm2d(32)
        "w1": nrm(ks[0], (3, 3, 1, 32)),
        "b1": nrm(ks[1], (32,)),
        "g1": 1.0 + nrm(ks[2], (32,)),
        "be1": nrm(ks[3], (32,)),
        "m1": nrm(ks[4], (32,)),
        "v1": 1.0 + 0.1 * jax.random.uniform(ks[5], (32,), jnp.float32),
        # layer2: Conv2d(32, 64, 3) + BatchNorm2d(64)
        "w2": nrm(ks[6], (3, 3, 32, 64)),
        "b2": nrm(ks[7], (64,)),
        "g2": 1.0 + nrm(ks[8], (64,)),
        "be2": nrm(ks[9], (64,)),
        "m2": nrm(ks[10], (64,)),
        "v2": 1.0 + 0.1 * jax.random.uniform(ks[11], (64,), jnp.float32),
        # fc1 / fc2 / fc3
        "fw1": nrm(ks[12], (64 * 6 * 6, 600), 0.02),
        "fb1": nrm(ks[13], (600,)),
        "fw2": nrm(ks[14], (600, 120), 0.02),
        "fb2": nrm(ks[15], (120,)),
        "fw3": nrm(ks[16], (120, 10), 0.02),
        "fb3": nrm(ks[17], (10,)),
    }


if __name__ == "__main__":
    key = jax.random.PRNGKey(0)
    pkey, xkey = jax.random.split(key)
    params = init_params(pkey)
    # FashionMNIST-style input (fc1 requires 28x28 spatial): batch=2, NCHW.
    x = jax.random.normal(xkey, (2, 1, 28, 28), dtype=jnp.float32)

    logits = jax.jit(fashion_cnn_forward)(x, params)
    logits = jax.block_until_ready(logits)

    assert logits.shape == (2, 10), logits.shape
    assert logits.dtype == jnp.float32
    assert bool(jnp.all(jnp.isfinite(logits)))
    print("KERNEL_OK")
</pallas_src>

<mosaic_0001>
module attributes {stable_mosaic.version = 11 : i64} {
  func.func @_conv_bn_relu_pool_kernel(%arg0: i32, %arg1: memref<392x16xbf16, #tpu.memory_space<vmem>>, %arg2: memref<16x128xbf16, #tpu.memory_space<vmem>>, %arg3: memref<1x128xf32, #tpu.memory_space<vmem>>, %arg4: memref<1x128xf32, #tpu.memory_space<vmem>>, %arg5: memref<392x32xbf16, #tpu.memory_space<vmem>>) attributes {dimension_semantics = [#tpu.dimension_semantics<parallel>], iteration_bounds = array<i64: 1>, scalar_prefetch = 0 : i64, scratch_operands = 0 : i64, tpu.core_type = #tpu.core_type<tc>, window_params = [{transform_indices = @transform_0, window_bounds = array<i64: 392, 16>}, {pipeline_mode = #tpu.pipeline_mode<synchronous>, transform_indices = @transform_1, window_bounds = array<i64: 16, 128>}, {pipeline_mode = #tpu.pipeline_mode<synchronous>, transform_indices = @transform_2, window_bounds = array<i64: 1, 128>}, {pipeline_mode = #tpu.pipeline_mode<synchronous>, transform_indices = @transform_3, window_bounds = array<i64: 1, 128>}, {transform_indices = @transform_4, window_bounds = array<i64: 392, 32>}]} {
    %c0 = arith.constant 0 : index
    %c0_0 = arith.constant 0 : index
    %0 = vector.load %arg2[%c0, %c0_0] : memref<16x128xbf16, #tpu.memory_space<vmem>>, vector<16x128xbf16>
    %c0_1 = arith.constant 0 : index
    %c0_2 = arith.constant 0 : index
    %1 = vector.load %arg3[%c0_1, %c0_2] : memref<1x128xf32, #tpu.memory_space<vmem>>, vector<1x128xf32>
    %c0_3 = arith.constant 0 : index
    %c0_4 = arith.constant 0 : index
    %2 = vector.load %arg4[%c0_3, %c0_4] : memref<1x128xf32, #tpu.memory_space<vmem>>, vector<1x128xf32>
    %c0_5 = arith.constant 0 : index
    %c0_6 = arith.constant 0 : index
    %3 = vector.load %arg1[%c0_5, %c0_6] : memref<392x16xbf16, #tpu.memory_space<vmem>>, vector<196x16xbf16>
    %cst = arith.constant dense<0.000000e+00> : vector<196x128xf32>
    %4 = tpu.matmul %3, %0, %cst {dimension_numbers = #tpu.dot_dimension_numbers<[1], [0], [0], [1], [0, 0, 1, 1], [], []>} : vector<196x16xbf16>, vector<16x128xbf16>, vector<196x128xf32> -> vector<196x128xf32>
    %5 = vector.broadcast %1 : vector<1x128xf32> to vector<196x128xf32>
    %6 = arith.mulf %4, %5 : vector<196x128xf32>
    %7 = vector.broadcast %2 : vector<1x128xf32> to vector<196x128xf32>
    %8 = arith.addf %6, %7 : vector<196x128xf32>
    %cst_7 = arith.constant 0.000000e+00 : f32
    %9 = vector.broadcast %cst_7 : f32 to vector<196x128xf32>
    %10 = arith.maximumf %8, %9 : vector<196x128xf32>
    %c64_i32 = arith.constant 64 : i32
    %11 = tpu.dynamic_rotate %10 by %c64_i32 dim 1 : vector<196x128xf32>, i32 -> vector<196x128xf32>
    %12 = arith.maximumf %10, %11 : vector<196x128xf32>
    %c32_i32 = arith.constant 32 : i32
    %13 = tpu.dynamic_rotate %12 by %c32_i32 dim 1 : vector<196x128xf32>, i32 -> vector<196x128xf32>
    %14 = arith.maximumf %12, %13 : vector<196x128xf32>
    %15 = vector.extract_strided_slice %14 {offsets = [0, 0], sizes = [196, 32], strides = [1, 1]} : vector<196x128xf32> to vector<196x32xf32>
    %16 = arith.truncf %15 : vector<196x32xf32> to vector<196x32xbf16>
    %c0_8 = arith.constant 0 : index
    %c0_9 = arith.constant 0 : index
    %17 = vector.load %arg5[%c0_8, %c0_9] : memref<392x32xbf16, #tpu.memory_space<vmem>>, vector<196x32xbf16>
    tpu.vector_store %arg5[%c0_8, %c0_9], %16 {strides = array<i32>} : memref<392x32xbf16, #tpu.memory_space<vmem>>, vector<196x32xbf16>,
    %c196 = arith.constant 196 : index
    %c0_10 = arith.constant 0 : index
    %18 = vector.load %arg1[%c196, %c0_10] : memref<392x16xbf16, #tpu.memory_space<vmem>>, vector<196x16xbf16>
    %cst_11 = arith.constant dense<0.000000e+00> : vector<196x128xf32>
    %19 = tpu.matmul %18, %0, %cst_11 {dimension_numbers = #tpu.dot_dimension_numbers<[1], [0], [0], [1], [0, 0, 1, 1], [], []>} : vector<196x16xbf16>, vector<16x128xbf16>, vector<196x128xf32> -> vector<196x128xf32>
    %20 = vector.broadcast %1 : vector<1x128xf32> to vector<196x128xf32>
    %21 = arith.mulf %19, %20 : vector<196x128xf32>
    %22 = vector.broadcast %2 : vector<1x128xf32> to vector<196x128xf32>
    %23 = arith.addf %21, %22 : vector<196x128xf32>
    %cst_12 = arith.constant 0.000000e+00 : f32
    %24 = vector.broadcast %cst_12 : f32 to vector<196x128xf32>
    %25 = arith.maximumf %23, %24 : vector<196x128xf32>
    %c64_i32_13 = arith.constant 64 : i32
    %26 = tpu.dynamic_rotate %25 by %c64_i32_13 dim 1 : vector<196x128xf32>, i32 -> vector<196x128xf32>
    %27 = arith.maximumf %25, %26 : vector<196x128xf32>
    %c32_i32_14 = arith.constant 32 : i32
    %28 = tpu.dynamic_rotate %27 by %c32_i32_14 dim 1 : vector<196x128xf32>, i32 -> vector<196x128xf32>
    %29 = arith.maximumf %27, %28 : vector<196x128xf32>
    %30 = vector.extract_strided_slice %29 {offsets = [0, 0], sizes = [196, 32], strides = [1, 1]} : vector<196x128xf32> to vector<196x32xf32>
    %31 = arith.truncf %30 : vector<196x32xf32> to vector<196x32xbf16>
    %c196_15 = arith.constant 196 : index
    %c0_16 = arith.constant 0 : index
    %32 = vector.load %arg5[%c196_15, %c0_16] : memref<392x32xbf16, #tpu.memory_space<vmem>>, vector<196x32xbf16>
    tpu.vector_store %arg5[%c196_15, %c0_16], %31 {strides = array<i32>} : memref<392x32xbf16, #tpu.memory_space<vmem>>, vector<196x32xbf16>,
    return
  }
  func.func @transform_0(%arg0: i32) -> (i32, i32) {
    %c0_i32 = arith.constant 0 : i32
    %c0_i32_0 = arith.constant 0 : i32
    return %arg0, %c0_i32 : i32, i32
  }
  func.func @transform_1(%arg0: i32) -> (i32, i32) {
    %c0_i32 = arith.constant 0 : i32
    %c0_i32_0 = arith.constant 0 : i32
    %c0_i32_1 = arith.constant 0 : i32
    return %c0_i32, %c0_i32_0 : i32, i32
  }
  func.func @transform_2(%arg0: i32) -> (i32, i32) {
    %c0_i32 = arith.constant 0 : i32
    %c0_i32_0 = arith.constant 0 : i32
    %c0_i32_1 = arith.constant 0 : i32
    return %c0_i32, %c0_i32_0 : i32, i32
  }
  func.func @transform_3(%arg0: i32) -> (i32, i32) {
    %c0_i32 = arith.constant 0 : i32
    %c0_i32_0 = arith.constant 0 : i32
    %c0_i32_1 = arith.constant 0 : i32
    return %c0_i32, %c0_i32_0 : i32, i32
  }
  func.func @transform_4(%arg0: i32) -> (i32, i32) {
    %c0_i32 = arith.constant 0 : i32
    %c0_i32_0 = arith.constant 0 : i32
    return %arg0, %c0_i32 : i32, i32
  }
}

module attributes {stable_mosaic.version = 11 : i64} {
  func.func @_conv_bn_relu_pool_kernel(%arg0: i32, %arg1: memref<72x512xbf16, #tpu.memory_space<vmem>>, %arg2: memref<512x256xbf16, #tpu.memory_space<vmem>>, %arg3: memref<1x256xf32, #tpu.memory_space<vmem>>, %arg4: memref<1x256xf32, #tpu.memory_space<vmem>>, %arg5: memref<72x64xbf16, #tpu.memory_space<vmem>>) attributes {dimension_semantics = [#tpu.dimension_semantics<parallel>], iteration_bounds = array<i64: 1>, scalar_prefetch = 0 : i64, scratch_operands = 0 : i64, tpu.core_type = #tpu.core_type<tc>, window_params = [{transform_indices = @transform_0, window_bounds = array<i64: 72, 512>}, {pipeline_mode = #tpu.pipeline_mode<synchronous>, transform_indices = @transform_1, window_bounds = array<i64: 512, 256>}, {pipeline_mode = #tpu.pipeline_mode<synchronous>, transform_indices = @transform_2, window_bounds = array<i64: 1, 256>}, {pipeline_mode = #tpu.pipeline_mode<synchronous>, transform_indices = @transform_3, window_bounds = array<i64: 1, 256>}, {transform_indices = @transform_4, window_bounds = array<i64: 72, 64>}]} {
    %c0 = arith.constant 0 : index
    %c0_0 = arith.constant 0 : index
    %0 = vector.load %arg2[%c0, %c0_0] : memref<512x256xbf16, #tpu.memory_space<vmem>>, vector<512x256xbf16>
    %c0_1 = arith.constant 0 : index
    %c0_2 = arith.constant 0 : index
    %1 = vector.load %arg3[%c0_1, %c0_2] : memref<1x256xf32, #tpu.memory_space<vmem>>, vector<1x256xf32>
    %c0_3 = arith.constant 0 : index
    %c0_4 = arith.constant 0 : index
    %2 = vector.load %arg4[%c0_3, %c0_4] : memref<1x256xf32, #tpu.memory_space<vmem>>, vector<1x256xf32>
    %c0_5 = arith.constant 0 : index
    %c0_6 = arith.constant 0 : index
    %3 = vector.load %arg1[%c0_5, %c0_6] : memref<72x512xbf16, #tpu.memory_space<vmem>>, vector<72x512xbf16>
    %cst = arith.constant dense<0.000000e+00> : vector<72x256xf32>
    %4 = tpu.matmul %3, %0, %cst {dimension_numbers = #tpu.dot_dimension_numbers<[1], [0], [0], [1], [0, 0, 1, 1], [], []>} : vector<72x512xbf16>, vector<512x256xbf16>, vector<72x256xf32> -> vector<72x256xf32>
    %5 = vector.broadcast %1 : vector<1x256xf32> to vector<72x256xf32>
    %6 = arith.mulf %4, %5 : vector<72x256xf32>
    %7 = vector.broadcast %2 : vector<1x256xf32> to vector<72x256xf32>
    %8 = arith.addf %6, %7 : vector<72x256xf32>
    %cst_7 = arith.constant 0.000000e+00 : f32
    %9 = vector.broadcast %cst_7 : f32 to vector<72x256xf32>
    %10 = arith.maximumf %8, %9 : vector<72x256xf32>
    %c128_i32 = arith.constant 128 : i32
    %11 = tpu.dynamic_rotate %10 by %c128_i32 dim 1 : vector<72x256xf32>, i32 -> vector<72x256xf32>
    %12 = arith.maximumf %10, %11 : vector<72x256xf32>
    %c64_i32 = arith.constant 64 : i32
    %13 = tpu.dynamic_rotate %12 by %c64_i32 dim 1 : vector<72x256xf32>, i32 -> vector<72x256xf32>
    %14 = arith.maximumf %12, %13 : vector<72x256xf32>
    %15 = vector.extract_strided_slice %14 {offsets = [0, 0], sizes = [72, 64], strides = [1, 1]} : vector<72x256xf32> to vector<72x64xf32>
    %16 = arith.truncf %15 : vector<72x64xf32> to vector<72x64xbf16>
    %c0_8 = arith.constant 0 : index
    %c0_9 = arith.constant 0 : index
    %17 = vector.load %arg5[%c0_8, %c0_9] : memref<72x64xbf16, #tpu.memory_space<vmem>>, vector<72x64xbf16>
    tpu.vector_store %arg5[%c0_8, %c0_9], %16 {strides = array<i32>} : memref<72x64xbf16, #tpu.memory_space<vmem>>, vector<72x64xbf16>,
    return
  }
  func.func @transform_0(%arg0: i32) -> (i32, i32) {
    %c0_i32 = arith.constant 0 : i32
    %c0_i32_0 = arith.constant 0 : i32
    return %arg0, %c0_i32 : i32, i32
  }
  func.func @transform_1(%arg0: i32) -> (i32, i32) {
    %c0_i32 = arith.constant 0 : i32
    %c0_i32_0 = arith.constant 0 : i32
    %c0_i32_1 = arith.constant 0 : i32
    return %c0_i32, %c0_i32_0 : i32, i32
  }
  func.func @transform_2(%arg0: i32) -> (i32, i32) {
    %c0_i32 = arith.constant 0 : i32
    %c0_i32_0 = arith.constant 0 : i32
    %c0_i32_1 = arith.constant 0 : i32
    return %c0_i32, %c0_i32_0 : i32, i32
  }
  func.func @transform_3(%arg0: i32) -> (i32, i32) {
    %c0_i32 = arith.constant 0 : i32
    %c0_i32_0 = arith.constant 0 : i32
    %c0_i32_1 = arith.constant 0 : i32
    return %c0_i32, %c0_i32_0 : i32, i32
  }
  func.func @transform_4(%arg0: i32) -> (i32, i32) {
    %c0_i32 = arith.constant 0 : i32
    %c0_i32_0 = arith.constant 0 : i32
    return %arg0, %c0_i32 : i32, i32
  }
}

module attributes {stable_mosaic.version = 11 : i64} {
  func.func @_mlp_kernel(%arg0: i32, %arg1: memref<8x2304xbf16, #tpu.memory_space<vmem>>, %arg2: memref<2304x640xbf16, #tpu.memory_space<vmem>>, %arg3: memref<1x640xf32, #tpu.memory_space<vmem>>, %arg4: memref<640x128xbf16, #tpu.memory_space<vmem>>, %arg5: memref<1x128xf32, #tpu.memory_space<vmem>>, %arg6: memref<128x128xbf16, #tpu.memory_space<vmem>>, %arg7: memref<1x128xf32, #tpu.memory_space<vmem>>, %arg8: memref<8x128xf32, #tpu.memory_space<vmem>>) attributes {dimension_semantics = [#tpu.dimension_semantics<parallel>], iteration_bounds = array<i64: 1>, scalar_prefetch = 0 : i64, scratch_operands = 0 : i64, tpu.core_type = #tpu.core_type<tc>, window_params = [{transform_indices = @transform_0, window_bounds = array<i64: 8, 2304>}, {pipeline_mode = #tpu.pipeline_mode<synchronous>, transform_indices = @transform_1, window_bounds = array<i64: 2304, 640>}, {pipeline_mode = #tpu.pipeline_mode<synchronous>, transform_indices = @transform_2, window_bounds = array<i64: 1, 640>}, {pipeline_mode = #tpu.pipeline_mode<synchronous>, transform_indices = @transform_3, window_bounds = array<i64: 640, 128>}, {pipeline_mode = #tpu.pipeline_mode<synchronous>, transform_indices = @transform_4, window_bounds = array<i64: 1, 128>}, {pipeline_mode = #tpu.pipeline_mode<synchronous>, transform_indices = @transform_5, window_bounds = array<i64: 128, 128>}, {pipeline_mode = #tpu.pipeline_mode<synchronous>, transform_indices = @transform_6, window_bounds = array<i64: 1, 128>}, {transform_indices = @transform_7, window_bounds = array<i64: 8, 128>}]} {
    %c0 = arith.constant 0 : index
    %c0_0 = arith.constant 0 : index
    %0 = vector.load %arg1[%c0, %c0_0] : memref<8x2304xbf16, #tpu.memory_space<vmem>>, vector<8x2304xbf16>
    %c0_1 = arith.constant 0 : index
    %c0_2 = arith.constant 0 : index
    %1 = vector.load %arg2[%c0_1, %c0_2] : memref<2304x640xbf16, #tpu.memory_space<vmem>>, vector<2304x640xbf16>
    %cst = arith.constant dense<0.000000e+00> : vector<8x640xf32>
    %2 = tpu.matmul %0, %1, %cst {dimension_numbers = #tpu.dot_dimension_numbers<[1], [0], [0], [1], [0, 0, 1, 1], [], []>} : vector<8x2304xbf16>, vector<2304x640xbf16>, vector<8x640xf32> -> vector<8x640xf32>
    %c0_3 = arith.constant 0 : index
    %c0_4 = arith.constant 0 : index
    %3 = vector.load %arg3[%c0_3, %c0_4] : memref<1x640xf32, #tpu.memory_space<vmem>>, vector<1x640xf32>
    %4 = vector.broadcast %3 : vector<1x640xf32> to vector<8x640xf32>
    %5 = arith.addf %2, %4 : vector<8x640xf32>
    %6 = arith.truncf %5 : vector<8x640xf32> to vector<8x640xbf16>
    %c0_5 = arith.constant 0 : index
    %c0_6 = arith.constant 0 : index
    %7 = vector.load %arg4[%c0_5, %c0_6] : memref<640x128xbf16, #tpu.memory_space<vmem>>, vector<640x128xbf16>
    %cst_7 = arith.constant dense<0.000000e+00> : vector<8x128xf32>
    %8 = tpu.matmul %6, %7, %cst_7 {dimension_numbers = #tpu.dot_dimension_numbers<[1], [0], [0], [1], [0, 0, 1, 1], [], []>} : vector<8x640xbf16>, vector<640x128xbf16>, vector<8x128xf32> -> vector<8x128xf32>
    %c0_8 = arith.constant 0 : index
    %c0_9 = arith.constant 0 : index
    %9 = vector.load %arg5[%c0_8, %c0_9] : memref<1x128xf32, #tpu.memory_space<vmem>>, vector<1x128xf32>
    %10 = vector.broadcast %9 : vector<1x128xf32> to vector<8x128xf32>
    %11 = arith.addf %8, %10 : vector<8x128xf32>
    %12 = arith.truncf %11 : vector<8x128xf32> to vector<8x128xbf16>
    %c0_10 = arith.constant 0 : index
    %c0_11 = arith.constant 0 : index
    %13 = vector.load %arg6[%c0_10, %c0_11] : memref<128x128xbf16, #tpu.memory_space<vmem>>, vector<128x128xbf16>
    %cst_12 = arith.constant dense<0.000000e+00> : vector<8x128xf32>
    %14 = tpu.matmul %12, %13, %cst_12 {dimension_numbers = #tpu.dot_dimension_numbers<[1], [0], [0], [1], [0, 0, 1, 1], [], []>} : vector<8x128xbf16>, vector<128x128xbf16>, vector<8x128xf32> -> vector<8x128xf32>
    %c0_13 = arith.constant 0 : index
    %c0_14 = arith.constant 0 : index
    %15 = vector.load %arg7[%c0_13, %c0_14] : memref<1x128xf32, #tpu.memory_space<vmem>>, vector<1x128xf32>
    %16 = vector.broadcast %15 : vector<1x128xf32> to vector<8x128xf32>
    %17 = arith.addf %14, %16 : vector<8x128xf32>
    %c0_15 = arith.constant 0 : index
    %c0_16 = arith.constant 0 : index
    %18 = vector.load %arg8[%c0_15, %c0_16] : memref<8x128xf32, #tpu.memory_space<vmem>>, vector<8x128xf32>
    tpu.vector_store %arg8[%c0_15, %c0_16], %17 {strides = array<i32>} : memref<8x128xf32, #tpu.memory_space<vmem>>, vector<8x128xf32>,
    return
  }
  func.func @transform_0(%arg0: i32) -> (i32, i32) {
    %c0_i32 = arith.constant 0 : i32
    %c0_i32_0 = arith.constant 0 : i32
    return %arg0, %c0_i32 : i32, i32
  }
  func.func @transform_1(%arg0: i32) -> (i32, i32) {
    %c0_i32 = arith.constant 0 : i32
    %c0_i32_0 = arith.constant 0 : i32
    %c0_i32_1 = arith.constant 0 : i32
    return %c0_i32, %c0_i32_0 : i32, i32
  }
  func.func @transform_2(%arg0: i32) -> (i32, i32) {
    %c0_i32 = arith.constant 0 : i32
    %c0_i32_0 = arith.constant 0 : i32
    %c0_i32_1 = arith.constant 0 : i32
    return %c0_i32, %c0_i32_0 : i32, i32
  }
  func.func @transform_3(%arg0: i32) -> (i32, i32) {
    %c0_i32 = arith.constant 0 : i32
    %c0_i32_0 = arith.constant 0 : i32
    %c0_i32_1 = arith.constant 0 : i32
    return %c0_i32, %c0_i32_0 : i32, i32
  }
  func.func @transform_4(%arg0: i32) -> (i32, i32) {
    %c0_i32 = arith.constant 0 : i32
    %c0_i32_0 = arith.constant 0 : i32
    %c0_i32_1 = arith.constant 0 : i32
    return %c0_i32, %c0_i32_0 : i32, i32
  }
  func.func @transform_5(%arg0: i32) -> (i32, i32) {
    %c0_i32 = arith.constant 0 : i32
    %c0_i32_0 = arith.constant 0 : i32
    %c0_i32_1 = arith.constant 0 : i32
    return %c0_i32, %c0_i32_0 : i32, i32
  }
  func.func @transform_6(%arg0: i32) -> (i32, i32) {
    %c0_i32 = arith.constant 0 : i32
    %c0_i32_0 = arith.constant 0 : i32
    %c0_i32_1 = arith.constant 0 : i32
    return %c0_i32, %c0_i32_0 : i32, i32
  }
  func.func @transform_7(%arg0: i32) -> (i32, i32) {
    %c0_i32 = arith.constant 0 : i32
    %c0_i32_0 = arith.constant 0 : i32
    return %arg0, %c0_i32 : i32, i32
  }
}

</mosaic_0001>

<llo_original>
// kernel: fashion_cnn_forward.3
$region0: #{fashion_cnn_forward.3}
  #allocation0 [shape = 'u32[]', space=smem, size = 0x4, offset = 0x4, fixed_abs, tag = 'smem constant byte address 0x4 - core index']
  #allocation1 [shape = 'u32[72,128]{1,0:T(1,128)}', space=vmem, size = 0x9000, scoped, tag = 'internal scratch']
  %s0 = inlined_call_operand.vmem [shape: bf16[392,16], index: 0, kind: input, shape index: {}]
  %s1 = inlined_call_operand.vmem [shape: bf16[16,128], index: 1, kind: input, shape index: {}]
  %s2 = inlined_call_operand.vmem [shape: f32[1,128], index: 2, kind: input, shape index: {}]
  %s3 = inlined_call_operand.vmem [shape: f32[1,128], index: 3, kind: input, shape index: {}]
  %s4 = inlined_call_operand.vmem [shape: bf16[392,32], index: 4, kind: output, shape index: {}]
  %s5 = sld [smem:[#allocation0]]
  $region26: #{fashion_cnn_forward.3} parent=0
    _
  %s7 = ssub.s32 1, %s5
  %s8 = scalar_select 0, %s7, %s5
  // Predicated region
  $region2: #{fashion_cnn_forward.3} parent=0 // pred_check
    _
  $region3: #{fashion_cnn_forward.3} parent=0 // pred_check_branch
    %10 = sbr.rel (0) target = $region5
  $region4: #{fashion_cnn_forward.3} parent=0 // pred_region
    _
  $region5: #{fashion_cnn_forward.3} parent=0 // pred_fallthru
    _
  // Predicated region
  $region6: #{fashion_cnn_forward.3} parent=0 // pred_check
    _
  $region7: #{fashion_cnn_forward.3} parent=0 // pred_check_branch
    %12 = sbr.rel (0) target = $region9
  $region8: #{fashion_cnn_forward.3} parent=0 // pred_region
    _
  $region9: #{fashion_cnn_forward.3} parent=0 // pred_fallthru
    _
  // Predicated region
  $region10: #{fashion_cnn_forward.3} parent=0 // pred_check
    _
  $region11: #{fashion_cnn_forward.3} parent=0 // pred_check_branch
    %14 = sbr.rel (0) target = $region13
  $region12: #{fashion_cnn_forward.3} parent=0 // pred_region
    _
  $region13: #{fashion_cnn_forward.3} parent=0 // pred_fallthru
    _
  // Predicated region
  $region14: #{fashion_cnn_forward.3} parent=0 // pred_check
    _
  $region15: #{fashion_cnn_forward.3} parent=0 // pred_check_branch
    %16 = sbr.rel (0) target = $region17
  $region16: #{fashion_cnn_forward.3} parent=0 // pred_region
    _
  $region17: #{fashion_cnn_forward.3} parent=0 // pred_fallthru
    _
  %v18 = vld [vmem:[%s1] sm:$0xf]
  %v19 = vld [vmem:[%s1 + $0x4] sm:$0xf]
  %v20 = vld [vmem:[%s2] sm:$0x1]
  %v21 = vld [vmem:[%s3] sm:$0x1]
  %v22 = vld [vmem:[%s0] sm:$0xf]
  %v23 = vld [vmem:[%s0 + $0x4] sm:$0xf]
  %v24 = vld [vmem:[%s0 + $0x8] sm:$0xf]
  %v25 = vld [vmem:[%s0 + $0xc] sm:$0xf]
  %v26 = vld [vmem:[%s0 + $0x10] sm:$0xf]
  %v27 = vld [vmem:[%s0 + $0x14] sm:$0xf]
  %v28 = vld [vmem:[%s0 + $0x18] sm:$0xf]
  %v29 = vld [vmem:[%s0 + $0x1c] sm:$0xf]
  %v30 = vld [vmem:[%s0 + $0x20] sm:$0xf]
  %v31 = vld [vmem:[%s0 + $0x24] sm:$0xf]
  %v32 = vld [vmem:[%s0 + $0x28] sm:$0xf]
  %v33 = vld [vmem:[%s0 + $0x2c] sm:$0xf]
  %v34 = vld [vmem:[%s0 + $0x30] sm:$0xf]
  %v35 = vld [vmem:[%s0 + $0x34] sm:$0xf]
  %v36 = vld [vmem:[%s0 + $0x38] sm:$0xf]
  %v37 = vld [vmem:[%s0 + $0x3c] sm:$0xf]
  %v38 = vld [vmem:[%s0 + $0x40] sm:$0xf]
  %v39 = vld [vmem:[%s0 + $0x44] sm:$0xf]
  %v40 = vld [vmem:[%s0 + $0x48] sm:$0xf]
  %v41 = vld [vmem:[%s0 + $0x4c] sm:$0xf]
  %v42 = vld [vmem:[%s0 + $0x50] sm:$0xf]
  %v43 = vld [vmem:[%s0 + $0x54] sm:$0xf]
  %v44 = vld [vmem:[%s0 + $0x58] sm:$0xf]
  %v45 = vld [vmem:[%s0 + $0x5c] sm:$0xf]
  %v46 = vld [vmem:[%s0 + $0x60] sm:$0x3]
  %v72 = vunpack.c.l.b16 %v22
  %v73 = vunpack.c.l.b16 %v23
  %v74 = vunpack.c.l.b16 %v24
  %v75 = vunpack.c.l.b16 %v25
  %v76 = vunpack.c.l.b16 %v26
  %v77 = vunpack.c.l.b16 %v27
  %v78 = vunpack.c.l.b16 %v28
  %v79 = vunpack.c.l.b16 %v29
  %v80 = vunpack.c.l.b16 %v30
  %v81 = vunpack.c.l.b16 %v31
  %v82 = vunpack.c.l.b16 %v32
  %v83 = vunpack.c.l.b16 %v33
  %v84 = vunpack.c.l.b16 %v34
  %v85 = vunpack.c.l.b16 %v35
  %v86 = vunpack.c.l.b16 %v36
  %v87 = vunpack.c.l.b16 %v37
  %v88 = vunpack.c.l.b16 %v38
  %v89 = vunpack.c.l.b16 %v39
  %v90 = vunpack.c.l.b16 %v40
  %v91 = vunpack.c.l.b16 %v41
  %v92 = vunpack.c.l.b16 %v42
  %v93 = vunpack.c.l.b16 %v43
  %v94 = vunpack.c.l.b16 %v44
  %v95 = vunpack.c.l.b16 %v45
  %v96 = vunpack.c.l.b16 %v46
  %v97 = vpack.c.b16 %v73, %v72
  %v98 = vpack.c.b16 %v75, %v74
  %v99 = vpack.c.b16 %v77, %v76
  %v100 = vpack.c.b16 %v79, %v78
  %v101 = vpack.c.b16 %v81, %v80
  %v102 = vpack.c.b16 %v83, %v82
  %v103 = vpack.c.b16 %v85, %v84
  %v104 = vpack.c.b16 %v87, %v86
  %v105 = vpack.c.b16 %v89, %v88
  %v106 = vpack.c.b16 %v91, %v90
  %v107 = vpack.c.b16 %v93, %v92
  %v108 = vpack.c.b16 %v95, %v94
  %v109 = vpack.c.b16 %v96, %v96
  %v112 = vunpack.c.l.b16 %v18
  %v113 = vunpack.c.l.b16 %v19
  %v114 = vpack.c.b16 %v113, %v112
  %vm116 = vcmask 130048
  %v118 = vsel %vm116, %v97, 0
  %v121 = vsel %vm116, %v98, 0
  %v124 = vsel %vm116, %v99, 0
  %v127 = vsel %vm116, %v100, 0
  %v130 = vsel %vm116, %v101, 0
  %v133 = vsel %vm116, %v102, 0
  %v136 = vsel %vm116, %v103, 0
  %v139 = vsel %vm116, %v104, 0
  %v142 = vsel %vm116, %v105, 0
  %v145 = vsel %vm116, %v106, 0
  %v148 = vsel %vm116, %v107, 0
  %v151 = vsel %vm116, %v108, 0
  %v154 = vsel %vm116, %v109, 0
  %156 = vmatpush.bf16.msra.mxu0 0
  %157 = vmatpush.bf16.msra.mxu0 0
  %158 = vmatpush.bf16.msra.mxu0 0
  %159 = vmatpush.bf16.msra.mxu0 0
  %160 = vmatpush.bf16.msra.mxu0 0
  %161 = vmatpush.bf16.msra.mxu0 0
  %162 = vmatpush.bf16.msra.mxu0 0
  %163 = vmatpush.bf16.msra.mxu0 %v114
  %164 = vmatmul.bf16.gmra.mxu0 %v118
  %v165 = vpop.f32.mrf.mxu0
  %v166 = vadd.f32 0.0, %v165
  %v167 = vpop.f32.mrf.mxu0
  %v168 = vadd.f32 0.0, %v167
  %169 = vmatmul.bf16.gmra.mxu0 %v121
  %v170 = vpop.f32.mrf.mxu0
  %v171 = vadd.f32 0.0, %v170
  %v172 = vpop.f32.mrf.mxu0
  %v173 = vadd.f32 0.0, %v172
  %174 = vmatmul.bf16.gmra.mxu0 %v124
  %v175 = vpop.f32.mrf.mxu0
  %v176 = vadd.f32 0.0, %v175
  %v177 = vpop.f32.mrf.mxu0
  %v178 = vadd.f32 0.0, %v177
  %179 = vmatmul.bf16.gmra.mxu0 %v127
  %v180 = vpop.f32.mrf.mxu0
  %v181 = vadd.f32 0.0, %v180
  %v182 = vpop.f32.mrf.mxu0
  %v183 = vadd.f32 0.0, %v182
  %184 = vmatmul.bf16.gmra.mxu0 %v130
  %v185 = vpop.f32.mrf.mxu0
  %v186 = vadd.f32 0.0, %v185
  %v187 = vpop.f32.mrf.mxu0
  %v188 = vadd.f32 0.0, %v187
  %189 = vmatmul.bf16.gmra.mxu0 %v133
  %v190 = vpop.f32.mrf.mxu0
  %v191 = vadd.f32 0.0, %v190
  %v192 = vpop.f32.mrf.mxu0
  %v193 = vadd.f32 0.0, %v192
  %194 = vmatmul.bf16.gmra.mxu0 %v136
  %v195 = vpop.f32.mrf.mxu0
  %v196 = vadd.f32 0.0, %v195
  %v197 = vpop.f32.mrf.mxu0
  %v198 = vadd.f32 0.0, %v197
  %199 = vmatmul.bf16.gmra.mxu0 %v139
  %v200 = vpop.f32.mrf.mxu0
  %v201 = vadd.f32 0.0, %v200
  %v202 = vpop.f32.mrf.mxu0
  %v203 = vadd.f32 0.0, %v202
  %204 = vmatmul.bf16.gmra.mxu0 %v142
  %v205 = vpop.f32.mrf.mxu0
  %v206 = vadd.f32 0.0, %v205
  %v207 = vpop.f32.mrf.mxu0
  %v208 = vadd.f32 0.0, %v207
  %209 = vmatmul.bf16.gmra.mxu0 %v145
  %v210 = vpop.f32.mrf.mxu0
  %v211 = vadd.f32 0.0, %v210
  %v212 = vpop.f32.mrf.mxu0
  %v213 = vadd.f32 0.0, %v212
  %214 = vmatmul.bf16.gmra.mxu0 %v148
  %v215 = vpop.f32.mrf.mxu0
  %v216 = vadd.f32 0.0, %v215
  %v217 = vpop.f32.mrf.mxu0
  %v218 = vadd.f32 0.0, %v217
  %219 = vmatmul.bf16.gmra.mxu0 %v151
  %v220 = vpop.f32.mrf.mxu0
  %v221 = vadd.f32 0.0, %v220
  %v222 = vpop.f32.mrf.mxu0
  %v223 = vadd.f32 0.0, %v222
  %224 = vmatmul.bf16.gmra.mxu0 %v154
  %v225 = vpop.f32.mrf.mxu0
  %v226 = vadd.f32 0.0, %v225
  %v227 = vpop.f32.mrf.mxu0
  %228 = vdwg.mxu0
  %v230 = vperm.slane %v20, 0
  %v232 = vmul.f32 %v166, %v230
  %v233 = vmul.f32 %v168, %v230
  %v234 = vmul.f32 %v171, %v230
  %v235 = vmul.f32 %v173, %v230
  %v236 = vmul.f32 %v176, %v230
  %v237 = vmul.f32 %v178, %v230
  %v238 = vmul.f32 %v181, %v230
  %v239 = vmul.f32 %v183, %v230
  %v240 = vmul.f32 %v186, %v230
  %v241 = vmul.f32 %v188, %v230
  %v242 = vmul.f32 %v191, %v230
  %v243 = vmul.f32 %v193, %v230
  %v244 = vmul.f32 %v196, %v230
  %v245 = vmul.f32 %v198, %v230
  %v246 = vmul.f32 %v201, %v230
  %v247 = vmul.f32 %v203, %v230
  %v248 = vmul.f32 %v206, %v230
  %v249 = vmul.f32 %v208, %v230
  %v250 = vmul.f32 %v211, %v230
  %v251 = vmul.f32 %v213, %v230
  %v252 = vmul.f32 %v216, %v230
  %v253 = vmul.f32 %v218, %v230
  %v254 = vmul.f32 %v221, %v230
  %v255 = vmul.f32 %v223, %v230
  %v256 = vmul.f32 %v226, %v230
  %v258 = vperm.slane %v21, 0
  %v260 = vadd.f32 %v232, %v258
  %v261 = vadd.f32 %v233, %v258
  %v262 = vadd.f32 %v234, %v258
  %v263 = vadd.f32 %v235, %v258
  %v264 = vadd.f32 %v236, %v258
  %v265 = vadd.f32 %v237, %v258
  %v266 = vadd.f32 %v238, %v258
  %v267 = vadd.f32 %v239, %v258
  %v268 = vadd.f32 %v240, %v258
  %v269 = vadd.f32 %v241, %v258
  %v270 = vadd.f32 %v242, %v258
  %v271 = vadd.f32 %v243, %v258
  %v272 = vadd.f32 %v244, %v258
  %v273 = vadd.f32 %v245, %v258
  %v274 = vadd.f32 %v246, %v258
  %v275 = vadd.f32 %v247, %v258
  %v276 = vadd.f32 %v248, %v258
  %v277 = vadd.f32 %v249, %v258
  %v278 = vadd.f32 %v250, %v258
  %v279 = vadd.f32 %v251, %v258
  %v280 = vadd.f32 %v252, %v258
  %v281 = vadd.f32 %v253, %v258
  %v282 = vadd.f32 %v254, %v258
  %v283 = vadd.f32 %v255, %v258
  %v284 = vadd.f32 %v256, %v258
  %v285 = vmax.f32 %v260, 0.0
  %v286 = vmax.f32 %v261, 0.0
  %v287 = vmax.f32 %v262, 0.0
  %v288 = vmax.f32 %v263, 0.0
  %v289 = vmax.f32 %v264, 0.0
  %v290 = vmax.f32 %v265, 0.0
  %v291 = vmax.f32 %v266, 0.0
  %v292 = vmax.f32 %v267, 0.0
  %v293 = vmax.f32 %v268, 0.0
  %v294 = vmax.f32 %v269, 0.0
  %v295 = vmax.f32 %v270, 0.0
  %v296 = vmax.f32 %v271, 0.0
  %v297 = vmax.f32 %v272, 0.0
  %v298 = vmax.f32 %v273, 0.0
  %v299 = vmax.f32 %v274, 0.0
  %v300 = vmax.f32 %v275, 0.0
  %v301 = vmax.f32 %v276, 0.0
  %v302 = vmax.f32 %v277, 0.0
  %v303 = vmax.f32 %v278, 0.0
  %v304 = vmax.f32 %v279, 0.0
  %v305 = vmax.f32 %v280, 0.0
  %v306 = vmax.f32 %v281, 0.0
  %v307 = vmax.f32 %v282, 0.0
  %v308 = vmax.f32 %v283, 0.0
  %v309 = vmax.f32 %v284, 0.0
  %310 = vrot.lane.b32.xlu0 %v285, 64
  %v311 = vpop.permute.xlu0 %310
  %312 = vrot.lane.b32.xlu0 %v286, 64
  %v313 = vpop.permute.xlu0 %312
  %314 = vrot.lane.b32.xlu0 %v287, 64
  %v315 = vpop.permute.xlu0 %314
  %316 = vrot.lane.b32.xlu0 %v288, 64
  %v317 = vpop.permute.xlu0 %316
  %318 = vrot.lane.b32.xlu0 %v289, 64
  %v319 = vpop.permute.xlu0 %318
  %320 = vrot.lane.b32.xlu0 %v290, 64
  %v321 = vpop.permute.xlu0 %320
  %322 = vrot.lane.b32.xlu0 %v291, 64
  %v323 = vpop.permute.xlu0 %322
  %324 = vrot.lane.b32.xlu0 %v292, 64
  %v325 = vpop.permute.xlu0 %324
  %326 = vrot.lane.b32.xlu0 %v293, 64
  %v327 = vpop.permute.xlu0 %326
  %328 = vrot.lane.b32.xlu0 %v294, 64
  %v329 = vpop.permute.xlu0 %328
  %330 = vrot.lane.b32.xlu0 %v295, 64
  %v331 = vpop.permute.xlu0 %330
  %332 = vrot.lane.b32.xlu0 %v296, 64
  %v333 = vpop.permute.xlu0 %332
  %334 = vrot.lane.b32.xlu0 %v297, 64
  %v335 = vpop.permute.xlu0 %334
  %336 = vrot.lane.b32.xlu0 %v298, 64
  %v337 = vpop.permute.xlu0 %336
  %338 = vrot.lane.b32.xlu0 %v299, 64
  %v339 = vpop.permute.xlu0 %338
  %340 = vrot.lane.b32.xlu0 %v300, 64
  %v341 = vpop.permute.xlu0 %340
  %342 = vrot.lane.b32.xlu0 %v301, 64
  %v343 = vpop.permute.xlu0 %342
  %344 = vrot.lane.b32.xlu0 %v302, 64
  %v345 = vpop.permute.xlu0 %344
  %346 = vrot.lane.b32.xlu0 %v303, 64
  %v347 = vpop.permute.xlu0 %346
  %348 = vrot.lane.b32.xlu0 %v304, 64
  %v349 = vpop.permute.xlu0 %348
  %350 = vrot.lane.b32.xlu0 %v305, 64
  %v351 = vpop.permute.xlu0 %350
  %352 = vrot.lane.b32.xlu0 %v306, 64
  %v353 = vpop.permute.xlu0 %352
  %354 = vrot.lane.b32.xlu0 %v307, 64
  %v355 = vpop.permute.xlu0 %354
  %356 = vrot.lane.b32.xlu0 %v308, 64
  %v357 = vpop.permute.xlu0 %356
  %358 = vrot.lane.b32.xlu0 %v309, 64
  %v359 = vpop.permute.xlu0 %358
  %v360 = vmax.f32 %v285, %v311
  %v361 = vmax.f32 %v286, %v313
  %v362 = vmax.f32 %v287, %v315
  %v363 = vmax.f32 %v288, %v317
  %v364 = vmax.f32 %v289, %v319
  %v365 = vmax.f32 %v290, %v321
  %v366 = vmax.f32 %v291, %v323
  %v367 = vmax.f32 %v292, %v325
  %v368 = vmax.f32 %v293, %v327
  %v369 = vmax.f32 %v294, %v329
  %v370 = vmax.f32 %v295, %v331
  %v371 = vmax.f32 %v296, %v333
  %v372 = vmax.f32 %v297, %v335
  %v373 = vmax.f32 %v298, %v337
  %v374 = vmax.f32 %v299, %v339
  %v375 = vmax.f32 %v300, %v341
  %v376 = vmax.f32 %v301, %v343
  %v377 = vmax.f32 %v302, %v345
  %v378 = vmax.f32 %v303, %v347
  %v379 = vmax.f32 %v304, %v349
  %v380 = vmax.f32 %v305, %v351
  %v381 = vmax.f32 %v306, %v353
  %v382 = vmax.f32 %v307, %v355
  %v383 = vmax.f32 %v308, %v357
  %v384 = vmax.f32 %v309, %v359
  %385 = vrot.lane.b32.xlu0 %v360, 32
  %v386 = vpop.permute.xlu0 %385
  %387 = vrot.lane.b32.xlu0 %v361, 32
  %v388 = vpop.permute.xlu0 %387
  %389 = vrot.lane.b32.xlu0 %v362, 32
  %v390 = vpop.permute.xlu0 %389
  %391 = vrot.lane.b32.xlu0 %v363, 32
  %v392 = vpop.permute.xlu0 %391
  %393 = vrot.lane.b32.xlu0 %v364, 32
  %v394 = vpop.permute.xlu0 %393
  %395 = vrot.lane.b32.xlu0 %v365, 32
  %v396 = vpop.permute.xlu0 %395
  %397 = vrot.lane.b32.xlu0 %v366, 32
  %v398 = vpop.permute.xlu0 %397
  %399 = vrot.lane.b32.xlu0 %v367, 32
  %v400 = vpop.permute.xlu0 %399
  %401 = vrot.lane.b32.xlu0 %v368, 32
  %v402 = vpop.permute.xlu0 %401
  %403 = vrot.lane.b32.xlu0 %v369, 32
  %v404 = vpop.permute.xlu0 %403
  %405 = vrot.lane.b32.xlu0 %v370, 32
  %v406 = vpop.permute.xlu0 %405
  %407 = vrot.lane.b32.xlu0 %v371, 32
  %v408 = vpop.permute.xlu0 %407
  %409 = vrot.lane.b32.xlu0 %v372, 32
  %v410 = vpop.permute.xlu0 %409
  %411 = vrot.lane.b32.xlu0 %v373, 32
  %v412 = vpop.permute.xlu0 %411
  %413 = vrot.lane.b32.xlu0 %v374, 32
  %v414 = vpop.permute.xlu0 %413
  %415 = vrot.lane.b32.xlu0 %v375, 32
  %v416 = vpop.permute.xlu0 %415
  %417 = vrot.lane.b32.xlu0 %v376, 32
  %v418 = vpop.permute.xlu0 %417
  %419 = vrot.lane.b32.xlu0 %v377, 32
  %v420 = vpop.permute.xlu0 %419
  %421 = vrot.lane.b32.xlu0 %v378, 32
  %v422 = vpop.permute.xlu0 %421
  %423 = vrot.lane.b32.xlu0 %v379, 32
  %v424 = vpop.permute.xlu0 %423
  %425 = vrot.lane.b32.xlu0 %v380, 32
  %v426 = vpop.permute.xlu0 %425
  %427 = vrot.lane.b32.xlu0 %v381, 32
  %v428 = vpop.permute.xlu0 %427
  %429 = vrot.lane.b32.xlu0 %v382, 32
  %v430 = vpop.permute.xlu0 %429
  %431 = vrot.lane.b32.xlu0 %v383, 32
  %v432 = vpop.permute.xlu0 %431
  %433 = vrot.lane.b32.xlu0 %v384, 32
  %v434 = vpop.permute.xlu0 %433
  %v435 = vmax.f32 %v360, %v386
  %v436 = vmax.f32 %v361, %v388
  %v437 = vmax.f32 %v362, %v390
  %v438 = vmax.f32 %v363, %v392
  %v439 = vmax.f32 %v364, %v394
  %v440 = vmax.f32 %v365, %v396
  %v441 = vmax.f32 %v366, %v398
  %v442 = vmax.f32 %v367, %v400
  %v443 = vmax.f32 %v368, %v402
  %v444 = vmax.f32 %v369, %v404
  %v445 = vmax.f32 %v370, %v406
  %v446 = vmax.f32 %v371, %v408
  %v447 = vmax.f32 %v372, %v410
  %v448 = vmax.f32 %v373, %v412
  %v449 = vmax.f32 %v374, %v414
  %v450 = vmax.f32 %v375, %v416
  %v451 = vmax.f32 %v376, %v418
  %v452 = vmax.f32 %v377, %v420
  %v453 = vmax.f32 %v378, %v422
  %v454 = vmax.f32 %v379, %v424
  %v455 = vmax.f32 %v380, %v426
  %v456 = vmax.f32 %v381, %v428
  %v457 = vmax.f32 %v382, %v430
  %v458 = vmax.f32 %v383, %v432
  %v459 = vmax.f32 %v384, %v434
  %v460 = vpack.c.bf16 %v435, %v435
  %v461 = vpack.c.bf16 %v436, %v436
  %v462 = vpack.c.bf16 %v437, %v437
  %v463 = vpack.c.bf16 %v438, %v438
  %v464 = vpack.c.bf16 %v439, %v439
  %v465 = vpack.c.bf16 %v440, %v440
  %v466 = vpack.c.bf16 %v441, %v441
  %v467 = vpack.c.bf16 %v442, %v442
  %v468 = vpack.c.bf16 %v443, %v443
  %v469 = vpack.c.bf16 %v444, %v444
  %v470 = vpack.c.bf16 %v445, %v445
  %v471 = vpack.c.bf16 %v446, %v446
  %v472 = vpack.c.bf16 %v447, %v447
  %v473 = vpack.c.bf16 %v448, %v448
  %v474 = vpack.c.bf16 %v449, %v449
  %v475 = vpack.c.bf16 %v450, %v450
  %v476 = vpack.c.bf16 %v451, %v451
  %v477 = vpack.c.bf16 %v452, %v452
  %v478 = vpack.c.bf16 %v453, %v453
  %v479 = vpack.c.bf16 %v454, %v454
  %v480 = vpack.c.bf16 %v455, %v455
  %v481 = vpack.c.bf16 %v456, %v456
  %v482 = vpack.c.bf16 %v457, %v457
  %v483 = vpack.c.bf16 %v458, %v458
  %v484 = vpack.c.bf16 %v459, %v459
  %vm485 = vcmask 257024
  %486 = vst.msk [vmem:[%s4] sm:$0xf] %vm485, %v460
  %487 = vst.msk [vmem:[%s4 + $0x4] sm:$0xf] %vm485, %v461
  %488 = vst.msk [vmem:[%s4 + $0x8] sm:$0xf] %vm485, %v462
  %489 = vst.msk [vmem:[%s4 + $0xc] sm:$0xf] %vm485, %v463
  %490 = vst.msk [vmem:[%s4 + $0x10] sm:$0xf] %vm485, %v464
  %491 = vst.msk [vmem:[%s4 + $0x14] sm:$0xf] %vm485, %v465
  %492 = vst.msk [vmem:[%s4 + $0x18] sm:$0xf] %vm485, %v466
  %493 = vst.msk [vmem:[%s4 + $0x1c] sm:$0xf] %vm485, %v467
  %494 = vst.msk [vmem:[%s4 + $0x20] sm:$0xf] %vm485, %v468
  %495 = vst.msk [vmem:[%s4 + $0x24] sm:$0xf] %vm485, %v469
  %496 = vst.msk [vmem:[%s4 + $0x28] sm:$0xf] %vm485, %v470
  %497 = vst.msk [vmem:[%s4 + $0x2c] sm:$0xf] %vm485, %v471
  %498 = vst.msk [vmem:[%s4 + $0x30] sm:$0xf] %vm485, %v472
  %499 = vst.msk [vmem:[%s4 + $0x34] sm:$0xf] %vm485, %v473
  %500 = vst.msk [vmem:[%s4 + $0x38] sm:$0xf] %vm485, %v474
  %501 = vst.msk [vmem:[%s4 + $0x3c] sm:$0xf] %vm485, %v475
  %502 = vst.msk [vmem:[%s4 + $0x40] sm:$0xf] %vm485, %v476
  %503 = vst.msk [vmem:[%s4 + $0x44] sm:$0xf] %vm485, %v477
  %504 = vst.msk [vmem:[%s4 + $0x48] sm:$0xf] %vm485, %v478
  %505 = vst.msk [vmem:[%s4 + $0x4c] sm:$0xf] %vm485, %v479
  %506 = vst.msk [vmem:[%s4 + $0x50] sm:$0xf] %vm485, %v480
  %507 = vst.msk [vmem:[%s4 + $0x54] sm:$0xf] %vm485, %v481
  %508 = vst.msk [vmem:[%s4 + $0x58] sm:$0xf] %vm485, %v482
  %509 = vst.msk [vmem:[%s4 + $0x5c] sm:$0xf] %vm485, %v483
  %vm510 = vcmask 254976
  %511 = vst.msk [vmem:[%s4 + $0x60] sm:$0x3] %vm510, %v484
  %v512 = vld [vmem:[%s0 + $0x60] sm:$0xc]
  %v513 = vld [vmem:[%s0 + $0x64] sm:$0xf]
  %v514 = vld [vmem:[%s0 + $0x68] sm:$0xf]
  %v515 = vld [vmem:[%s0 + $0x6c] sm:$0xf]
  %v516 = vld [vmem:[%s0 + $0x70] sm:$0xf]
  %v517 = vld [vmem:[%s0 + $0x74] sm:$0xf]
  %v518 = vld [vmem:[%s0 + $0x78] sm:$0xf]
  %v519 = vld [vmem:[%s0 + $0x7c] sm:$0xf]
  %v520 = vld [vmem:[%s0 + $0x80] sm:$0xf]
  %v521 = vld [vmem:[%s0 + $0x84] sm:$0xf]
  %v522 = vld [vmem:[%s0 + $0x88] sm:$0xf]
  %v523 = vld [vmem:[%s0 + $0x8c] sm:$0xf]
  %v524 = vld [vmem:[%s0 + $0x90] sm:$0xf]
  %v525 = vld [vmem:[%s0 + $0x94] sm:$0xf]
  %v526 = vld [vmem:[%s0 + $0x98] sm:$0xf]
  %v527 = vld [vmem:[%s0 + $0x9c] sm:$0xf]
  %v528 = vld [vmem:[%s0 + $0xa0] sm:$0xf]
  %v529 = vld [vmem:[%s0 + $0xa4] sm:$0xf]
  %v530 = vld [vmem:[%s0 + $0xa8] sm:$0xf]
  %v531 = vld [vmem:[%s0 + $0xac] sm:$0xf]
  %v532 = vld [vmem:[%s0 + $0xb0] sm:$0xf]
  %v533 = vld [vmem:[%s0 + $0xb4] sm:$0xf]
  %v534 = vld [vmem:[%s0 + $0xb8] sm:$0xf]
  %v535 = vld [vmem:[%s0 + $0xbc] sm:$0xf]
  %v536 = vld [vmem:[%s0 + $0xc0] sm:$0xf]
  %v562 = vunpack.c.l.b16 %v512
  %v563 = vunpack.c.l.b16 %v513
  %v564 = vunpack.c.l.b16 %v514
  %v565 = vunpack.c.l.b16 %v515
  %v566 = vunpack.c.l.b16 %v516
  %v567 = vunpack.c.l.b16 %v517
  %v568 = vunpack.c.l.b16 %v518
  %v569 = vunpack.c.l.b16 %v519
  %v570 = vunpack.c.l.b16 %v520
  %v571 = vunpack.c.l.b16 %v521
  %v572 = vunpack.c.l.b16 %v522
  %v573 = vunpack.c.l.b16 %v523
  %v574 = vunpack.c.l.b16 %v524
  %v575 = vunpack.c.l.b16 %v525
  %v576 = vunpack.c.l.b16 %v526
  %v577 = vunpack.c.l.b16 %v527
  %v578 = vunpack.c.l.b16 %v528
  %v579 = vunpack.c.l.b16 %v529
  %v580 = vunpack.c.l.b16 %v530
  %v581 = vunpack.c.l.b16 %v531
  %v582 = vunpack.c.l.b16 %v532
  %v583 = vunpack.c.l.b16 %v533
  %v584 = vunpack.c.l.b16 %v534
  %v585 = vunpack.c.l.b16 %v535
  %v586 = vunpack.c.l.b16 %v536
  %v587 = vpack.c.b16 %v563, %v562
  %v588 = vpack.c.b16 %v565, %v564
  %v589 = vpack.c.b16 %v567, %v566
  %v590 = vpack.c.b16 %v569, %v568
  %v591 = vpack.c.b16 %v571, %v570
  %v592 = vpack.c.b16 %v573, %v572
  %v593 = vpack.c.b16 %v575, %v574
  %v594 = vpack.c.b16 %v577, %v576
  %v595 = vpack.c.b16 %v579, %v578
  %v596 = vpack.c.b16 %v581, %v580
  %v597 = vpack.c.b16 %v583, %v582
  %v598 = vpack.c.b16 %v585, %v584
  %v599 = vpack.c.b16 %v586, %v586
  %vm600 = vcmask 1045504
  %v601 = vrot.slane %v587, 2
  %v602 = vrot.slane %v588, 2
  %v603 = vsel %vm600, %v601, %v602
  %v604 = vrot.slane %v589, 2
  %v605 = vsel %vm600, %v602, %v604
  %v606 = vrot.slane %v590, 2
  %v607 = vsel %vm600, %v604, %v606
  %v608 = vrot.slane %v591, 2
  %v609 = vsel %vm600, %v606, %v608
  %v610 = vrot.slane %v592, 2
  %v611 = vsel %vm600, %v608, %v610
  %v612 = vrot.slane %v593, 2
  %v613 = vsel %vm600, %v610, %v612
  %v614 = vrot.slane %v594, 2
  %v615 = vsel %vm600, %v612, %v614
  %v616 = vrot.slane %v595, 2
  %v617 = vsel %vm600, %v614, %v616
  %v618 = vrot.slane %v596, 2
  %v619 = vsel %vm600, %v616, %v618
  %v620 = vrot.slane %v597, 2
  %v621 = vsel %vm600, %v618, %v620
  %v622 = vrot.slane %v598, 2
  %v623 = vsel %vm600, %v620, %v622
  %v624 = vrot.slane %v599, 2
  %v625 = vsel %vm600, %v622, %v624
  %v627 = vsel %vm116, %v603, 0
  %v630 = vsel %vm116, %v605, 0
  %v633 = vsel %vm116, %v607, 0
  %v636 = vsel %vm116, %v609, 0
  %v639 = vsel %vm116, %v611, 0
  %v642 = vsel %vm116, %v613, 0
  %v645 = vsel %vm116, %v615, 0
  %v648 = vsel %vm116, %v617, 0
  %v651 = vsel %vm116, %v619, 0
  %v654 = vsel %vm116, %v621, 0
  %v657 = vsel %vm116, %v623, 0
  %v660 = vsel %vm116, %v625, 0
  %v663 = vsel %vm116, %v624, 0
  %665 = vmatpush.bf16.msra.mxu0 0
  %666 = vmatpush.bf16.msra.mxu0 0
  %667 = vmatpush.bf16.msra.mxu0 0
  %668 = vmatpush.bf16.msra.mxu0 0
  %669 = vmatpush.bf16.msra.mxu0 0
  %670 = vmatpush.bf16.msra.mxu0 0
  %671 = vmatpush.bf16.msra.mxu0 0
  %672 = vmatpush.bf16.msra.mxu0 %v114
  %673 = vmatmul.bf16.gmra.mxu0 %v627
  %v674 = vpop.f32.mrf.mxu0
  %v675 = vadd.f32 0.0, %v674
  %v676 = vpop.f32.mrf.mxu0
  %v677 = vadd.f32 0.0, %v676
  %678 = vmatmul.bf16.gmra.mxu0 %v630
  %v679 = vpop.f32.mrf.mxu0
  %v680 = vadd.f32 0.0, %v679
  %v681 = vpop.f32.mrf.mxu0
  %v682 = vadd.f32 0.0, %v681
  %683 = vmatmul.bf16.gmra.mxu0 %v633
  %v684 = vpop.f32.mrf.mxu0
  %v685 = vadd.f32 0.0, %v684
  %v686 = vpop.f32.mrf.mxu0
  %v687 = vadd.f32 0.0, %v686
  %688 = vmatmul.bf16.gmra.mxu0 %v636
  %v689 = vpop.f32.mrf.mxu0
  %v690 = vadd.f32 0.0, %v689
  %v691 = vpop.f32.mrf.mxu0
  %v692 = vadd.f32 0.0, %v691
  %693 = vmatmul.bf16.gmra.mxu0 %v639
  %v694 = vpop.f32.mrf.mxu0
  %v695 = vadd.f32 0.0, %v694
  %v696 = vpop.f32.mrf.mxu0
  %v697 = vadd.f32 0.0, %v696
  %698 = vmatmul.bf16.gmra.mxu0 %v642
  %v699 = vpop.f32.mrf.mxu0
  %v700 = vadd.f32 0.0, %v699
  %v701 = vpop.f32.mrf.mxu0
  %v702 = vadd.f32 0.0, %v701
  %703 = vmatmul.bf16.gmra.mxu0 %v645
  %v704 = vpop.f32.mrf.mxu0
  %v705 = vadd.f32 0.0, %v704
  %v706 = vpop.f32.mrf.mxu0
  %v707 = vadd.f32 0.0, %v706
  %708 = vmatmul.bf16.gmra.mxu0 %v648
  %v709 = vpop.f32.mrf.mxu0
  %v710 = vadd.f32 0.0, %v709
  %v711 = vpop.f32.mrf.mxu0
  %v712 = vadd.f32 0.0, %v711
  %713 = vmatmul.bf16.gmra.mxu0 %v651
  %v714 = vpop.f32.mrf.mxu0
  %v715 = vadd.f32 0.0, %v714
  %v716 = vpop.f32.mrf.mxu0
  %v717 = vadd.f32 0.0, %v716
  %718 = vmatmul.bf16.gmra.mxu0 %v654
  %v719 = vpop.f32.mrf.mxu0
  %v720 = vadd.f32 0.0, %v719
  %v721 = vpop.f32.mrf.mxu0
  %v722 = vadd.f32 0.0, %v721
  %723 = vmatmul.bf16.gmra.mxu0 %v657
  %v724 = vpop.f32.mrf.mxu0
  %v725 = vadd.f32 0.0, %v724
  %v726 = vpop.f32.mrf.mxu0
  %v727 = vadd.f32 0.0, %v726
  %728 = vmatmul.bf16.gmra.mxu0 %v660
  %v729 = vpop.f32.mrf.mxu0
  %v730 = vadd.f32 0.0, %v729
  %v731 = vpop.f32.mrf.mxu0
  %v732 = vadd.f32 0.0, %v731
  %733 = vmatmul.bf16.gmra.mxu0 %v663
  %v734 = vpop.f32.mrf.mxu0
  %v735 = vadd.f32 0.0, %v734
  %v736 = vpop.f32.mrf.mxu0
  %737 = vdwg.mxu0
  %v738 = vmul.f32 %v675, %v230
  %v739 = vmul.f32 %v677, %v230
  %v740 = vmul.f32 %v680, %v230
  %v741 = vmul.f32 %v682, %v230
  %v742 = vmul.f32 %v685, %v230
  %v743 = vmul.f32 %v687, %v230
  %v744 = vmul.f32 %v690, %v230
  %v745 = vmul.f32 %v692, %v230
  %v746 = vmul.f32 %v695, %v230
  %v747 = vmul.f32 %v697, %v230
  %v748 = vmul.f32 %v700, %v230
  %v749 = vmul.f32 %v702, %v230
  %v750 = vmul.f32 %v705, %v230
  %v751 = vmul.f32 %v707, %v230
  %v752 = vmul.f32 %v710, %v230
  %v753 = vmul.f32 %v712, %v230
  %v754 = vmul.f32 %v715, %v230
  %v755 = vmul.f32 %v717, %v230
  %v756 = vmul.f32 %v720, %v230
  %v757 = vmul.f32 %v722, %v230
  %v758 = vmul.f32 %v725, %v230
  %v759 = vmul.f32 %v727, %v230
  %v760 = vmul.f32 %v730, %v230
  %v761 = vmul.f32 %v732, %v230
  %v762 = vmul.f32 %v735, %v230
  %v763 = vadd.f32 %v738, %v258
  %v764 = vadd.f32 %v739, %v258
  %v765 = vadd.f32 %v740, %v258
  %v766 = vadd.f32 %v741, %v258
  %v767 = vadd.f32 %v742, %v258
  %v768 = vadd.f32 %v743, %v258
  %v769 = vadd.f32 %v744, %v258
  %v770 = vadd.f32 %v745, %v258
  %v771 = vadd.f32 %v746, %v258
  %v772 = vadd.f32 %v747, %v258
  %v773 = vadd.f32 %v748, %v258
  %v774 = vadd.f32 %v749, %v258
  %v775 = vadd.f32 %v750, %v258
  %v776 = vadd.f32 %v751, %v258
  %v777 = vadd.f32 %v752, %v258
  %v778 = vadd.f32 %v753, %v258
  %v779 = vadd.f32 %v754, %v258
  %v780 = vadd.f32 %v755, %v258
  %v781 = vadd.f32 %v756, %v258
  %v782 = vadd.f32 %v757, %v258
  %v783 = vadd.f32 %v758, %v258
  %v784 = vadd.f32 %v759, %v258
  %v785 = vadd.f32 %v760, %v258
  %v786 = vadd.f32 %v761, %v258
  %v787 = vadd.f32 %v762, %v258
  %v788 = vmax.f32 %v763, 0.0
  %v789 = vmax.f32 %v764, 0.0
  %v790 = vmax.f32 %v765, 0.0
  %v791 = vmax.f32 %v766, 0.0
  %v792 = vmax.f32 %v767, 0.0
  %v793 = vmax.f32 %v768, 0.0
  %v794 = vmax.f32 %v769, 0.0
  %v795 = vmax.f32 %v770, 0.0
  %v796 = vmax.f32 %v771, 0.0
  %v797 = vmax.f32 %v772, 0.0
  %v798 = vmax.f32 %v773, 0.0
  %v799 = vmax.f32 %v774, 0.0
  %v800 = vmax.f32 %v775, 0.0
  %v801 = vmax.f32 %v776, 0.0
  %v802 = vmax.f32 %v777, 0.0
  %v803 = vmax.f32 %v778, 0.0
  %v804 = vmax.f32 %v779, 0.0
  %v805 = vmax.f32 %v780, 0.0
  %v806 = vmax.f32 %v781, 0.0
  %v807 = vmax.f32 %v782, 0.0
  %v808 = vmax.f32 %v783, 0.0
  %v809 = vmax.f32 %v784, 0.0
  %v810 = vmax.f32 %v785, 0.0
  %v811 = vmax.f32 %v786, 0.0
  %v812 = vmax.f32 %v787, 0.0
  %813 = vrot.lane.b32.xlu0 %v788, 64
  %v814 = vpop.permute.xlu0 %813
  %815 = vrot.lane.b32.xlu0 %v789, 64
  %v816 = vpop.permute.xlu0 %815
  %817 = vrot.lane.b32.xlu0 %v790, 64
  %v818 = vpop.permute.xlu0 %817
  %819 = vrot.lane.b32.xlu0 %v791, 64
  %v820 = vpop.permute.xlu0 %819
  %821 = vrot.lane.b32.xlu0 %v792, 64
  %v822 = vpop.permute.xlu0 %821
  %823 = vrot.lane.b32.xlu0 %v793, 64
  %v824 = vpop.permute.xlu0 %823
  %825 = vrot.lane.b32.xlu0 %v794, 64
  %v826 = vpop.permute.xlu0 %825
  %827 = vrot.lane.b32.xlu0 %v795, 64
  %v828 = vpop.permute.xlu0 %827
  %829 = vrot.lane.b32.xlu0 %v796, 64
  %v830 = vpop.permute.xlu0 %829
  %831 = vrot.lane.b32.xlu0 %v797, 64
  %v832 = vpop.permute.xlu0 %831
  %833 = vrot.lane.b32.xlu0 %v798, 64
  %v834 = vpop.permute.xlu0 %833
  %835 = vrot.lane.b32.xlu0 %v799, 64
  %v836 = vpop.permute.xlu0 %835
  %837 = vrot.lane.b32.xlu0 %v800, 64
  %v838 = vpop.permute.xlu0 %837
  %839 = vrot.lane.b32.xlu0 %v801, 64
  %v840 = vpop.permute.xlu0 %839
  %841 = vrot.lane.b32.xlu0 %v802, 64
  %v842 = vpop.permute.xlu0 %841
  %843 = vrot.lane.b32.xlu0 %v803, 64
  %v844 = vpop.permute.xlu0 %843
  %845 = vrot.lane.b32.xlu0 %v804, 64
  %v846 = vpop.permute.xlu0 %845
  %847 = vrot.lane.b32.xlu0 %v805, 64
  %v848 = vpop.permute.xlu0 %847
  %849 = vrot.lane.b32.xlu0 %v806, 64
  %v850 = vpop.permute.xlu0 %849
  %851 = vrot.lane.b32.xlu0 %v807, 64
  %v852 = vpop.permute.xlu0 %851
  %853 = vrot.lane.b32.xlu0 %v808, 64
  %v854 = vpop.permute.xlu0 %853
  %855 = vrot.lane.b32.xlu0 %v809, 64
  %v856 = vpop.permute.xlu0 %855
  %857 = vrot.lane.b32.xlu0 %v810, 64
  %v858 = vpop.permute.xlu0 %857
  %859 = vrot.lane.b32.xlu0 %v811, 64
  %v860 = vpop.permute.xlu0 %859
  %861 = vrot.lane.b32.xlu0 %v812, 64
  %v862 = vpop.permute.xlu0 %861
  %v863 = vmax.f32 %v788, %v814
  %v864 = vmax.f32 %v789, %v816
  %v865 = vmax.f32 %v790, %v818
  %v866 = vmax.f32 %v791, %v820
  %v867 = vmax.f32 %v792, %v822
  %v868 = vmax.f32 %v793, %v824
  %v869 = vmax.f32 %v794, %v826
  %v870 = vmax.f32 %v795, %v828
  %v871 = vmax.f32 %v796, %v830
  %v872 = vmax.f32 %v797, %v832
  %v873 = vmax.f32 %v798, %v834
  %v874 = vmax.f32 %v799, %v836
  %v875 = vmax.f32 %v800, %v838
  %v876 = vmax.f32 %v801, %v840
  %v877 = vmax.f32 %v802, %v842
  %v878 = vmax.f32 %v803, %v844
  %v879 = vmax.f32 %v804, %v846
  %v880 = vmax.f32 %v805, %v848
  %v881 = vmax.f32 %v806, %v850
  %v882 = vmax.f32 %v807, %v852
  %v883 = vmax.f32 %v808, %v854
  %v884 = vmax.f32 %v809, %v856
  %v885 = vmax.f32 %v810, %v858
  %v886 = vmax.f32 %v811, %v860
  %v887 = vmax.f32 %v812, %v862
  %888 = vrot.lane.b32.xlu0 %v863, 32
  %v889 = vpop.permute.xlu0 %888
  %890 = vrot.lane.b32.xlu0 %v864, 32
  %v891 = vpop.permute.xlu0 %890
  %892 = vrot.lane.b32.xlu0 %v865, 32
  %v893 = vpop.permute.xlu0 %892
  %894 = vrot.lane.b32.xlu0 %v866, 32
  %v895 = vpop.permute.xlu0 %894
  %896 = vrot.lane.b32.xlu0 %v867, 32
  %v897 = vpop.permute.xlu0 %896
  %898 = vrot.lane.b32.xlu0 %v868, 32
  %v899 = vpop.permute.xlu0 %898
  %900 = vrot.lane.b32.xlu0 %v869, 32
  %v901 = vpop.permute.xlu0 %900
  %902 = vrot.lane.b32.xlu0 %v870, 32
  %v903 = vpop.permute.xlu0 %902
  %904 = vrot.lane.b32.xlu0 %v871, 32
  %v905 = vpop.permute.xlu0 %904
  %906 = vrot.lane.b32.xlu0 %v872, 32
  %v907 = vpop.permute.xlu0 %906
  %908 = vrot.lane.b32.xlu0 %v873, 32
  %v909 = vpop.permute.xlu0 %908
  %910 = vrot.lane.b32.xlu0 %v874, 32
  %v911 = vpop.permute.xlu0 %910
  %912 = vrot.lane.b32.xlu0 %v875, 32
  %v913 = vpop.permute.xlu0 %912
  %914 = vrot.lane.b32.xlu0 %v876, 32
  %v915 = vpop.permute.xlu0 %914
  %916 = vrot.lane.b32.xlu0 %v877, 32
  %v917 = vpop.permute.xlu0 %916
  %918 = vrot.lane.b32.xlu0 %v878, 32
  %v919 = vpop.permute.xlu0 %918
  %920 = vrot.lane.b32.xlu0 %v879, 32
  %v921 = vpop.permute.xlu0 %920
  %922 = vrot.lane.b32.xlu0 %v880, 32
  %v923 = vpop.permute.xlu0 %922
  %924 = vrot.lane.b32.xlu0 %v881, 32
  %v925 = vpop.permute.xlu0 %924
  %926 = vrot.lane.b32.xlu0 %v882, 32
  %v927 = vpop.permute.xlu0 %926
  %928 = vrot.lane.b32.xlu0 %v883, 32
  %v929 = vpop.permute.xlu0 %928
  %930 = vrot.lane.b32.xlu0 %v884, 32
  %v931 = vpop.permute.xlu0 %930
  %932 = vrot.lane.b32.xlu0 %v885, 32
  %v933 = vpop.permute.xlu0 %932
  %934 = vrot.lane.b32.xlu0 %v886, 32
  %v935 = vpop.permute.xlu0 %934
  %936 = vrot.lane.b32.xlu0 %v887, 32
  %v937 = vpop.permute.xlu0 %936
  %v938 = vmax.f32 %v863, %v889
  %v939 = vmax.f32 %v864, %v891
  %v940 = vmax.f32 %v865, %v893
  %v941 = vmax.f32 %v866, %v895
  %v942 = vmax.f32 %v867, %v897
  %v943 = vmax.f32 %v868, %v899
  %v944 = vmax.f32 %v869, %v901
  %v945 = vmax.f32 %v870, %v903
  %v946 = vmax.f32 %v871, %v905
  %v947 = vmax.f32 %v872, %v907
  %v948 = vmax.f32 %v873, %v909
  %v949 = vmax.f32 %v874, %v911
  %v950 = vmax.f32 %v875, %v913
  %v951 = vmax.f32 %v876, %v915
  %v952 = vmax.f32 %v877, %v917
  %v953 = vmax.f32 %v878, %v919
  %v954 = vmax.f32 %v879, %v921
  %v955 = vmax.f32 %v880, %v923
  %v956 = vmax.f32 %v881, %v925
  %v957 = vmax.f32 %v882, %v927
  %v958 = vmax.f32 %v883, %v929
  %v959 = vmax.f32 %v884, %v931
  %v960 = vmax.f32 %v885, %v933
  %v961 = vmax.f32 %v886, %v935
  %v962 = vmax.f32 %v887, %v937
  %v963 = vpack.c.bf16 %v938, %v938
  %v964 = vpack.c.bf16 %v939, %v939
  %v965 = vpack.c.bf16 %v940, %v940
  %v966 = vpack.c.bf16 %v941, %v941
  %v967 = vpack.c.bf16 %v942, %v942
  %v968 = vpack.c.bf16 %v943, %v943
  %v969 = vpack.c.bf16 %v944, %v944
  %v970 = vpack.c.bf16 %v945, %v945
  %v971 = vpack.c.bf16 %v946, %v946
  %v972 = vpack.c.bf16 %v947, %v947
  %v973 = vpack.c.bf16 %v948, %v948
  %v974 = vpack.c.bf16 %v949, %v949
  %v975 = vpack.c.bf16 %v950, %v950
  %v976 = vpack.c.bf16 %v951, %v951
  %v977 = vpack.c.bf16 %v952, %v952
  %v978 = vpack.c.bf16 %v953, %v953
  %v979 = vpack.c.bf16 %v954, %v954
  %v980 = vpack.c.bf16 %v955, %v955
  %v981 = vpack.c.bf16 %v956, %v956
  %v982 = vpack.c.bf16 %v957, %v957
  %v983 = vpack.c.bf16 %v958, %v958
  %v984 = vpack.c.bf16 %v959, %v959
  %v985 = vpack.c.bf16 %v960, %v960
  %v986 = vpack.c.bf16 %v961, %v961
  %v987 = vpack.c.bf16 %v962, %v962
  %vm1013 = vcmask 1041408
  %vm1014 = vcmask 1045508
  %vm1015 = vmor %vm1013, %vm1014
  %v1016 = vrot.slane %v963, 6
  %v1017 = vrot.slane %v1016, 4
  %v1018 = vrot.slane %v964, 6
  %v1019 = vsel %vm1015, %v1017, %v1018
  %v1020 = vrot.slane %v1018, 4
  %v1021 = vrot.slane %v965, 6
  %v1022 = vsel %vm1015, %v1020, %v1021
  %v1023 = vrot.slane %v1021, 4
  %v1024 = vrot.slane %v966, 6
  %v1025 = vsel %vm1015, %v1023, %v1024
  %v1026 = vrot.slane %v1024, 4
  %v1027 = vrot.slane %v967, 6
  %v1028 = vsel %vm1015, %v1026, %v1027
  %v1029 = vrot.slane %v1027, 4
  %v1030 = vrot.slane %v968, 6
  %v1031 = vsel %vm1015, %v1029, %v1030
  %v1032 = vrot.slane %v1030, 4
  %v1033 = vrot.slane %v969, 6
  %v1034 = vsel %vm1015, %v1032, %v1033
  %v1035 = vrot.slane %v1033, 4
  %v1036 = vrot.slane %v970, 6
  %v1037 = vsel %vm1015, %v1035, %v1036
  %v1038 = vrot.slane %v1036, 4
  %v1039 = vrot.slane %v971, 6
  %v1040 = vsel %vm1015, %v1038, %v1039
  %v1041 = vrot.slane %v1039, 4
  %v1042 = vrot.slane %v972, 6
  %v1043 = vsel %vm1015, %v1041, %v1042
  %v1044 = vrot.slane %v1042, 4
  %v1045 = vrot.slane %v973, 6
  %v1046 = vsel %vm1015, %v1044, %v1045
  %v1047 = vrot.slane %v1045, 4
  %v1048 = vrot.slane %v974, 6
  %v1049 = vsel %vm1015, %v1047, %v1048
  %v1050 = vrot.slane %v1048, 4
  %v1051 = vrot.slane %v975, 6
  %v1052 = vsel %vm1015, %v1050, %v1051
  %v1053 = vrot.slane %v1051, 4
  %v1054 = vrot.slane %v976, 6
  %v1055 = vsel %vm1015, %v1053, %v1054
  %v1056 = vrot.slane %v1054, 4
  %v1057 = vrot.slane %v977, 6
  %v1058 = vsel %vm1015, %v1056, %v1057
  %v1059 = vrot.slane %v1057, 4
  %v1060 = vrot.slane %v978, 6
  %v1061 = vsel %vm1015, %v1059, %v1060
  %v1062 = vrot.slane %v1060, 4
  %v1063 = vrot.slane %v979, 6
  %v1064 = vsel %vm1015, %v1062, %v1063
  %v1065 = vrot.slane %v1063, 4
  %v1066 = vrot.slane %v980, 6
  %v1067 = vsel %vm1015, %v1065, %v1066
  %v1068 = vrot.slane %v1066, 4
  %v1069 = vrot.slane %v981, 6
  %v1070 = vsel %vm1015, %v1068, %v1069
  %v1071 = vrot.slane %v1069, 4
  %v1072 = vrot.slane %v982, 6
  %v1073 = vsel %vm1015, %v1071, %v1072
  %v1074 = vrot.slane %v1072, 4
  %v1075 = vrot.slane %v983, 6
  %v1076 = vsel %vm1015, %v1074, %v1075
  %v1077 = vrot.slane %v1075, 4
  %v1078 = vrot.slane %v984, 6
  %v1079 = vsel %vm1015, %v1077, %v1078
  %v1080 = vrot.slane %v1078, 4
  %v1081 = vrot.slane %v985, 6
  %v1082 = vsel %vm1015, %v1080, %v1081
  %v1083 = vrot.slane %v1081, 4
  %v1084 = vrot.slane %v986, 6
  %v1085 = vsel %vm1015, %v1083, %v1084
  %v1086 = vrot.slane %v1084, 4
  %v1087 = vrot.slane %v987, 6
  %v1088 = vsel %vm1015, %v1086, %v1087
  %vm1114 = vcmask 257026
  %1115 = vst.msk [vmem:[%s4 + $0x60] sm:$0xc] %vm1114, %v1016
  %1116 = vst.msk [vmem:[%s4 + $0x64] sm:$0xf] %vm485, %v1019
  %1117 = vst.msk [vmem:[%s4 + $0x68] sm:$0xf] %vm485, %v1022
  %1118 = vst.msk [vmem:[%s4 + $0x6c] sm:$0xf] %vm485, %v1025
  %1119 = vst.msk [vmem:[%s4 + $0x70] sm:$0xf] %vm485, %v1028
  %1120 = vst.msk [vmem:[%s4 + $0x74] sm:$0xf] %vm485, %v1031
  %1121 = vst.msk [vmem:[%s4 + $0x78] sm:$0xf] %vm485, %v1034
  %1122 = vst.msk [vmem:[%s4 + $0x7c] sm:$0xf] %vm485, %v1037
  %1123 = vst.msk [vmem:[%s4 + $0x80] sm:$0xf] %vm485, %v1040
  %1124 = vst.msk [vmem:[%s4 + $0x84] sm:$0xf] %vm485, %v1043
  %1125 = vst.msk [vmem:[%s4 + $0x88] sm:$0xf] %vm485, %v1046
  %1126 = vst.msk [vmem:[%s4 + $0x8c] sm:$0xf] %vm485, %v1049
  %1127 = vst.msk [vmem:[%s4 + $0x90] sm:$0xf] %vm485, %v1052
  %1128 = vst.msk [vmem:[%s4 + $0x94] sm:$0xf] %vm485, %v1055
  %1129 = vst.msk [vmem:[%s4 + $0x98] sm:$0xf] %vm485, %v1058
  %1130 = vst.msk [vmem:[%s4 + $0x9c] sm:$0xf] %vm485, %v1061
  %1131 = vst.msk [vmem:[%s4 + $0xa0] sm:$0xf] %vm485, %v1064
  %1132 = vst.msk [vmem:[%s4 + $0xa4] sm:$0xf] %vm485, %v1067
  %1133 = vst.msk [vmem:[%s4 + $0xa8] sm:$0xf] %vm485, %v1070
  %1134 = vst.msk [vmem:[%s4 + $0xac] sm:$0xf] %vm485, %v1073
  %1135 = vst.msk [vmem:[%s4 + $0xb0] sm:$0xf] %vm485, %v1076
  %1136 = vst.msk [vmem:[%s4 + $0xb4] sm:$0xf] %vm485, %v1079
  %1137 = vst.msk [vmem:[%s4 + $0xb8] sm:$0xf] %vm485, %v1082
  %1138 = vst.msk [vmem:[%s4 + $0xbc] sm:$0xf] %vm485, %v1085
  %1139 = vst.msk [vmem:[%s4 + $0xc0] sm:$0xf] %vm485, %v1088
  // Predicated region
  $region18: #{fashion_cnn_forward.3} parent=0 // pred_check
    _
  $region19: #{fashion_cnn_forward.3} parent=0 // pred_check_branch
    %1141 = sbr.rel (0) target = $region21
  $region20: #{fashion_cnn_forward.3} parent=0 // pred_region
    _
  $region21: #{fashion_cnn_forward.3} parent=0 // pred_fallthru
    _
  // Predicated region
  $region22: #{fashion_cnn_forward.3} parent=0 // pred_check
    _
  $region23: #{fashion_cnn_forward.3} parent=0 // pred_check_branch
    %1143 = sbr.rel (0) target = $region25
  $region24: #{fashion_cnn_forward.3} parent=0 // pred_region
    _
  $region25: #{fashion_cnn_forward.3} parent=0 // pred_fallthru
    _

// kernel: fashion_cnn_forward.4
$region0: #{fashion_cnn_forward.4}
  #allocation0 [shape = 'u32[]', space=smem, size = 0x4, offset = 0x4, fixed_abs, tag = 'smem constant byte address 0x4 - core index']
  #allocation1 [shape = 'u32[72,128]{1,0:T(1,128)}', space=vmem, size = 0x9000, scoped, tag = 'internal scratch']
  %s0 = inlined_call_operand.vmem [shape: bf16[72,512], index: 0, kind: input, shape index: {}]
  %s1 = inlined_call_operand.vmem [shape: bf16[512,256], index: 1, kind: input, shape index: {}]
  %s2 = inlined_call_operand.vmem [shape: f32[1,256], index: 2, kind: input, shape index: {}]
  %s3 = inlined_call_operand.vmem [shape: f32[1,256], index: 3, kind: input, shape index: {}]
  %s4 = inlined_call_operand.vmem [shape: bf16[72,64], index: 4, kind: output, shape index: {}]
  %s5 = sld [smem:[#allocation0]]
  $region26: #{fashion_cnn_forward.4} parent=0
    _
  %s7 = ssub.s32 1, %s5
  %s8 = scalar_select 0, %s7, %s5
  // Predicated region
  $region2: #{fashion_cnn_forward.4} parent=0 // pred_check
    _
  $region3: #{fashion_cnn_forward.4} parent=0 // pred_check_branch
    %10 = sbr.rel (0) target = $region5
  $region4: #{fashion_cnn_forward.4} parent=0 // pred_region
    _
  $region5: #{fashion_cnn_forward.4} parent=0 // pred_fallthru
    _
  // Predicated region
  $region6: #{fashion_cnn_forward.4} parent=0 // pred_check
    _
  $region7: #{fashion_cnn_forward.4} parent=0 // pred_check_branch
    %12 = sbr.rel (0) target = $region9
  $region8: #{fashion_cnn_forward.4} parent=0 // pred_region
    _
  $region9: #{fashion_cnn_forward.4} parent=0 // pred_fallthru
    _
  // Predicated region
  $region10: #{fashion_cnn_forward.4} parent=0 // pred_check
    _
  $region11: #{fashion_cnn_forward.4} parent=0 // pred_check_branch
    %14 = sbr.rel (0) target = $region13
  $region12: #{fashion_cnn_forward.4} parent=0 // pred_region
    _
  $region13: #{fashion_cnn_forward.4} parent=0 // pred_fallthru
    _
  // Predicated region
  $region14: #{fashion_cnn_forward.4} parent=0 // pred_check
    _
  $region15: #{fashion_cnn_forward.4} parent=0 // pred_check_branch
    %16 = sbr.rel (0) target = $region17
  $region16: #{fashion_cnn_forward.4} parent=0 // pred_region
    _
  $region17: #{fashion_cnn_forward.4} parent=0 // pred_fallthru
    _
  %v17 = vld [vmem:[%s1] sm:$0xff]
  %v18 = vld [vmem:[%s1 + $0x8] sm:$0xff]
  %v19 = vld [vmem:[%s1 + $0x10] sm:$0xff]
  %v20 = vld [vmem:[%s1 + $0x18] sm:$0xff]
  %v21 = vld [vmem:[%s1 + $0x20] sm:$0xff]
  %v22 = vld [vmem:[%s1 + $0x28] sm:$0xff]
  %v23 = vld [vmem:[%s1 + $0x30] sm:$0xff]
  %v24 = vld [vmem:[%s1 + $0x38] sm:$0xff]
  %v25 = vld [vmem:[%s1 + $0x40] sm:$0xff]
  %v26 = vld [vmem:[%s1 + $0x48] sm:$0xff]
  %v27 = vld [vmem:[%s1 + $0x50] sm:$0xff]
  %v28 = vld [vmem:[%s1 + $0x58] sm:$0xff]
  %v29 = vld [vmem:[%s1 + $0x60] sm:$0xff]
  %v30 = vld [vmem:[%s1 + $0x68] sm:$0xff]
  %v31 = vld [vmem:[%s1 + $0x70] sm:$0xff]
  %v32 = vld [vmem:[%s1 + $0x78] sm:$0xff]
  %v33 = vld [vmem:[%s1 + $0x80] sm:$0xff]
  %v34 = vld [vmem:[%s1 + $0x88] sm:$0xff]
  %v35 = vld [vmem:[%s1 + $0x90] sm:$0xff]
  %v36 = vld [vmem:[%s1 + $0x98] sm:$0xff]
  %v37 = vld [vmem:[%s1 + $0xa0] sm:$0xff]
  %v38 = vld [vmem:[%s1 + $0xa8] sm:$0xff]
  %v39 = vld [vmem:[%s1 + $0xb0] sm:$0xff]
  %v40 = vld [vmem:[%s1 + $0xb8] sm:$0xff]
  %v41 = vld [vmem:[%s1 + $0xc0] sm:$0xff]
  %v42 = vld [vmem:[%s1 + $0xc8] sm:$0xff]
  %v43 = vld [vmem:[%s1 + $0xd0] sm:$0xff]
  %v44 = vld [vmem:[%s1 + $0xd8] sm:$0xff]
  %v45 = vld [vmem:[%s1 + $0xe0] sm:$0xff]
  %v46 = vld [vmem:[%s1 + $0xe8] sm:$0xff]
  %v47 = vld [vmem:[%s1 + $0xf0] sm:$0xff]
  %v48 = vld [vmem:[%s1 + $0xf8] sm:$0xff]
  %v49 = vld [vmem:[%s1 + $0x100] sm:$0xff]
  %v50 = vld [vmem:[%s1 + $0x108] sm:$0xff]
  %v51 = vld [vmem:[%s1 + $0x110] sm:$0xff]
  %v52 = vld [vmem:[%s1 + $0x118] sm:$0xff]
  %v53 = vld [vmem:[%s1 + $0x120] sm:$0xff]
  %v54 = vld [vmem:[%s1 + $0x128] sm:$0xff]
  %v55 = vld [vmem:[%s1 + $0x130] sm:$0xff]
  %v56 = vld [vmem:[%s1 + $0x138] sm:$0xff]
  %v57 = vld [vmem:[%s1 + $0x140] sm:$0xff]
  %v58 = vld [vmem:[%s1 + $0x148] sm:$0xff]
  %v59 = vld [vmem:[%s1 + $0x150] sm:$0xff]
  %v60 = vld [vmem:[%s1 + $0x158] sm:$0xff]
  %v61 = vld [vmem:[%s1 + $0x160] sm:$0xff]
  %v62 = vld [vmem:[%s1 + $0x168] sm:$0xff]
  %v63 = vld [vmem:[%s1 + $0x170] sm:$0xff]
  %v64 = vld [vmem:[%s1 + $0x178] sm:$0xff]
  %v65 = vld [vmem:[%s1 + $0x180] sm:$0xff]
  %v66 = vld [vmem:[%s1 + $0x188] sm:$0xff]
  %v67 = vld [vmem:[%s1 + $0x190] sm:$0xff]
  %v68 = vld [vmem:[%s1 + $0x198] sm:$0xff]
  %v69 = vld [vmem:[%s1 + $0x1a0] sm:$0xff]
  %v70 = vld [vmem:[%s1 + $0x1a8] sm:$0xff]
  %v71 = vld [vmem:[%s1 + $0x1b0] sm:$0xff]
  %v72 = vld [vmem:[%s1 + $0x1b8] sm:$0xff]
  %v73 = vld [vmem:[%s1 + $0x1c0] sm:$0xff]
  %v74 = vld [vmem:[%s1 + $0x1c8] sm:$0xff]
  %v75 = vld [vmem:[%s1 + $0x1d0] sm:$0xff]
  %v76 = vld [vmem:[%s1 + $0x1d8] sm:$0xff]
  %v77 = vld [vmem:[%s1 + $0x1e0] sm:$0xff]
  %v78 = vld [vmem:[%s1 + $0x1e8] sm:$0xff]
  %v79 = vld [vmem:[%s1 + $0x1f0] sm:$0xff]
  %v80 = vld [vmem:[%s1 + $0x1f8] sm:$0xff]
  %v81 = vld [vmem:[%s2] sm:$0x3]
  %v82 = vld [vmem:[%s3] sm:$0x3]
  %v83 = vld [vmem:[%s0] sm:$0xff]
  %v84 = vld [vmem:[%s0 + $0x8] sm:$0xff]
  %v85 = vld [vmem:[%s0 + $0x10] sm:$0xff]
  %v86 = vld [vmem:[%s0 + $0x18] sm:$0xff]
  %v87 = vld [vmem:[%s0 + $0x20] sm:$0xff]
  %v88 = vld [vmem:[%s0 + $0x28] sm:$0xff]
  %v89 = vld [vmem:[%s0 + $0x30] sm:$0xff]
  %v90 = vld [vmem:[%s0 + $0x38] sm:$0xff]
  %v91 = vld [vmem:[%s0 + $0x40] sm:$0xff]
  %v92 = vld [vmem:[%s0 + $0x48] sm:$0xff]
  %v93 = vld [vmem:[%s0 + $0x50] sm:$0xff]
  %v94 = vld [vmem:[%s0 + $0x58] sm:$0xff]
  %v95 = vld [vmem:[%s0 + $0x60] sm:$0xff]
  %v96 = vld [vmem:[%s0 + $0x68] sm:$0xff]
  %v97 = vld [vmem:[%s0 + $0x70] sm:$0xff]
  %v98 = vld [vmem:[%s0 + $0x78] sm:$0xff]
  %v99 = vld [vmem:[%s0 + $0x80] sm:$0xff]
  %v100 = vld [vmem:[%s0 + $0x88] sm:$0xff]
  %v119 = vunpack.c.l.b16 %v83
  %v120 = vunpack.c.h.b16 %v83
  %v121 = vunpack.c.l.b16 %v84
  %v122 = vunpack.c.h.b16 %v84
  %v123 = vunpack.c.l.b16 %v85
  %v124 = vunpack.c.h.b16 %v85
  %v125 = vunpack.c.l.b16 %v86
  %v126 = vunpack.c.h.b16 %v86
  %v127 = vunpack.c.l.b16 %v87
  %v128 = vunpack.c.h.b16 %v87
  %v129 = vunpack.c.l.b16 %v88
  %v130 = vunpack.c.h.b16 %v88
  %v131 = vunpack.c.l.b16 %v89
  %v132 = vunpack.c.h.b16 %v89
  %v133 = vunpack.c.l.b16 %v90
  %v134 = vunpack.c.h.b16 %v90
  %v135 = vunpack.c.l.b16 %v91
  %v136 = vunpack.c.h.b16 %v91
  %v137 = vunpack.c.l.b16 %v92
  %v138 = vunpack.c.h.b16 %v92
  %v139 = vunpack.c.l.b16 %v93
  %v140 = vunpack.c.h.b16 %v93
  %v141 = vunpack.c.l.b16 %v94
  %v142 = vunpack.c.h.b16 %v94
  %v143 = vunpack.c.l.b16 %v95
  %v144 = vunpack.c.h.b16 %v95
  %v145 = vunpack.c.l.b16 %v96
  %v146 = vunpack.c.h.b16 %v96
  %v147 = vunpack.c.l.b16 %v97
  %v148 = vunpack.c.h.b16 %v97
  %v149 = vunpack.c.l.b16 %v98
  %v150 = vunpack.c.h.b16 %v98
  %v151 = vunpack.c.l.b16 %v99
  %v152 = vunpack.c.h.b16 %v99
  %v153 = vunpack.c.l.b16 %v100
  %v154 = vunpack.c.h.b16 %v100
  %v155 = vpack.c.b16 %v123, %v119
  %v156 = vpack.c.b16 %v124, %v120
  %v157 = vpack.c.b16 %v125, %v121
  %v158 = vpack.c.b16 %v126, %v122
  %v159 = vpack.c.b16 %v131, %v127
  %v160 = vpack.c.b16 %v132, %v128
  %v161 = vpack.c.b16 %v133, %v129
  %v162 = vpack.c.b16 %v134, %v130
  %v163 = vpack.c.b16 %v139, %v135
  %v164 = vpack.c.b16 %v140, %v136
  %v165 = vpack.c.b16 %v141, %v137
  %v166 = vpack.c.b16 %v142, %v138
  %v167 = vpack.c.b16 %v147, %v143
  %v168 = vpack.c.b16 %v148, %v144
  %v169 = vpack.c.b16 %v149, %v145
  %v170 = vpack.c.b16 %v150, %v146
  %v171 = vpack.c.b16 %v151, %v151
  %v172 = vpack.c.b16 %v152, %v152
  %v173 = vpack.c.b16 %v153, %v153
  %v174 = vpack.c.b16 %v154, %v154
  %v259 = vunpack.c.l.b16 %v17
  %v260 = vunpack.c.h.b16 %v17
  %v261 = vunpack.c.l.b16 %v18
  %v262 = vunpack.c.h.b16 %v18
  %v263 = vunpack.c.l.b16 %v19
  %v264 = vunpack.c.h.b16 %v19
  %v265 = vunpack.c.l.b16 %v20
  %v266 = vunpack.c.h.b16 %v20
  %v267 = vunpack.c.l.b16 %v21
  %v268 = vunpack.c.h.b16 %v21
  %v269 = vunpack.c.l.b16 %v22
  %v270 = vunpack.c.h.b16 %v22
  %v271 = vunpack.c.l.b16 %v23
  %v272 = vunpack.c.h.b16 %v23
  %v273 = vunpack.c.l.b16 %v24
  %v274 = vunpack.c.h.b16 %v24
  %v275 = vunpack.c.l.b16 %v25
  %v276 = vunpack.c.h.b16 %v25
  %v277 = vunpack.c.l.b16 %v26
  %v278 = vunpack.c.h.b16 %v26
  %v279 = vunpack.c.l.b16 %v27
  %v280 = vunpack.c.h.b16 %v27
  %v281 = vunpack.c.l.b16 %v28
  %v282 = vunpack.c.h.b16 %v28
  %v283 = vunpack.c.l.b16 %v29
  %v284 = vunpack.c.h.b16 %v29
  %v285 = vunpack.c.l.b16 %v30
  %v286 = vunpack.c.h.b16 %v30
  %v287 = vunpack.c.l.b16 %v31
  %v288 = vunpack.c.h.b16 %v31
  %v289 = vunpack.c.l.b16 %v32
  %v290 = vunpack.c.h.b16 %v32
  %v291 = vunpack.c.l.b16 %v33
  %v292 = vunpack.c.h.b16 %v33
  %v293 = vunpack.c.l.b16 %v34
  %v294 = vunpack.c.h.b16 %v34
  %v295 = vunpack.c.l.b16 %v35
  %v296 = vunpack.c.h.b16 %v35
  %v297 = vunpack.c.l.b16 %v36
  %v298 = vunpack.c.h.b16 %v36
  %v299 = vunpack.c.l.b16 %v37
  %v300 = vunpack.c.h.b16 %v37
  %v301 = vunpack.c.l.b16 %v38
  %v302 = vunpack.c.h.b16 %v38
  %v303 = vunpack.c.l.b16 %v39
  %v304 = vunpack.c.h.b16 %v39
  %v305 = vunpack.c.l.b16 %v40
  %v306 = vunpack.c.h.b16 %v40
  %v307 = vunpack.c.l.b16 %v41
  %v308 = vunpack.c.h.b16 %v41
  %v309 = vunpack.c.l.b16 %v42
  %v310 = vunpack.c.h.b16 %v42
  %v311 = vunpack.c.l.b16 %v43
  %v312 = vunpack.c.h.b16 %v43
  %v313 = vunpack.c.l.b16 %v44
  %v314 = vunpack.c.h.b16 %v44
  %v315 = vunpack.c.l.b16 %v45
  %v316 = vunpack.c.h.b16 %v45
  %v317 = vunpack.c.l.b16 %v46
  %v318 = vunpack.c.h.b16 %v46
  %v319 = vunpack.c.l.b16 %v47
  %v320 = vunpack.c.h.b16 %v47
  %v321 = vunpack.c.l.b16 %v48
  %v322 = vunpack.c.h.b16 %v48
  %v323 = vunpack.c.l.b16 %v49
  %v324 = vunpack.c.h.b16 %v49
  %v325 = vunpack.c.l.b16 %v50
  %v326 = vunpack.c.h.b16 %v50
  %v327 = vunpack.c.l.b16 %v51
  %v328 = vunpack.c.h.b16 %v51
  %v329 = vunpack.c.l.b16 %v52
  %v330 = vunpack.c.h.b16 %v52
  %v331 = vunpack.c.l.b16 %v53
  %v332 = vunpack.c.h.b16 %v53
  %v333 = vunpack.c.l.b16 %v54
  %v334 = vunpack.c.h.b16 %v54
  %v335 = vunpack.c.l.b16 %v55
  %v336 = vunpack.c.h.b16 %v55
  %v337 = vunpack.c.l.b16 %v56
  %v338 = vunpack.c.h.b16 %v56
  %v339 = vunpack.c.l.b16 %v57
  %v340 = vunpack.c.h.b16 %v57
  %v341 = vunpack.c.l.b16 %v58
  %v342 = vunpack.c.h.b16 %v58
  %v343 = vunpack.c.l.b16 %v59
  %v344 = vunpack.c.h.b16 %v59
  %v345 = vunpack.c.l.b16 %v60
  %v346 = vunpack.c.h.b16 %v60
  %v347 = vunpack.c.l.b16 %v61
  %v348 = vunpack.c.h.b16 %v61
  %v349 = vunpack.c.l.b16 %v62
  %v350 = vunpack.c.h.b16 %v62
  %v351 = vunpack.c.l.b16 %v63
  %v352 = vunpack.c.h.b16 %v63
  %v353 = vunpack.c.l.b16 %v64
  %v354 = vunpack.c.h.b16 %v64
  %v355 = vunpack.c.l.b16 %v65
  %v356 = vunpack.c.h.b16 %v65
  %v357 = vunpack.c.l.b16 %v66
  %v358 = vunpack.c.h.b16 %v66
  %v359 = vunpack.c.l.b16 %v67
  %v360 = vunpack.c.h.b16 %v67
  %v361 = vunpack.c.l.b16 %v68
  %v362 = vunpack.c.h.b16 %v68
  %v363 = vunpack.c.l.b16 %v69
  %v364 = vunpack.c.h.b16 %v69
  %v365 = vunpack.c.l.b16 %v70
  %v366 = vunpack.c.h.b16 %v70
  %v367 = vunpack.c.l.b16 %v71
  %v368 = vunpack.c.h.b16 %v71
  %v369 = vunpack.c.l.b16 %v72
  %v370 = vunpack.c.h.b16 %v72
  %v371 = vunpack.c.l.b16 %v73
  %v372 = vunpack.c.h.b16 %v73
  %v373 = vunpack.c.l.b16 %v74
  %v374 = vunpack.c.h.b16 %v74
  %v375 = vunpack.c.l.b16 %v75
  %v376 = vunpack.c.h.b16 %v75
  %v377 = vunpack.c.l.b16 %v76
  %v378 = vunpack.c.h.b16 %v76
  %v379 = vunpack.c.l.b16 %v77
  %v380 = vunpack.c.h.b16 %v77
  %v381 = vunpack.c.l.b16 %v78
  %v382 = vunpack.c.h.b16 %v78
  %v383 = vunpack.c.l.b16 %v79
  %v384 = vunpack.c.h.b16 %v79
  %v385 = vunpack.c.l.b16 %v80
  %v386 = vunpack.c.h.b16 %v80
  %v387 = vpack.c.b16 %v261, %v259
  %v388 = vpack.c.b16 %v262, %v260
  %v389 = vpack.c.b16 %v265, %v263
  %v390 = vpack.c.b16 %v266, %v264
  %v391 = vpack.c.b16 %v269, %v267
  %v392 = vpack.c.b16 %v270, %v268
  %v393 = vpack.c.b16 %v273, %v271
  %v394 = vpack.c.b16 %v274, %v272
  %v395 = vpack.c.b16 %v277, %v275
  %v396 = vpack.c.b16 %v278, %v276
  %v397 = vpack.c.b16 %v281, %v279
  %v398 = vpack.c.b16 %v282, %v280
  %v399 = vpack.c.b16 %v285, %v283
  %v400 = vpack.c.b16 %v286, %v284
  %v401 = vpack.c.b16 %v289, %v287
  %v402 = vpack.c.b16 %v290, %v288
  %v403 = vpack.c.b16 %v293, %v291
  %v404 = vpack.c.b16 %v294, %v292
  %v405 = vpack.c.b16 %v297, %v295
  %v406 = vpack.c.b16 %v298, %v296
  %v407 = vpack.c.b16 %v301, %v299
  %v408 = vpack.c.b16 %v302, %v300
  %v409 = vpack.c.b16 %v305, %v303
  %v410 = vpack.c.b16 %v306, %v304
  %v411 = vpack.c.b16 %v309, %v307
  %v412 = vpack.c.b16 %v310, %v308
  %v413 = vpack.c.b16 %v313, %v311
  %v414 = vpack.c.b16 %v314, %v312
  %v415 = vpack.c.b16 %v317, %v315
  %v416 = vpack.c.b16 %v318, %v316
  %v417 = vpack.c.b16 %v321, %v319
  %v418 = vpack.c.b16 %v322, %v320
  %v419 = vpack.c.b16 %v325, %v323
  %v420 = vpack.c.b16 %v326, %v324
  %v421 = vpack.c.b16 %v329, %v327
  %v422 = vpack.c.b16 %v330, %v328
  %v423 = vpack.c.b16 %v333, %v331
  %v424 = vpack.c.b16 %v334, %v332
  %v425 = vpack.c.b16 %v337, %v335
  %v426 = vpack.c.b16 %v338, %v336
  %v427 = vpack.c.b16 %v341, %v339
  %v428 = vpack.c.b16 %v342, %v340
  %v429 = vpack.c.b16 %v345, %v343
  %v430 = vpack.c.b16 %v346, %v344
  %v431 = vpack.c.b16 %v349, %v347
  %v432 = vpack.c.b16 %v350, %v348
  %v433 = vpack.c.b16 %v353, %v351
  %v434 = vpack.c.b16 %v354, %v352
  %v435 = vpack.c.b16 %v357, %v355
  %v436 = vpack.c.b16 %v358, %v356
  %v437 = vpack.c.b16 %v361, %v359
  %v438 = vpack.c.b16 %v362, %v360
  %v439 = vpack.c.b16 %v365, %v363
  %v440 = vpack.c.b16 %v366, %v364
  %v441 = vpack.c.b16 %v369, %v367
  %v442 = vpack.c.b16 %v370, %v368
  %v443 = vpack.c.b16 %v373, %v371
  %v444 = vpack.c.b16 %v374, %v372
  %v445 = vpack.c.b16 %v377, %v375
  %v446 = vpack.c.b16 %v378, %v376
  %v447 = vpack.c.b16 %v381, %v379
  %v448 = vpack.c.b16 %v382, %v380
  %v449 = vpack.c.b16 %v385, %v383
  %v450 = vpack.c.b16 %v386, %v384
  %515 = vmatpush.bf16.msra.mxu0 %v401
  %516 = vmatpush.bf16.msra.mxu0 %v399
  %517 = vmatpush.bf16.msra.mxu0 %v397
  %518 = vmatpush.bf16.msra.mxu0 %v395
  %519 = vmatpush.bf16.msra.mxu0 %v393
  %520 = vmatpush.bf16.msra.mxu0 %v391
  %521 = vmatpush.bf16.msra.mxu0 %v389
  %522 = vmatpush.bf16.msra.mxu0 %v387
  %523 = vmatmul.bf16.gmra.mxu0 %v155
  %v524 = vpop.f32.mrf.mxu0
  %v525 = vadd.f32 0.0, %v524
  %v526 = vpop.f32.mrf.mxu0
  %v527 = vadd.f32 0.0, %v526
  %528 = vmatmul.bf16.gmra.mxu0 %v159
  %v529 = vpop.f32.mrf.mxu0
  %v530 = vadd.f32 0.0, %v529
  %v531 = vpop.f32.mrf.mxu0
  %v532 = vadd.f32 0.0, %v531
  %533 = vmatmul.bf16.gmra.mxu0 %v163
  %v534 = vpop.f32.mrf.mxu0
  %v535 = vadd.f32 0.0, %v534
  %v536 = vpop.f32.mrf.mxu0
  %v537 = vadd.f32 0.0, %v536
  %538 = vmatmul.bf16.gmra.mxu0 %v167
  %v539 = vpop.f32.mrf.mxu0
  %v540 = vadd.f32 0.0, %v539
  %v541 = vpop.f32.mrf.mxu0
  %v542 = vadd.f32 0.0, %v541
  %543 = vmatmul.bf16.gmra.mxu0 %v171
  %v544 = vpop.f32.mrf.mxu0
  %v545 = vadd.f32 0.0, %v544
  %v546 = vpop.f32.mrf.mxu0
  %547 = vdwg.mxu0
  %548 = vmatpush.bf16.msra.mxu0 %v417
  %549 = vmatpush.bf16.msra.mxu0 %v415
  %550 = vmatpush.bf16.msra.mxu0 %v413
  %551 = vmatpush.bf16.msra.mxu0 %v411
  %552 = vmatpush.bf16.msra.mxu0 %v409
  %553 = vmatpush.bf16.msra.mxu0 %v407
  %554 = vmatpush.bf16.msra.mxu0 %v405
  %555 = vmatpush.bf16.msra.mxu0 %v403
  %556 = vmatmul.bf16.gmra.mxu0 %v156
  %v557 = vpop.f32.mrf.mxu0
  %v558 = vadd.f32 %v525, %v557
  %v559 = vpop.f32.mrf.mxu0
  %v560 = vadd.f32 %v527, %v559
  %561 = vmatmul.bf16.gmra.mxu0 %v160
  %v562 = vpop.f32.mrf.mxu0
  %v563 = vadd.f32 %v530, %v562
  %v564 = vpop.f32.mrf.mxu0
  %v565 = vadd.f32 %v532, %v564
  %566 = vmatmul.bf16.gmra.mxu0 %v164
  %v567 = vpop.f32.mrf.mxu0
  %v568 = vadd.f32 %v535, %v567
  %v569 = vpop.f32.mrf.mxu0
  %v570 = vadd.f32 %v537, %v569
  %571 = vmatmul.bf16.gmra.mxu0 %v168
  %v572 = vpop.f32.mrf.mxu0
  %v573 = vadd.f32 %v540, %v572
  %v574 = vpop.f32.mrf.mxu0
  %v575 = vadd.f32 %v542, %v574
  %576 = vmatmul.bf16.gmra.mxu0 %v172
  %v577 = vpop.f32.mrf.mxu0
  %v578 = vadd.f32 %v545, %v577
  %v579 = vpop.f32.mrf.mxu0
  %580 = vdwg.mxu0
  %581 = vmatpush.bf16.msra.mxu0 %v433
  %582 = vmatpush.bf16.msra.mxu0 %v431
  %583 = vmatpush.bf16.msra.mxu0 %v429
  %584 = vmatpush.bf16.msra.mxu0 %v427
  %585 = vmatpush.bf16.msra.mxu0 %v425
  %586 = vmatpush.bf16.msra.mxu0 %v423
  %587 = vmatpush.bf16.msra.mxu0 %v421
  %588 = vmatpush.bf16.msra.mxu0 %v419
  %589 = vmatmul.bf16.gmra.mxu0 %v157
  %v590 = vpop.f32.mrf.mxu0
  %v591 = vadd.f32 %v558, %v590
  %v592 = vpop.f32.mrf.mxu0
  %v593 = vadd.f32 %v560, %v592
  %594 = vmatmul.bf16.gmra.mxu0 %v161
  %v595 = vpop.f32.mrf.mxu0
  %v596 = vadd.f32 %v563, %v595
  %v597 = vpop.f32.mrf.mxu0
  %v598 = vadd.f32 %v565, %v597
  %599 = vmatmul.bf16.gmra.mxu0 %v165
  %v600 = vpop.f32.mrf.mxu0
  %v601 = vadd.f32 %v568, %v600
  %v602 = vpop.f32.mrf.mxu0
  %v603 = vadd.f32 %v570, %v602
  %604 = vmatmul.bf16.gmra.mxu0 %v169
  %v605 = vpop.f32.mrf.mxu0
  %v606 = vadd.f32 %v573, %v605
  %v607 = vpop.f32.mrf.mxu0
  %v608 = vadd.f32 %v575, %v607
  %609 = vmatmul.bf16.gmra.mxu0 %v173
  %v610 = vpop.f32.mrf.mxu0
  %v611 = vadd.f32 %v578, %v610
  %v612 = vpop.f32.mrf.mxu0
  %613 = vdwg.mxu0
  %614 = vmatpush.bf16.msra.mxu0 %v449
  %615 = vmatpush.bf16.msra.mxu0 %v447
  %616 = vmatpush.bf16.msra.mxu0 %v445
  %617 = vmatpush.bf16.msra.mxu0 %v443
  %618 = vmatpush.bf16.msra.mxu0 %v441
  %619 = vmatpush.bf16.msra.mxu0 %v439
  %620 = vmatpush.bf16.msra.mxu0 %v437
  %621 = vmatpush.bf16.msra.mxu0 %v435
  %622 = vmatmul.bf16.gmra.mxu0 %v158
  %v623 = vpop.f32.mrf.mxu0
  %v624 = vadd.f32 %v591, %v623
  %v625 = vpop.f32.mrf.mxu0
  %v626 = vadd.f32 %v593, %v625
  %627 = vmatmul.bf16.gmra.mxu0 %v162
  %v628 = vpop.f32.mrf.mxu0
  %v629 = vadd.f32 %v596, %v628
  %v630 = vpop.f32.mrf.mxu0
  %v631 = vadd.f32 %v598, %v630
  %632 = vmatmul.bf16.gmra.mxu0 %v166
  %v633 = vpop.f32.mrf.mxu0
  %v634 = vadd.f32 %v601, %v633
  %v635 = vpop.f32.mrf.mxu0
  %v636 = vadd.f32 %v603, %v635
  %637 = vmatmul.bf16.gmra.mxu0 %v170
  %v638 = vpop.f32.mrf.mxu0
  %v639 = vadd.f32 %v606, %v638
  %v640 = vpop.f32.mrf.mxu0
  %v641 = vadd.f32 %v608, %v640
  %642 = vmatmul.bf16.gmra.mxu0 %v174
  %v643 = vpop.f32.mrf.mxu0
  %v644 = vadd.f32 %v611, %v643
  %v645 = vpop.f32.mrf.mxu0
  %646 = vdwg.mxu0
  %647 = vmatpush.bf16.msra.mxu0 %v402
  %648 = vmatpush.bf16.msra.mxu0 %v400
  %649 = vmatpush.bf16.msra.mxu0 %v398
  %650 = vmatpush.bf16.msra.mxu0 %v396
  %651 = vmatpush.bf16.msra.mxu0 %v394
  %652 = vmatpush.bf16.msra.mxu0 %v392
  %653 = vmatpush.bf16.msra.mxu0 %v390
  %654 = vmatpush.bf16.msra.mxu0 %v388
  %655 = vmatmul.bf16.gmra.mxu0 %v155
  %v656 = vpop.f32.mrf.mxu0
  %v657 = vadd.f32 0.0, %v656
  %v658 = vpop.f32.mrf.mxu0
  %v659 = vadd.f32 0.0, %v658
  %660 = vmatmul.bf16.gmra.mxu0 %v159
  %v661 = vpop.f32.mrf.mxu0
  %v662 = vadd.f32 0.0, %v661
  %v663 = vpop.f32.mrf.mxu0
  %v664 = vadd.f32 0.0, %v663
  %665 = vmatmul.bf16.gmra.mxu0 %v163
  %v666 = vpop.f32.mrf.mxu0
  %v667 = vadd.f32 0.0, %v666
  %v668 = vpop.f32.mrf.mxu0
  %v669 = vadd.f32 0.0, %v668
  %670 = vmatmul.bf16.gmra.mxu0 %v167
  %v671 = vpop.f32.mrf.mxu0
  %v672 = vadd.f32 0.0, %v671
  %v673 = vpop.f32.mrf.mxu0
  %v674 = vadd.f32 0.0, %v673
  %675 = vmatmul.bf16.gmra.mxu0 %v171
  %v676 = vpop.f32.mrf.mxu0
  %v677 = vadd.f32 0.0, %v676
  %v678 = vpop.f32.mrf.mxu0
  %679 = vdwg.mxu0
  %680 = vmatpush.bf16.msra.mxu0 %v418
  %681 = vmatpush.bf16.msra.mxu0 %v416
  %682 = vmatpush.bf16.msra.mxu0 %v414
  %683 = vmatpush.bf16.msra.mxu0 %v412
  %684 = vmatpush.bf16.msra.mxu0 %v410
  %685 = vmatpush.bf16.msra.mxu0 %v408
  %686 = vmatpush.bf16.msra.mxu0 %v406
  %687 = vmatpush.bf16.msra.mxu0 %v404
  %688 = vmatmul.bf16.gmra.mxu0 %v156
  %v689 = vpop.f32.mrf.mxu0
  %v690 = vadd.f32 %v657, %v689
  %v691 = vpop.f32.mrf.mxu0
  %v692 = vadd.f32 %v659, %v691
  %693 = vmatmul.bf16.gmra.mxu0 %v160
  %v694 = vpop.f32.mrf.mxu0
  %v695 = vadd.f32 %v662, %v694
  %v696 = vpop.f32.mrf.mxu0
  %v697 = vadd.f32 %v664, %v696
  %698 = vmatmul.bf16.gmra.mxu0 %v164
  %v699 = vpop.f32.mrf.mxu0
  %v700 = vadd.f32 %v667, %v699
  %v701 = vpop.f32.mrf.mxu0
  %v702 = vadd.f32 %v669, %v701
  %703 = vmatmul.bf16.gmra.mxu0 %v168
  %v704 = vpop.f32.mrf.mxu0
  %v705 = vadd.f32 %v672, %v704
  %v706 = vpop.f32.mrf.mxu0
  %v707 = vadd.f32 %v674, %v706
  %708 = vmatmul.bf16.gmra.mxu0 %v172
  %v709 = vpop.f32.mrf.mxu0
  %v710 = vadd.f32 %v677, %v709
  %v711 = vpop.f32.mrf.mxu0
  %712 = vdwg.mxu0
  %713 = vmatpush.bf16.msra.mxu0 %v434
  %714 = vmatpush.bf16.msra.mxu0 %v432
  %715 = vmatpush.bf16.msra.mxu0 %v430
  %716 = vmatpush.bf16.msra.mxu0 %v428
  %717 = vmatpush.bf16.msra.mxu0 %v426
  %718 = vmatpush.bf16.msra.mxu0 %v424
  %719 = vmatpush.bf16.msra.mxu0 %v422
  %720 = vmatpush.bf16.msra.mxu0 %v420
  %721 = vmatmul.bf16.gmra.mxu0 %v157
  %v722 = vpop.f32.mrf.mxu0
  %v723 = vadd.f32 %v690, %v722
  %v724 = vpop.f32.mrf.mxu0
  %v725 = vadd.f32 %v692, %v724
  %726 = vmatmul.bf16.gmra.mxu0 %v161
  %v727 = vpop.f32.mrf.mxu0
  %v728 = vadd.f32 %v695, %v727
  %v729 = vpop.f32.mrf.mxu0
  %v730 = vadd.f32 %v697, %v729
  %731 = vmatmul.bf16.gmra.mxu0 %v165
  %v732 = vpop.f32.mrf.mxu0
  %v733 = vadd.f32 %v700, %v732
  %v734 = vpop.f32.mrf.mxu0
  %v735 = vadd.f32 %v702, %v734
  %736 = vmatmul.bf16.gmra.mxu0 %v169
  %v737 = vpop.f32.mrf.mxu0
  %v738 = vadd.f32 %v705, %v737
  %v739 = vpop.f32.mrf.mxu0
  %v740 = vadd.f32 %v707, %v739
  %741 = vmatmul.bf16.gmra.mxu0 %v173
  %v742 = vpop.f32.mrf.mxu0
  %v743 = vadd.f32 %v710, %v742
  %v744 = vpop.f32.mrf.mxu0
  %745 = vdwg.mxu0
  %746 = vmatpush.bf16.msra.mxu0 %v450
  %747 = vmatpush.bf16.msra.mxu0 %v448
  %748 = vmatpush.bf16.msra.mxu0 %v446
  %749 = vmatpush.bf16.msra.mxu0 %v444
  %750 = vmatpush.bf16.msra.mxu0 %v442
  %751 = vmatpush.bf16.msra.mxu0 %v440
  %752 = vmatpush.bf16.msra.mxu0 %v438
  %753 = vmatpush.bf16.msra.mxu0 %v436
  %754 = vmatmul.bf16.gmra.mxu0 %v158
  %v755 = vpop.f32.mrf.mxu0
  %v756 = vadd.f32 %v723, %v755
  %v757 = vpop.f32.mrf.mxu0
  %v758 = vadd.f32 %v725, %v757
  %759 = vmatmul.bf16.gmra.mxu0 %v162
  %v760 = vpop.f32.mrf.mxu0
  %v761 = vadd.f32 %v728, %v760
  %v762 = vpop.f32.mrf.mxu0
  %v763 = vadd.f32 %v730, %v762
  %764 = vmatmul.bf16.gmra.mxu0 %v166
  %v765 = vpop.f32.mrf.mxu0
  %v766 = vadd.f32 %v733, %v765
  %v767 = vpop.f32.mrf.mxu0
  %v768 = vadd.f32 %v735, %v767
  %769 = vmatmul.bf16.gmra.mxu0 %v170
  %v770 = vpop.f32.mrf.mxu0
  %v771 = vadd.f32 %v738, %v770
  %v772 = vpop.f32.mrf.mxu0
  %v773 = vadd.f32 %v740, %v772
  %774 = vmatmul.bf16.gmra.mxu0 %v174
  %v775 = vpop.f32.mrf.mxu0
  %v776 = vadd.f32 %v743, %v775
  %v777 = vpop.f32.mrf.mxu0
  %778 = vdwg.mxu0
  %v780 = vperm.slane %v81, 0
  %v781 = vperm.slane %v81, 1
  %v784 = vmul.f32 %v624, %v780
  %v785 = vmul.f32 %v756, %v781
  %v786 = vmul.f32 %v626, %v780
  %v787 = vmul.f32 %v758, %v781
  %v788 = vmul.f32 %v629, %v780
  %v789 = vmul.f32 %v761, %v781
  %v790 = vmul.f32 %v631, %v780
  %v791 = vmul.f32 %v763, %v781
  %v792 = vmul.f32 %v634, %v780
  %v793 = vmul.f32 %v766, %v781
  %v794 = vmul.f32 %v636, %v780
  %v795 = vmul.f32 %v768, %v781
  %v796 = vmul.f32 %v639, %v780
  %v797 = vmul.f32 %v771, %v781
  %v798 = vmul.f32 %v641, %v780
  %v799 = vmul.f32 %v773, %v781
  %v800 = vmul.f32 %v644, %v780
  %v801 = vmul.f32 %v776, %v781
  %v803 = vperm.slane %v82, 0
  %v804 = vperm.slane %v82, 1
  %v807 = vadd.f32 %v784, %v803
  %v808 = vadd.f32 %v785, %v804
  %v809 = vadd.f32 %v786, %v803
  %v810 = vadd.f32 %v787, %v804
  %v811 = vadd.f32 %v788, %v803
  %v812 = vadd.f32 %v789, %v804
  %v813 = vadd.f32 %v790, %v803
  %v814 = vadd.f32 %v791, %v804
  %v815 = vadd.f32 %v792, %v803
  %v816 = vadd.f32 %v793, %v804
  %v817 = vadd.f32 %v794, %v803
  %v818 = vadd.f32 %v795, %v804
  %v819 = vadd.f32 %v796, %v803
  %v820 = vadd.f32 %v797, %v804
  %v821 = vadd.f32 %v798, %v803
  %v822 = vadd.f32 %v799, %v804
  %v823 = vadd.f32 %v800, %v803
  %v824 = vadd.f32 %v801, %v804
  %v825 = vmax.f32 %v807, 0.0
  %v826 = vmax.f32 %v808, 0.0
  %v827 = vmax.f32 %v809, 0.0
  %v828 = vmax.f32 %v810, 0.0
  %v829 = vmax.f32 %v811, 0.0
  %v830 = vmax.f32 %v812, 0.0
  %v831 = vmax.f32 %v813, 0.0
  %v832 = vmax.f32 %v814, 0.0
  %v833 = vmax.f32 %v815, 0.0
  %v834 = vmax.f32 %v816, 0.0
  %v835 = vmax.f32 %v817, 0.0
  %v836 = vmax.f32 %v818, 0.0
  %v837 = vmax.f32 %v819, 0.0
  %v838 = vmax.f32 %v820, 0.0
  %v839 = vmax.f32 %v821, 0.0
  %v840 = vmax.f32 %v822, 0.0
  %v841 = vmax.f32 %v823, 0.0
  %v842 = vmax.f32 %v824, 0.0
  %v843 = vmax.f32 %v825, %v826
  %v844 = vmax.f32 %v827, %v828
  %v845 = vmax.f32 %v829, %v830
  %v846 = vmax.f32 %v831, %v832
  %v847 = vmax.f32 %v833, %v834
  %v848 = vmax.f32 %v835, %v836
  %v849 = vmax.f32 %v837, %v838
  %v850 = vmax.f32 %v839, %v840
  %v851 = vmax.f32 %v841, %v842
  %852 = vrot.lane.b32.xlu0 %v843, 64
  %v853 = vpop.permute.xlu0 %852
  %854 = vrot.lane.b32.xlu0 %v844, 64
  %v855 = vpop.permute.xlu0 %854
  %856 = vrot.lane.b32.xlu0 %v845, 64
  %v857 = vpop.permute.xlu0 %856
  %858 = vrot.lane.b32.xlu0 %v846, 64
  %v859 = vpop.permute.xlu0 %858
  %860 = vrot.lane.b32.xlu0 %v847, 64
  %v861 = vpop.permute.xlu0 %860
  %862 = vrot.lane.b32.xlu0 %v848, 64
  %v863 = vpop.permute.xlu0 %862
  %864 = vrot.lane.b32.xlu0 %v849, 64
  %v865 = vpop.permute.xlu0 %864
  %866 = vrot.lane.b32.xlu0 %v850, 64
  %v867 = vpop.permute.xlu0 %866
  %868 = vrot.lane.b32.xlu0 %v851, 64
  %v869 = vpop.permute.xlu0 %868
  %v870 = vlaneseq
  %v871 = vand.u32 %v870, 127
  %v872 = vmax.f32 %v843, %v853
  %v873 = vmax.f32 %v844, %v855
  %v874 = vmax.f32 %v845, %v857
  %v875 = vmax.f32 %v846, %v859
  %v876 = vmax.f32 %v847, %v861
  %v877 = vmax.f32 %v848, %v863
  %v878 = vmax.f32 %v849, %v865
  %v879 = vmax.f32 %v850, %v867
  %v880 = vmax.f32 %v851, %v869
  %v881 = vpack.c.bf16 %v872, %v872
  %v882 = vpack.c.bf16 %v873, %v873
  %v883 = vpack.c.bf16 %v874, %v874
  %v884 = vpack.c.bf16 %v875, %v875
  %v885 = vpack.c.bf16 %v876, %v876
  %v886 = vpack.c.bf16 %v877, %v877
  %v887 = vpack.c.bf16 %v878, %v878
  %v888 = vpack.c.bf16 %v879, %v879
  %v889 = vpack.c.bf16 %v880, %v880
  %vm890 = vcmask 519168
  %891 = vst.msk [vmem:[%s4] sm:$0xf] %vm890, %v881
  %892 = vst.msk [vmem:[%s4 + $0x4] sm:$0xf] %vm890, %v882
  %893 = vst.msk [vmem:[%s4 + $0x8] sm:$0xf] %vm890, %v883
  %894 = vst.msk [vmem:[%s4 + $0xc] sm:$0xf] %vm890, %v884
  %895 = vst.msk [vmem:[%s4 + $0x10] sm:$0xf] %vm890, %v885
  %896 = vst.msk [vmem:[%s4 + $0x14] sm:$0xf] %vm890, %v886
  %897 = vst.msk [vmem:[%s4 + $0x18] sm:$0xf] %vm890, %v887
  %898 = vst.msk [vmem:[%s4 + $0x1c] sm:$0xf] %vm890, %v888
  %899 = vst.msk [vmem:[%s4 + $0x20] sm:$0xf] %vm890, %v889
  // Predicated region
  $region18: #{fashion_cnn_forward.4} parent=0 // pred_check
    _
  $region19: #{fashion_cnn_forward.4} parent=0 // pred_check_branch
    %901 = sbr.rel (0) target = $region21
  $region20: #{fashion_cnn_forward.4} parent=0 // pred_region
    _
  $region21: #{fashion_cnn_forward.4} parent=0 // pred_fallthru
    _
  // Predicated region
  $region22: #{fashion_cnn_forward.4} parent=0 // pred_check
    _
  $region23: #{fashion_cnn_forward.4} parent=0 // pred_check_branch
    %903 = sbr.rel (0) target = $region25
  $region24: #{fashion_cnn_forward.4} parent=0 // pred_region
    _
  $region25: #{fashion_cnn_forward.4} parent=0 // pred_fallthru
    _

// kernel: fashion_cnn_forward.5
$region0: #{fashion_cnn_forward.5}
  #allocation0 [shape = 'u32[]', space=smem, size = 0x4, offset = 0x4, fixed_abs, tag = 'smem constant byte address 0x4 - core index']
  #allocation1 [shape = 'u32[72,128]{1,0:T(1,128)}', space=vmem, size = 0x9000, scoped, tag = 'internal scratch']
  %s0 = inlined_call_operand.vmem [shape: bf16[8,2304], index: 0, kind: input, shape index: {}]
  %s1 = inlined_call_operand.vmem [shape: bf16[2304,640], index: 1, kind: input, shape index: {}]
  %s2 = inlined_call_operand.vmem [shape: f32[1,640], index: 2, kind: input, shape index: {}]
  %s3 = inlined_call_operand.vmem [shape: bf16[640,128], index: 3, kind: input, shape index: {}]
  %s4 = inlined_call_operand.vmem [shape: f32[1,128], index: 4, kind: input, shape index: {}]
  %s5 = inlined_call_operand.vmem [shape: bf16[128,128], index: 5, kind: input, shape index: {}]
  %s6 = inlined_call_operand.vmem [shape: f32[1,128], index: 6, kind: input, shape index: {}]
  %s7 = inlined_call_operand.vmem [shape: f32[8,128], index: 7, kind: output, shape index: {}]
  %s8 = sld [smem:[#allocation0]]
  $region38: #{fashion_cnn_forward.5} parent=0
    _
  %s10 = ssub.s32 1, %s8
  %s11 = scalar_select 0, %s10, %s8
  // Predicated region
  $region2: #{fashion_cnn_forward.5} parent=0 // pred_check
    _
  $region3: #{fashion_cnn_forward.5} parent=0 // pred_check_branch
    %13 = sbr.rel (0) target = $region5
  $region4: #{fashion_cnn_forward.5} parent=0 // pred_region
    _
  $region5: #{fashion_cnn_forward.5} parent=0 // pred_fallthru
    _
  // Predicated region
  $region6: #{fashion_cnn_forward.5} parent=0 // pred_check
    _
  $region7: #{fashion_cnn_forward.5} parent=0 // pred_check_branch
    %15 = sbr.rel (0) target = $region9
  $region8: #{fashion_cnn_forward.5} parent=0 // pred_region
    _
  $region9: #{fashion_cnn_forward.5} parent=0 // pred_fallthru
    _
  // Predicated region
  $region10: #{fashion_cnn_forward.5} parent=0 // pred_check
    _
  $region11: #{fashion_cnn_forward.5} parent=0 // pred_check_branch
    %17 = sbr.rel (0) target = $region13
  $region12: #{fashion_cnn_forward.5} parent=0 // pred_region
    _
  $region13: #{fashion_cnn_forward.5} parent=0 // pred_fallthru
    _
  // Predicated region
  $region14: #{fashion_cnn_forward.5} parent=0 // pred_check
    _
  $region15: #{fashion_cnn_forward.5} parent=0 // pred_check_branch
    %19 = sbr.rel (0) target = $region17
  $region16: #{fashion_cnn_forward.5} parent=0 // pred_region
    _
  $region17: #{fashion_cnn_forward.5} parent=0 // pred_fallthru
    _
  // Predicated region
  $region18: #{fashion_cnn_forward.5} parent=0 // pred_check
    _
  $region19: #{fashion_cnn_forward.5} parent=0 // pred_check_branch
    %21 = sbr.rel (0) target = $region21
  $region20: #{fashion_cnn_forward.5} parent=0 // pred_region
    _
  $region21: #{fashion_cnn_forward.5} parent=0 // pred_fallthru
    _
  // Predicated region
  $region22: #{fashion_cnn_forward.5} parent=0 // pred_check
    _
  $region23: #{fashion_cnn_forward.5} parent=0 // pred_check_branch
    %23 = sbr.rel (0) target = $region25
  $region24: #{fashion_cnn_forward.5} parent=0 // pred_region
    _
  $region25: #{fashion_cnn_forward.5} parent=0 // pred_fallthru
    _
  // Predicated region
  $region26: #{fashion_cnn_forward.5} parent=0 // pred_check
    _
  $region27: #{fashion_cnn_forward.5} parent=0 // pred_check_branch
    %25 = sbr.rel (0) target = $region29
  $region28: #{fashion_cnn_forward.5} parent=0 // pred_region
    _
  $region29: #{fashion_cnn_forward.5} parent=0 // pred_fallthru
    _
  %v26 = vld [vmem:[%s0] sm:$0xff]
  %v27 = vld [vmem:[%s0 + $0x8] sm:$0xff]
  %v28 = vld [vmem:[%s0 + $0x10] sm:$0xff]
  %v29 = vld [vmem:[%s0 + $0x18] sm:$0xff]
  %v30 = vld [vmem:[%s0 + $0x20] sm:$0xff]
  %v31 = vld [vmem:[%s0 + $0x28] sm:$0xff]
  %v32 = vld [vmem:[%s0 + $0x30] sm:$0xff]
  %v33 = vld [vmem:[%s0 + $0x38] sm:$0xff]
  %v34 = vld [vmem:[%s0 + $0x40] sm:$0xff]
  %v35 = vld [vmem:[%s1] sm:$0xff]
  %v36 = vld [vmem:[%s1 + $0x8] sm:$0xff]
  %v37 = vld [vmem:[%s1 + $0x10] sm:$0xf]
  %v38 = vld [vmem:[%s1 + $0x14] sm:$0xff]
  %v39 = vld [vmem:[%s1 + $0x1c] sm:$0xff]
  %v40 = vld [vmem:[%s1 + $0x24] sm:$0xf]
  %v41 = vld [vmem:[%s1 + $0x28] sm:$0xff]
  %v42 = vld [vmem:[%s1 + $0x30] sm:$0xff]
  %v43 = vld [vmem:[%s1 + $0x38] sm:$0xf]
  %v44 = vld [vmem:[%s1 + $0x3c] sm:$0xff]
  %v45 = vld [vmem:[%s1 + $0x44] sm:$0xff]
  %v46 = vld [vmem:[%s1 + $0x4c] sm:$0xf]
  %v47 = vld [vmem:[%s1 + $0x50] sm:$0xff]
  %v48 = vld [vmem:[%s1 + $0x58] sm:$0xff]
  %v49 = vld [vmem:[%s1 + $0x60] sm:$0xf]
  %v50 = vld [vmem:[%s1 + $0x64] sm:$0xff]
  %v51 = vld [vmem:[%s1 + $0x6c] sm:$0xff]
  %v52 = vld [vmem:[%s1 + $0x74] sm:$0xf]
  %v53 = vld [vmem:[%s1 + $0x78] sm:$0xff]
  %v54 = vld [vmem:[%s1 + $0x80] sm:$0xff]
  %v55 = vld [vmem:[%s1 + $0x88] sm:$0xf]
  %v56 = vld [vmem:[%s1 + $0x8c] sm:$0xff]
  %v57 = vld [vmem:[%s1 + $0x94] sm:$0xff]
  %v58 = vld [vmem:[%s1 + $0x9c] sm:$0xf]
  %v59 = vld [vmem:[%s1 + $0xa0] sm:$0xff]
  %v60 = vld [vmem:[%s1 + $0xa8] sm:$0xff]
  %v61 = vld [vmem:[%s1 + $0xb0] sm:$0xf]
  %v62 = vld [vmem:[%s1 + $0xb4] sm:$0xff]
  %v63 = vld [vmem:[%s1 + $0xbc] sm:$0xff]
  %v64 = vld [vmem:[%s1 + $0xc4] sm:$0xf]
  %v65 = vld [vmem:[%s1 + $0xc8] sm:$0xff]
  %v66 = vld [vmem:[%s1 + $0xd0] sm:$0xff]
  %v67 = vld [vmem:[%s1 + $0xd8] sm:$0xf]
  %v68 = vld [vmem:[%s1 + $0xdc] sm:$0xff]
  %v69 = vld [vmem:[%s1 + $0xe4] sm:$0xff]
  %v70 = vld [vmem:[%s1 + $0xec] sm:$0xf]
  %v71 = vld [vmem:[%s1 + $0xf0] sm:$0xff]
  %v72 = vld [vmem:[%s1 + $0xf8] sm:$0xff]
  %v73 = vld [vmem:[%s1 + $0x100] sm:$0xf]
  %v74 = vld [vmem:[%s1 + $0x104] sm:$0xff]
  %v75 = vld [vmem:[%s1 + $0x10c] sm:$0xff]
  %v76 = vld [vmem:[%s1 + $0x114] sm:$0xf]
  %v77 = vld [vmem:[%s1 + $0x118] sm:$0xff]
  %v78 = vld [vmem:[%s1 + $0x120] sm:$0xff]
  %v79 = vld [vmem:[%s1 + $0x128] sm:$0xf]
  %v80 = vld [vmem:[%s1 + $0x12c] sm:$0xff]
  %v81 = vld [vmem:[%s1 + $0x134] sm:$0xff]
  %v82 = vld [vmem:[%s1 + $0x13c] sm:$0xf]
  %v83 = vld [vmem:[%s1 + $0x140] sm:$0xff]
  %v84 = vld [vmem:[%s1 + $0x148] sm:$0xff]
  %v85 = vld [vmem:[%s1 + $0x150] sm:$0xf]
  %v86 = vld [vmem:[%s1 + $0x154] sm:$0xff]
  %v87 = vld [vmem:[%s1 + $0x15c] sm:$0xff]
  %v88 = vld [vmem:[%s1 + $0x164] sm:$0xf]
  %v89 = vld [vmem:[%s1 + $0x168] sm:$0xff]
  %v90 = vld [vmem:[%s1 + $0x170] sm:$0xff]
  %v91 = vld [vmem:[%s1 + $0x178] sm:$0xf]
  %v92 = vld [vmem:[%s1 + $0x17c] sm:$0xff]
  %v93 = vld [vmem:[%s1 + $0x184] sm:$0xff]
  %v94 = vld [vmem:[%s1 + $0x18c] sm:$0xf]
  %v95 = vld [vmem:[%s1 + $0x190] sm:$0xff]
  %v96 = vld [vmem:[%s1 + $0x198] sm:$0xff]
  %v97 = vld [vmem:[%s1 + $0x1a0] sm:$0xf]
  %v98 = vld [vmem:[%s1 + $0x1a4] sm:$0xff]
  %v99 = vld [vmem:[%s1 + $0x1ac] sm:$0xff]
  %v100 = vld [vmem:[%s1 + $0x1b4] sm:$0xf]
  %v101 = vld [vmem:[%s1 + $0x1b8] sm:$0xff]
  %v102 = vld [vmem:[%s1 + $0x1c0] sm:$0xff]
  %v103 = vld [vmem:[%s1 + $0x1c8] sm:$0xf]
  %v104 = vld [vmem:[%s1 + $0x1cc] sm:$0xff]
  %v105 = vld [vmem:[%s1 + $0x1d4] sm:$0xff]
  %v106 = vld [vmem:[%s1 + $0x1dc] sm:$0xf]
  %v107 = vld [vmem:[%s1 + $0x1e0] sm:$0xff]
  %v108 = vld [vmem:[%s1 + $0x1e8] sm:$0xff]
  %v109 = vld [vmem:[%s1 + $0x1f0] sm:$0xf]
  %v110 = vld [vmem:[%s1 + $0x1f4] sm:$0xff]
  %v111 = vld [vmem:[%s1 + $0x1fc] sm:$0xff]
  %v112 = vld [vmem:[%s1 + $0x204] sm:$0xf]
  %v113 = vld [vmem:[%s1 + $0x208] sm:$0xff]
  %v114 = vld [vmem:[%s1 + $0x210] sm:$0xff]
  %v115 = vld [vmem:[%s1 + $0x218] sm:$0xf]
  %v116 = vld [vmem:[%s1 + $0x21c] sm:$0xff]
  %v117 = vld [vmem:[%s1 + $0x224] sm:$0xff]
  %v118 = vld [vmem:[%s1 + $0x22c] sm:$0xf]
  %v119 = vld [vmem:[%s1 + $0x230] sm:$0xff]
  %v120 = vld [vmem:[%s1 + $0x238] sm:$0xff]
  %v121 = vld [vmem:[%s1 + $0x240] sm:$0xf]
  %v122 = vld [vmem:[%s1 + $0x244] sm:$0xff]
  %v123 = vld [vmem:[%s1 + $0x24c] sm:$0xff]
  %v124 = vld [vmem:[%s1 + $0x254] sm:$0xf]
  %v125 = vld [vmem:[%s1 + $0x258] sm:$0xff]
  %v126 = vld [vmem:[%s1 + $0x260] sm:$0xff]
  %v127 = vld [vmem:[%s1 + $0x268] sm:$0xf]
  %v128 = vld [vmem:[%s1 + $0x26c] sm:$0xff]
  %v129 = vld [vmem:[%s1 + $0x274] sm:$0xff]
  %v130 = vld [vmem:[%s1 + $0x27c] sm:$0xf]
  %v131 = vld [vmem:[%s1 + $0x280] sm:$0xff]
  %v132 = vld [vmem:[%s1 + $0x288] sm:$0xff]
  %v133 = vld [vmem:[%s1 + $0x290] sm:$0xf]
  %v134 = vld [vmem:[%s1 + $0x294] sm:$0xff]
  %v135 = vld [vmem:[%s1 + $0x29c] sm:$0xff]
  %v136 = vld [vmem:[%s1 + $0x2a4] sm:$0xf]
  %v137 = vld [vmem:[%s1 + $0x2a8] sm:$0xff]
  %v138 = vld [vmem:[%s1 + $0x2b0] sm:$0xff]
  %v139 = vld [vmem:[%s1 + $0x2b8] sm:$0xf]
  %v140 = vld [vmem:[%s1 + $0x2bc] sm:$0xff]
  %v141 = vld [vmem:[%s1 + $0x2c4] sm:$0xff]
  %v142 = vld [vmem:[%s1 + $0x2cc] sm:$0xf]
  %v143 = vld [vmem:[%s1 + $0x2d0] sm:$0xff]
  %v144 = vld [vmem:[%s1 + $0x2d8] sm:$0xff]
  %v145 = vld [vmem:[%s1 + $0x2e0] sm:$0xf]
  %v146 = vld [vmem:[%s1 + $0x2e4] sm:$0xff]
  %v147 = vld [vmem:[%s1 + $0x2ec] sm:$0xff]
  %v148 = vld [vmem:[%s1 + $0x2f4] sm:$0xf]
  %v149 = vld [vmem:[%s1 + $0x2f8] sm:$0xff]
  %v150 = vld [vmem:[%s1 + $0x300] sm:$0xff]
  %v151 = vld [vmem:[%s1 + $0x308] sm:$0xf]
  %v152 = vld [vmem:[%s1 + $0x30c] sm:$0xff]
  %v153 = vld [vmem:[%s1 + $0x314] sm:$0xff]
  %v154 = vld [vmem:[%s1 + $0x31c] sm:$0xf]
  %v155 = vld [vmem:[%s1 + $0x320] sm:$0xff]
  %v156 = vld [vmem:[%s1 + $0x328] sm:$0xff]
  %v157 = vld [vmem:[%s1 + $0x330] sm:$0xf]
  %v158 = vld [vmem:[%s1 + $0x334] sm:$0xff]
  %v159 = vld [vmem:[%s1 + $0x33c] sm:$0xff]
  %v160 = vld [vmem:[%s1 + $0x344] sm:$0xf]
  %v161 = vld [vmem:[%s1 + $0x348] sm:$0xff]
  %v162 = vld [vmem:[%s1 + $0x350] sm:$0xff]
  %v163 = vld [vmem:[%s1 + $0x358] sm:$0xf]
  %v164 = vld [vmem:[%s1 + $0x35c] sm:$0xff]
  %v165 = vld [vmem:[%s1 + $0x364] sm:$0xff]
  %v166 = vld [vmem:[%s1 + $0x36c] sm:$0xf]
  %v167 = vld [vmem:[%s1 + $0x370] sm:$0xff]
  %v168 = vld [vmem:[%s1 + $0x378] sm:$0xff]
  %v169 = vld [vmem:[%s1 + $0x380] sm:$0xf]
  %v170 = vld [vmem:[%s1 + $0x384] sm:$0xff]
  %v171 = vld [vmem:[%s1 + $0x38c] sm:$0xff]
  %v172 = vld [vmem:[%s1 + $0x394] sm:$0xf]
  %v173 = vld [vmem:[%s1 + $0x398] sm:$0xff]
  %v174 = vld [vmem:[%s1 + $0x3a0] sm:$0xff]
  %v175 = vld [vmem:[%s1 + $0x3a8] sm:$0xf]
  %v176 = vld [vmem:[%s1 + $0x3ac] sm:$0xff]
  %v177 = vld [vmem:[%s1 + $0x3b4] sm:$0xff]
  %v178 = vld [vmem:[%s1 + $0x3bc] sm:$0xf]
  %v179 = vld [vmem:[%s1 + $0x3c0] sm:$0xff]
  %v180 = vld [vmem:[%s1 + $0x3c8] sm:$0xff]
  %v181 = vld [vmem:[%s1 + $0x3d0] sm:$0xf]
  %v182 = vld [vmem:[%s1 + $0x3d4] sm:$0xff]
  %v183 = vld [vmem:[%s1 + $0x3dc] sm:$0xff]
  %v184 = vld [vmem:[%s1 + $0x3e4] sm:$0xf]
  %v185 = vld [vmem:[%s1 + $0x3e8] sm:$0xff]
  %v186 = vld [vmem:[%s1 + $0x3f0] sm:$0xff]
  %v187 = vld [vmem:[%s1 + $0x3f8] sm:$0xf]
  %v188 = vld [vmem:[%s1 + $0x3fc] sm:$0xff]
  %v189 = vld [vmem:[%s1 + $0x404] sm:$0xff]
  %v190 = vld [vmem:[%s1 + $0x40c] sm:$0xf]
  %v191 = vld [vmem:[%s1 + $0x410] sm:$0xff]
  %v192 = vld [vmem:[%s1 + $0x418] sm:$0xff]
  %v193 = vld [vmem:[%s1 + $0x420] sm:$0xf]
  %v194 = vld [vmem:[%s1 + $0x424] sm:$0xff]
  %v195 = vld [vmem:[%s1 + $0x42c] sm:$0xff]
  %v196 = vld [vmem:[%s1 + $0x434] sm:$0xf]
  %v197 = vld [vmem:[%s1 + $0x438] sm:$0xff]
  %v198 = vld [vmem:[%s1 + $0x440] sm:$0xff]
  %v199 = vld [vmem:[%s1 + $0x448] sm:$0xf]
  %v200 = vld [vmem:[%s1 + $0x44c] sm:$0xff]
  %v201 = vld [vmem:[%s1 + $0x454] sm:$0xff]
  %v202 = vld [vmem:[%s1 + $0x45c] sm:$0xf]
  %v203 = vld [vmem:[%s1 + $0x460] sm:$0xff]
  %v204 = vld [vmem:[%s1 + $0x468] sm:$0xff]
  %v205 = vld [vmem:[%s1 + $0x470] sm:$0xf]
  %v206 = vld [vmem:[%s1 + $0x474] sm:$0xff]
  %v207 = vld [vmem:[%s1 + $0x47c] sm:$0xff]
  %v208 = vld [vmem:[%s1 + $0x484] sm:$0xf]
  %v209 = vld [vmem:[%s1 + $0x488] sm:$0xff]
  %v210 = vld [vmem:[%s1 + $0x490] sm:$0xff]
  %v211 = vld [vmem:[%s1 + $0x498] sm:$0xf]
  %v212 = vld [vmem:[%s1 + $0x49c] sm:$0xff]
  %v213 = vld [vmem:[%s1 + $0x4a4] sm:$0xff]
  %v214 = vld [vmem:[%s1 + $0x4ac] sm:$0xf]
  %v215 = vld [vmem:[%s1 + $0x4b0] sm:$0xff]
  %v216 = vld [vmem:[%s1 + $0x4b8] sm:$0xff]
  %v217 = vld [vmem:[%s1 + $0x4c0] sm:$0xf]
  %v218 = vld [vmem:[%s1 + $0x4c4] sm:$0xff]
  %v219 = vld [vmem:[%s1 + $0x4cc] sm:$0xff]
  %v220 = vld [vmem:[%s1 + $0x4d4] sm:$0xf]
  %v221 = vld [vmem:[%s1 + $0x4d8] sm:$0xff]
  %v222 = vld [vmem:[%s1 + $0x4e0] sm:$0xff]
  %v223 = vld [vmem:[%s1 + $0x4e8] sm:$0xf]
  %v224 = vld [vmem:[%s1 + $0x4ec] sm:$0xff]
  %v225 = vld [vmem:[%s1 + $0x4f4] sm:$0xff]
  %v226 = vld [vmem:[%s1 + $0x4fc] sm:$0xf]
  %v227 = vld [vmem:[%s1 + $0x500] sm:$0xff]
  %v228 = vld [vmem:[%s1 + $0x508] sm:$0xff]
  %v229 = vld [vmem:[%s1 + $0x510] sm:$0xf]
  %v230 = vld [vmem:[%s1 + $0x514] sm:$0xff]
  %v231 = vld [vmem:[%s1 + $0x51c] sm:$0xff]
  %v232 = vld [vmem:[%s1 + $0x524] sm:$0xf]
  %v233 = vld [vmem:[%s1 + $0x528] sm:$0xff]
  %v234 = vld [vmem:[%s1 + $0x530] sm:$0xff]
  %v235 = vld [vmem:[%s1 + $0x538] sm:$0xf]
  %v236 = vld [vmem:[%s1 + $0x53c] sm:$0xff]
  %v237 = vld [vmem:[%s1 + $0x544] sm:$0xff]
  %v238 = vld [vmem:[%s1 + $0x54c] sm:$0xf]
  %v239 = vld [vmem:[%s1 + $0x550] sm:$0xff]
  %v240 = vld [vmem:[%s1 + $0x558] sm:$0xff]
  %v241 = vld [vmem:[%s1 + $0x560] sm:$0xf]
  %v242 = vld [vmem:[%s1 + $0x564] sm:$0xff]
  %v243 = vld [vmem:[%s1 + $0x56c] sm:$0xff]
  %v244 = vld [vmem:[%s1 + $0x574] sm:$0xf]
  %v245 = vld [vmem:[%s1 + $0x578] sm:$0xff]
  %v246 = vld [vmem:[%s1 + $0x580] sm:$0xff]
  %v247 = vld [vmem:[%s1 + $0x588] sm:$0xf]
  %v248 = vld [vmem:[%s1 + $0x58c] sm:$0xff]
  %v249 = vld [vmem:[%s1 + $0x594] sm:$0xff]
  %v250 = vld [vmem:[%s1 + $0x59c] sm:$0xf]
  %v251 = vld [vmem:[%s1 + $0x5a0] sm:$0xff]
  %v252 = vld [vmem:[%s1 + $0x5a8] sm:$0xff]
  %v253 = vld [vmem:[%s1 + $0x5b0] sm:$0xf]
  %v254 = vld [vmem:[%s1 + $0x5b4] sm:$0xff]
  %v255 = vld [vmem:[%s1 + $0x5bc] sm:$0xff]
  %v256 = vld [vmem:[%s1 + $0x5c4] sm:$0xf]
  %v257 = vld [vmem:[%s1 + $0x5c8] sm:$0xff]
  %v258 = vld [vmem:[%s1 + $0x5d0] sm:$0xff]
  %v259 = vld [vmem:[%s1 + $0x5d8] sm:$0xf]
  %v260 = vld [vmem:[%s1 + $0x5dc] sm:$0xff]
  %v261 = vld [vmem:[%s1 + $0x5e4] sm:$0xff]
  %v262 = vld [vmem:[%s1 + $0x5ec] sm:$0xf]
  %v263 = vld [vmem:[%s1 + $0x5f0] sm:$0xff]
  %v264 = vld [vmem:[%s1 + $0x5f8] sm:$0xff]
  %v265 = vld [vmem:[%s1 + $0x600] sm:$0xf]
  %v266 = vld [vmem:[%s1 + $0x604] sm:$0xff]
  %v267 = vld [vmem:[%s1 + $0x60c] sm:$0xff]
  %v268 = vld [vmem:[%s1 + $0x614] sm:$0xf]
  %v269 = vld [vmem:[%s1 + $0x618] sm:$0xff]
  %v270 = vld [vmem:[%s1 + $0x620] sm:$0xff]
  %v271 = vld [vmem:[%s1 + $0x628] sm:$0xf]
  %v272 = vld [vmem:[%s1 + $0x62c] sm:$0xff]
  %v273 = vld [vmem:[%s1 + $0x634] sm:$0xff]
  %v274 = vld [vmem:[%s1 + $0x63c] sm:$0xf]
  %v275 = vld [vmem:[%s1 + $0x640] sm:$0xff]
  %v276 = vld [vmem:[%s1 + $0x648] sm:$0xff]
  %v277 = vld [vmem:[%s1 + $0x650] sm:$0xf]
  %v278 = vld [vmem:[%s1 + $0x654] sm:$0xff]
  %v279 = vld [vmem:[%s1 + $0x65c] sm:$0xff]
  %v280 = vld [vmem:[%s1 + $0x664] sm:$0xf]
  %v281 = vld [vmem:[%s1 + $0x668] sm:$0xff]
  %v282 = vld [vmem:[%s1 + $0x670] sm:$0xff]
  %v283 = vld [vmem:[%s1 + $0x678] sm:$0xf]
  %v284 = vld [vmem:[%s1 + $0x67c] sm:$0xff]
  %v285 = vld [vmem:[%s1 + $0x684] sm:$0xff]
  %v286 = vld [vmem:[%s1 + $0x68c] sm:$0xf]
  %v287 = vld [vmem:[%s1 + $0x690] sm:$0xff]
  %v288 = vld [vmem:[%s1 + $0x698] sm:$0xff]
  %v289 = vld [vmem:[%s1 + $0x6a0] sm:$0xf]
  %v290 = vld [vmem:[%s1 + $0x6a4] sm:$0xff]
  %v291 = vld [vmem:[%s1 + $0x6ac] sm:$0xff]
  %v292 = vld [vmem:[%s1 + $0x6b4] sm:$0xf]
  %v293 = vld [vmem:[%s1 + $0x6b8] sm:$0xff]
  %v294 = vld [vmem:[%s1 + $0x6c0] sm:$0xff]
  %v295 = vld [vmem:[%s1 + $0x6c8] sm:$0xf]
  %v296 = vld [vmem:[%s1 + $0x6cc] sm:$0xff]
  %v297 = vld [vmem:[%s1 + $0x6d4] sm:$0xff]
  %v298 = vld [vmem:[%s1 + $0x6dc] sm:$0xf]
  %v299 = vld [vmem:[%s1 + $0x6e0] sm:$0xff]
  %v300 = vld [vmem:[%s1 + $0x6e8] sm:$0xff]
  %v301 = vld [vmem:[%s1 + $0x6f0] sm:$0xf]
  %v302 = vld [vmem:[%s1 + $0x6f4] sm:$0xff]
  %v303 = vld [vmem:[%s1 + $0x6fc] sm:$0xff]
  %v304 = vld [vmem:[%s1 + $0x704] sm:$0xf]
  %v305 = vld [vmem:[%s1 + $0x708] sm:$0xff]
  %v306 = vld [vmem:[%s1 + $0x710] sm:$0xff]
  %v307 = vld [vmem:[%s1 + $0x718] sm:$0xf]
  %v308 = vld [vmem:[%s1 + $0x71c] sm:$0xff]
  %v309 = vld [vmem:[%s1 + $0x724] sm:$0xff]
  %v310 = vld [vmem:[%s1 + $0x72c] sm:$0xf]
  %v311 = vld [vmem:[%s1 + $0x730] sm:$0xff]
  %v312 = vld [vmem:[%s1 + $0x738] sm:$0xff]
  %v313 = vld [vmem:[%s1 + $0x740] sm:$0xf]
  %v314 = vld [vmem:[%s1 + $0x744] sm:$0xff]
  %v315 = vld [vmem:[%s1 + $0x74c] sm:$0xff]
  %v316 = vld [vmem:[%s1 + $0x754] sm:$0xf]
  %v317 = vld [vmem:[%s1 + $0x758] sm:$0xff]
  %v318 = vld [vmem:[%s1 + $0x760] sm:$0xff]
  %v319 = vld [vmem:[%s1 + $0x768] sm:$0xf]
  %v320 = vld [vmem:[%s1 + $0x76c] sm:$0xff]
  %v321 = vld [vmem:[%s1 + $0x774] sm:$0xff]
  %v322 = vld [vmem:[%s1 + $0x77c] sm:$0xf]
  %v323 = vld [vmem:[%s1 + $0x780] sm:$0xff]
  %v324 = vld [vmem:[%s1 + $0x788] sm:$0xff]
  %v325 = vld [vmem:[%s1 + $0x790] sm:$0xf]
  %v326 = vld [vmem:[%s1 + $0x794] sm:$0xff]
  %v327 = vld [vmem:[%s1 + $0x79c] sm:$0xff]
  %v328 = vld [vmem:[%s1 + $0x7a4] sm:$0xf]
  %v329 = vld [vmem:[%s1 + $0x7a8] sm:$0xff]
  %v330 = vld [vmem:[%s1 + $0x7b0] sm:$0xff]
  %v331 = vld [vmem:[%s1 + $0x7b8] sm:$0xf]
  %v332 = vld [vmem:[%s1 + $0x7bc] sm:$0xff]
  %v333 = vld [vmem:[%s1 + $0x7c4] sm:$0xff]
  %v334 = vld [vmem:[%s1 + $0x7cc] sm:$0xf]
  %v335 = vld [vmem:[%s1 + $0x7d0] sm:$0xff]
  %v336 = vld [vmem:[%s1 + $0x7d8] sm:$0xff]
  %v337 = vld [vmem:[%s1 + $0x7e0] sm:$0xf]
  %v338 = vld [vmem:[%s1 + $0x7e4] sm:$0xff]
  %v339 = vld [vmem:[%s1 + $0x7ec] sm:$0xff]
  %v340 = vld [vmem:[%s1 + $0x7f4] sm:$0xf]
  %v341 = vld [vmem:[%s1 + $0x7f8] sm:$0xff]
  %v342 = vld [vmem:[%s1 + $0x800] sm:$0xff]
  %v343 = vld [vmem:[%s1 + $0x808] sm:$0xf]
  %v344 = vld [vmem:[%s1 + $0x80c] sm:$0xff]
  %v345 = vld [vmem:[%s1 + $0x814] sm:$0xff]
  %v346 = vld [vmem:[%s1 + $0x81c] sm:$0xf]
  %v347 = vld [vmem:[%s1 + $0x820] sm:$0xff]
  %v348 = vld [vmem:[%s1 + $0x828] sm:$0xff]
  %v349 = vld [vmem:[%s1 + $0x830] sm:$0xf]
  %v350 = vld [vmem:[%s1 + $0x834] sm:$0xff]
  %v351 = vld [vmem:[%s1 + $0x83c] sm:$0xff]
  %v352 = vld [vmem:[%s1 + $0x844] sm:$0xf]
  %v353 = vld [vmem:[%s1 + $0x848] sm:$0xff]
  %v354 = vld [vmem:[%s1 + $0x850] sm:$0xff]
  %v355 = vld [vmem:[%s1 + $0x858] sm:$0xf]
  %v356 = vld [vmem:[%s1 + $0x85c] sm:$0xff]
  %v357 = vld [vmem:[%s1 + $0x864] sm:$0xff]
  %v358 = vld [vmem:[%s1 + $0x86c] sm:$0xf]
  %v359 = vld [vmem:[%s1 + $0x870] sm:$0xff]
  %v360 = vld [vmem:[%s1 + $0x878] sm:$0xff]
  %v361 = vld [vmem:[%s1 + $0x880] sm:$0xf]
  %v362 = vld [vmem:[%s1 + $0x884] sm:$0xff]
  %v363 = vld [vmem:[%s1 + $0x88c] sm:$0xff]
  %v364 = vld [vmem:[%s1 + $0x894] sm:$0xf]
  %v365 = vld [vmem:[%s1 + $0x898] sm:$0xff]
  %v366 = vld [vmem:[%s1 + $0x8a0] sm:$0xff]
  %v367 = vld [vmem:[%s1 + $0x8a8] sm:$0xf]
  %v368 = vld [vmem:[%s1 + $0x8ac] sm:$0xff]
  %v369 = vld [vmem:[%s1 + $0x8b4] sm:$0xff]
  %v370 = vld [vmem:[%s1 + $0x8bc] sm:$0xf]
  %v371 = vld [vmem:[%s1 + $0x8c0] sm:$0xff]
  %v372 = vld [vmem:[%s1 + $0x8c8] sm:$0xff]
  %v373 = vld [vmem:[%s1 + $0x8d0] sm:$0xf]
  %v374 = vld [vmem:[%s1 + $0x8d4] sm:$0xff]
  %v375 = vld [vmem:[%s1 + $0x8dc] sm:$0xff]
  %v376 = vld [vmem:[%s1 + $0x8e4] sm:$0xf]
  %v377 = vld [vmem:[%s1 + $0x8e8] sm:$0xff]
  %v378 = vld [vmem:[%s1 + $0x8f0] sm:$0xff]
  %v379 = vld [vmem:[%s1 + $0x8f8] sm:$0xf]
  %v380 = vld [vmem:[%s1 + $0x8fc] sm:$0xff]
  %v381 = vld [vmem:[%s1 + $0x904] sm:$0xff]
  %v382 = vld [vmem:[%s1 + $0x90c] sm:$0xf]
  %v383 = vld [vmem:[%s1 + $0x910] sm:$0xff]
  %v384 = vld [vmem:[%s1 + $0x918] sm:$0xff]
  %v385 = vld [vmem:[%s1 + $0x920] sm:$0xf]
  %v386 = vld [vmem:[%s1 + $0x924] sm:$0xff]
  %v387 = vld [vmem:[%s1 + $0x92c] sm:$0xff]
  %v388 = vld [vmem:[%s1 + $0x934] sm:$0xf]
  %v389 = vld [vmem:[%s1 + $0x938] sm:$0xff]
  %v390 = vld [vmem:[%s1 + $0x940] sm:$0xff]
  %v391 = vld [vmem:[%s1 + $0x948] sm:$0xf]
  %v392 = vld [vmem:[%s1 + $0x94c] sm:$0xff]
  %v393 = vld [vmem:[%s1 + $0x954] sm:$0xff]
  %v394 = vld [vmem:[%s1 + $0x95c] sm:$0xf]
  %v395 = vld [vmem:[%s1 + $0x960] sm:$0xff]
  %v396 = vld [vmem:[%s1 + $0x968] sm:$0xff]
  %v397 = vld [vmem:[%s1 + $0x970] sm:$0xf]
  %v398 = vld [vmem:[%s1 + $0x974] sm:$0xff]
  %v399 = vld [vmem:[%s1 + $0x97c] sm:$0xff]
  %v400 = vld [vmem:[%s1 + $0x984] sm:$0xf]
  %v401 = vld [vmem:[%s1 + $0x988] sm:$0xff]
  %v402 = vld [vmem:[%s1 + $0x990] sm:$0xff]
  %v403 = vld [vmem:[%s1 + $0x998] sm:$0xf]
  %v404 = vld [vmem:[%s1 + $0x99c] sm:$0xff]
  %v405 = vld [vmem:[%s1 + $0x9a4] sm:$0xff]
  %v406 = vld [vmem:[%s1 + $0x9ac] sm:$0xf]
  %v407 = vld [vmem:[%s1 + $0x9b0] sm:$0xff]
  %v408 = vld [vmem:[%s1 + $0x9b8] sm:$0xff]
  %v409 = vld [vmem:[%s1 + $0x9c0] sm:$0xf]
  %v410 = vld [vmem:[%s1 + $0x9c4] sm:$0xff]
  %v411 = vld [vmem:[%s1 + $0x9cc] sm:$0xff]
  %v412 = vld [vmem:[%s1 + $0x9d4] sm:$0xf]
  %v413 = vld [vmem:[%s1 + $0x9d8] sm:$0xff]
  %v414 = vld [vmem:[%s1 + $0x9e0] sm:$0xff]
  %v415 = vld [vmem:[%s1 + $0x9e8] sm:$0xf]
  %v416 = vld [vmem:[%s1 + $0x9ec] sm:$0xff]
  %v417 = vld [vmem:[%s1 + $0x9f4] sm:$0xff]
  %v418 = vld [vmem:[%s1 + $0x9fc] sm:$0xf]
  %v419 = vld [vmem:[%s1 + $0xa00] sm:$0xff]
  %v420 = vld [vmem:[%s1 + $0xa08] sm:$0xff]
  %v421 = vld [vmem:[%s1 + $0xa10] sm:$0xf]
  %v422 = vld [vmem:[%s1 + $0xa14] sm:$0xff]
  %v423 = vld [vmem:[%s1 + $0xa1c] sm:$0xff]
  %v424 = vld [vmem:[%s1 + $0xa24] sm:$0xf]
  %v425 = vld [vmem:[%s1 + $0xa28] sm:$0xff]
  %v426 = vld [vmem:[%s1 + $0xa30] sm:$0xff]
  %v427 = vld [vmem:[%s1 + $0xa38] sm:$0xf]
  %v428 = vld [vmem:[%s1 + $0xa3c] sm:$0xff]
  %v429 = vld [vmem:[%s1 + $0xa44] sm:$0xff]
  %v430 = vld [vmem:[%s1 + $0xa4c] sm:$0xf]
  %v431 = vld [vmem:[%s1 + $0xa50] sm:$0xff]
  %v432 = vld [vmem:[%s1 + $0xa58] sm:$0xff]
  %v433 = vld [vmem:[%s1 + $0xa60] sm:$0xf]
  %v434 = vld [vmem:[%s1 + $0xa64] sm:$0xff]
  %v435 = vld [vmem:[%s1 + $0xa6c] sm:$0xff]
  %v436 = vld [vmem:[%s1 + $0xa74] sm:$0xf]
  %v437 = vld [vmem:[%s1 + $0xa78] sm:$0xff]
  %v438 = vld [vmem:[%s1 + $0xa80] sm:$0xff]
  %v439 = vld [vmem:[%s1 + $0xa88] sm:$0xf]
  %v440 = vld [vmem:[%s1 + $0xa8c] sm:$0xff]
  %v441 = vld [vmem:[%s1 + $0xa94] sm:$0xff]
  %v442 = vld [vmem:[%s1 + $0xa9c] sm:$0xf]
  %v443 = vld [vmem:[%s1 + $0xaa0] sm:$0xff]
  %v444 = vld [vmem:[%s1 + $0xaa8] sm:$0xff]
  %v445 = vld [vmem:[%s1 + $0xab0] sm:$0xf]
  %v446 = vld [vmem:[%s1 + $0xab4] sm:$0xff]
  %v447 = vld [vmem:[%s1 + $0xabc] sm:$0xff]
  %v448 = vld [vmem:[%s1 + $0xac4] sm:$0xf]
  %v449 = vld [vmem:[%s1 + $0xac8] sm:$0xff]
  %v450 = vld [vmem:[%s1 + $0xad0] sm:$0xff]
  %v451 = vld [vmem:[%s1 + $0xad8] sm:$0xf]
  %v452 = vld [vmem:[%s1 + $0xadc] sm:$0xff]
  %v453 = vld [vmem:[%s1 + $0xae4] sm:$0xff]
  %v454 = vld [vmem:[%s1 + $0xaec] sm:$0xf]
  %v455 = vld [vmem:[%s1 + $0xaf0] sm:$0xff]
  %v456 = vld [vmem:[%s1 + $0xaf8] sm:$0xff]
  %v457 = vld [vmem:[%s1 + $0xb00] sm:$0xf]
  %v458 = vld [vmem:[%s1 + $0xb04] sm:$0xff]
  %v459 = vld [vmem:[%s1 + $0xb0c] sm:$0xff]
  %v460 = vld [vmem:[%s1 + $0xb14] sm:$0xf]
  %v461 = vld [vmem:[%s1 + $0xb18] sm:$0xff]
  %v462 = vld [vmem:[%s1 + $0xb20] sm:$0xff]
  %v463 = vld [vmem:[%s1 + $0xb28] sm:$0xf]
  %v464 = vld [vmem:[%s1 + $0xb2c] sm:$0xff]
  %v465 = vld [vmem:[%s1 + $0xb34] sm:$0xff]
  %v466 = vld [vmem:[%s1 + $0xb3c] sm:$0xf]
  %v467 = vld [vmem:[%s1 + $0xb40] sm:$0xff]
  %v468 = vld [vmem:[%s1 + $0xb48] sm:$0xff]
  %v469 = vld [vmem:[%s1 + $0xb50] sm:$0xf]
  %v470 = vld [vmem:[%s1 + $0xb54] sm:$0xff]
  %v471 = vld [vmem:[%s1 + $0xb5c] sm:$0xff]
  %v472 = vld [vmem:[%s1 + $0xb64] sm:$0xf]
  %v473 = vld [vmem:[%s1 + $0xb68] sm:$0xff]
  %v474 = vld [vmem:[%s1 + $0xb70] sm:$0xff]
  %v475 = vld [vmem:[%s1 + $0xb78] sm:$0xf]
  %v476 = vld [vmem:[%s1 + $0xb7c] sm:$0xff]
  %v477 = vld [vmem:[%s1 + $0xb84] sm:$0xff]
  %v478 = vld [vmem:[%s1 + $0xb8c] sm:$0xf]
  %v479 = vld [vmem:[%s1 + $0xb90] sm:$0xff]
  %v480 = vld [vmem:[%s1 + $0xb98] sm:$0xff]
  %v481 = vld [vmem:[%s1 + $0xba0] sm:$0xf]
  %v482 = vld [vmem:[%s1 + $0xba4] sm:$0xff]
  %v483 = vld [vmem:[%s1 + $0xbac] sm:$0xff]
  %v484 = vld [vmem:[%s1 + $0xbb4] sm:$0xf]
  %v485 = vld [vmem:[%s1 + $0xbb8] sm:$0xff]
  %v486 = vld [vmem:[%s1 + $0xbc0] sm:$0xff]
  %v487 = vld [vmem:[%s1 + $0xbc8] sm:$0xf]
  %v488 = vld [vmem:[%s1 + $0xbcc] sm:$0xff]
  %v489 = vld [vmem:[%s1 + $0xbd4] sm:$0xff]
  %v490 = vld [vmem:[%s1 + $0xbdc] sm:$0xf]
  %v491 = vld [vmem:[%s1 + $0xbe0] sm:$0xff]
  %v492 = vld [vmem:[%s1 + $0xbe8] sm:$0xff]
  %v493 = vld [vmem:[%s1 + $0xbf0] sm:$0xf]
  %v494 = vld [vmem:[%s1 + $0xbf4] sm:$0xff]
  %v495 = vld [vmem:[%s1 + $0xbfc] sm:$0xff]
  %v496 = vld [vmem:[%s1 + $0xc04] sm:$0xf]
  %v497 = vld [vmem:[%s1 + $0xc08] sm:$0xff]
  %v498 = vld [vmem:[%s1 + $0xc10] sm:$0xff]
  %v499 = vld [vmem:[%s1 + $0xc18] sm:$0xf]
  %v500 = vld [vmem:[%s1 + $0xc1c] sm:$0xff]
  %v501 = vld [vmem:[%s1 + $0xc24] sm:$0xff]
  %v502 = vld [vmem:[%s1 + $0xc2c] sm:$0xf]
  %v503 = vld [vmem:[%s1 + $0xc30] sm:$0xff]
  %v504 = vld [vmem:[%s1 + $0xc38] sm:$0xff]
  %v505 = vld [vmem:[%s1 + $0xc40] sm:$0xf]
  %v506 = vld [vmem:[%s1 + $0xc44] sm:$0xff]
  %v507 = vld [vmem:[%s1 + $0xc4c] sm:$0xff]
  %v508 = vld [vmem:[%s1 + $0xc54] sm:$0xf]
  %v509 = vld [vmem:[%s1 + $0xc58] sm:$0xff]
  %v510 = vld [vmem:[%s1 + $0xc60] sm:$0xff]
  %v511 = vld [vmem:[%s1 + $0xc68] sm:$0xf]
  %v512 = vld [vmem:[%s1 + $0xc6c] sm:$0xff]
  %v513 = vld [vmem:[%s1 + $0xc74] sm:$0xff]
  %v514 = vld [vmem:[%s1 + $0xc7c] sm:$0xf]
  %v515 = vld [vmem:[%s1 + $0xc80] sm:$0xff]
  %v516 = vld [vmem:[%s1 + $0xc88] sm:$0xff]
  %v517 = vld [vmem:[%s1 + $0xc90] sm:$0xf]
  %v518 = vld [vmem:[%s1 + $0xc94] sm:$0xff]
  %v519 = vld [vmem:[%s1 + $0xc9c] sm:$0xff]
  %v520 = vld [vmem:[%s1 + $0xca4] sm:$0xf]
  %v521 = vld [vmem:[%s1 + $0xca8] sm:$0xff]
  %v522 = vld [vmem:[%s1 + $0xcb0] sm:$0xff]
  %v523 = vld [vmem:[%s1 + $0xcb8] sm:$0xf]
  %v524 = vld [vmem:[%s1 + $0xcbc] sm:$0xff]
  %v525 = vld [vmem:[%s1 + $0xcc4] sm:$0xff]
  %v526 = vld [vmem:[%s1 + $0xccc] sm:$0xf]
  %v527 = vld [vmem:[%s1 + $0xcd0] sm:$0xff]
  %v528 = vld [vmem:[%s1 + $0xcd8] sm:$0xff]
  %v529 = vld [vmem:[%s1 + $0xce0] sm:$0xf]
  %v530 = vld [vmem:[%s1 + $0xce4] sm:$0xff]
  %v531 = vld [vmem:[%s1 + $0xcec] sm:$0xff]
  %v532 = vld [vmem:[%s1 + $0xcf4] sm:$0xf]
  %v533 = vld [vmem:[%s1 + $0xcf8] sm:$0xff]
  %v534 = vld [vmem:[%s1 + $0xd00] sm:$0xff]
  %v535 = vld [vmem:[%s1 + $0xd08] sm:$0xf]
  %v536 = vld [vmem:[%s1 + $0xd0c] sm:$0xff]
  %v537 = vld [vmem:[%s1 + $0xd14] sm:$0xff]
  %v538 = vld [vmem:[%s1 + $0xd1c] sm:$0xf]
  %v539 = vld [vmem:[%s1 + $0xd20] sm:$0xff]
  %v540 = vld [vmem:[%s1 + $0xd28] sm:$0xff]
  %v541 = vld [vmem:[%s1 + $0xd30] sm:$0xf]
  %v542 = vld [vmem:[%s1 + $0xd34] sm:$0xff]
  %v543 = vld [vmem:[%s1 + $0xd3c] sm:$0xff]
  %v544 = vld [vmem:[%s1 + $0xd44] sm:$0xf]
  %v545 = vld [vmem:[%s1 + $0xd48] sm:$0xff]
  %v546 = vld [vmem:[%s1 + $0xd50] sm:$0xff]
  %v547 = vld [vmem:[%s1 + $0xd58] sm:$0xf]
  %v548 = vld [vmem:[%s1 + $0xd5c] sm:$0xff]
  %v549 = vld [vmem:[%s1 + $0xd64] sm:$0xff]
  %v550 = vld [vmem:[%s1 + $0xd6c] sm:$0xf]
  %v551 = vld [vmem:[%s1 + $0xd70] sm:$0xff]
  %v552 = vld [vmem:[%s1 + $0xd78] sm:$0xff]
  %v553 = vld [vmem:[%s1 + $0xd80] sm:$0xf]
  %v554 = vld [vmem:[%s1 + $0xd84] sm:$0xff]
  %v555 = vld [vmem:[%s1 + $0xd8c] sm:$0xff]
  %v556 = vld [vmem:[%s1 + $0xd94] sm:$0xf]
  %v557 = vld [vmem:[%s1 + $0xd98] sm:$0xff]
  %v558 = vld [vmem:[%s1 + $0xda0] sm:$0xff]
  %v559 = vld [vmem:[%s1 + $0xda8] sm:$0xf]
  %v560 = vld [vmem:[%s1 + $0xdac] sm:$0xff]
  %v561 = vld [vmem:[%s1 + $0xdb4] sm:$0xff]
  %v562 = vld [vmem:[%s1 + $0xdbc] sm:$0xf]
  %v563 = vld [vmem:[%s1 + $0xdc0] sm:$0xff]
  %v564 = vld [vmem:[%s1 + $0xdc8] sm:$0xff]
  %v565 = vld [vmem:[%s1 + $0xdd0] sm:$0xf]
  %v566 = vld [vmem:[%s1 + $0xdd4] sm:$0xff]
  %v567 = vld [vmem:[%s1 + $0xddc] sm:$0xff]
  %v568 = vld [vmem:[%s1 + $0xde4] sm:$0xf]
  %v569 = vld [vmem:[%s1 + $0xde8] sm:$0xff]
  %v570 = vld [vmem:[%s1 + $0xdf0] sm:$0xff]
  %v571 = vld [vmem:[%s1 + $0xdf8] sm:$0xf]
  %v572 = vld [vmem:[%s1 + $0xdfc] sm:$0xff]
  %v573 = vld [vmem:[%s1 + $0xe04] sm:$0xff]
  %v574 = vld [vmem:[%s1 + $0xe0c] sm:$0xf]
  %v575 = vld [vmem:[%s1 + $0xe10] sm:$0xff]
  %v576 = vld [vmem:[%s1 + $0xe18] sm:$0xff]
  %v577 = vld [vmem:[%s1 + $0xe20] sm:$0xf]
  %v578 = vld [vmem:[%s1 + $0xe24] sm:$0xff]
  %v579 = vld [vmem:[%s1 + $0xe2c] sm:$0xff]
  %v580 = vld [vmem:[%s1 + $0xe34] sm:$0xf]
  %v581 = vld [vmem:[%s1 + $0xe38] sm:$0xff]
  %v582 = vld [vmem:[%s1 + $0xe40] sm:$0xff]
  %v583 = vld [vmem:[%s1 + $0xe48] sm:$0xf]
  %v584 = vld [vmem:[%s1 + $0xe4c] sm:$0xff]
  %v585 = vld [vmem:[%s1 + $0xe54] sm:$0xff]
  %v586 = vld [vmem:[%s1 + $0xe5c] sm:$0xf]
  %v587 = vld [vmem:[%s1 + $0xe60] sm:$0xff]
  %v588 = vld [vmem:[%s1 + $0xe68] sm:$0xff]
  %v589 = vld [vmem:[%s1 + $0xe70] sm:$0xf]
  %v590 = vld [vmem:[%s1 + $0xe74] sm:$0xff]
  %v591 = vld [vmem:[%s1 + $0xe7c] sm:$0xff]
  %v592 = vld [vmem:[%s1 + $0xe84] sm:$0xf]
  %v593 = vld [vmem:[%s1 + $0xe88] sm:$0xff]
  %v594 = vld [vmem:[%s1 + $0xe90] sm:$0xff]
  %v595 = vld [vmem:[%s1 + $0xe98] sm:$0xf]
  %v596 = vld [vmem:[%s1 + $0xe9c] sm:$0xff]
  %v597 = vld [vmem:[%s1 + $0xea4] sm:$0xff]
  %v598 = vld [vmem:[%s1 + $0xeac] sm:$0xf]
  %v599 = vld [vmem:[%s1 + $0xeb0] sm:$0xff]
  %v600 = vld [vmem:[%s1 + $0xeb8] sm:$0xff]
  %v601 = vld [vmem:[%s1 + $0xec0] sm:$0xf]
  %v602 = vld [vmem:[%s1 + $0xec4] sm:$0xff]
  %v603 = vld [vmem:[%s1 + $0xecc] sm:$0xff]
  %v604 = vld [vmem:[%s1 + $0xed4] sm:$0xf]
  %v605 = vld [vmem:[%s1 + $0xed8] sm:$0xff]
  %v606 = vld [vmem:[%s1 + $0xee0] sm:$0xff]
  %v607 = vld [vmem:[%s1 + $0xee8] sm:$0xf]
  %v608 = vld [vmem:[%s1 + $0xeec] sm:$0xff]
  %v609 = vld [vmem:[%s1 + $0xef4] sm:$0xff]
  %v610 = vld [vmem:[%s1 + $0xefc] sm:$0xf]
  %v611 = vld [vmem:[%s1 + $0xf00] sm:$0xff]
  %v612 = vld [vmem:[%s1 + $0xf08] sm:$0xff]
  %v613 = vld [vmem:[%s1 + $0xf10] sm:$0xf]
  %v614 = vld [vmem:[%s1 + $0xf14] sm:$0xff]
  %v615 = vld [vmem:[%s1 + $0xf1c] sm:$0xff]
  %v616 = vld [vmem:[%s1 + $0xf24] sm:$0xf]
  %v617 = vld [vmem:[%s1 + $0xf28] sm:$0xff]
  %v618 = vld [vmem:[%s1 + $0xf30] sm:$0xff]
  %v619 = vld [vmem:[%s1 + $0xf38] sm:$0xf]
  %v620 = vld [vmem:[%s1 + $0xf3c] sm:$0xff]
  %v621 = vld [vmem:[%s1 + $0xf44] sm:$0xff]
  %v622 = vld [vmem:[%s1 + $0xf4c] sm:$0xf]
  %v623 = vld [vmem:[%s1 + $0xf50] sm:$0xff]
  %v624 = vld [vmem:[%s1 + $0xf58] sm:$0xff]
  %v625 = vld [vmem:[%s1 + $0xf60] sm:$0xf]
  %v626 = vld [vmem:[%s1 + $0xf64] sm:$0xff]
  %v627 = vld [vmem:[%s1 + $0xf6c] sm:$0xff]
  %v628 = vld [vmem:[%s1 + $0xf74] sm:$0xf]
  %v629 = vld [vmem:[%s1 + $0xf78] sm:$0xff]
  %v630 = vld [vmem:[%s1 + $0xf80] sm:$0xff]
  %v631 = vld [vmem:[%s1 + $0xf88] sm:$0xf]
  %v632 = vld [vmem:[%s1 + $0xf8c] sm:$0xff]
  %v633 = vld [vmem:[%s1 + $0xf94] sm:$0xff]
  %v634 = vld [vmem:[%s1 + $0xf9c] sm:$0xf]
  %v635 = vld [vmem:[%s1 + $0xfa0] sm:$0xff]
  %v636 = vld [vmem:[%s1 + $0xfa8] sm:$0xff]
  %v637 = vld [vmem:[%s1 + $0xfb0] sm:$0xf]
  %v638 = vld [vmem:[%s1 + $0xfb4] sm:$0xff]
  %v639 = vld [vmem:[%s1 + $0xfbc] sm:$0xff]
  %v640 = vld [vmem:[%s1 + $0xfc4] sm:$0xf]
  %v641 = vld [vmem:[%s1 + $0xfc8] sm:$0xff]
  %v642 = vld [vmem:[%s1 + $0xfd0] sm:$0xff]
  %v643 = vld [vmem:[%s1 + $0xfd8] sm:$0xf]
  %v644 = vld [vmem:[%s1 + $0xfdc] sm:$0xff]
  %v645 = vld [vmem:[%s1 + $0xfe4] sm:$0xff]
  %v646 = vld [vmem:[%s1 + $0xfec] sm:$0xf]
  %v647 = vld [vmem:[%s1 + $0xff0] sm:$0xff]
  %v648 = vld [vmem:[%s1 + $0xff8] sm:$0xff]
  %v649 = vld [vmem:[%s1 + $0x1000] sm:$0xf]
  %v650 = vld [vmem:[%s1 + $0x1004] sm:$0xff]
  %v651 = vld [vmem:[%s1 + $0x100c] sm:$0xff]
  %v652 = vld [vmem:[%s1 + $0x1014] sm:$0xf]
  %v653 = vld [vmem:[%s1 + $0x1018] sm:$0xff]
  %v654 = vld [vmem:[%s1 + $0x1020] sm:$0xff]
  %v655 = vld [vmem:[%s1 + $0x1028] sm:$0xf]
  %v656 = vld [vmem:[%s1 + $0x102c] sm:$0xff]
  %v657 = vld [vmem:[%s1 + $0x1034] sm:$0xff]
  %v658 = vld [vmem:[%s1 + $0x103c] sm:$0xf]
  %v659 = vld [vmem:[%s1 + $0x1040] sm:$0xff]
  %v660 = vld [vmem:[%s1 + $0x1048] sm:$0xff]
  %v661 = vld [vmem:[%s1 + $0x1050] sm:$0xf]
  %v662 = vld [vmem:[%s1 + $0x1054] sm:$0xff]
  %v663 = vld [vmem:[%s1 + $0x105c] sm:$0xff]
  %v664 = vld [vmem:[%s1 + $0x1064] sm:$0xf]
  %v665 = vld [vmem:[%s1 + $0x1068] sm:$0xff]
  %v666 = vld [vmem:[%s1 + $0x1070] sm:$0xff]
  %v667 = vld [vmem:[%s1 + $0x1078] sm:$0xf]
  %v668 = vld [vmem:[%s1 + $0x107c] sm:$0xff]
  %v669 = vld [vmem:[%s1 + $0x1084] sm:$0xff]
  %v670 = vld [vmem:[%s1 + $0x108c] sm:$0xf]
  %v671 = vld [vmem:[%s1 + $0x1090] sm:$0xff]
  %v672 = vld [vmem:[%s1 + $0x1098] sm:$0xff]
  %v673 = vld [vmem:[%s1 + $0x10a0] sm:$0xf]
  %v674 = vld [vmem:[%s1 + $0x10a4] sm:$0xff]
  %v675 = vld [vmem:[%s1 + $0x10ac] sm:$0xff]
  %v676 = vld [vmem:[%s1 + $0x10b4] sm:$0xf]
  %v677 = vld [vmem:[%s1 + $0x10b8] sm:$0xff]
  %v678 = vld [vmem:[%s1 + $0x10c0] sm:$0xff]
  %v679 = vld [vmem:[%s1 + $0x10c8] sm:$0xf]
  %v680 = vld [vmem:[%s1 + $0x10cc] sm:$0xff]
  %v681 = vld [vmem:[%s1 + $0x10d4] sm:$0xff]
  %v682 = vld [vmem:[%s1 + $0x10dc] sm:$0xf]
  %v683 = vld [vmem:[%s1 + $0x10e0] sm:$0xff]
  %v684 = vld [vmem:[%s1 + $0x10e8] sm:$0xff]
  %v685 = vld [vmem:[%s1 + $0x10f0] sm:$0xf]
  %v686 = vld [vmem:[%s1 + $0x10f4] sm:$0xff]
  %v687 = vld [vmem:[%s1 + $0x10fc] sm:$0xff]
  %v688 = vld [vmem:[%s1 + $0x1104] sm:$0xf]
  %v689 = vld [vmem:[%s1 + $0x1108] sm:$0xff]
  %v690 = vld [vmem:[%s1 + $0x1110] sm:$0xff]
  %v691 = vld [vmem:[%s1 + $0x1118] sm:$0xf]
  %v692 = vld [vmem:[%s1 + $0x111c] sm:$0xff]
  %v693 = vld [vmem:[%s1 + $0x1124] sm:$0xff]
  %v694 = vld [vmem:[%s1 + $0x112c] sm:$0xf]
  %v695 = vld [vmem:[%s1 + $0x1130] sm:$0xff]
  %v696 = vld [vmem:[%s1 + $0x1138] sm:$0xff]
  %v697 = vld [vmem:[%s1 + $0x1140] sm:$0xf]
  %v698 = vld [vmem:[%s1 + $0x1144] sm:$0xff]
  %v699 = vld [vmem:[%s1 + $0x114c] sm:$0xff]
  %v700 = vld [vmem:[%s1 + $0x1154] sm:$0xf]
  %v701 = vld [vmem:[%s1 + $0x1158] sm:$0xff]
  %v702 = vld [vmem:[%s1 + $0x1160] sm:$0xff]
  %v703 = vld [vmem:[%s1 + $0x1168] sm:$0xf]
  %v704 = vld [vmem:[%s1 + $0x116c] sm:$0xff]
  %v705 = vld [vmem:[%s1 + $0x1174] sm:$0xff]
  %v706 = vld [vmem:[%s1 + $0x117c] sm:$0xf]
  %v707 = vld [vmem:[%s1 + $0x1180] sm:$0xff]
  %v708 = vld [vmem:[%s1 + $0x1188] sm:$0xff]
  %v709 = vld [vmem:[%s1 + $0x1190] sm:$0xf]
  %v710 = vld [vmem:[%s1 + $0x1194] sm:$0xff]
  %v711 = vld [vmem:[%s1 + $0x119c] sm:$0xff]
  %v712 = vld [vmem:[%s1 + $0x11a4] sm:$0xf]
  %v713 = vld [vmem:[%s1 + $0x11a8] sm:$0xff]
  %v714 = vld [vmem:[%s1 + $0x11b0] sm:$0xff]
  %v715 = vld [vmem:[%s1 + $0x11b8] sm:$0xf]
  %v716 = vld [vmem:[%s1 + $0x11bc] sm:$0xff]
  %v717 = vld [vmem:[%s1 + $0x11c4] sm:$0xff]
  %v718 = vld [vmem:[%s1 + $0x11cc] sm:$0xf]
  %v719 = vld [vmem:[%s1 + $0x11d0] sm:$0xff]
  %v720 = vld [vmem:[%s1 + $0x11d8] sm:$0xff]
  %v721 = vld [vmem:[%s1 + $0x11e0] sm:$0xf]
  %v722 = vld [vmem:[%s1 + $0x11e4] sm:$0xff]
  %v723 = vld [vmem:[%s1 + $0x11ec] sm:$0xff]
  %v724 = vld [vmem:[%s1 + $0x11f4] sm:$0xf]
  %v725 = vld [vmem:[%s1 + $0x11f8] sm:$0xff]
  %v726 = vld [vmem:[%s1 + $0x1200] sm:$0xff]
  %v727 = vld [vmem:[%s1 + $0x1208] sm:$0xf]
  %v728 = vld [vmem:[%s1 + $0x120c] sm:$0xff]
  %v729 = vld [vmem:[%s1 + $0x1214] sm:$0xff]
  %v730 = vld [vmem:[%s1 + $0x121c] sm:$0xf]
  %v731 = vld [vmem:[%s1 + $0x1220] sm:$0xff]
  %v732 = vld [vmem:[%s1 + $0x1228] sm:$0xff]
  %v733 = vld [vmem:[%s1 + $0x1230] sm:$0xf]
  %v734 = vld [vmem:[%s1 + $0x1234] sm:$0xff]
  %v735 = vld [vmem:[%s1 + $0x123c] sm:$0xff]
  %v736 = vld [vmem:[%s1 + $0x1244] sm:$0xf]
  %v737 = vld [vmem:[%s1 + $0x1248] sm:$0xff]
  %v738 = vld [vmem:[%s1 + $0x1250] sm:$0xff]
  %v739 = vld [vmem:[%s1 + $0x1258] sm:$0xf]
  %v740 = vld [vmem:[%s1 + $0x125c] sm:$0xff]
  %v741 = vld [vmem:[%s1 + $0x1264] sm:$0xff]
  %v742 = vld [vmem:[%s1 + $0x126c] sm:$0xf]
  %v743 = vld [vmem:[%s1 + $0x1270] sm:$0xff]
  %v744 = vld [vmem:[%s1 + $0x1278] sm:$0xff]
  %v745 = vld [vmem:[%s1 + $0x1280] sm:$0xf]
  %v746 = vld [vmem:[%s1 + $0x1284] sm:$0xff]
  %v747 = vld [vmem:[%s1 + $0x128c] sm:$0xff]
  %v748 = vld [vmem:[%s1 + $0x1294] sm:$0xf]
  %v749 = vld [vmem:[%s1 + $0x1298] sm:$0xff]
  %v750 = vld [vmem:[%s1 + $0x12a0] sm:$0xff]
  %v751 = vld [vmem:[%s1 + $0x12a8] sm:$0xf]
  %v752 = vld [vmem:[%s1 + $0x12ac] sm:$0xff]
  %v753 = vld [vmem:[%s1 + $0x12b4] sm:$0xff]
  %v754 = vld [vmem:[%s1 + $0x12bc] sm:$0xf]
  %v755 = vld [vmem:[%s1 + $0x12c0] sm:$0xff]
  %v756 = vld [vmem:[%s1 + $0x12c8] sm:$0xff]
  %v757 = vld [vmem:[%s1 + $0x12d0] sm:$0xf]
  %v758 = vld [vmem:[%s1 + $0x12d4] sm:$0xff]
  %v759 = vld [vmem:[%s1 + $0x12dc] sm:$0xff]
  %v760 = vld [vmem:[%s1 + $0x12e4] sm:$0xf]
  %v761 = vld [vmem:[%s1 + $0x12e8] sm:$0xff]
  %v762 = vld [vmem:[%s1 + $0x12f0] sm:$0xff]
  %v763 = vld [vmem:[%s1 + $0x12f8] sm:$0xf]
  %v764 = vld [vmem:[%s1 + $0x12fc] sm:$0xff]
  %v765 = vld [vmem:[%s1 + $0x1304] sm:$0xff]
  %v766 = vld [vmem:[%s1 + $0x130c] sm:$0xf]
  %v767 = vld [vmem:[%s1 + $0x1310] sm:$0xff]
  %v768 = vld [vmem:[%s1 + $0x1318] sm:$0xff]
  %v769 = vld [vmem:[%s1 + $0x1320] sm:$0xf]
  %v770 = vld [vmem:[%s1 + $0x1324] sm:$0xff]
  %v771 = vld [vmem:[%s1 + $0x132c] sm:$0xff]
  %v772 = vld [vmem:[%s1 + $0x1334] sm:$0xf]
  %v773 = vld [vmem:[%s1 + $0x1338] sm:$0xff]
  %v774 = vld [vmem:[%s1 + $0x1340] sm:$0xff]
  %v775 = vld [vmem:[%s1 + $0x1348] sm:$0xf]
  %v776 = vld [vmem:[%s1 + $0x134c] sm:$0xff]
  %v777 = vld [vmem:[%s1 + $0x1354] sm:$0xff]
  %v778 = vld [vmem:[%s1 + $0x135c] sm:$0xf]
  %v779 = vld [vmem:[%s1 + $0x1360] sm:$0xff]
  %v780 = vld [vmem:[%s1 + $0x1368] sm:$0xff]
  %v781 = vld [vmem:[%s1 + $0x1370] sm:$0xf]
  %v782 = vld [vmem:[%s1 + $0x1374] sm:$0xff]
  %v783 = vld [vmem:[%s1 + $0x137c] sm:$0xff]
  %v784 = vld [vmem:[%s1 + $0x1384] sm:$0xf]
  %v785 = vld [vmem:[%s1 + $0x1388] sm:$0xff]
  %v786 = vld [vmem:[%s1 + $0x1390] sm:$0xff]
  %v787 = vld [vmem:[%s1 + $0x1398] sm:$0xf]
  %v788 = vld [vmem:[%s1 + $0x139c] sm:$0xff]
  %v789 = vld [vmem:[%s1 + $0x13a4] sm:$0xff]
  %v790 = vld [vmem:[%s1 + $0x13ac] sm:$0xf]
  %v791 = vld [vmem:[%s1 + $0x13b0] sm:$0xff]
  %v792 = vld [vmem:[%s1 + $0x13b8] sm:$0xff]
  %v793 = vld [vmem:[%s1 + $0x13c0] sm:$0xf]
  %v794 = vld [vmem:[%s1 + $0x13c4] sm:$0xff]
  %v795 = vld [vmem:[%s1 + $0x13cc] sm:$0xff]
  %v796 = vld [vmem:[%s1 + $0x13d4] sm:$0xf]
  %v797 = vld [vmem:[%s1 + $0x13d8] sm:$0xff]
  %v798 = vld [vmem:[%s1 + $0x13e0] sm:$0xff]
  %v799 = vld [vmem:[%s1 + $0x13e8] sm:$0xf]
  %v800 = vld [vmem:[%s1 + $0x13ec] sm:$0xff]
  %v801 = vld [vmem:[%s1 + $0x13f4] sm:$0xff]
  %v802 = vld [vmem:[%s1 + $0x13fc] sm:$0xf]
  %v803 = vld [vmem:[%s1 + $0x1400] sm:$0xff]
  %v804 = vld [vmem:[%s1 + $0x1408] sm:$0xff]
  %v805 = vld [vmem:[%s1 + $0x1410] sm:$0xf]
  %v806 = vld [vmem:[%s1 + $0x1414] sm:$0xff]
  %v807 = vld [vmem:[%s1 + $0x141c] sm:$0xff]
  %v808 = vld [vmem:[%s1 + $0x1424] sm:$0xf]
  %v809 = vld [vmem:[%s1 + $0x1428] sm:$0xff]
  %v810 = vld [vmem:[%s1 + $0x1430] sm:$0xff]
  %v811 = vld [vmem:[%s1 + $0x1438] sm:$0xf]
  %v812 = vld [vmem:[%s1 + $0x143c] sm:$0xff]
  %v813 = vld [vmem:[%s1 + $0x1444] sm:$0xff]
  %v814 = vld [vmem:[%s1 + $0x144c] sm:$0xf]
  %v815 = vld [vmem:[%s1 + $0x1450] sm:$0xff]
  %v816 = vld [vmem:[%s1 + $0x1458] sm:$0xff]
  %v817 = vld [vmem:[%s1 + $0x1460] sm:$0xf]
  %v818 = vld [vmem:[%s1 + $0x1464] sm:$0xff]
  %v819 = vld [vmem:[%s1 + $0x146c] sm:$0xff]
  %v820 = vld [vmem:[%s1 + $0x1474] sm:$0xf]
  %v821 = vld [vmem:[%s1 + $0x1478] sm:$0xff]
  %v822 = vld [vmem:[%s1 + $0x1480] sm:$0xff]
  %v823 = vld [vmem:[%s1 + $0x1488] sm:$0xf]
  %v824 = vld [vmem:[%s1 + $0x148c] sm:$0xff]
  %v825 = vld [vmem:[%s1 + $0x1494] sm:$0xff]
  %v826 = vld [vmem:[%s1 + $0x149c] sm:$0xf]
  %v827 = vld [vmem:[%s1 + $0x14a0] sm:$0xff]
  %v828 = vld [vmem:[%s1 + $0x14a8] sm:$0xff]
  %v829 = vld [vmem:[%s1 + $0x14b0] sm:$0xf]
  %v830 = vld [vmem:[%s1 + $0x14b4] sm:$0xff]
  %v831 = vld [vmem:[%s1 + $0x14bc] sm:$0xff]
  %v832 = vld [vmem:[%s1 + $0x14c4] sm:$0xf]
  %v833 = vld [vmem:[%s1 + $0x14c8] sm:$0xff]
  %v834 = vld [vmem:[%s1 + $0x14d0] sm:$0xff]
  %v835 = vld [vmem:[%s1 + $0x14d8] sm:$0xf]
  %v836 = vld [vmem:[%s1 + $0x14dc] sm:$0xff]
  %v837 = vld [vmem:[%s1 + $0x14e4] sm:$0xff]
  %v838 = vld [vmem:[%s1 + $0x14ec] sm:$0xf]
  %v839 = vld [vmem:[%s1 + $0x14f0] sm:$0xff]
  %v840 = vld [vmem:[%s1 + $0x14f8] sm:$0xff]
  %v841 = vld [vmem:[%s1 + $0x1500] sm:$0xf]
  %v842 = vld [vmem:[%s1 + $0x1504] sm:$0xff]
  %v843 = vld [vmem:[%s1 + $0x150c] sm:$0xff]
  %v844 = vld [vmem:[%s1 + $0x1514] sm:$0xf]
  %v845 = vld [vmem:[%s1 + $0x1518] sm:$0xff]
  %v846 = vld [vmem:[%s1 + $0x1520] sm:$0xff]
  %v847 = vld [vmem:[%s1 + $0x1528] sm:$0xf]
  %v848 = vld [vmem:[%s1 + $0x152c] sm:$0xff]
  %v849 = vld [vmem:[%s1 + $0x1534] sm:$0xff]
  %v850 = vld [vmem:[%s1 + $0x153c] sm:$0xf]
  %v851 = vld [vmem:[%s1 + $0x1540] sm:$0xff]
  %v852 = vld [vmem:[%s1 + $0x1548] sm:$0xff]
  %v853 = vld [vmem:[%s1 + $0x1550] sm:$0xf]
  %v854 = vld [vmem:[%s1 + $0x1554] sm:$0xff]
  %v855 = vld [vmem:[%s1 + $0x155c] sm:$0xff]
  %v856 = vld [vmem:[%s1 + $0x1564] sm:$0xf]
  %v857 = vld [vmem:[%s1 + $0x1568] sm:$0xff]
  %v858 = vld [vmem:[%s1 + $0x1570] sm:$0xff]
  %v859 = vld [vmem:[%s1 + $0x1578] sm:$0xf]
  %v860 = vld [vmem:[%s1 + $0x157c] sm:$0xff]
  %v861 = vld [vmem:[%s1 + $0x1584] sm:$0xff]
  %v862 = vld [vmem:[%s1 + $0x158c] sm:$0xf]
  %v863 = vld [vmem:[%s1 + $0x1590] sm:$0xff]
  %v864 = vld [vmem:[%s1 + $0x1598] sm:$0xff]
  %v865 = vld [vmem:[%s1 + $0x15a0] sm:$0xf]
  %v866 = vld [vmem:[%s1 + $0x15a4] sm:$0xff]
  %v867 = vld [vmem:[%s1 + $0x15ac] sm:$0xff]
  %v868 = vld [vmem:[%s1 + $0x15b4] sm:$0xf]
  %v869 = vld [vmem:[%s1 + $0x15b8] sm:$0xff]
  %v870 = vld [vmem:[%s1 + $0x15c0] sm:$0xff]
  %v871 = vld [vmem:[%s1 + $0x15c8] sm:$0xf]
  %v872 = vld [vmem:[%s1 + $0x15cc] sm:$0xff]
  %v873 = vld [vmem:[%s1 + $0x15d4] sm:$0xff]
  %v874 = vld [vmem:[%s1 + $0x15dc] sm:$0xf]
  %v875 = vld [vmem:[%s1 + $0x15e0] sm:$0xff]
  %v876 = vld [vmem:[%s1 + $0x15e8] sm:$0xff]
  %v877 = vld [vmem:[%s1 + $0x15f0] sm:$0xf]
  %v878 = vld [vmem:[%s1 + $0x15f4] sm:$0xff]
  %v879 = vld [vmem:[%s1 + $0x15fc] sm:$0xff]
  %v880 = vld [vmem:[%s1 + $0x1604] sm:$0xf]
  %v881 = vld [vmem:[%s1 + $0x1608] sm:$0xff]
  %v882 = vld [vmem:[%s1 + $0x1610] sm:$0xff]
  %v883 = vld [vmem:[%s1 + $0x1618] sm:$0xf]
  %v884 = vld [vmem:[%s1 + $0x161c] sm:$0xff]
  %v885 = vld [vmem:[%s1 + $0x1624] sm:$0xff]
  %v886 = vld [vmem:[%s1 + $0x162c] sm:$0xf]
  %v887 = vld [vmem:[%s1 + $0x1630] sm:$0xff]
  %v888 = vld [vmem:[%s1 + $0x1638] sm:$0xff]
  %v889 = vld [vmem:[%s1 + $0x1640] sm:$0xf]
  %v890 = vld [vmem:[%s1 + $0x1644] sm:$0xff]
  %v891 = vld [vmem:[%s1 + $0x164c] sm:$0xff]
  %v892 = vld [vmem:[%s1 + $0x1654] sm:$0xf]
  %v893 = vld [vmem:[%s1 + $0x1658] sm:$0xff]
  %v894 = vld [vmem:[%s1 + $0x1660] sm:$0xff]
  %v895 = vld [vmem:[%s1 + $0x1668] sm:$0xf]
  %v896 = vld [vmem:[%s1 + $0x166c] sm:$0xff]
  %v897 = vld [vmem:[%s1 + $0x1674] sm:$0xff]
  %v898 = vld [vmem:[%s1 + $0x167c] sm:$0xf]
  %v899 = vld [vmem:[%s2] sm:$0x1f]
  %v901 = vperm.slane %v899, 0
  %v902 = vperm.slane %v899, 1
  %v903 = vperm.slane %v899, 2
  %v904 = vperm.slane %v899, 3
  %v905 = vperm.slane %v899, 4
  %v920 = vunpack.c.l.b16 %v26
  %v921 = vunpack.c.h.b16 %v26
  %v922 = vunpack.c.l.b16 %v27
  %v923 = vunpack.c.h.b16 %v27
  %v924 = vunpack.c.l.b16 %v28
  %v925 = vunpack.c.h.b16 %v28
  %v926 = vunpack.c.l.b16 %v29
  %v927 = vunpack.c.h.b16 %v29
  %v928 = vunpack.c.l.b16 %v30
  %v929 = vunpack.c.h.b16 %v30
  %v930 = vunpack.c.l.b16 %v31
  %v931 = vunpack.c.h.b16 %v31
  %v932 = vunpack.c.l.b16 %v32
  %v933 = vunpack.c.h.b16 %v32
  %v934 = vunpack.c.l.b16 %v33
  %v935 = vunpack.c.h.b16 %v33
  %v936 = vunpack.c.l.b16 %v34
  %v937 = vunpack.c.h.b16 %v34
  %v938 = vpack.c.b16 %v920, %v920
  %v939 = vpack.c.b16 %v921, %v921
  %v940 = vpack.c.b16 %v922, %v922
  %v941 = vpack.c.b16 %v923, %v923
  %v942 = vpack.c.b16 %v924, %v924
  %v943 = vpack.c.b16 %v925, %v925
  %v944 = vpack.c.b16 %v926, %v926
  %v945 = vpack.c.b16 %v927, %v927
  %v946 = vpack.c.b16 %v928, %v928
  %v947 = vpack.c.b16 %v929, %v929
  %v948 = vpack.c.b16 %v930, %v930
  %v949 = vpack.c.b16 %v931, %v931
  %v950 = vpack.c.b16 %v932, %v932
  %v951 = vpack.c.b16 %v933, %v933
  %v952 = vpack.c.b16 %v934, %v934
  %v953 = vpack.c.b16 %v935, %v935
  %v954 = vpack.c.b16 %v936, %v936
  %v955 = vpack.c.b16 %v937, %v937
  %v1838 = vunpack.c.l.b16 %v35
  %v1839 = vunpack.c.h.b16 %v35
  %v1840 = vunpack.c.l.b16 %v36
  %v1841 = vunpack.c.h.b16 %v36
  %v1842 = vunpack.c.l.b16 %v37
  %v1843 = vunpack.c.l.b16 %v38
  %v1844 = vunpack.c.h.b16 %v38
  %v1845 = vunpack.c.l.b16 %v39
  %v1846 = vunpack.c.h.b16 %v39
  %v1847 = vunpack.c.l.b16 %v40
  %v1848 = vunpack.c.l.b16 %v41
  %v1849 = vunpack.c.h.b16 %v41
  %v1850 = vunpack.c.l.b16 %v42
  %v1851 = vunpack.c.h.b16 %v42
  %v1852 = vunpack.c.l.b16 %v43
  %v1853 = vunpack.c.l.b16 %v44
  %v1854 = vunpack.c.h.b16 %v44
  %v1855 = vunpack.c.l.b16 %v45
  %v1856 = vunpack.c.h.b16 %v45
  %v1857 = vunpack.c.l.b16 %v46
  %v1858 = vunpack.c.l.b16 %v47
  %v1859 = vunpack.c.h.b16 %v47
  %v1860 = vunpack.c.l.b16 %v48
  %v1861 = vunpack.c.h.b16 %v48
  %v1862 = vunpack.c.l.b16 %v49
  %v1863 = vunpack.c.l.b16 %v50
  %v1864 = vunpack.c.h.b16 %v50
  %v1865 = vunpack.c.l.b16 %v51
  %v1866 = vunpack.c.h.b16 %v51
  %v1867 = vunpack.c.l.b16 %v52
  %v1868 = vunpack.c.l.b16 %v53
  %v1869 = vunpack.c.h.b16 %v53
  %v1870 = vunpack.c.l.b16 %v54
  %v1871 = vunpack.c.h.b16 %v54
  %v1872 = vunpack.c.l.b16 %v55
  %v1873 = vunpack.c.l.b16 %v56
  %v1874 = vunpack.c.h.b16 %v56
  %v1875 = vunpack.c.l.b16 %v57
  %v1876 = vunpack.c.h.b16 %v57
  %v1877 = vunpack.c.l.b16 %v58
  %v1878 = vunpack.c.l.b16 %v59
  %v1879 = vunpack.c.h.b16 %v59
  %v1880 = vunpack.c.l.b16 %v60
  %v1881 = vunpack.c.h.b16 %v60
  %v1882 = vunpack.c.l.b16 %v61
  %v1883 = vunpack.c.l.b16 %v62
  %v1884 = vunpack.c.h.b16 %v62
  %v1885 = vunpack.c.l.b16 %v63
  %v1886 = vunpack.c.h.b16 %v63
  %v1887 = vunpack.c.l.b16 %v64
  %v1888 = vunpack.c.l.b16 %v65
  %v1889 = vunpack.c.h.b16 %v65
  %v1890 = vunpack.c.l.b16 %v66
  %v1891 = vunpack.c.h.b16 %v66
  %v1892 = vunpack.c.l.b16 %v67
  %v1893 = vunpack.c.l.b16 %v68
  %v1894 = vunpack.c.h.b16 %v68
  %v1895 = vunpack.c.l.b16 %v69
  %v1896 = vunpack.c.h.b16 %v69
  %v1897 = vunpack.c.l.b16 %v70
  %v1898 = vunpack.c.l.b16 %v71
  %v1899 = vunpack.c.h.b16 %v71
  %v1900 = vunpack.c.l.b16 %v72
  %v1901 = vunpack.c.h.b16 %v72
  %v1902 = vunpack.c.l.b16 %v73
  %v1903 = vunpack.c.l.b16 %v74
  %v1904 = vunpack.c.h.b16 %v74
  %v1905 = vunpack.c.l.b16 %v75
  %v1906 = vunpack.c.h.b16 %v75
  %v1907 = vunpack.c.l.b16 %v76
  %v1908 = vunpack.c.l.b16 %v77
  %v1909 = vunpack.c.h.b16 %v77
  %v1910 = vunpack.c.l.b16 %v78
  %v1911 = vunpack.c.h.b16 %v78
  %v1912 = vunpack.c.l.b16 %v79
  %v1913 = vunpack.c.l.b16 %v80
  %v1914 = vunpack.c.h.b16 %v80
  %v1915 = vunpack.c.l.b16 %v81
  %v1916 = vunpack.c.h.b16 %v81
  %v1917 = vunpack.c.l.b16 %v82
  %v1918 = vunpack.c.l.b16 %v83
  %v1919 = vunpack.c.h.b16 %v83
  %v1920 = vunpack.c.l.b16 %v84
  %v1921 = vunpack.c.h.b16 %v84
  %v1922 = vunpack.c.l.b16 %v85
  %v1923 = vunpack.c.l.b16 %v86
  %v1924 = vunpack.c.h.b16 %v86
  %v1925 = vunpack.c.l.b16 %v87
  %v1926 = vunpack.c.h.b16 %v87
  %v1927 = vunpack.c.l.b16 %v88
  %v1928 = vunpack.c.l.b16 %v89
  %v1929 = vunpack.c.h.b16 %v89
  %v1930 = vunpack.c.l.b16 %v90
  %v1931 = vunpack.c.h.b16 %v90
  %v1932 = vunpack.c.l.b16 %v91
  %v1933 = vunpack.c.l.b16 %v92
  %v1934 = vunpack.c.h.b16 %v92
  %v1935 = vunpack.c.l.b16 %v93
  %v1936 = vunpack.c.h.b16 %v93
  %v1937 = vunpack.c.l.b16 %v94
  %v1938 = vunpack.c.l.b16 %v95
  %v1939 = vunpack.c.h.b16 %v95
  %v1940 = vunpack.c.l.b16 %v96
  %v1941 = vunpack.c.h.b16 %v96
  %v1942 = vunpack.c.l.b16 %v97
  %v1943 = vunpack.c.l.b16 %v98
  %v1944 = vunpack.c.h.b16 %v98
  %v1945 = vunpack.c.l.b16 %v99
  %v1946 = vunpack.c.h.b16 %v99
  %v1947 = vunpack.c.l.b16 %v100
  %v1948 = vunpack.c.l.b16 %v101
  %v1949 = vunpack.c.h.b16 %v101
  %v1950 = vunpack.c.l.b16 %v102
  %v1951 = vunpack.c.h.b16 %v102
  %v1952 = vunpack.c.l.b16 %v103
  %v1953 = vunpack.c.l.b16 %v104
  %v1954 = vunpack.c.h.b16 %v104
  %v1955 = vunpack.c.l.b16 %v105
  %v1956 = vunpack.c.h.b16 %v105
  %v1957 = vunpack.c.l.b16 %v106
  %v1958 = vunpack.c.l.b16 %v107
  %v1959 = vunpack.c.h.b16 %v107
  %v1960 = vunpack.c.l.b16 %v108
  %v1961 = vunpack.c.h.b16 %v108
  %v1962 = vunpack.c.l.b16 %v109
  %v1963 = vunpack.c.l.b16 %v110
  %v1964 = vunpack.c.h.b16 %v110
  %v1965 = vunpack.c.l.b16 %v111
  %v1966 = vunpack.c.h.b16 %v111
  %v1967 = vunpack.c.l.b16 %v112
  %v1968 = vunpack.c.l.b16 %v113
  %v1969 = vunpack.c.h.b16 %v113
  %v1970 = vunpack.c.l.b16 %v114
  %v1971 = vunpack.c.h.b16 %v114
  %v1972 = vunpack.c.l.b16 %v115
  %v1973 = vunpack.c.l.b16 %v116
  %v1974 = vunpack.c.h.b16 %v116
  %v1975 = vunpack.c.l.b16 %v117
  %v1976 = vunpack.c.h.b16 %v117
  %v1977 = vunpack.c.l.b16 %v118
  %v1978 = vunpack.c.l.b16 %v119
  %v1979 = vunpack.c.h.b16 %v119
  %v1980 = vunpack.c.l.b16 %v120
  %v1981 = vunpack.c.h.b16 %v120
  %v1982 = vunpack.c.l.b16 %v121
  %v1983 = vunpack.c.l.b16 %v122
  %v1984 = vunpack.c.h.b16 %v122
  %v1985 = vunpack.c.l.b16 %v123
  %v1986 = vunpack.c.h.b16 %v123
  %v1987 = vunpack.c.l.b16 %v124
  %v1988 = vunpack.c.l.b16 %v125
  %v1989 = vunpack.c.h.b16 %v125
  %v1990 = vunpack.c.l.b16 %v126
  %v1991 = vunpack.c.h.b16 %v126
  %v1992 = vunpack.c.l.b16 %v127
  %v1993 = vunpack.c.l.b16 %v128
  %v1994 = vunpack.c.h.b16 %v128
  %v1995 = vunpack.c.l.b16 %v129
  %v1996 = vunpack.c.h.b16 %v129
  %v1997 = vunpack.c.l.b16 %v130
  %v1998 = vunpack.c.l.b16 %v131
  %v1999 = vunpack.c.h.b16 %v131
  %v2000 = vunpack.c.l.b16 %v132
  %v2001 = vunpack.c.h.b16 %v132
  %v2002 = vunpack.c.l.b16 %v133
  %v2003 = vunpack.c.l.b16 %v134
  %v2004 = vunpack.c.h.b16 %v134
  %v2005 = vunpack.c.l.b16 %v135
  %v2006 = vunpack.c.h.b16 %v135
  %v2007 = vunpack.c.l.b16 %v136
  %v2008 = vunpack.c.l.b16 %v137
  %v2009 = vunpack.c.h.b16 %v137
  %v2010 = vunpack.c.l.b16 %v138
  %v2011 = vunpack.c.h.b16 %v138
  %v2012 = vunpack.c.l.b16 %v139
  %v2013 = vunpack.c.l.b16 %v140
  %v2014 = vunpack.c.h.b16 %v140
  %v2015 = vunpack.c.l.b16 %v141
  %v2016 = vunpack.c.h.b16 %v141
  %v2017 = vunpack.c.l.b16 %v142
  %v2018 = vunpack.c.l.b16 %v143
  %v2019 = vunpack.c.h.b16 %v143
  %v2020 = vunpack.c.l.b16 %v144
  %v2021 = vunpack.c.h.b16 %v144
  %v2022 = vunpack.c.l.b16 %v145
  %v2023 = vunpack.c.l.b16 %v146
  %v2024 = vunpack.c.h.b16 %v146
  %v2025 = vunpack.c.l.b16 %v147
  %v2026 = vunpack.c.h.b16 %v147
  %v2027 = vunpack.c.l.b16 %v148
  %v2028 = vunpack.c.l.b16 %v149
  %v2029 = vunpack.c.h.b16 %v149
  %v2030 = vunpack.c.l.b16 %v150
  %v2031 = vunpack.c.h.b16 %v150
  %v2032 = vunpack.c.l.b16 %v151
  %v2033 = vunpack.c.l.b16 %v152
  %v2034 = vunpack.c.h.b16 %v152
  %v2035 = vunpack.c.l.b16 %v153
  %v2036 = vunpack.c.h.b16 %v153
  %v2037 = vunpack.c.l.b16 %v154
  %v2038 = vunpack.c.l.b16 %v155
  %v2039 = vunpack.c.h.b16 %v155
  %v2040 = vunpack.c.l.b16 %v156
  %v2041 = vunpack.c.h.b16 %v156
  %v2042 = vunpack.c.l.b16 %v157
  %v2043 = vunpack.c.l.b16 %v158
  %v2044 = vunpack.c.h.b16 %v158
  %v2045 = vunpack.c.l.b16 %v159
  %v2046 = vunpack.c.h.b16 %v159
  %v2047 = vunpack.c.l.b16 %v160
  %v2048 = vunpack.c.l.b16 %v161
  %v2049 = vunpack.c.h.b16 %v161
  %v2050 = vunpack.c.l.b16 %v162
  %v2051 = vunpack.c.h.b16 %v162
  %v2052 = vunpack.c.l.b16 %v163
  %v2053 = vunpack.c.l.b16 %v164
  %v2054 = vunpack.c.h.b16 %v164
  %v2055 = vunpack.c.l.b16 %v165
  %v2056 = vunpack.c.h.b16 %v165
  %v2057 = vunpack.c.l.b16 %v166
  %v2058 = vunpack.c.l.b16 %v167
  %v2059 = vunpack.c.h.b16 %v167
  %v2060 = vunpack.c.l.b16 %v168
  %v2061 = vunpack.c.h.b16 %v168
  %v2062 = vunpack.c.l.b16 %v169
  %v2063 = vunpack.c.l.b16 %v170
  %v2064 = vunpack.c.h.b16 %v170
  %v2065 = vunpack.c.l.b16 %v171
  %v2066 = vunpack.c.h.b16 %v171
  %v2067 = vunpack.c.l.b16 %v172
  %v2068 = vunpack.c.l.b16 %v173
  %v2069 = vunpack.c.h.b16 %v173
  %v2070 = vunpack.c.l.b16 %v174
  %v2071 = vunpack.c.h.b16 %v174
  %v2072 = vunpack.c.l.b16 %v175
  %v2073 = vunpack.c.l.b16 %v176
  %v2074 = vunpack.c.h.b16 %v176
  %v2075 = vunpack.c.l.b16 %v177
  %v2076 = vunpack.c.h.b16 %v177
  %v2077 = vunpack.c.l.b16 %v178
  %v2078 = vunpack.c.l.b16 %v179
  %v2079 = vunpack.c.h.b16 %v179
  %v2080 = vunpack.c.l.b16 %v180
  %v2081 = vunpack.c.h.b16 %v180
  %v2082 = vunpack.c.l.b16 %v181
  %v2083 = vunpack.c.l.b16 %v182
  %v2084 = vunpack.c.h.b16 %v182
  %v2085 = vunpack.c.l.b16 %v183
  %v2086 = vunpack.c.h.b16 %v183
  %v2087 = vunpack.c.l.b16 %v184
  %v2088 = vunpack.c.l.b16 %v185
  %v2089 = vunpack.c.h.b16 %v185
  %v2090 = vunpack.c.l.b16 %v186
  %v2091 = vunpack.c.h.b16 %v186
  %v2092 = vunpack.c.l.b16 %v187
  %v2093 = vunpack.c.l.b16 %v188
  %v2094 = vunpack.c.h.b16 %v188
  %v2095 = vunpack.c.l.b16 %v189
  %v2096 = vunpack.c.h.b16 %v189
  %v2097 = vunpack.c.l.b16 %v190
  %v2098 = vunpack.c.l.b16 %v191
  %v2099 = vunpack.c.h.b16 %v191
  %v2100 = vunpack.c.l.b16 %v192
  %v2101 = vunpack.c.h.b16 %v192
  %v2102 = vunpack.c.l.b16 %v193
  %v2103 = vunpack.c.l.b16 %v194
  %v2104 = vunpack.c.h.b16 %v194
  %v2105 = vunpack.c.l.b16 %v195
  %v2106 = vunpack.c.h.b16 %v195
  %v2107 = vunpack.c.l.b16 %v196
  %v2108 = vunpack.c.l.b16 %v197
  %v2109 = vunpack.c.h.b16 %v197
  %v2110 = vunpack.c.l.b16 %v198
  %v2111 = vunpack.c.h.b16 %v198
  %v2112 = vunpack.c.l.b16 %v199
  %v2113 = vunpack.c.l.b16 %v200
  %v2114 = vunpack.c.h.b16 %v200
  %v2115 = vunpack.c.l.b16 %v201
  %v2116 = vunpack.c.h.b16 %v201
  %v2117 = vunpack.c.l.b16 %v202
  %v2118 = vunpack.c.l.b16 %v203
  %v2119 = vunpack.c.h.b16 %v203
  %v2120 = vunpack.c.l.b16 %v204
  %v2121 = vunpack.c.h.b16 %v204
  %v2122 = vunpack.c.l.b16 %v205
  %v2123 = vunpack.c.l.b16 %v206
  %v2124 = vunpack.c.h.b16 %v206
  %v2125 = vunpack.c.l.b16 %v207
  %v2126 = vunpack.c.h.b16 %v207
  %v2127 = vunpack.c.l.b16 %v208
  %v2128 = vunpack.c.l.b16 %v209
  %v2129 = vunpack.c.h.b16 %v209
  %v2130 = vunpack.c.l.b16 %v210
  %v2131 = vunpack.c.h.b16 %v210
  %v2132 = vunpack.c.l.b16 %v211
  %v2133 = vunpack.c.l.b16 %v212
  %v2134 = vunpack.c.h.b16 %v212
  %v2135 = vunpack.c.l.b16 %v213
  %v2136 = vunpack.c.h.b16 %v213
  %v2137 = vunpack.c.l.b16 %v214
  %v2138 = vunpack.c.l.b16 %v215
  %v2139 = vunpack.c.h.b16 %v215
  %v2140 = vunpack.c.l.b16 %v216
  %v2141 = vunpack.c.h.b16 %v216
  %v2142 = vunpack.c.l.b16 %v217
  %v2143 = vunpack.c.l.b16 %v218
  %v2144 = vunpack.c.h.b16 %v218
  %v2145 = vunpack.c.l.b16 %v219
  %v2146 = vunpack.c.h.b16 %v219
  %v2147 = vunpack.c.l.b16 %v220
  %v2148 = vunpack.c.l.b16 %v221
  %v2149 = vunpack.c.h.b16 %v221
  %v2150 = vunpack.c.l.b16 %v222
  %v2151 = vunpack.c.h.b16 %v222
  %v2152 = vunpack.c.l.b16 %v223
  %v2153 = vunpack.c.l.b16 %v224
  %v2154 = vunpack.c.h.b16 %v224
  %v2155 = vunpack.c.l.b16 %v225
  %v2156 = vunpack.c.h.b16 %v225
  %v2157 = vunpack.c.l.b16 %v226
  %v2158 = vunpack.c.l.b16 %v227
  %v2159 = vunpack.c.h.b16 %v227
  %v2160 = vunpack.c.l.b16 %v228
  %v2161 = vunpack.c.h.b16 %v228
  %v2162 = vunpack.c.l.b16 %v229
  %v2163 = vunpack.c.l.b16 %v230
  %v2164 = vunpack.c.h.b16 %v230
  %v2165 = vunpack.c.l.b16 %v231
  %v2166 = vunpack.c.h.b16 %v231
  %v2167 = vunpack.c.l.b16 %v232
  %v2168 = vunpack.c.l.b16 %v233
  %v2169 = vunpack.c.h.b16 %v233
  %v2170 = vunpack.c.l.b16 %v234
  %v2171 = vunpack.c.h.b16 %v234
  %v2172 = vunpack.c.l.b16 %v235
  %v2173 = vunpack.c.l.b16 %v236
  %v2174 = vunpack.c.h.b16 %v236
  %v2175 = vunpack.c.l.b16 %v237
  %v2176 = vunpack.c.h.b16 %v237
  %v2177 = vunpack.c.l.b16 %v238
  %v2178 = vunpack.c.l.b16 %v239
  %v2179 = vunpack.c.h.b16 %v239
  %v2180 = vunpack.c.l.b16 %v240
  %v2181 = vunpack.c.h.b16 %v240
  %v2182 = vunpack.c.l.b16 %v241
  %v2183 = vunpack.c.l.b16 %v242
  %v2184 = vunpack.c.h.b16 %v242
  %v2185 = vunpack.c.l.b16 %v243
  %v2186 = vunpack.c.h.b16 %v243
  %v2187 = vunpack.c.l.b16 %v244
  %v2188 = vunpack.c.l.b16 %v245
  %v2189 = vunpack.c.h.b16 %v245
  %v2190 = vunpack.c.l.b16 %v246
  %v2191 = vunpack.c.h.b16 %v246
  %v2192 = vunpack.c.l.b16 %v247
  %v2193 = vunpack.c.l.b16 %v248
  %v2194 = vunpack.c.h.b16 %v248
  %v2195 = vunpack.c.l.b16 %v249
  %v2196 = vunpack.c.h.b16 %v249
  %v2197 = vunpack.c.l.b16 %v250
  %v2198 = vunpack.c.l.b16 %v251
  %v2199 = vunpack.c.h.b16 %v251
  %v2200 = vunpack.c.l.b16 %v252
  %v2201 = vunpack.c.h.b16 %v252
  %v2202 = vunpack.c.l.b16 %v253
  %v2203 = vunpack.c.l.b16 %v254
  %v2204 = vunpack.c.h.b16 %v254
  %v2205 = vunpack.c.l.b16 %v255
  %v2206 = vunpack.c.h.b16 %v255
  %v2207 = vunpack.c.l.b16 %v256
  %v2208 = vunpack.c.l.b16 %v257
  %v2209 = vunpack.c.h.b16 %v257
  %v2210 = vunpack.c.l.b16 %v258
  %v2211 = vunpack.c.h.b16 %v258
  %v2212 = vunpack.c.l.b16 %v259
  %v2213 = vunpack.c.l.b16 %v260
  %v2214 = vunpack.c.h.b16 %v260
  %v2215 = vunpack.c.l.b16 %v261
  %v2216 = vunpack.c.h.b16 %v261
  %v2217 = vunpack.c.l.b16 %v262
  %v2218 = vunpack.c.l.b16 %v263
  %v2219 = vunpack.c.h.b16 %v263
  %v2220 = vunpack.c.l.b16 %v264
  %v2221 = vunpack.c.h.b16 %v264
  %v2222 = vunpack.c.l.b16 %v265
  %v2223 = vunpack.c.l.b16 %v266
  %v2224 = vunpack.c.h.b16 %v266
  %v2225 = vunpack.c.l.b16 %v267
  %v2226 = vunpack.c.h.b16 %v267
  %v2227 = vunpack.c.l.b16 %v268
  %v2228 = vunpack.c.l.b16 %v269
  %v2229 = vunpack.c.h.b16 %v269
  %v2230 = vunpack.c.l.b16 %v270
  %v2231 = vunpack.c.h.b16 %v270
  %v2232 = vunpack.c.l.b16 %v271
  %v2233 = vunpack.c.l.b16 %v272
  %v2234 = vunpack.c.h.b16 %v272
  %v2235 = vunpack.c.l.b16 %v273
  %v2236 = vunpack.c.h.b16 %v273
  %v2237 = vunpack.c.l.b16 %v274
  %v2238 = vunpack.c.l.b16 %v275
  %v2239 = vunpack.c.h.b16 %v275
  %v2240 = vunpack.c.l.b16 %v276
  %v2241 = vunpack.c.h.b16 %v276
  %v2242 = vunpack.c.l.b16 %v277
  %v2243 = vunpack.c.l.b16 %v278
  %v2244 = vunpack.c.h.b16 %v278
  %v2245 = vunpack.c.l.b16 %v279
  %v2246 = vunpack.c.h.b16 %v279
  %v2247 = vunpack.c.l.b16 %v280
  %v2248 = vunpack.c.l.b16 %v281
  %v2249 = vunpack.c.h.b16 %v281
  %v2250 = vunpack.c.l.b16 %v282
  %v2251 = vunpack.c.h.b16 %v282
  %v2252 = vunpack.c.l.b16 %v283
  %v2253 = vunpack.c.l.b16 %v284
  %v2254 = vunpack.c.h.b16 %v284
  %v2255 = vunpack.c.l.b16 %v285
  %v2256 = vunpack.c.h.b16 %v285
  %v2257 = vunpack.c.l.b16 %v286
  %v2258 = vunpack.c.l.b16 %v287
  %v2259 = vunpack.c.h.b16 %v287
  %v2260 = vunpack.c.l.b16 %v288
  %v2261 = vunpack.c.h.b16 %v288
  %v2262 = vunpack.c.l.b16 %v289
  %v2263 = vunpack.c.l.b16 %v290
  %v2264 = vunpack.c.h.b16 %v290
  %v2265 = vunpack.c.l.b16 %v291
  %v2266 = vunpack.c.h.b16 %v291
  %v2267 = vunpack.c.l.b16 %v292
  %v2268 = vunpack.c.l.b16 %v293
  %v2269 = vunpack.c.h.b16 %v293
  %v2270 = vunpack.c.l.b16 %v294
  %v2271 = vunpack.c.h.b16 %v294
  %v2272 = vunpack.c.l.b16 %v295
  %v2273 = vunpack.c.l.b16 %v296
  %v2274 = vunpack.c.h.b16 %v296
  %v2275 = vunpack.c.l.b16 %v297
  %v2276 = vunpack.c.h.b16 %v297
  %v2277 = vunpack.c.l.b16 %v298
  %v2278 = vunpack.c.l.b16 %v299
  %v2279 = vunpack.c.h.b16 %v299
  %v2280 = vunpack.c.l.b16 %v300
  %v2281 = vunpack.c.h.b16 %v300
  %v2282 = vunpack.c.l.b16 %v301
  %v2283 = vunpack.c.l.b16 %v302
  %v2284 = vunpack.c.h.b16 %v302
  %v2285 = vunpack.c.l.b16 %v303
  %v2286 = vunpack.c.h.b16 %v303
  %v2287 = vunpack.c.l.b16 %v304
  %v2288 = vunpack.c.l.b16 %v305
  %v2289 = vunpack.c.h.b16 %v305
  %v2290 = vunpack.c.l.b16 %v306
  %v2291 = vunpack.c.h.b16 %v306
  %v2292 = vunpack.c.l.b16 %v307
  %v2293 = vunpack.c.l.b16 %v308
  %v2294 = vunpack.c.h.b16 %v308
  %v2295 = vunpack.c.l.b16 %v309
  %v2296 = vunpack.c.h.b16 %v309
  %v2297 = vunpack.c.l.b16 %v310
  %v2298 = vunpack.c.l.b16 %v311
  %v2299 = vunpack.c.h.b16 %v311
  %v2300 = vunpack.c.l.b16 %v312
  %v2301 = vunpack.c.h.b16 %v312
  %v2302 = vunpack.c.l.b16 %v313
  %v2303 = vunpack.c.l.b16 %v314
  %v2304 = vunpack.c.h.b16 %v314
  %v2305 = vunpack.c.l.b16 %v315
  %v2306 = vunpack.c.h.b16 %v315
  %v2307 = vunpack.c.l.b16 %v316
  %v2308 = vunpack.c.l.b16 %v317
  %v2309 = vunpack.c.h.b16 %v317
  %v2310 = vunpack.c.l.b16 %v318
  %v2311 = vunpack.c.h.b16 %v318
  %v2312 = vunpack.c.l.b16 %v319
  %v2313 = vunpack.c.l.b16 %v320
  %v2314 = vunpack.c.h.b16 %v320
  %v2315 = vunpack.c.l.b16 %v321
  %v2316 = vunpack.c.h.b16 %v321
  %v2317 = vunpack.c.l.b16 %v322
  %v2318 = vunpack.c.l.b16 %v323
  %v2319 = vunpack.c.h.b16 %v323
  %v2320 = vunpack.c.l.b16 %v324
  %v2321 = vunpack.c.h.b16 %v324
  %v2322 = vunpack.c.l.b16 %v325
  %v2323 = vunpack.c.l.b16 %v326
  %v2324 = vunpack.c.h.b16 %v326
  %v2325 = vunpack.c.l.b16 %v327
  %v2326 = vunpack.c.h.b16 %v327
  %v2327 = vunpack.c.l.b16 %v328
  %v2328 = vunpack.c.l.b16 %v329
  %v2329 = vunpack.c.h.b16 %v329
  %v2330 = vunpack.c.l.b16 %v330
  %v2331 = vunpack.c.h.b16 %v330
  %v2332 = vunpack.c.l.b16 %v331
  %v2333 = vunpack.c.l.b16 %v332
  %v2334 = vunpack.c.h.b16 %v332
  %v2335 = vunpack.c.l.b16 %v333
  %v2336 = vunpack.c.h.b16 %v333
  %v2337 = vunpack.c.l.b16 %v334
  %v2338 = vunpack.c.l.b16 %v335
  %v2339 = vunpack.c.h.b16 %v335
  %v2340 = vunpack.c.l.b16 %v336
  %v2341 = vunpack.c.h.b16 %v336
  %v2342 = vunpack.c.l.b16 %v337
  %v2343 = vunpack.c.l.b16 %v338
  %v2344 = vunpack.c.h.b16 %v338
  %v2345 = vunpack.c.l.b16 %v339
  %v2346 = vunpack.c.h.b16 %v339
  %v2347 = vunpack.c.l.b16 %v340
  %v2348 = vunpack.c.l.b16 %v341
  %v2349 = vunpack.c.h.b16 %v341
  %v2350 = vunpack.c.l.b16 %v342
  %v2351 = vunpack.c.h.b16 %v342
  %v2352 = vunpack.c.l.b16 %v343
  %v2353 = vunpack.c.l.b16 %v344
  %v2354 = vunpack.c.h.b16 %v344
  %v2355 = vunpack.c.l.b16 %v345
  %v2356 = vunpack.c.h.b16 %v345
  %v2357 = vunpack.c.l.b16 %v346
  %v2358 = vunpack.c.l.b16 %v347
  %v2359 = vunpack.c.h.b16 %v347
  %v2360 = vunpack.c.l.b16 %v348
  %v2361 = vunpack.c.h.b16 %v348
  %v2362 = vunpack.c.l.b16 %v349
  %v2363 = vunpack.c.l.b16 %v350
  %v2364 = vunpack.c.h.b16 %v350
  %v2365 = vunpack.c.l.b16 %v351
  %v2366 = vunpack.c.h.b16 %v351
  %v2367 = vunpack.c.l.b16 %v352
  %v2368 = vunpack.c.l.b16 %v353
  %v2369 = vunpack.c.h.b16 %v353
  %v2370 = vunpack.c.l.b16 %v354
  %v2371 = vunpack.c.h.b16 %v354
  %v2372 = vunpack.c.l.b16 %v355
  %v2373 = vunpack.c.l.b16 %v356
  %v2374 = vunpack.c.h.b16 %v356
  %v2375 = vunpack.c.l.b16 %v357
  %v2376 = vunpack.c.h.b16 %v357
  %v2377 = vunpack.c.l.b16 %v358
  %v2378 = vunpack.c.l.b16 %v359
  %v2379 = vunpack.c.h.b16 %v359
  %v2380 = vunpack.c.l.b16 %v360
  %v2381 = vunpack.c.h.b16 %v360
  %v2382 = vunpack.c.l.b16 %v361
  %v2383 = vunpack.c.l.b16 %v362
  %v2384 = vunpack.c.h.b16 %v362
  %v2385 = vunpack.c.l.b16 %v363
  %v2386 = vunpack.c.h.b16 %v363
  %v2387 = vunpack.c.l.b16 %v364
  %v2388 = vunpack.c.l.b16 %v365
  %v2389 = vunpack.c.h.b16 %v365
  %v2390 = vunpack.c.l.b16 %v366
  %v2391 = vunpack.c.h.b16 %v366
  %v2392 = vunpack.c.l.b16 %v367
  %v2393 = vunpack.c.l.b16 %v368
  %v2394 = vunpack.c.h.b16 %v368
  %v2395 = vunpack.c.l.b16 %v369
  %v2396 = vunpack.c.h.b16 %v369
  %v2397 = vunpack.c.l.b16 %v370
  %v2398 = vunpack.c.l.b16 %v371
  %v2399 = vunpack.c.h.b16 %v371
  %v2400 = vunpack.c.l.b16 %v372
  %v2401 = vunpack.c.h.b16 %v372
  %v2402 = vunpack.c.l.b16 %v373
  %v2403 = vunpack.c.l.b16 %v374
  %v2404 = vunpack.c.h.b16 %v374
  %v2405 = vunpack.c.l.b16 %v375
  %v2406 = vunpack.c.h.b16 %v375
  %v2407 = vunpack.c.l.b16 %v376
  %v2408 = vunpack.c.l.b16 %v377
  %v2409 = vunpack.c.h.b16 %v377
  %v2410 = vunpack.c.l.b16 %v378
  %v2411 = vunpack.c.h.b16 %v378
  %v2412 = vunpack.c.l.b16 %v379
  %v2413 = vunpack.c.l.b16 %v380
  %v2414 = vunpack.c.h.b16 %v380
  %v2415 = vunpack.c.l.b16 %v381
  %v2416 = vunpack.c.h.b16 %v381
  %v2417 = vunpack.c.l.b16 %v382
  %v2418 = vunpack.c.l.b16 %v383
  %v2419 = vunpack.c.h.b16 %v383
  %v2420 = vunpack.c.l.b16 %v384
  %v2421 = vunpack.c.h.b16 %v384
  %v2422 = vunpack.c.l.b16 %v385
  %v2423 = vunpack.c.l.b16 %v386
  %v2424 = vunpack.c.h.b16 %v386
  %v2425 = vunpack.c.l.b16 %v387
  %v2426 = vunpack.c.h.b16 %v387
  %v2427 = vunpack.c.l.b16 %v388
  %v2428 = vunpack.c.l.b16 %v389
  %v2429 = vunpack.c.h.b16 %v389
  %v2430 = vunpack.c.l.b16 %v390
  %v2431 = vunpack.c.h.b16 %v390
  %v2432 = vunpack.c.l.b16 %v391
  %v2433 = vunpack.c.l.b16 %v392
  %v2434 = vunpack.c.h.b16 %v392
  %v2435 = vunpack.c.l.b16 %v393
  %v2436 = vunpack.c.h.b16 %v393
  %v2437 = vunpack.c.l.b16 %v394
  %v2438 = vunpack.c.l.b16 %v395
  %v2439 = vunpack.c.h.b16 %v395
  %v2440 = vunpack.c.l.b16 %v396
  %v2441 = vunpack.c.h.b16 %v396
  %v2442 = vunpack.c.l.b16 %v397
  %v2443 = vunpack.c.l.b16 %v398
  %v2444 = vunpack.c.h.b16 %v398
  %v2445 = vunpack.c.l.b16 %v399
  %v2446 = vunpack.c.h.b16 %v399
  %v2447 = vunpack.c.l.b16 %v400
  %v2448 = vunpack.c.l.b16 %v401
  %v2449 = vunpack.c.h.b16 %v401
  %v2450 = vunpack.c.l.b16 %v402
  %v2451 = vunpack.c.h.b16 %v402
  %v2452 = vunpack.c.l.b16 %v403
  %v2453 = vunpack.c.l.b16 %v404
  %v2454 = vunpack.c.h.b16 %v404
  %v2455 = vunpack.c.l.b16 %v405
  %v2456 = vunpack.c.h.b16 %v405
  %v2457 = vunpack.c.l.b16 %v406
  %v2458 = vunpack.c.l.b16 %v407
  %v2459 = vunpack.c.h.b16 %v407
  %v2460 = vunpack.c.l.b16 %v408
  %v2461 = vunpack.c.h.b16 %v408
  %v2462 = vunpack.c.l.b16 %v409
  %v2463 = vunpack.c.l.b16 %v410
  %v2464 = vunpack.c.h.b16 %v410
  %v2465 = vunpack.c.l.b16 %v411
  %v2466 = vunpack.c.h.b16 %v411
  %v2467 = vunpack.c.l.b16 %v412
  %v2468 = vunpack.c.l.b16 %v413
  %v2469 = vunpack.c.h.b16 %v413
  %v2470 = vunpack.c.l.b16 %v414
  %v2471 = vunpack.c.h.b16 %v414
  %v2472 = vunpack.c.l.b16 %v415
  %v2473 = vunpack.c.l.b16 %v416
  %v2474 = vunpack.c.h.b16 %v416
  %v2475 = vunpack.c.l.b16 %v417
  %v2476 = vunpack.c.h.b16 %v417
  %v2477 = vunpack.c.l.b16 %v418
  %v2478 = vunpack.c.l.b16 %v419
  %v2479 = vunpack.c.h.b16 %v419
  %v2480 = vunpack.c.l.b16 %v420
  %v2481 = vunpack.c.h.b16 %v420
  %v2482 = vunpack.c.l.b16 %v421
  %v2483 = vunpack.c.l.b16 %v422
  %v2484 = vunpack.c.h.b16 %v422
  %v2485 = vunpack.c.l.b16 %v423
  %v2486 = vunpack.c.h.b16 %v423
  %v2487 = vunpack.c.l.b16 %v424
  %v2488 = vunpack.c.l.b16 %v425
  %v2489 = vunpack.c.h.b16 %v425
  %v2490 = vunpack.c.l.b16 %v426
  %v2491 = vunpack.c.h.b16 %v426
  %v2492 = vunpack.c.l.b16 %v427
  %v2493 = vunpack.c.l.b16 %v428
  %v2494 = vunpack.c.h.b16 %v428
  %v2495 = vunpack.c.l.b16 %v429
  %v2496 = vunpack.c.h.b16 %v429
  %v2497 = vunpack.c.l.b16 %v430
  %v2498 = vunpack.c.l.b16 %v431
  %v2499 = vunpack.c.h.b16 %v431
  %v2500 = vunpack.c.l.b16 %v432
  %v2501 = vunpack.c.h.b16 %v432
  %v2502 = vunpack.c.l.b16 %v433
  %v2503 = vunpack.c.l.b16 %v434
  %v2504 = vunpack.c.h.b16 %v434
  %v2505 = vunpack.c.l.b16 %v435
  %v2506 = vunpack.c.h.b16 %v435
  %v2507 = vunpack.c.l.b16 %v436
  %v2508 = vunpack.c.l.b16 %v437
  %v2509 = vunpack.c.h.b16 %v437
  %v2510 = vunpack.c.l.b16 %v438
  %v2511 = vunpack.c.h.b16 %v438
  %v2512 = vunpack.c.l.b16 %v439
  %v2513 = vunpack.c.l.b16 %v440
  %v2514 = vunpack.c.h.b16 %v440
  %v2515 = vunpack.c.l.b16 %v441
  %v2516 = vunpack.c.h.b16 %v441
  %v2517 = vunpack.c.l.b16 %v442
  %v2518 = vunpack.c.l.b16 %v443
  %v2519 = vunpack.c.h.b16 %v443
  %v2520 = vunpack.c.l.b16 %v444
  %v2521 = vunpack.c.h.b16 %v444
  %v2522 = vunpack.c.l.b16 %v445
  %v2523 = vunpack.c.l.b16 %v446
  %v2524 = vunpack.c.h.b16 %v446
  %v2525 = vunpack.c.l.b16 %v447
  %v2526 = vunpack.c.h.b16 %v447
  %v2527 = vunpack.c.l.b16 %v448
  %v2528 = vunpack.c.l.b16 %v449
  %v2529 = vunpack.c.h.b16 %v449
  %v2530 = vunpack.c.l.b16 %v450
  %v2531 = vunpack.c.h.b16 %v450
  %v2532 = vunpack.c.l.b16 %v451
  %v2533 = vunpack.c.l.b16 %v452
  %v2534 = vunpack.c.h.b16 %v452
  %v2535 = vunpack.c.l.b16 %v453
  %v2536 = vunpack.c.h.b16 %v453
  %v2537 = vunpack.c.l.b16 %v454
  %v2538 = vunpack.c.l.b16 %v455
  %v2539 = vunpack.c.h.b16 %v455
  %v2540 = vunpack.c.l.b16 %v456
  %v2541 = vunpack.c.h.b16 %v456
  %v2542 = vunpack.c.l.b16 %v457
  %v2543 = vunpack.c.l.b16 %v458
  %v2544 = vunpack.c.h.b16 %v458
  %v2545 = vunpack.c.l.b16 %v459
  %v2546 = vunpack.c.h.b16 %v459
  %v2547 = vunpack.c.l.b16 %v460
  %v2548 = vunpack.c.l.b16 %v461
  %v2549 = vunpack.c.h.b16 %v461
  %v2550 = vunpack.c.l.b16 %v462
  %v2551 = vunpack.c.h.b16 %v462
  %v2552 = vunpack.c.l.b16 %v463
  %v2553 = vunpack.c.l.b16 %v464
  %v2554 = vunpack.c.h.b16 %v464
  %v2555 = vunpack.c.l.b16 %v465
  %v2556 = vunpack.c.h.b16 %v465
  %v2557 = vunpack.c.l.b16 %v466
  %v2558 = vunpack.c.l.b16 %v467
  %v2559 = vunpack.c.h.b16 %v467
  %v2560 = vunpack.c.l.b16 %v468
  %v2561 = vunpack.c.h.b16 %v468
  %v2562 = vunpack.c.l.b16 %v469
  %v2563 = vunpack.c.l.b16 %v470
  %v2564 = vunpack.c.h.b16 %v470
  %v2565 = vunpack.c.l.b16 %v471
  %v2566 = vunpack.c.h.b16 %v471
  %v2567 = vunpack.c.l.b16 %v472
  %v2568 = vunpack.c.l.b16 %v473
  %v2569 = vunpack.c.h.b16 %v473
  %v2570 = vunpack.c.l.b16 %v474
  %v2571 = vunpack.c.h.b16 %v474
  %v2572 = vunpack.c.l.b16 %v475
  %v2573 = vunpack.c.l.b16 %v476
  %v2574 = vunpack.c.h.b16 %v476
  %v2575 = vunpack.c.l.b16 %v477
  %v2576 = vunpack.c.h.b16 %v477
  %v2577 = vunpack.c.l.b16 %v478
  %v2578 = vunpack.c.l.b16 %v479
  %v2579 = vunpack.c.h.b16 %v479
  %v2580 = vunpack.c.l.b16 %v480
  %v2581 = vunpack.c.h.b16 %v480
  %v2582 = vunpack.c.l.b16 %v481
  %v2583 = vunpack.c.l.b16 %v482
  %v2584 = vunpack.c.h.b16 %v482
  %v2585 = vunpack.c.l.b16 %v483
  %v2586 = vunpack.c.h.b16 %v483
  %v2587 = vunpack.c.l.b16 %v484
  %v2588 = vunpack.c.l.b16 %v485
  %v2589 = vunpack.c.h.b16 %v485
  %v2590 = vunpack.c.l.b16 %v486
  %v2591 = vunpack.c.h.b16 %v486
  %v2592 = vunpack.c.l.b16 %v487
  %v2593 = vunpack.c.l.b16 %v488
  %v2594 = vunpack.c.h.b16 %v488
  %v2595 = vunpack.c.l.b16 %v489
  %v2596 = vunpack.c.h.b16 %v489
  %v2597 = vunpack.c.l.b16 %v490
  %v2598 = vunpack.c.l.b16 %v491
  %v2599 = vunpack.c.h.b16 %v491
  %v2600 = vunpack.c.l.b16 %v492
  %v2601 = vunpack.c.h.b16 %v492
  %v2602 = vunpack.c.l.b16 %v493
  %v2603 = vunpack.c.l.b16 %v494
  %v2604 = vunpack.c.h.b16 %v494
  %v2605 = vunpack.c.l.b16 %v495
  %v2606 = vunpack.c.h.b16 %v495
  %v2607 = vunpack.c.l.b16 %v496
  %v2608 = vunpack.c.l.b16 %v497
  %v2609 = vunpack.c.h.b16 %v497
  %v2610 = vunpack.c.l.b16 %v498
  %v2611 = vunpack.c.h.b16 %v498
  %v2612 = vunpack.c.l.b16 %v499
  %v2613 = vunpack.c.l.b16 %v500
  %v2614 = vunpack.c.h.b16 %v500
  %v2615 = vunpack.c.l.b16 %v501
  %v2616 = vunpack.c.h.b16 %v501
  %v2617 = vunpack.c.l.b16 %v502
  %v2618 = vunpack.c.l.b16 %v503
  %v2619 = vunpack.c.h.b16 %v503
  %v2620 = vunpack.c.l.b16 %v504
  %v2621 = vunpack.c.h.b16 %v504
  %v2622 = vunpack.c.l.b16 %v505
  %v2623 = vunpack.c.l.b16 %v506
  %v2624 = vunpack.c.h.b16 %v506
  %v2625 = vunpack.c.l.b16 %v507
  %v2626 = vunpack.c.h.b16 %v507
  %v2627 = vunpack.c.l.b16 %v508
  %v2628 = vunpack.c.l.b16 %v509
  %v2629 = vunpack.c.h.b16 %v509
  %v2630 = vunpack.c.l.b16 %v510
  %v2631 = vunpack.c.h.b16 %v510
  %v2632 = vunpack.c.l.b16 %v511
  %v2633 = vunpack.c.l.b16 %v512
  %v2634 = vunpack.c.h.b16 %v512
  %v2635 = vunpack.c.l.b16 %v513
  %v2636 = vunpack.c.h.b16 %v513
  %v2637 = vunpack.c.l.b16 %v514
  %v2638 = vunpack.c.l.b16 %v515
  %v2639 = vunpack.c.h.b16 %v515
  %v2640 = vunpack.c.l.b16 %v516
  %v2641 = vunpack.c.h.b16 %v516
  %v2642 = vunpack.c.l.b16 %v517
  %v2643 = vunpack.c.l.b16 %v518
  %v2644 = vunpack.c.h.b16 %v518
  %v2645 = vunpack.c.l.b16 %v519
  %v2646 = vunpack.c.h.b16 %v519
  %v2647 = vunpack.c.l.b16 %v520
  %v2648 = vunpack.c.l.b16 %v521
  %v2649 = vunpack.c.h.b16 %v521
  %v2650 = vunpack.c.l.b16 %v522
  %v2651 = vunpack.c.h.b16 %v522
  %v2652 = vunpack.c.l.b16 %v523
  %v2653 = vunpack.c.l.b16 %v524
  %v2654 = vunpack.c.h.b16 %v524
  %v2655 = vunpack.c.l.b16 %v525
  %v2656 = vunpack.c.h.b16 %v525
  %v2657 = vunpack.c.l.b16 %v526
  %v2658 = vunpack.c.l.b16 %v527
  %v2659 = vunpack.c.h.b16 %v527
  %v2660 = vunpack.c.l.b16 %v528
  %v2661 = vunpack.c.h.b16 %v528
  %v2662 = vunpack.c.l.b16 %v529
  %v2663 = vunpack.c.l.b16 %v530
  %v2664 = vunpack.c.h.b16 %v530
  %v2665 = vunpack.c.l.b16 %v531
  %v2666 = vunpack.c.h.b16 %v531
  %v2667 = vunpack.c.l.b16 %v532
  %v2668 = vunpack.c.l.b16 %v533
  %v2669 = vunpack.c.h.b16 %v533
  %v2670 = vunpack.c.l.b16 %v534
  %v2671 = vunpack.c.h.b16 %v534
  %v2672 = vunpack.c.l.b16 %v535
  %v2673 = vunpack.c.l.b16 %v536
  %v2674 = vunpack.c.h.b16 %v536
  %v2675 = vunpack.c.l.b16 %v537
  %v2676 = vunpack.c.h.b16 %v537
  %v2677 = vunpack.c.l.b16 %v538
  %v2678 = vunpack.c.l.b16 %v539
  %v2679 = vunpack.c.h.b16 %v539
  %v2680 = vunpack.c.l.b16 %v540
  %v2681 = vunpack.c.h.b16 %v540
  %v2682 = vunpack.c.l.b16 %v541
  %v2683 = vunpack.c.l.b16 %v542
  %v2684 = vunpack.c.h.b16 %v542
  %v2685 = vunpack.c.l.b16 %v543
  %v2686 = vunpack.c.h.b16 %v543
  %v2687 = vunpack.c.l.b16 %v544
  %v2688 = vunpack.c.l.b16 %v545
  %v2689 = vunpack.c.h.b16 %v545
  %v2690 = vunpack.c.l.b16 %v546
  %v2691 = vunpack.c.h.b16 %v546
  %v2692 = vunpack.c.l.b16 %v547
  %v2693 = vunpack.c.l.b16 %v548
  %v2694 = vunpack.c.h.b16 %v548
  %v2695 = vunpack.c.l.b16 %v549
  %v2696 = vunpack.c.h.b16 %v549
  %v2697 = vunpack.c.l.b16 %v550
  %v2698 = vunpack.c.l.b16 %v551
  %v2699 = vunpack.c.h.b16 %v551
  %v2700 = vunpack.c.l.b16 %v552
  %v2701 = vunpack.c.h.b16 %v552
  %v2702 = vunpack.c.l.b16 %v553
  %v2703 = vunpack.c.l.b16 %v554
  %v2704 = vunpack.c.h.b16 %v554
  %v2705 = vunpack.c.l.b16 %v555
  %v2706 = vunpack.c.h.b16 %v555
  %v2707 = vunpack.c.l.b16 %v556
  %v2708 = vunpack.c.l.b16 %v557
  %v2709 = vunpack.c.h.b16 %v557
  %v2710 = vunpack.c.l.b16 %v558
  %v2711 = vunpack.c.h.b16 %v558
  %v2712 = vunpack.c.l.b16 %v559
  %v2713 = vunpack.c.l.b16 %v560
  %v2714 = vunpack.c.h.b16 %v560
  %v2715 = vunpack.c.l.b16 %v561
  %v2716 = vunpack.c.h.b16 %v561
  %v2717 = vunpack.c.l.b16 %v562
  %v2718 = vunpack.c.l.b16 %v563
  %v2719 = vunpack.c.h.b16 %v563
  %v2720 = vunpack.c.l.b16 %v564
  %v2721 = vunpack.c.h.b16 %v564
  %v2722 = vunpack.c.l.b16 %v565
  %v2723 = vunpack.c.l.b16 %v566
  %v2724 = vunpack.c.h.b16 %v566
  %v2725 = vunpack.c.l.b16 %v567
  %v2726 = vunpack.c.h.b16 %v567
  %v2727 = vunpack.c.l.b16 %v568
  %v2728 = vunpack.c.l.b16 %v569
  %v2729 = vunpack.c.h.b16 %v569
  %v2730 = vunpack.c.l.b16 %v570
  %v2731 = vunpack.c.h.b16 %v570
  %v2732 = vunpack.c.l.b16 %v571
  %v2733 = vunpack.c.l.b16 %v572
  %v2734 = vunpack.c.h.b16 %v572
  %v2735 = vunpack.c.l.b16 %v573
  %v2736 = vunpack.c.h.b16 %v573
  %v2737 = vunpack.c.l.b16 %v574
  %v2738 = vunpack.c.l.b16 %v575
  %v2739 = vunpack.c.h.b16 %v575
  %v2740 = vunpack.c.l.b16 %v576
  %v2741 = vunpack.c.h.b16 %v576
  %v2742 = vunpack.c.l.b16 %v577
  %v2743 = vunpack.c.l.b16 %v578
  %v2744 = vunpack.c.h.b16 %v578
  %v2745 = vunpack.c.l.b16 %v579
  %v2746 = vunpack.c.h.b16 %v579
  %v2747 = vunpack.c.l.b16 %v580
  %v2748 = vunpack.c.l.b16 %v581
  %v2749 = vunpack.c.h.b16 %v581
  %v2750 = vunpack.c.l.b16 %v582
  %v2751 = vunpack.c.h.b16 %v582
  %v2752 = vunpack.c.l.b16 %v583
  %v2753 = vunpack.c.l.b16 %v584
  %v2754 = vunpack.c.h.b16 %v584
  %v2755 = vunpack.c.l.b16 %v585
  %v2756 = vunpack.c.h.b16 %v585
  %v2757 = vunpack.c.l.b16 %v586
  %v2758 = vunpack.c.l.b16 %v587
  %v2759 = vunpack.c.h.b16 %v587
  %v2760 = vunpack.c.l.b16 %v588
  %v2761 = vunpack.c.h.b16 %v588
  %v2762 = vunpack.c.l.b16 %v589
  %v2763 = vunpack.c.l.b16 %v590
  %v2764 = vunpack.c.h.b16 %v590
  %v2765 = vunpack.c.l.b16 %v591
  %v2766 = vunpack.c.h.b16 %v591
  %v2767 = vunpack.c.l.b16 %v592
  %v2768 = vunpack.c.l.b16 %v593
  %v2769 = vunpack.c.h.b16 %v593
  %v2770 = vunpack.c.l.b16 %v594
  %v2771 = vunpack.c.h.b16 %v594
  %v2772 = vunpack.c.l.b16 %v595
  %v2773 = vunpack.c.l.b16 %v596
  %v2774 = vunpack.c.h.b16 %v596
  %v2775 = vunpack.c.l.b16 %v597
  %v2776 = vunpack.c.h.b16 %v597
  %v2777 = vunpack.c.l.b16 %v598
  %v2778 = vunpack.c.l.b16 %v599
  %v2779 = vunpack.c.h.b16 %v599
  %v2780 = vunpack.c.l.b16 %v600
  %v2781 = vunpack.c.h.b16 %v600
  %v2782 = vunpack.c.l.b16 %v601
  %v2783 = vunpack.c.l.b16 %v602
  %v2784 = vunpack.c.h.b16 %v602
  %v2785 = vunpack.c.l.b16 %v603
  %v2786 = vunpack.c.h.b16 %v603
  %v2787 = vunpack.c.l.b16 %v604
  %v2788 = vunpack.c.l.b16 %v605
  %v2789 = vunpack.c.h.b16 %v605
  %v2790 = vunpack.c.l.b16 %v606
  %v2791 = vunpack.c.h.b16 %v606
  %v2792 = vunpack.c.l.b16 %v607
  %v2793 = vunpack.c.l.b16 %v608
  %v2794 = vunpack.c.h.b16 %v608
  %v2795 = vunpack.c.l.b16 %v609
  %v2796 = vunpack.c.h.b16 %v609
  %v2797 = vunpack.c.l.b16 %v610
  %v2798 = vunpack.c.l.b16 %v611
  %v2799 = vunpack.c.h.b16 %v611
  %v2800 = vunpack.c.l.b16 %v612
  %v2801 = vunpack.c.h.b16 %v612
  %v2802 = vunpack.c.l.b16 %v613
  %v2803 = vunpack.c.l.b16 %v614
  %v2804 = vunpack.c.h.b16 %v614
  %v2805 = vunpack.c.l.b16 %v615
  %v2806 = vunpack.c.h.b16 %v615
  %v2807 = vunpack.c.l.b16 %v616
  %v2808 = vunpack.c.l.b16 %v617
  %v2809 = vunpack.c.h.b16 %v617
  %v2810 = vunpack.c.l.b16 %v618
  %v2811 = vunpack.c.h.b16 %v618
  %v2812 = vunpack.c.l.b16 %v619
  %v2813 = vunpack.c.l.b16 %v620
  %v2814 = vunpack.c.h.b16 %v620
  %v2815 = vunpack.c.l.b16 %v621
  %v2816 = vunpack.c.h.b16 %v621
  %v2817 = vunpack.c.l.b16 %v622
  %v2818 = vunpack.c.l.b16 %v623
  %v2819 = vunpack.c.h.b16 %v623
  %v2820 = vunpack.c.l.b16 %v624
  %v2821 = vunpack.c.h.b16 %v624
  %v2822 = vunpack.c.l.b16 %v625
  %v2823 = vunpack.c.l.b16 %v626
  %v2824 = vunpack.c.h.b16 %v626
  %v2825 = vunpack.c.l.b16 %v627
  %v2826 = vunpack.c.h.b16 %v627
  %v2827 = vunpack.c.l.b16 %v628
  %v2828 = vunpack.c.l.b16 %v629
  %v2829 = vunpack.c.h.b16 %v629
  %v2830 = vunpack.c.l.b16 %v630
  %v2831 = vunpack.c.h.b16 %v630
  %v2832 = vunpack.c.l.b16 %v631
  %v2833 = vunpack.c.l.b16 %v632
  %v2834 = vunpack.c.h.b16 %v632
  %v2835 = vunpack.c.l.b16 %v633
  %v2836 = vunpack.c.h.b16 %v633
  %v2837 = vunpack.c.l.b16 %v634
  %v2838 = vunpack.c.l.b16 %v635
  %v2839 = vunpack.c.h.b16 %v635
  %v2840 = vunpack.c.l.b16 %v636
  %v2841 = vunpack.c.h.b16 %v636
  %v2842 = vunpack.c.l.b16 %v637
  %v2843 = vunpack.c.l.b16 %v638
  %v2844 = vunpack.c.h.b16 %v638
  %v2845 = vunpack.c.l.b16 %v639
  %v2846 = vunpack.c.h.b16 %v639
  %v2847 = vunpack.c.l.b16 %v640
  %v2848 = vunpack.c.l.b16 %v641
  %v2849 = vunpack.c.h.b16 %v641
  %v2850 = vunpack.c.l.b16 %v642
  %v2851 = vunpack.c.h.b16 %v642
  %v2852 = vunpack.c.l.b16 %v643
  %v2853 = vunpack.c.l.b16 %v644
  %v2854 = vunpack.c.h.b16 %v644
  %v2855 = vunpack.c.l.b16 %v645
  %v2856 = vunpack.c.h.b16 %v645
  %v2857 = vunpack.c.l.b16 %v646
  %v2858 = vunpack.c.l.b16 %v647
  %v2859 = vunpack.c.h.b16 %v647
  %v2860 = vunpack.c.l.b16 %v648
  %v2861 = vunpack.c.h.b16 %v648
  %v2862 = vunpack.c.l.b16 %v649
  %v2863 = vunpack.c.l.b16 %v650
  %v2864 = vunpack.c.h.b16 %v650
  %v2865 = vunpack.c.l.b16 %v651
  %v2866 = vunpack.c.h.b16 %v651
  %v2867 = vunpack.c.l.b16 %v652
  %v2868 = vunpack.c.l.b16 %v653
  %v2869 = vunpack.c.h.b16 %v653
  %v2870 = vunpack.c.l.b16 %v654
  %v2871 = vunpack.c.h.b16 %v654
  %v2872 = vunpack.c.l.b16 %v655
  %v2873 = vunpack.c.l.b16 %v656
  %v2874 = vunpack.c.h.b16 %v656
  %v2875 = vunpack.c.l.b16 %v657
  %v2876 = vunpack.c.h.b16 %v657
  %v2877 = vunpack.c.l.b16 %v658
  %v2878 = vunpack.c.l.b16 %v659
  %v2879 = vunpack.c.h.b16 %v659
  %v2880 = vunpack.c.l.b16 %v660
  %v2881 = vunpack.c.h.b16 %v660
  %v2882 = vunpack.c.l.b16 %v661
  %v2883 = vunpack.c.l.b16 %v662
  %v2884 = vunpack.c.h.b16 %v662
  %v2885 = vunpack.c.l.b16 %v663
  %v2886 = vunpack.c.h.b16 %v663
  %v2887 = vunpack.c.l.b16 %v664
  %v2888 = vunpack.c.l.b16 %v665
  %v2889 = vunpack.c.h.b16 %v665
  %v2890 = vunpack.c.l.b16 %v666
  %v2891 = vunpack.c.h.b16 %v666
  %v2892 = vunpack.c.l.b16 %v667
  %v2893 = vunpack.c.l.b16 %v668
  %v2894 = vunpack.c.h.b16 %v668
  %v2895 = vunpack.c.l.b16 %v669
  %v2896 = vunpack.c.h.b16 %v669
  %v2897 = vunpack.c.l.b16 %v670
  %v2898 = vunpack.c.l.b16 %v671
  %v2899 = vunpack.c.h.b16 %v671
  %v2900 = vunpack.c.l.b16 %v672
  %v2901 = vunpack.c.h.b16 %v672
  %v2902 = vunpack.c.l.b16 %v673
  %v2903 = vunpack.c.l.b16 %v674
  %v2904 = vunpack.c.h.b16 %v674
  %v2905 = vunpack.c.l.b16 %v675
  %v2906 = vunpack.c.h.b16 %v675
  %v2907 = vunpack.c.l.b16 %v676
  %v2908 = vunpack.c.l.b16 %v677
  %v2909 = vunpack.c.h.b16 %v677
  %v2910 = vunpack.c.l.b16 %v678
  %v2911 = vunpack.c.h.b16 %v678
  %v2912 = vunpack.c.l.b16 %v679
  %v2913 = vunpack.c.l.b16 %v680
  %v2914 = vunpack.c.h.b16 %v680
  %v2915 = vunpack.c.l.b16 %v681
  %v2916 = vunpack.c.h.b16 %v681
  %v2917 = vunpack.c.l.b16 %v682
  %v2918 = vunpack.c.l.b16 %v683
  %v2919 = vunpack.c.h.b16 %v683
  %v2920 = vunpack.c.l.b16 %v684
  %v2921 = vunpack.c.h.b16 %v684
  %v2922 = vunpack.c.l.b16 %v685
  %v2923 = vunpack.c.l.b16 %v686
  %v2924 = vunpack.c.h.b16 %v686
  %v2925 = vunpack.c.l.b16 %v687
  %v2926 = vunpack.c.h.b16 %v687
  %v2927 = vunpack.c.l.b16 %v688
  %v2928 = vunpack.c.l.b16 %v689
  %v2929 = vunpack.c.h.b16 %v689
  %v2930 = vunpack.c.l.b16 %v690
  %v2931 = vunpack.c.h.b16 %v690
  %v2932 = vunpack.c.l.b16 %v691
  %v2933 = vunpack.c.l.b16 %v692
  %v2934 = vunpack.c.h.b16 %v692
  %v2935 = vunpack.c.l.b16 %v693
  %v2936 = vunpack.c.h.b16 %v693
  %v2937 = vunpack.c.l.b16 %v694
  %v2938 = vunpack.c.l.b16 %v695
  %v2939 = vunpack.c.h.b16 %v695
  %v2940 = vunpack.c.l.b16 %v696
  %v2941 = vunpack.c.h.b16 %v696
  %v2942 = vunpack.c.l.b16 %v697
  %v2943 = vunpack.c.l.b16 %v698
  %v2944 = vunpack.c.h.b16 %v698
  %v2945 = vunpack.c.l.b16 %v699
  %v2946 = vunpack.c.h.b16 %v699
  %v2947 = vunpack.c.l.b16 %v700
  %v2948 = vunpack.c.l.b16 %v701
  %v2949 = vunpack.c.h.b16 %v701
  %v2950 = vunpack.c.l.b16 %v702
  %v2951 = vunpack.c.h.b16 %v702
  %v2952 = vunpack.c.l.b16 %v703
  %v2953 = vunpack.c.l.b16 %v704
  %v2954 = vunpack.c.h.b16 %v704
  %v2955 = vunpack.c.l.b16 %v705
  %v2956 = vunpack.c.h.b16 %v705
  %v2957 = vunpack.c.l.b16 %v706
  %v2958 = vunpack.c.l.b16 %v707
  %v2959 = vunpack.c.h.b16 %v707
  %v2960 = vunpack.c.l.b16 %v708
  %v2961 = vunpack.c.h.b16 %v708
  %v2962 = vunpack.c.l.b16 %v709
  %v2963 = vunpack.c.l.b16 %v710
  %v2964 = vunpack.c.h.b16 %v710
  %v2965 = vunpack.c.l.b16 %v711
  %v2966 = vunpack.c.h.b16 %v711
  %v2967 = vunpack.c.l.b16 %v712
  %v2968 = vunpack.c.l.b16 %v713
  %v2969 = vunpack.c.h.b16 %v713
  %v2970 = vunpack.c.l.b16 %v714
  %v2971 = vunpack.c.h.b16 %v714
  %v2972 = vunpack.c.l.b16 %v715
  %v2973 = vunpack.c.l.b16 %v716
  %v2974 = vunpack.c.h.b16 %v716
  %v2975 = vunpack.c.l.b16 %v717
  %v2976 = vunpack.c.h.b16 %v717
  %v2977 = vunpack.c.l.b16 %v718
  %v2978 = vunpack.c.l.b16 %v719
  %v2979 = vunpack.c.h.b16 %v719
  %v2980 = vunpack.c.l.b16 %v720
  %v2981 = vunpack.c.h.b16 %v720
  %v2982 = vunpack.c.l.b16 %v721
  %v2983 = vunpack.c.l.b16 %v722
  %v2984 = vunpack.c.h.b16 %v722
  %v2985 = vunpack.c.l.b16 %v723
  %v2986 = vunpack.c.h.b16 %v723
  %v2987 = vunpack.c.l.b16 %v724
  %v2988 = vunpack.c.l.b16 %v725
  %v2989 = vunpack.c.h.b16 %v725
  %v2990 = vunpack.c.l.b16 %v726
  %v2991 = vunpack.c.h.b16 %v726
  %v2992 = vunpack.c.l.b16 %v727
  %v2993 = vunpack.c.l.b16 %v728
  %v2994 = vunpack.c.h.b16 %v728
  %v2995 = vunpack.c.l.b16 %v729
  %v2996 = vunpack.c.h.b16 %v729
  %v2997 = vunpack.c.l.b16 %v730
  %v2998 = vunpack.c.l.b16 %v731
  %v2999 = vunpack.c.h.b16 %v731
  %v3000 = vunpack.c.l.b16 %v732
  %v3001 = vunpack.c.h.b16 %v732
  %v3002 = vunpack.c.l.b16 %v733
  %v3003 = vunpack.c.l.b16 %v734
  %v3004 = vunpack.c.h.b16 %v734
  %v3005 = vunpack.c.l.b16 %v735
  %v3006 = vunpack.c.h.b16 %v735
  %v3007 = vunpack.c.l.b16 %v736
  %v3008 = vunpack.c.l.b16 %v737
  %v3009 = vunpack.c.h.b16 %v737
  %v3010 = vunpack.c.l.b16 %v738
  %v3011 = vunpack.c.h.b16 %v738
  %v3012 = vunpack.c.l.b16 %v739
  %v3013 = vunpack.c.l.b16 %v740
  %v3014 = vunpack.c.h.b16 %v740
  %v3015 = vunpack.c.l.b16 %v741
  %v3016 = vunpack.c.h.b16 %v741
  %v3017 = vunpack.c.l.b16 %v742
  %v3018 = vunpack.c.l.b16 %v743
  %v3019 = vunpack.c.h.b16 %v743
  %v3020 = vunpack.c.l.b16 %v744
  %v3021 = vunpack.c.h.b16 %v744
  %v3022 = vunpack.c.l.b16 %v745
  %v3023 = vunpack.c.l.b16 %v746
  %v3024 = vunpack.c.h.b16 %v746
  %v3025 = vunpack.c.l.b16 %v747
  %v3026 = vunpack.c.h.b16 %v747
  %v3027 = vunpack.c.l.b16 %v748
  %v3028 = vunpack.c.l.b16 %v749
  %v3029 = vunpack.c.h.b16 %v749
  %v3030 = vunpack.c.l.b16 %v750
  %v3031 = vunpack.c.h.b16 %v750
  %v3032 = vunpack.c.l.b16 %v751
  %v3033 = vunpack.c.l.b16 %v752
  %v3034 = vunpack.c.h.b16 %v752
  %v3035 = vunpack.c.l.b16 %v753
  %v3036 = vunpack.c.h.b16 %v753
  %v3037 = vunpack.c.l.b16 %v754
  %v3038 = vunpack.c.l.b16 %v755
  %v3039 = vunpack.c.h.b16 %v755
  %v3040 = vunpack.c.l.b16 %v756
  %v3041 = vunpack.c.h.b16 %v756
  %v3042 = vunpack.c.l.b16 %v757
  %v3043 = vunpack.c.l.b16 %v758
  %v3044 = vunpack.c.h.b16 %v758
  %v3045 = vunpack.c.l.b16 %v759
  %v3046 = vunpack.c.h.b16 %v759
  %v3047 = vunpack.c.l.b16 %v760
  %v3048 = vunpack.c.l.b16 %v761
  %v3049 = vunpack.c.h.b16 %v761
  %v3050 = vunpack.c.l.b16 %v762
  %v3051 = vunpack.c.h.b16 %v762
  %v3052 = vunpack.c.l.b16 %v763
  %v3053 = vunpack.c.l.b16 %v764
  %v3054 = vunpack.c.h.b16 %v764
  %v3055 = vunpack.c.l.b16 %v765
  %v3056 = vunpack.c.h.b16 %v765
  %v3057 = vunpack.c.l.b16 %v766
  %v3058 = vunpack.c.l.b16 %v767
  %v3059 = vunpack.c.h.b16 %v767
  %v3060 = vunpack.c.l.b16 %v768
  %v3061 = vunpack.c.h.b16 %v768
  %v3062 = vunpack.c.l.b16 %v769
  %v3063 = vunpack.c.l.b16 %v770
  %v3064 = vunpack.c.h.b16 %v770
  %v3065 = vunpack.c.l.b16 %v771
  %v3066 = vunpack.c.h.b16 %v771
  %v3067 = vunpack.c.l.b16 %v772
  %v3068 = vunpack.c.l.b16 %v773
  %v3069 = vunpack.c.h.b16 %v773
  %v3070 = vunpack.c.l.b16 %v774
  %v3071 = vunpack.c.h.b16 %v774
  %v3072 = vunpack.c.l.b16 %v775
  %v3073 = vunpack.c.l.b16 %v776
  %v3074 = vunpack.c.h.b16 %v776
  %v3075 = vunpack.c.l.b16 %v777
  %v3076 = vunpack.c.h.b16 %v777
  %v3077 = vunpack.c.l.b16 %v778
  %v3078 = vunpack.c.l.b16 %v779
  %v3079 = vunpack.c.h.b16 %v779
  %v3080 = vunpack.c.l.b16 %v780
  %v3081 = vunpack.c.h.b16 %v780
  %v3082 = vunpack.c.l.b16 %v781
  %v3083 = vunpack.c.l.b16 %v782
  %v3084 = vunpack.c.h.b16 %v782
  %v3085 = vunpack.c.l.b16 %v783
  %v3086 = vunpack.c.h.b16 %v783
  %v3087 = vunpack.c.l.b16 %v784
  %v3088 = vunpack.c.l.b16 %v785
  %v3089 = vunpack.c.h.b16 %v785
  %v3090 = vunpack.c.l.b16 %v786
  %v3091 = vunpack.c.h.b16 %v786
  %v3092 = vunpack.c.l.b16 %v787
  %v3093 = vunpack.c.l.b16 %v788
  %v3094 = vunpack.c.h.b16 %v788
  %v3095 = vunpack.c.l.b16 %v789
  %v3096 = vunpack.c.h.b16 %v789
  %v3097 = vunpack.c.l.b16 %v790
  %v3098 = vunpack.c.l.b16 %v791
  %v3099 = vunpack.c.h.b16 %v791
  %v3100 = vunpack.c.l.b16 %v792
  %v3101 = vunpack.c.h.b16 %v792
  %v3102 = vunpack.c.l.b16 %v793
  %v3103 = vunpack.c.l.b16 %v794
  %v3104 = vunpack.c.h.b16 %v794
  %v3105 = vunpack.c.l.b16 %v795
  %v3106 = vunpack.c.h.b16 %v795
  %v3107 = vunpack.c.l.b16 %v796
  %v3108 = vunpack.c.l.b16 %v797
  %v3109 = vunpack.c.h.b16 %v797
  %v3110 = vunpack.c.l.b16 %v798
  %v3111 = vunpack.c.h.b16 %v798
  %v3112 = vunpack.c.l.b16 %v799
  %v3113 = vunpack.c.l.b16 %v800
  %v3114 = vunpack.c.h.b16 %v800
  %v3115 = vunpack.c.l.b16 %v801
  %v3116 = vunpack.c.h.b16 %v801
  %v3117 = vunpack.c.l.b16 %v802
  %v3118 = vunpack.c.l.b16 %v803
  %v3119 = vunpack.c.h.b16 %v803
  %v3120 = vunpack.c.l.b16 %v804
  %v3121 = vunpack.c.h.b16 %v804
  %v3122 = vunpack.c.l.b16 %v805
  %v3123 = vunpack.c.l.b16 %v806
  %v3124 = vunpack.c.h.b16 %v806
  %v3125 = vunpack.c.l.b16 %v807
  %v3126 = vunpack.c.h.b16 %v807
  %v3127 = vunpack.c.l.b16 %v808
  %v3128 = vunpack.c.l.b16 %v809
  %v3129 = vunpack.c.h.b16 %v809
  %v3130 = vunpack.c.l.b16 %v810
  %v3131 = vunpack.c.h.b16 %v810
  %v3132 = vunpack.c.l.b16 %v811
  %v3133 = vunpack.c.l.b16 %v812
  %v3134 = vunpack.c.h.b16 %v812
  %v3135 = vunpack.c.l.b16 %v813
  %v3136 = vunpack.c.h.b16 %v813
  %v3137 = vunpack.c.l.b16 %v814
  %v3138 = vunpack.c.l.b16 %v815
  %v3139 = vunpack.c.h.b16 %v815
  %v3140 = vunpack.c.l.b16 %v816
  %v3141 = vunpack.c.h.b16 %v816
  %v3142 = vunpack.c.l.b16 %v817
  %v3143 = vunpack.c.l.b16 %v818
  %v3144 = vunpack.c.h.b16 %v818
  %v3145 = vunpack.c.l.b16 %v819
  %v3146 = vunpack.c.h.b16 %v819
  %v3147 = vunpack.c.l.b16 %v820
  %v3148 = vunpack.c.l.b16 %v821
  %v3149 = vunpack.c.h.b16 %v821
  %v3150 = vunpack.c.l.b16 %v822
  %v3151 = vunpack.c.h.b16 %v822
  %v3152 = vunpack.c.l.b16 %v823
  %v3153 = vunpack.c.l.b16 %v824
  %v3154 = vunpack.c.h.b16 %v824
  %v3155 = vunpack.c.l.b16 %v825
  %v3156 = vunpack.c.h.b16 %v825
  %v3157 = vunpack.c.l.b16 %v826
  %v3158 = vunpack.c.l.b16 %v827
  %v3159 = vunpack.c.h.b16 %v827
  %v3160 = vunpack.c.l.b16 %v828
  %v3161 = vunpack.c.h.b16 %v828
  %v3162 = vunpack.c.l.b16 %v829
  %v3163 = vunpack.c.l.b16 %v830
  %v3164 = vunpack.c.h.b16 %v830
  %v3165 = vunpack.c.l.b16 %v831
  %v3166 = vunpack.c.h.b16 %v831
  %v3167 = vunpack.c.l.b16 %v832
  %v3168 = vunpack.c.l.b16 %v833
  %v3169 = vunpack.c.h.b16 %v833
  %v3170 = vunpack.c.l.b16 %v834
  %v3171 = vunpack.c.h.b16 %v834
  %v3172 = vunpack.c.l.b16 %v835
  %v3173 = vunpack.c.l.b16 %v836
  %v3174 = vunpack.c.h.b16 %v836
  %v3175 = vunpack.c.l.b16 %v837
  %v3176 = vunpack.c.h.b16 %v837
  %v3177 = vunpack.c.l.b16 %v838
  %v3178 = vunpack.c.l.b16 %v839
  %v3179 = vunpack.c.h.b16 %v839
  %v3180 = vunpack.c.l.b16 %v840
  %v3181 = vunpack.c.h.b16 %v840
  %v3182 = vunpack.c.l.b16 %v841
  %v3183 = vunpack.c.l.b16 %v842
  %v3184 = vunpack.c.h.b16 %v842
  %v3185 = vunpack.c.l.b16 %v843
  %v3186 = vunpack.c.h.b16 %v843
  %v3187 = vunpack.c.l.b16 %v844
  %v3188 = vunpack.c.l.b16 %v845
  %v3189 = vunpack.c.h.b16 %v845
  %v3190 = vunpack.c.l.b16 %v846
  %v3191 = vunpack.c.h.b16 %v846
  %v3192 = vunpack.c.l.b16 %v847
  %v3193 = vunpack.c.l.b16 %v848
  %v3194 = vunpack.c.h.b16 %v848
  %v3195 = vunpack.c.l.b16 %v849
  %v3196 = vunpack.c.h.b16 %v849
  %v3197 = vunpack.c.l.b16 %v850
  %v3198 = vunpack.c.l.b16 %v851
  %v3199 = vunpack.c.h.b16 %v851
  %v3200 = vunpack.c.l.b16 %v852
  %v3201 = vunpack.c.h.b16 %v852
  %v3202 = vunpack.c.l.b16 %v853
  %v3203 = vunpack.c.l.b16 %v854
  %v3204 = vunpack.c.h.b16 %v854
  %v3205 = vunpack.c.l.b16 %v855
  %v3206 = vunpack.c.h.b16 %v855
  %v3207 = vunpack.c.l.b16 %v856
  %v3208 = vunpack.c.l.b16 %v857
  %v3209 = vunpack.c.h.b16 %v857
  %v3210 = vunpack.c.l.b16 %v858
  %v3211 = vunpack.c.h.b16 %v858
  %v3212 = vunpack.c.l.b16 %v859
  %v3213 = vunpack.c.l.b16 %v860
  %v3214 = vunpack.c.h.b16 %v860
  %v3215 = vunpack.c.l.b16 %v861
  %v3216 = vunpack.c.h.b16 %v861
  %v3217 = vunpack.c.l.b16 %v862
  %v3218 = vunpack.c.l.b16 %v863
  %v3219 = vunpack.c.h.b16 %v863
  %v3220 = vunpack.c.l.b16 %v864
  %v3221 = vunpack.c.h.b16 %v864
  %v3222 = vunpack.c.l.b16 %v865
  %v3223 = vunpack.c.l.b16 %v866
  %v3224 = vunpack.c.h.b16 %v866
  %v3225 = vunpack.c.l.b16 %v867
  %v3226 = vunpack.c.h.b16 %v867
  %v3227 = vunpack.c.l.b16 %v868
  %v3228 = vunpack.c.l.b16 %v869
  %v3229 = vunpack.c.h.b16 %v869
  %v3230 = vunpack.c.l.b16 %v870
  %v3231 = vunpack.c.h.b16 %v870
  %v3232 = vunpack.c.l.b16 %v871
  %v3233 = vunpack.c.l.b16 %v872
  %v3234 = vunpack.c.h.b16 %v872
  %v3235 = vunpack.c.l.b16 %v873
  %v3236 = vunpack.c.h.b16 %v873
  %v3237 = vunpack.c.l.b16 %v874
  %v3238 = vunpack.c.l.b16 %v875
  %v3239 = vunpack.c.h.b16 %v875
  %v3240 = vunpack.c.l.b16 %v876
  %v3241 = vunpack.c.h.b16 %v876
  %v3242 = vunpack.c.l.b16 %v877
  %v3243 = vunpack.c.l.b16 %v878
  %v3244 = vunpack.c.h.b16 %v878
  %v3245 = vunpack.c.l.b16 %v879
  %v3246 = vunpack.c.h.b16 %v879
  %v3247 = vunpack.c.l.b16 %v880
  %v3248 = vunpack.c.l.b16 %v881
  %v3249 = vunpack.c.h.b16 %v881
  %v3250 = vunpack.c.l.b16 %v882
  %v3251 = vunpack.c.h.b16 %v882
  %v3252 = vunpack.c.l.b16 %v883
  %v3253 = vunpack.c.l.b16 %v884
  %v3254 = vunpack.c.h.b16 %v884
  %v3255 = vunpack.c.l.b16 %v885
  %v3256 = vunpack.c.h.b16 %v885
  %v3257 = vunpack.c.l.b16 %v886
  %v3258 = vunpack.c.l.b16 %v887
  %v3259 = vunpack.c.h.b16 %v887
  %v3260 = vunpack.c.l.b16 %v888
  %v3261 = vunpack.c.h.b16 %v888
  %v3262 = vunpack.c.l.b16 %v889
  %v3263 = vunpack.c.l.b16 %v890
  %v3264 = vunpack.c.h.b16 %v890
  %v3265 = vunpack.c.l.b16 %v891
  %v3266 = vunpack.c.h.b16 %v891
  %v3267 = vunpack.c.l.b16 %v892
  %v3268 = vunpack.c.l.b16 %v893
  %v3269 = vunpack.c.h.b16 %v893
  %v3270 = vunpack.c.l.b16 %v894
  %v3271 = vunpack.c.h.b16 %v894
  %v3272 = vunpack.c.l.b16 %v895
  %v3273 = vunpack.c.l.b16 %v896
  %v3274 = vunpack.c.h.b16 %v896
  %v3275 = vunpack.c.l.b16 %v897
  %v3276 = vunpack.c.h.b16 %v897
  %v3277 = vunpack.c.l.b16 %v898
  %v3278 = vpack.c.b16 %v1843, %v1838
  %v3279 = vpack.c.b16 %v1844, %v1839
  %v3280 = vpack.c.b16 %v1845, %v1840
  %v3281 = vpack.c.b16 %v1846, %v1841
  %v3282 = vpack.c.b16 %v1847, %v1842
  %v3283 = vpack.c.b16 %v1853, %v1848
  %v3284 = vpack.c.b16 %v1854, %v1849
  %v3285 = vpack.c.b16 %v1855, %v1850
  %v3286 = vpack.c.b16 %v1856, %v1851
  %v3287 = vpack.c.b16 %v1857, %v1852
  %v3288 = vpack.c.b16 %v1863, %v1858
  %v3289 = vpack.c.b16 %v1864, %v1859
  %v3290 = vpack.c.b16 %v1865, %v1860
  %v3291 = vpack.c.b16 %v1866, %v1861
  %v3292 = vpack.c.b16 %v1867, %v1862
  %v3293 = vpack.c.b16 %v1873, %v1868
  %v3294 = vpack.c.b16 %v1874, %v1869
  %v3295 = vpack.c.b16 %v1875, %v1870
  %v3296 = vpack.c.b16 %v1876, %v1871
  %v3297 = vpack.c.b16 %v1877, %v1872
  %v3298 = vpack.c.b16 %v1883, %v1878
  %v3299 = vpack.c.b16 %v1884, %v1879
  %v3300 = vpack.c.b16 %v1885, %v1880
  %v3301 = vpack.c.b16 %v1886, %v1881
  %v3302 = vpack.c.b16 %v1887, %v1882
  %v3303 = vpack.c.b16 %v1893, %v1888
  %v3304 = vpack.c.b16 %v1894, %v1889
  %v3305 = vpack.c.b16 %v1895, %v1890
  %v3306 = vpack.c.b16 %v1896, %v1891
  %v3307 = vpack.c.b16 %v1897, %v1892
  %v3308 = vpack.c.b16 %v1903, %v1898
  %v3309 = vpack.c.b16 %v1904, %v1899
  %v3310 = vpack.c.b16 %v1905, %v1900
  %v3311 = vpack.c.b16 %v1906, %v1901
  %v3312 = vpack.c.b16 %v1907, %v1902
  %v3313 = vpack.c.b16 %v1913, %v1908
  %v3314 = vpack.c.b16 %v1914, %v1909
  %v3315 = vpack.c.b16 %v1915, %v1910
  %v3316 = vpack.c.b16 %v1916, %v1911
  %v3317 = vpack.c.b16 %v1917, %v1912
  %v3318 = vpack.c.b16 %v1923, %v1918
  %v3319 = vpack.c.b16 %v1924, %v1919
  %v3320 = vpack.c.b16 %v1925, %v1920
  %v3321 = vpack.c.b16 %v1926, %v1921
  %v3322 = vpack.c.b16 %v1927, %v1922
  %v3323 = vpack.c.b16 %v1933, %v1928
  %v3324 = vpack.c.b16 %v1934, %v1929
  %v3325 = vpack.c.b16 %v1935, %v1930
  %v3326 = vpack.c.b16 %v1936, %v1931
  %v3327 = vpack.c.b16 %v1937, %v1932
  %v3328 = vpack.c.b16 %v1943, %v1938
  %v3329 = vpack.c.b16 %v1944, %v1939
  %v3330 = vpack.c.b16 %v1945, %v1940
  %v3331 = vpack.c.b16 %v1946, %v1941
  %v3332 = vpack.c.b16 %v1947, %v1942
  %v3333 = vpack.c.b16 %v1953, %v1948
  %v3334 = vpack.c.b16 %v1954, %v1949
  %v3335 = vpack.c.b16 %v1955, %v1950
  %v3336 = vpack.c.b16 %v1956, %v1951
  %v3337 = vpack.c.b16 %v1957, %v1952
  %v3338 = vpack.c.b16 %v1963, %v1958
  %v3339 = vpack.c.b16 %v1964, %v1959
  %v3340 = vpack.c.b16 %v1965, %v1960
  %v3341 = vpack.c.b16 %v1966, %v1961
  %v3342 = vpack.c.b16 %v1967, %v1962
  %v3343 = vpack.c.b16 %v1973, %v1968
  %v3344 = vpack.c.b16 %v1974, %v1969
  %v3345 = vpack.c.b16 %v1975, %v1970
  %v3346 = vpack.c.b16 %v1976, %v1971
  %v3347 = vpack.c.b16 %v1977, %v1972
  %v3348 = vpack.c.b16 %v1983, %v1978
  %v3349 = vpack.c.b16 %v1984, %v1979
  %v3350 = vpack.c.b16 %v1985, %v1980
  %v3351 = vpack.c.b16 %v1986, %v1981
  %v3352 = vpack.c.b16 %v1987, %v1982
  %v3353 = vpack.c.b16 %v1993, %v1988
  %v3354 = vpack.c.b16 %v1994, %v1989
  %v3355 = vpack.c.b16 %v1995, %v1990
  %v3356 = vpack.c.b16 %v1996, %v1991
  %v3357 = vpack.c.b16 %v1997, %v1992
  %v3358 = vpack.c.b16 %v2003, %v1998
  %v3359 = vpack.c.b16 %v2004, %v1999
  %v3360 = vpack.c.b16 %v2005, %v2000
  %v3361 = vpack.c.b16 %v2006, %v2001
  %v3362 = vpack.c.b16 %v2007, %v2002
  %v3363 = vpack.c.b16 %v2013, %v2008
  %v3364 = vpack.c.b16 %v2014, %v2009
  %v3365 = vpack.c.b16 %v2015, %v2010
  %v3366 = vpack.c.b16 %v2016, %v2011
  %v3367 = vpack.c.b16 %v2017, %v2012
  %v3368 = vpack.c.b16 %v2023, %v2018
  %v3369 = vpack.c.b16 %v2024, %v2019
  %v3370 = vpack.c.b16 %v2025, %v2020
  %v3371 = vpack.c.b16 %v2026, %v2021
  %v3372 = vpack.c.b16 %v2027, %v2022
  %v3373 = vpack.c.b16 %v2033, %v2028
  %v3374 = vpack.c.b16 %v2034, %v2029
  %v3375 = vpack.c.b16 %v2035, %v2030
  %v3376 = vpack.c.b16 %v2036, %v2031
  %v3377 = vpack.c.b16 %v2037, %v2032
  %v3378 = vpack.c.b16 %v2043, %v2038
  %v3379 = vpack.c.b16 %v2044, %v2039
  %v3380 = vpack.c.b16 %v2045, %v2040
  %v3381 = vpack.c.b16 %v2046, %v2041
  %v3382 = vpack.c.b16 %v2047, %v2042
  %v3383 = vpack.c.b16 %v2053, %v2048
  %v3384 = vpack.c.b16 %v2054, %v2049
  %v3385 = vpack.c.b16 %v2055, %v2050
  %v3386 = vpack.c.b16 %v2056, %v2051
  %v3387 = vpack.c.b16 %v2057, %v2052
  %v3388 = vpack.c.b16 %v2063, %v2058
  %v3389 = vpack.c.b16 %v2064, %v2059
  %v3390 = vpack.c.b16 %v2065, %v2060
  %v3391 = vpack.c.b16 %v2066, %v2061
  %v3392 = vpack.c.b16 %v2067, %v2062
  %v3393 = vpack.c.b16 %v2073, %v2068
  %v3394 = vpack.c.b16 %v2074, %v2069
  %v3395 = vpack.c.b16 %v2075, %v2070
  %v3396 = vpack.c.b16 %v2076, %v2071
  %v3397 = vpack.c.b16 %v2077, %v2072
  %v3398 = vpack.c.b16 %v2083, %v2078
  %v3399 = vpack.c.b16 %v2084, %v2079
  %v3400 = vpack.c.b16 %v2085, %v2080
  %v3401 = vpack.c.b16 %v2086, %v2081
  %v3402 = vpack.c.b16 %v2087, %v2082
  %v3403 = vpack.c.b16 %v2093, %v2088
  %v3404 = vpack.c.b16 %v2094, %v2089
  %v3405 = vpack.c.b16 %v2095, %v2090
  %v3406 = vpack.c.b16 %v2096, %v2091
  %v3407 = vpack.c.b16 %v2097, %v2092
  %v3408 = vpack.c.b16 %v2103, %v2098
  %v3409 = vpack.c.b16 %v2104, %v2099
  %v3410 = vpack.c.b16 %v2105, %v2100
  %v3411 = vpack.c.b16 %v2106, %v2101
  %v3412 = vpack.c.b16 %v2107, %v2102
  %v3413 = vpack.c.b16 %v2113, %v2108
  %v3414 = vpack.c.b16 %v2114, %v2109
  %v3415 = vpack.c.b16 %v2115, %v2110
  %v3416 = vpack.c.b16 %v2116, %v2111
  %v3417 = vpack.c.b16 %v2117, %v2112
  %v3418 = vpack.c.b16 %v2123, %v2118
  %v3419 = vpack.c.b16 %v2124, %v2119
  %v3420 = vpack.c.b16 %v2125, %v2120
  %v3421 = vpack.c.b16 %v2126, %v2121
  %v3422 = vpack.c.b16 %v2127, %v2122
  %v3423 = vpack.c.b16 %v2133, %v2128
  %v3424 = vpack.c.b16 %v2134, %v2129
  %v3425 = vpack.c.b16 %v2135, %v2130
  %v3426 = vpack.c.b16 %v2136, %v2131
  %v3427 = vpack.c.b16 %v2137, %v2132
  %v3428 = vpack.c.b16 %v2143, %v2138
  %v3429 = vpack.c.b16 %v2144, %v2139
  %v3430 = vpack.c.b16 %v2145, %v2140
  %v3431 = vpack.c.b16 %v2146, %v2141
  %v3432 = vpack.c.b16 %v2147, %v2142
  %v3433 = vpack.c.b16 %v2153, %v2148
  %v3434 = vpack.c.b16 %v2154, %v2149
  %v3435 = vpack.c.b16 %v2155, %v2150
  %v3436 = vpack.c.b16 %v2156, %v2151
  %v3437 = vpack.c.b16 %v2157, %v2152
  %v3438 = vpack.c.b16 %v2163, %v2158
  %v3439 = vpack.c.b16 %v2164, %v2159
  %v3440 = vpack.c.b16 %v2165, %v2160
  %v3441 = vpack.c.b16 %v2166, %v2161
  %v3442 = vpack.c.b16 %v2167, %v2162
  %v3443 = vpack.c.b16 %v2173, %v2168
  %v3444 = vpack.c.b16 %v2174, %v2169
  %v3445 = vpack.c.b16 %v2175, %v2170
  %v3446 = vpack.c.b16 %v2176, %v2171
  %v3447 = vpack.c.b16 %v2177, %v2172
  %v3448 = vpack.c.b16 %v2183, %v2178
  %v3449 = vpack.c.b16 %v2184, %v2179
  %v3450 = vpack.c.b16 %v2185, %v2180
  %v3451 = vpack.c.b16 %v2186, %v2181
  %v3452 = vpack.c.b16 %v2187, %v2182
  %v3453 = vpack.c.b16 %v2193, %v2188
  %v3454 = vpack.c.b16 %v2194, %v2189
  %v3455 = vpack.c.b16 %v2195, %v2190
  %v3456 = vpack.c.b16 %v2196, %v2191
  %v3457 = vpack.c.b16 %v2197, %v2192
  %v3458 = vpack.c.b16 %v2203, %v2198
  %v3459 = vpack.c.b16 %v2204, %v2199
  %v3460 = vpack.c.b16 %v2205, %v2200
  %v3461 = vpack.c.b16 %v2206, %v2201
  %v3462 = vpack.c.b16 %v2207, %v2202
  %v3463 = vpack.c.b16 %v2213, %v2208
  %v3464 = vpack.c.b16 %v2214, %v2209
  %v3465 = vpack.c.b16 %v2215, %v2210
  %v3466 = vpack.c.b16 %v2216, %v2211
  %v3467 = vpack.c.b16 %v2217, %v2212
  %v3468 = vpack.c.b16 %v2223, %v2218
  %v3469 = vpack.c.b16 %v2224, %v2219
  %v3470 = vpack.c.b16 %v2225, %v2220
  %v3471 = vpack.c.b16 %v2226, %v2221
  %v3472 = vpack.c.b16 %v2227, %v2222
  %v3473 = vpack.c.b16 %v2233, %v2228
  %v3474 = vpack.c.b16 %v2234, %v2229
  %v3475 = vpack.c.b16 %v2235, %v2230
  %v3476 = vpack.c.b16 %v2236, %v2231
  %v3477 = vpack.c.b16 %v2237, %v2232
  %v3478 = vpack.c.b16 %v2243, %v2238
  %v3479 = vpack.c.b16 %v2244, %v2239
  %v3480 = vpack.c.b16 %v2245, %v2240
  %v3481 = vpack.c.b16 %v2246, %v2241
  %v3482 = vpack.c.b16 %v2247, %v2242
  %v3483 = vpack.c.b16 %v2253, %v2248
  %v3484 = vpack.c.b16 %v2254, %v2249
  %v3485 = vpack.c.b16 %v2255, %v2250
  %v3486 = vpack.c.b16 %v2256, %v2251
  %v3487 = vpack.c.b16 %v2257, %v2252
  %v3488 = vpack.c.b16 %v2263, %v2258
  %v3489 = vpack.c.b16 %v2264, %v2259
  %v3490 = vpack.c.b16 %v2265, %v2260
  %v3491 = vpack.c.b16 %v2266, %v2261
  %v3492 = vpack.c.b16 %v2267, %v2262
  %v3493 = vpack.c.b16 %v2273, %v2268
  %v3494 = vpack.c.b16 %v2274, %v2269
  %v3495 = vpack.c.b16 %v2275, %v2270
  %v3496 = vpack.c.b16 %v2276, %v2271
  %v3497 = vpack.c.b16 %v2277, %v2272
  %v3498 = vpack.c.b16 %v2283, %v2278
  %v3499 = vpack.c.b16 %v2284, %v2279
  %v3500 = vpack.c.b16 %v2285, %v2280
  %v3501 = vpack.c.b16 %v2286, %v2281
  %v3502 = vpack.c.b16 %v2287, %v2282
  %v3503 = vpack.c.b16 %v2293, %v2288
  %v3504 = vpack.c.b16 %v2294, %v2289
  %v3505 = vpack.c.b16 %v2295, %v2290
  %v3506 = vpack.c.b16 %v2296, %v2291
  %v3507 = vpack.c.b16 %v2297, %v2292
  %v3508 = vpack.c.b16 %v2303, %v2298
  %v3509 = vpack.c.b16 %v2304, %v2299
  %v3510 = vpack.c.b16 %v2305, %v2300
  %v3511 = vpack.c.b16 %v2306, %v2301
  %v3512 = vpack.c.b16 %v2307, %v2302
  %v3513 = vpack.c.b16 %v2313, %v2308
  %v3514 = vpack.c.b16 %v2314, %v2309
  %v3515 = vpack.c.b16 %v2315, %v2310
  %v3516 = vpack.c.b16 %v2316, %v2311
  %v3517 = vpack.c.b16 %v2317, %v2312
  %v3518 = vpack.c.b16 %v2323, %v2318
  %v3519 = vpack.c.b16 %v2324, %v2319
  %v3520 = vpack.c.b16 %v2325, %v2320
  %v3521 = vpack.c.b16 %v2326, %v2321
  %v3522 = vpack.c.b16 %v2327, %v2322
  %v3523 = vpack.c.b16 %v2333, %v2328
  %v3524 = vpack.c.b16 %v2334, %v2329
  %v3525 = vpack.c.b16 %v2335, %v2330
  %v3526 = vpack.c.b16 %v2336, %v2331
  %v3527 = vpack.c.b16 %v2337, %v2332
  %v3528 = vpack.c.b16 %v2343, %v2338
  %v3529 = vpack.c.b16 %v2344, %v2339
  %v3530 = vpack.c.b16 %v2345, %v2340
  %v3531 = vpack.c.b16 %v2346, %v2341
  %v3532 = vpack.c.b16 %v2347, %v2342
  %v3533 = vpack.c.b16 %v2353, %v2348
  %v3534 = vpack.c.b16 %v2354, %v2349
  %v3535 = vpack.c.b16 %v2355, %v2350
  %v3536 = vpack.c.b16 %v2356, %v2351
  %v3537 = vpack.c.b16 %v2357, %v2352
  %v3538 = vpack.c.b16 %v2363, %v2358
  %v3539 = vpack.c.b16 %v2364, %v2359
  %v3540 = vpack.c.b16 %v2365, %v2360
  %v3541 = vpack.c.b16 %v2366, %v2361
  %v3542 = vpack.c.b16 %v2367, %v2362
  %v3543 = vpack.c.b16 %v2373, %v2368
  %v3544 = vpack.c.b16 %v2374, %v2369
  %v3545 = vpack.c.b16 %v2375, %v2370
  %v3546 = vpack.c.b16 %v2376, %v2371
  %v3547 = vpack.c.b16 %v2377, %v2372
  %v3548 = vpack.c.b16 %v2383, %v2378
  %v3549 = vpack.c.b16 %v2384, %v2379
  %v3550 = vpack.c.b16 %v2385, %v2380
  %v3551 = vpack.c.b16 %v2386, %v2381
  %v3552 = vpack.c.b16 %v2387, %v2382
  %v3553 = vpack.c.b16 %v2393, %v2388
  %v3554 = vpack.c.b16 %v2394, %v2389
  %v3555 = vpack.c.b16 %v2395, %v2390
  %v3556 = vpack.c.b16 %v2396, %v2391
  %v3557 = vpack.c.b16 %v2397, %v2392
  %v3558 = vpack.c.b16 %v2403, %v2398
  %v3559 = vpack.c.b16 %v2404, %v2399
  %v3560 = vpack.c.b16 %v2405, %v2400
  %v3561 = vpack.c.b16 %v2406, %v2401
  %v3562 = vpack.c.b16 %v2407, %v2402
  %v3563 = vpack.c.b16 %v2413, %v2408
  %v3564 = vpack.c.b16 %v2414, %v2409
  %v3565 = vpack.c.b16 %v2415, %v2410
  %v3566 = vpack.c.b16 %v2416, %v2411
  %v3567 = vpack.c.b16 %v2417, %v2412
  %v3568 = vpack.c.b16 %v2423, %v2418
  %v3569 = vpack.c.b16 %v2424, %v2419
  %v3570 = vpack.c.b16 %v2425, %v2420
  %v3571 = vpack.c.b16 %v2426, %v2421
  %v3572 = vpack.c.b16 %v2427, %v2422
  %v3573 = vpack.c.b16 %v2433, %v2428
  %v3574 = vpack.c.b16 %v2434, %v2429
  %v3575 = vpack.c.b16 %v2435, %v2430
  %v3576 = vpack.c.b16 %v2436, %v2431
  %v3577 = vpack.c.b16 %v2437, %v2432
  %v3578 = vpack.c.b16 %v2443, %v2438
  %v3579 = vpack.c.b16 %v2444, %v2439
  %v3580 = vpack.c.b16 %v2445, %v2440
  %v3581 = vpack.c.b16 %v2446, %v2441
  %v3582 = vpack.c.b16 %v2447, %v2442
  %v3583 = vpack.c.b16 %v2453, %v2448
  %v3584 = vpack.c.b16 %v2454, %v2449
  %v3585 = vpack.c.b16 %v2455, %v2450
  %v3586 = vpack.c.b16 %v2456, %v2451
  %v3587 = vpack.c.b16 %v2457, %v2452
  %v3588 = vpack.c.b16 %v2463, %v2458
  %v3589 = vpack.c.b16 %v2464, %v2459
  %v3590 = vpack.c.b16 %v2465, %v2460
  %v3591 = vpack.c.b16 %v2466, %v2461
  %v3592 = vpack.c.b16 %v2467, %v2462
  %v3593 = vpack.c.b16 %v2473, %v2468
  %v3594 = vpack.c.b16 %v2474, %v2469
  %v3595 = vpack.c.b16 %v2475, %v2470
  %v3596 = vpack.c.b16 %v2476, %v2471
  %v3597 = vpack.c.b16 %v2477, %v2472
  %v3598 = vpack.c.b16 %v2483, %v2478
  %v3599 = vpack.c.b16 %v2484, %v2479
  %v3600 = vpack.c.b16 %v2485, %v2480
  %v3601 = vpack.c.b16 %v2486, %v2481
  %v3602 = vpack.c.b16 %v2487, %v2482
  %v3603 = vpack.c.b16 %v2493, %v2488
  %v3604 = vpack.c.b16 %v2494, %v2489
  %v3605 = vpack.c.b16 %v2495, %v2490
  %v3606 = vpack.c.b16 %v2496, %v2491
  %v3607 = vpack.c.b16 %v2497, %v2492
  %v3608 = vpack.c.b16 %v2503, %v2498
  %v3609 = vpack.c.b16 %v2504, %v2499
  %v3610 = vpack.c.b16 %v2505, %v2500
  %v3611 = vpack.c.b16 %v2506, %v2501
  %v3612 = vpack.c.b16 %v2507, %v2502
  %v3613 = vpack.c.b16 %v2513, %v2508
  %v3614 = vpack.c.b16 %v2514, %v2509
  %v3615 = vpack.c.b16 %v2515, %v2510
  %v3616 = vpack.c.b16 %v2516, %v2511
  %v3617 = vpack.c.b16 %v2517, %v2512
  %v3618 = vpack.c.b16 %v2523, %v2518
  %v3619 = vpack.c.b16 %v2524, %v2519
  %v3620 = vpack.c.b16 %v2525, %v2520
  %v3621 = vpack.c.b16 %v2526, %v2521
  %v3622 = vpack.c.b16 %v2527, %v2522
  %v3623 = vpack.c.b16 %v2533, %v2528
  %v3624 = vpack.c.b16 %v2534, %v2529
  %v3625 = vpack.c.b16 %v2535, %v2530
  %v3626 = vpack.c.b16 %v2536, %v2531
  %v3627 = vpack.c.b16 %v2537, %v2532
  %v3628 = vpack.c.b16 %v2543, %v2538
  %v3629 = vpack.c.b16 %v2544, %v2539
  %v3630 = vpack.c.b16 %v2545, %v2540
  %v3631 = vpack.c.b16 %v2546, %v2541
  %v3632 = vpack.c.b16 %v2547, %v2542
  %v3633 = vpack.c.b16 %v2553, %v2548
  %v3634 = vpack.c.b16 %v2554, %v2549
  %v3635 = vpack.c.b16 %v2555, %v2550
  %v3636 = vpack.c.b16 %v2556, %v2551
  %v3637 = vpack.c.b16 %v2557, %v2552
  %v3638 = vpack.c.b16 %v2563, %v2558
  %v3639 = vpack.c.b16 %v2564, %v2559
  %v3640 = vpack.c.b16 %v2565, %v2560
  %v3641 = vpack.c.b16 %v2566, %v2561
  %v3642 = vpack.c.b16 %v2567, %v2562
  %v3643 = vpack.c.b16 %v2573, %v2568
  %v3644 = vpack.c.b16 %v2574, %v2569
  %v3645 = vpack.c.b16 %v2575, %v2570
  %v3646 = vpack.c.b16 %v2576, %v2571
  %v3647 = vpack.c.b16 %v2577, %v2572
  %v3648 = vpack.c.b16 %v2583, %v2578
  %v3649 = vpack.c.b16 %v2584, %v2579
  %v3650 = vpack.c.b16 %v2585, %v2580
  %v3651 = vpack.c.b16 %v2586, %v2581
  %v3652 = vpack.c.b16 %v2587, %v2582
  %v3653 = vpack.c.b16 %v2593, %v2588
  %v3654 = vpack.c.b16 %v2594, %v2589
  %v3655 = vpack.c.b16 %v2595, %v2590
  %v3656 = vpack.c.b16 %v2596, %v2591
  %v3657 = vpack.c.b16 %v2597, %v2592
  %v3658 = vpack.c.b16 %v2603, %v2598
  %v3659 = vpack.c.b16 %v2604, %v2599
  %v3660 = vpack.c.b16 %v2605, %v2600
  %v3661 = vpack.c.b16 %v2606, %v2601
  %v3662 = vpack.c.b16 %v2607, %v2602
  %v3663 = vpack.c.b16 %v2613, %v2608
  %v3664 = vpack.c.b16 %v2614, %v2609
  %v3665 = vpack.c.b16 %v2615, %v2610
  %v3666 = vpack.c.b16 %v2616, %v2611
  %v3667 = vpack.c.b16 %v2617, %v2612
  %v3668 = vpack.c.b16 %v2623, %v2618
  %v3669 = vpack.c.b16 %v2624, %v2619
  %v3670 = vpack.c.b16 %v2625, %v2620
  %v3671 = vpack.c.b16 %v2626, %v2621
  %v3672 = vpack.c.b16 %v2627, %v2622
  %v3673 = vpack.c.b16 %v2633, %v2628
  %v3674 = vpack.c.b16 %v2634, %v2629
  %v3675 = vpack.c.b16 %v2635, %v2630
  %v3676 = vpack.c.b16 %v2636, %v2631
  %v3677 = vpack.c.b16 %v2637, %v2632
  %v3678 = vpack.c.b16 %v2643, %v2638
  %v3679 = vpack.c.b16 %v2644, %v2639
  %v3680 = vpack.c.b16 %v2645, %v2640
  %v3681 = vpack.c.b16 %v2646, %v2641
  %v3682 = vpack.c.b16 %v2647, %v2642
  %v3683 = vpack.c.b16 %v2653, %v2648
  %v3684 = vpack.c.b16 %v2654, %v2649
  %v3685 = vpack.c.b16 %v2655, %v2650
  %v3686 = vpack.c.b16 %v2656, %v2651
  %v3687 = vpack.c.b16 %v2657, %v2652
  %v3688 = vpack.c.b16 %v2663, %v2658
  %v3689 = vpack.c.b16 %v2664, %v2659
  %v3690 = vpack.c.b16 %v2665, %v2660
  %v3691 = vpack.c.b16 %v2666, %v2661
  %v3692 = vpack.c.b16 %v2667, %v2662
  %v3693 = vpack.c.b16 %v2673, %v2668
  %v3694 = vpack.c.b16 %v2674, %v2669
  %v3695 = vpack.c.b16 %v2675, %v2670
  %v3696 = vpack.c.b16 %v2676, %v2671
  %v3697 = vpack.c.b16 %v2677, %v2672
  %v3698 = vpack.c.b16 %v2683, %v2678
  %v3699 = vpack.c.b16 %v2684, %v2679
  %v3700 = vpack.c.b16 %v2685, %v2680
  %v3701 = vpack.c.b16 %v2686, %v2681
  %v3702 = vpack.c.b16 %v2687, %v2682
  %v3703 = vpack.c.b16 %v2693, %v2688
  %v3704 = vpack.c.b16 %v2694, %v2689
  %v3705 = vpack.c.b16 %v2695, %v2690
  %v3706 = vpack.c.b16 %v2696, %v2691
  %v3707 = vpack.c.b16 %v2697, %v2692
  %v3708 = vpack.c.b16 %v2703, %v2698
  %v3709 = vpack.c.b16 %v2704, %v2699
  %v3710 = vpack.c.b16 %v2705, %v2700
  %v3711 = vpack.c.b16 %v2706, %v2701
  %v3712 = vpack.c.b16 %v2707, %v2702
  %v3713 = vpack.c.b16 %v2713, %v2708
  %v3714 = vpack.c.b16 %v2714, %v2709
  %v3715 = vpack.c.b16 %v2715, %v2710
  %v3716 = vpack.c.b16 %v2716, %v2711
  %v3717 = vpack.c.b16 %v2717, %v2712
  %v3718 = vpack.c.b16 %v2723, %v2718
  %v3719 = vpack.c.b16 %v2724, %v2719
  %v3720 = vpack.c.b16 %v2725, %v2720
  %v3721 = vpack.c.b16 %v2726, %v2721
  %v3722 = vpack.c.b16 %v2727, %v2722
  %v3723 = vpack.c.b16 %v2733, %v2728
  %v3724 = vpack.c.b16 %v2734, %v2729
  %v3725 = vpack.c.b16 %v2735, %v2730
  %v3726 = vpack.c.b16 %v2736, %v2731
  %v3727 = vpack.c.b16 %v2737, %v2732
  %v3728 = vpack.c.b16 %v2743, %v2738
  %v3729 = vpack.c.b16 %v2744, %v2739
  %v3730 = vpack.c.b16 %v2745, %v2740
  %v3731 = vpack.c.b16 %v2746, %v2741
  %v3732 = vpack.c.b16 %v2747, %v2742
  %v3733 = vpack.c.b16 %v2753, %v2748
  %v3734 = vpack.c.b16 %v2754, %v2749
  %v3735 = vpack.c.b16 %v2755, %v2750
  %v3736 = vpack.c.b16 %v2756, %v2751
  %v3737 = vpack.c.b16 %v2757, %v2752
  %v3738 = vpack.c.b16 %v2763, %v2758
  %v3739 = vpack.c.b16 %v2764, %v2759
  %v3740 = vpack.c.b16 %v2765, %v2760
  %v3741 = vpack.c.b16 %v2766, %v2761
  %v3742 = vpack.c.b16 %v2767, %v2762
  %v3743 = vpack.c.b16 %v2773, %v2768
  %v3744 = vpack.c.b16 %v2774, %v2769
  %v3745 = vpack.c.b16 %v2775, %v2770
  %v3746 = vpack.c.b16 %v2776, %v2771
  %v3747 = vpack.c.b16 %v2777, %v2772
  %v3748 = vpack.c.b16 %v2783, %v2778
  %v3749 = vpack.c.b16 %v2784, %v2779
  %v3750 = vpack.c.b16 %v2785, %v2780
  %v3751 = vpack.c.b16 %v2786, %v2781
  %v3752 = vpack.c.b16 %v2787, %v2782
  %v3753 = vpack.c.b16 %v2793, %v2788
  %v3754 = vpack.c.b16 %v2794, %v2789
  %v3755 = vpack.c.b16 %v2795, %v2790
  %v3756 = vpack.c.b16 %v2796, %v2791
  %v3757 = vpack.c.b16 %v2797, %v2792
  %v3758 = vpack.c.b16 %v2803, %v2798
  %v3759 = vpack.c.b16 %v2804, %v2799
  %v3760 = vpack.c.b16 %v2805, %v2800
  %v3761 = vpack.c.b16 %v2806, %v2801
  %v3762 = vpack.c.b16 %v2807, %v2802
  %v3763 = vpack.c.b16 %v2813, %v2808
  %v3764 = vpack.c.b16 %v2814, %v2809
  %v3765 = vpack.c.b16 %v2815, %v2810
  %v3766 = vpack.c.b16 %v2816, %v2811
  %v3767 = vpack.c.b16 %v2817, %v2812
  %v3768 = vpack.c.b16 %v2823, %v2818
  %v3769 = vpack.c.b16 %v2824, %v2819
  %v3770 = vpack.c.b16 %v2825, %v2820
  %v3771 = vpack.c.b16 %v2826, %v2821
  %v3772 = vpack.c.b16 %v2827, %v2822
  %v3773 = vpack.c.b16 %v2833, %v2828
  %v3774 = vpack.c.b16 %v2834, %v2829
  %v3775 = vpack.c.b16 %v2835, %v2830
  %v3776 = vpack.c.b16 %v2836, %v2831
  %v3777 = vpack.c.b16 %v2837, %v2832
  %v3778 = vpack.c.b16 %v2843, %v2838
  %v3779 = vpack.c.b16 %v2844, %v2839
  %v3780 = vpack.c.b16 %v2845, %v2840
  %v3781 = vpack.c.b16 %v2846, %v2841
  %v3782 = vpack.c.b16 %v2847, %v2842
  %v3783 = vpack.c.b16 %v2853, %v2848
  %v3784 = vpack.c.b16 %v2854, %v2849
  %v3785 = vpack.c.b16 %v2855, %v2850
  %v3786 = vpack.c.b16 %v2856, %v2851
  %v3787 = vpack.c.b16 %v2857, %v2852
  %v3788 = vpack.c.b16 %v2863, %v2858
  %v3789 = vpack.c.b16 %v2864, %v2859
  %v3790 = vpack.c.b16 %v2865, %v2860
  %v3791 = vpack.c.b16 %v2866, %v2861
  %v3792 = vpack.c.b16 %v2867, %v2862
  %v3793 = vpack.c.b16 %v2873, %v2868
  %v3794 = vpack.c.b16 %v2874, %v2869
  %v3795 = vpack.c.b16 %v2875, %v2870
  %v3796 = vpack.c.b16 %v2876, %v2871
  %v3797 = vpack.c.b16 %v2877, %v2872
  %v3798 = vpack.c.b16 %v2883, %v2878
  %v3799 = vpack.c.b16 %v2884, %v2879
  %v3800 = vpack.c.b16 %v2885, %v2880
  %v3801 = vpack.c.b16 %v2886, %v2881
  %v3802 = vpack.c.b16 %v2887, %v2882
  %v3803 = vpack.c.b16 %v2893, %v2888
  %v3804 = vpack.c.b16 %v2894, %v2889
  %v3805 = vpack.c.b16 %v2895, %v2890
  %v3806 = vpack.c.b16 %v2896, %v2891
  %v3807 = vpack.c.b16 %v2897, %v2892
  %v3808 = vpack.c.b16 %v2903, %v2898
  %v3809 = vpack.c.b16 %v2904, %v2899
  %v3810 = vpack.c.b16 %v2905, %v2900
  %v3811 = vpack.c.b16 %v2906, %v2901
  %v3812 = vpack.c.b16 %v2907, %v2902
  %v3813 = vpack.c.b16 %v2913, %v2908
  %v3814 = vpack.c.b16 %v2914, %v2909
  %v3815 = vpack.c.b16 %v2915, %v2910
  %v3816 = vpack.c.b16 %v2916, %v2911
  %v3817 = vpack.c.b16 %v2917, %v2912
  %v3818 = vpack.c.b16 %v2923, %v2918
  %v3819 = vpack.c.b16 %v2924, %v2919
  %v3820 = vpack.c.b16 %v2925, %v2920
  %v3821 = vpack.c.b16 %v2926, %v2921
  %v3822 = vpack.c.b16 %v2927, %v2922
  %v3823 = vpack.c.b16 %v2933, %v2928
  %v3824 = vpack.c.b16 %v2934, %v2929
  %v3825 = vpack.c.b16 %v2935, %v2930
  %v3826 = vpack.c.b16 %v2936, %v2931
  %v3827 = vpack.c.b16 %v2937, %v2932
  %v3828 = vpack.c.b16 %v2943, %v2938
  %v3829 = vpack.c.b16 %v2944, %v2939
  %v3830 = vpack.c.b16 %v2945, %v2940
  %v3831 = vpack.c.b16 %v2946, %v2941
  %v3832 = vpack.c.b16 %v2947, %v2942
  %v3833 = vpack.c.b16 %v2953, %v2948
  %v3834 = vpack.c.b16 %v2954, %v2949
  %v3835 = vpack.c.b16 %v2955, %v2950
  %v3836 = vpack.c.b16 %v2956, %v2951
  %v3837 = vpack.c.b16 %v2957, %v2952
  %v3838 = vpack.c.b16 %v2963, %v2958
  %v3839 = vpack.c.b16 %v2964, %v2959
  %v3840 = vpack.c.b16 %v2965, %v2960
  %v3841 = vpack.c.b16 %v2966, %v2961
  %v3842 = vpack.c.b16 %v2967, %v2962
  %v3843 = vpack.c.b16 %v2973, %v2968
  %v3844 = vpack.c.b16 %v2974, %v2969
  %v3845 = vpack.c.b16 %v2975, %v2970
  %v3846 = vpack.c.b16 %v2976, %v2971
  %v3847 = vpack.c.b16 %v2977, %v2972
  %v3848 = vpack.c.b16 %v2983, %v2978
  %v3849 = vpack.c.b16 %v2984, %v2979
  %v3850 = vpack.c.b16 %v2985, %v2980
  %v3851 = vpack.c.b16 %v2986, %v2981
  %v3852 = vpack.c.b16 %v2987, %v2982
  %v3853 = vpack.c.b16 %v2993, %v2988
  %v3854 = vpack.c.b16 %v2994, %v2989
  %v3855 = vpack.c.b16 %v2995, %v2990
  %v3856 = vpack.c.b16 %v2996, %v2991
  %v3857 = vpack.c.b16 %v2997, %v2992
  %v3858 = vpack.c.b16 %v3003, %v2998
  %v3859 = vpack.c.b16 %v3004, %v2999
  %v3860 = vpack.c.b16 %v3005, %v3000
  %v3861 = vpack.c.b16 %v3006, %v3001
  %v3862 = vpack.c.b16 %v3007, %v3002
  %v3863 = vpack.c.b16 %v3013, %v3008
  %v3864 = vpack.c.b16 %v3014, %v3009
  %v3865 = vpack.c.b16 %v3015, %v3010
  %v3866 = vpack.c.b16 %v3016, %v3011
  %v3867 = vpack.c.b16 %v3017, %v3012
  %v3868 = vpack.c.b16 %v3023, %v3018
  %v3869 = vpack.c.b16 %v3024, %v3019
  %v3870 = vpack.c.b16 %v3025, %v3020
  %v3871 = vpack.c.b16 %v3026, %v3021
  %v3872 = vpack.c.b16 %v3027, %v3022
  %v3873 = vpack.c.b16 %v3033, %v3028
  %v3874 = vpack.c.b16 %v3034, %v3029
  %v3875 = vpack.c.b16 %v3035, %v3030
  %v3876 = vpack.c.b16 %v3036, %v3031
  %v3877 = vpack.c.b16 %v3037, %v3032
  %v3878 = vpack.c.b16 %v3043, %v3038
  %v3879 = vpack.c.b16 %v3044, %v3039
  %v3880 = vpack.c.b16 %v3045, %v3040
  %v3881 = vpack.c.b16 %v3046, %v3041
  %v3882 = vpack.c.b16 %v3047, %v3042
  %v3883 = vpack.c.b16 %v3053, %v3048
  %v3884 = vpack.c.b16 %v3054, %v3049
  %v3885 = vpack.c.b16 %v3055, %v3050
  %v3886 = vpack.c.b16 %v3056, %v3051
  %v3887 = vpack.c.b16 %v3057, %v3052
  %v3888 = vpack.c.b16 %v3063, %v3058
  %v3889 = vpack.c.b16 %v3064, %v3059
  %v3890 = vpack.c.b16 %v3065, %v3060
  %v3891 = vpack.c.b16 %v3066, %v3061
  %v3892 = vpack.c.b16 %v3067, %v3062
  %v3893 = vpack.c.b16 %v3073, %v3068
  %v3894 = vpack.c.b16 %v3074, %v3069
  %v3895 = vpack.c.b16 %v3075, %v3070
  %v3896 = vpack.c.b16 %v3076, %v3071
  %v3897 = vpack.c.b16 %v3077, %v3072
  %v3898 = vpack.c.b16 %v3083, %v3078
  %v3899 = vpack.c.b16 %v3084, %v3079
  %v3900 = vpack.c.b16 %v3085, %v3080
  %v3901 = vpack.c.b16 %v3086, %v3081
  %v3902 = vpack.c.b16 %v3087, %v3082
  %v3903 = vpack.c.b16 %v3093, %v3088
  %v3904 = vpack.c.b16 %v3094, %v3089
  %v3905 = vpack.c.b16 %v3095, %v3090
  %v3906 = vpack.c.b16 %v3096, %v3091
  %v3907 = vpack.c.b16 %v3097, %v3092
  %v3908 = vpack.c.b16 %v3103, %v3098
  %v3909 = vpack.c.b16 %v3104, %v3099
  %v3910 = vpack.c.b16 %v3105, %v3100
  %v3911 = vpack.c.b16 %v3106, %v3101
  %v3912 = vpack.c.b16 %v3107, %v3102
  %v3913 = vpack.c.b16 %v3113, %v3108
  %v3914 = vpack.c.b16 %v3114, %v3109
  %v3915 = vpack.c.b16 %v3115, %v3110
  %v3916 = vpack.c.b16 %v3116, %v3111
  %v3917 = vpack.c.b16 %v3117, %v3112
  %v3918 = vpack.c.b16 %v3123, %v3118
  %v3919 = vpack.c.b16 %v3124, %v3119
  %v3920 = vpack.c.b16 %v3125, %v3120
  %v3921 = vpack.c.b16 %v3126, %v3121
  %v3922 = vpack.c.b16 %v3127, %v3122
  %v3923 = vpack.c.b16 %v3133, %v3128
  %v3924 = vpack.c.b16 %v3134, %v3129
  %v3925 = vpack.c.b16 %v3135, %v3130
  %v3926 = vpack.c.b16 %v3136, %v3131
  %v3927 = vpack.c.b16 %v3137, %v3132
  %v3928 = vpack.c.b16 %v3143, %v3138
  %v3929 = vpack.c.b16 %v3144, %v3139
  %v3930 = vpack.c.b16 %v3145, %v3140
  %v3931 = vpack.c.b16 %v3146, %v3141
  %v3932 = vpack.c.b16 %v3147, %v3142
  %v3933 = vpack.c.b16 %v3153, %v3148
  %v3934 = vpack.c.b16 %v3154, %v3149
  %v3935 = vpack.c.b16 %v3155, %v3150
  %v3936 = vpack.c.b16 %v3156, %v3151
  %v3937 = vpack.c.b16 %v3157, %v3152
  %v3938 = vpack.c.b16 %v3163, %v3158
  %v3939 = vpack.c.b16 %v3164, %v3159
  %v3940 = vpack.c.b16 %v3165, %v3160
  %v3941 = vpack.c.b16 %v3166, %v3161
  %v3942 = vpack.c.b16 %v3167, %v3162
  %v3943 = vpack.c.b16 %v3173, %v3168
  %v3944 = vpack.c.b16 %v3174, %v3169
  %v3945 = vpack.c.b16 %v3175, %v3170
  %v3946 = vpack.c.b16 %v3176, %v3171
  %v3947 = vpack.c.b16 %v3177, %v3172
  %v3948 = vpack.c.b16 %v3183, %v3178
  %v3949 = vpack.c.b16 %v3184, %v3179
  %v3950 = vpack.c.b16 %v3185, %v3180
  %v3951 = vpack.c.b16 %v3186, %v3181
  %v3952 = vpack.c.b16 %v3187, %v3182
  %v3953 = vpack.c.b16 %v3193, %v3188
  %v3954 = vpack.c.b16 %v3194, %v3189
  %v3955 = vpack.c.b16 %v3195, %v3190
  %v3956 = vpack.c.b16 %v3196, %v3191
  %v3957 = vpack.c.b16 %v3197, %v3192
  %v3958 = vpack.c.b16 %v3203, %v3198
  %v3959 = vpack.c.b16 %v3204, %v3199
  %v3960 = vpack.c.b16 %v3205, %v3200
  %v3961 = vpack.c.b16 %v3206, %v3201
  %v3962 = vpack.c.b16 %v3207, %v3202
  %v3963 = vpack.c.b16 %v3213, %v3208
  %v3964 = vpack.c.b16 %v3214, %v3209
  %v3965 = vpack.c.b16 %v3215, %v3210
  %v3966 = vpack.c.b16 %v3216, %v3211
  %v3967 = vpack.c.b16 %v3217, %v3212
  %v3968 = vpack.c.b16 %v3223, %v3218
  %v3969 = vpack.c.b16 %v3224, %v3219
  %v3970 = vpack.c.b16 %v3225, %v3220
  %v3971 = vpack.c.b16 %v3226, %v3221
  %v3972 = vpack.c.b16 %v3227, %v3222
  %v3973 = vpack.c.b16 %v3233, %v3228
  %v3974 = vpack.c.b16 %v3234, %v3229
  %v3975 = vpack.c.b16 %v3235, %v3230
  %v3976 = vpack.c.b16 %v3236, %v3231
  %v3977 = vpack.c.b16 %v3237, %v3232
  %v3978 = vpack.c.b16 %v3243, %v3238
  %v3979 = vpack.c.b16 %v3244, %v3239
  %v3980 = vpack.c.b16 %v3245, %v3240
  %v3981 = vpack.c.b16 %v3246, %v3241
  %v3982 = vpack.c.b16 %v3247, %v3242
  %v3983 = vpack.c.b16 %v3253, %v3248
  %v3984 = vpack.c.b16 %v3254, %v3249
  %v3985 = vpack.c.b16 %v3255, %v3250
  %v3986 = vpack.c.b16 %v3256, %v3251
  %v3987 = vpack.c.b16 %v3257, %v3252
  %v3988 = vpack.c.b16 %v3263, %v3258
  %v3989 = vpack.c.b16 %v3264, %v3259
  %v3990 = vpack.c.b16 %v3265, %v3260
  %v3991 = vpack.c.b16 %v3266, %v3261
  %v3992 = vpack.c.b16 %v3267, %v3262
  %v3993 = vpack.c.b16 %v3273, %v3268
  %v3994 = vpack.c.b16 %v3274, %v3269
  %v3995 = vpack.c.b16 %v3275, %v3270
  %v3996 = vpack.c.b16 %v3276, %v3271
  %v3997 = vpack.c.b16 %v3277, %v3272
  %4718 = vmatpush.bf16.msra.mxu0 %v3313
  %4719 = vmatpush.bf16.msra.mxu0 %v3308
  %4720 = vmatpush.bf16.msra.mxu0 %v3303
  %4721 = vmatpush.bf16.msra.mxu0 %v3298
  %4722 = vmatpush.bf16.msra.mxu0 %v3293
  %4723 = vmatpush.bf16.msra.mxu0 %v3288
  %4724 = vmatpush.bf16.msra.mxu0 %v3283
  %4725 = vmatpush.bf16.msra.mxu0 %v3278
  %4726 = vmatmul.bf16.gmra.mxu0 %v938
  %v4727 = vpop.f32.mrf.mxu0
  %v4728 = vadd.f32 %v901, %v4727
  %v4729 = vpop.f32.mrf.mxu0
  %4730 = vdwg.mxu0
  %4731 = vmatpush.bf16.msra.mxu0 %v3353
  %4732 = vmatpush.bf16.msra.mxu0 %v3348
  %4733 = vmatpush.bf16.msra.mxu0 %v3343
  %4734 = vmatpush.bf16.msra.mxu0 %v3338
  %4735 = vmatpush.bf16.msra.mxu0 %v3333
  %4736 = vmatpush.bf16.msra.mxu0 %v3328
  %4737 = vmatpush.bf16.msra.mxu0 %v3323
  %4738 = vmatpush.bf16.msra.mxu0 %v3318
  %4739 = vmatmul.bf16.gmra.mxu0 %v939
  %v4740 = vpop.f32.mrf.mxu0
  %v4741 = vadd.f32 %v4728, %v4740
  %v4742 = vpop.f32.mrf.mxu0
  %4743 = vdwg.mxu0
  %4744 = vmatpush.bf16.msra.mxu0 %v3393
  %4745 = vmatpush.bf16.msra.mxu0 %v3388
  %4746 = vmatpush.bf16.msra.mxu0 %v3383
  %4747 = vmatpush.bf16.msra.mxu0 %v3378
  %4748 = vmatpush.bf16.msra.mxu0 %v3373
  %4749 = vmatpush.bf16.msra.mxu0 %v3368
  %4750 = vmatpush.bf16.msra.mxu0 %v3363
  %4751 = vmatpush.bf16.msra.mxu0 %v3358
  %4752 = vmatmul.bf16.gmra.mxu0 %v940
  %v4753 = vpop.f32.mrf.mxu0
  %v4754 = vadd.f32 %v4741, %v4753
  %v4755 = vpop.f32.mrf.mxu0
  %4756 = vdwg.mxu0
  %4757 = vmatpush.bf16.msra.mxu0 %v3433
  %4758 = vmatpush.bf16.msra.mxu0 %v3428
  %4759 = vmatpush.bf16.msra.mxu0 %v3423
  %4760 = vmatpush.bf16.msra.mxu0 %v3418
  %4761 = vmatpush.bf16.msra.mxu0 %v3413
  %4762 = vmatpush.bf16.msra.mxu0 %v3408
  %4763 = vmatpush.bf16.msra.mxu0 %v3403
  %4764 = vmatpush.bf16.msra.mxu0 %v3398
  %4765 = vmatmul.bf16.gmra.mxu0 %v941
  %v4766 = vpop.f32.mrf.mxu0
  %v4767 = vadd.f32 %v4754, %v4766
  %v4768 = vpop.f32.mrf.mxu0
  %4769 = vdwg.mxu0
  %4770 = vmatpush.bf16.msra.mxu0 %v3473
  %4771 = vmatpush.bf16.msra.mxu0 %v3468
  %4772 = vmatpush.bf16.msra.mxu0 %v3463
  %4773 = vmatpush.bf16.msra.mxu0 %v3458
  %4774 = vmatpush.bf16.msra.mxu0 %v3453
  %4775 = vmatpush.bf16.msra.mxu0 %v3448
  %4776 = vmatpush.bf16.msra.mxu0 %v3443
  %4777 = vmatpush.bf16.msra.mxu0 %v3438
  %4778 = vmatmul.bf16.gmra.mxu0 %v942
  %v4779 = vpop.f32.mrf.mxu0
  %v4780 = vadd.f32 %v4767, %v4779
  %v4781 = vpop.f32.mrf.mxu0
  %4782 = vdwg.mxu0
  %4783 = vmatpush.bf16.msra.mxu0 %v3513
  %4784 = vmatpush.bf16.msra.mxu0 %v3508
  %4785 = vmatpush.bf16.msra.mxu0 %v3503
  %4786 = vmatpush.bf16.msra.mxu0 %v3498
  %4787 = vmatpush.bf16.msra.mxu0 %v3493
  %4788 = vmatpush.bf16.msra.mxu0 %v3488
  %4789 = vmatpush.bf16.msra.mxu0 %v3483
  %4790 = vmatpush.bf16.msra.mxu0 %v3478
  %4791 = vmatmul.bf16.gmra.mxu0 %v943
  %v4792 = vpop.f32.mrf.mxu0
  %v4793 = vadd.f32 %v4780, %v4792
  %v4794 = vpop.f32.mrf.mxu0
  %4795 = vdwg.mxu0
  %4796 = vmatpush.bf16.msra.mxu0 %v3553
  %4797 = vmatpush.bf16.msra.mxu0 %v3548
  %4798 = vmatpush.bf16.msra.mxu0 %v3543
  %4799 = vmatpush.bf16.msra.mxu0 %v3538
  %4800 = vmatpush.bf16.msra.mxu0 %v3533
  %4801 = vmatpush.bf16.msra.mxu0 %v3528
  %4802 = vmatpush.bf16.msra.mxu0 %v3523
  %4803 = vmatpush.bf16.msra.mxu0 %v3518
  %4804 = vmatmul.bf16.gmra.mxu0 %v944
  %v4805 = vpop.f32.mrf.mxu0
  %v4806 = vadd.f32 %v4793, %v4805
  %v4807 = vpop.f32.mrf.mxu0
  %4808 = vdwg.mxu0
  %4809 = vmatpush.bf16.msra.mxu0 %v3593
  %4810 = vmatpush.bf16.msra.mxu0 %v3588
  %4811 = vmatpush.bf16.msra.mxu0 %v3583
  %4812 = vmatpush.bf16.msra.mxu0 %v3578
  %4813 = vmatpush.bf16.msra.mxu0 %v3573
  %4814 = vmatpush.bf16.msra.mxu0 %v3568
  %4815 = vmatpush.bf16.msra.mxu0 %v3563
  %4816 = vmatpush.bf16.msra.mxu0 %v3558
  %4817 = vmatmul.bf16.gmra.mxu0 %v945
  %v4818 = vpop.f32.mrf.mxu0
  %v4819 = vadd.f32 %v4806, %v4818
  %v4820 = vpop.f32.mrf.mxu0
  %4821 = vdwg.mxu0
  %4822 = vmatpush.bf16.msra.mxu0 %v3633
  %4823 = vmatpush.bf16.msra.mxu0 %v3628
  %4824 = vmatpush.bf16.msra.mxu0 %v3623
  %4825 = vmatpush.bf16.msra.mxu0 %v3618
  %4826 = vmatpush.bf16.msra.mxu0 %v3613
  %4827 = vmatpush.bf16.msra.mxu0 %v3608
  %4828 = vmatpush.bf16.msra.mxu0 %v3603
  %4829 = vmatpush.bf16.msra.mxu0 %v3598
  %4830 = vmatmul.bf16.gmra.mxu0 %v946
  %v4831 = vpop.f32.mrf.mxu0
  %v4832 = vadd.f32 %v4819, %v4831
  %v4833 = vpop.f32.mrf.mxu0
  %4834 = vdwg.mxu0
  %4835 = vmatpush.bf16.msra.mxu0 %v3673
  %4836 = vmatpush.bf16.msra.mxu0 %v3668
  %4837 = vmatpush.bf16.msra.mxu0 %v3663
  %4838 = vmatpush.bf16.msra.mxu0 %v3658
  %4839 = vmatpush.bf16.msra.mxu0 %v3653
  %4840 = vmatpush.bf16.msra.mxu0 %v3648
  %4841 = vmatpush.bf16.msra.mxu0 %v3643
  %4842 = vmatpush.bf16.msra.mxu0 %v3638
  %4843 = vmatmul.bf16.gmra.mxu0 %v947
  %v4844 = vpop.f32.mrf.mxu0
  %v4845 = vadd.f32 %v4832, %v4844
  %v4846 = vpop.f32.mrf.mxu0
  %4847 = vdwg.mxu0
  %4848 = vmatpush.bf16.msra.mxu0 %v3713
  %4849 = vmatpush.bf16.msra.mxu0 %v3708
  %4850 = vmatpush.bf16.msra.mxu0 %v3703
  %4851 = vmatpush.bf16.msra.mxu0 %v3698
  %4852 = vmatpush.bf16.msra.mxu0 %v3693
  %4853 = vmatpush.bf16.msra.mxu0 %v3688
  %4854 = vmatpush.bf16.msra.mxu0 %v3683
  %4855 = vmatpush.bf16.msra.mxu0 %v3678
  %4856 = vmatmul.bf16.gmra.mxu0 %v948
  %v4857 = vpop.f32.mrf.mxu0
  %v4858 = vadd.f32 %v4845, %v4857
  %v4859 = vpop.f32.mrf.mxu0
  %4860 = vdwg.mxu0
  %4861 = vmatpush.bf16.msra.mxu0 %v3753
  %4862 = vmatpush.bf16.msra.mxu0 %v3748
  %4863 = vmatpush.bf16.msra.mxu0 %v3743
  %4864 = vmatpush.bf16.msra.mxu0 %v3738
  %4865 = vmatpush.bf16.msra.mxu0 %v3733
  %4866 = vmatpush.bf16.msra.mxu0 %v3728
  %4867 = vmatpush.bf16.msra.mxu0 %v3723
  %4868 = vmatpush.bf16.msra.mxu0 %v3718
  %4869 = vmatmul.bf16.gmra.mxu0 %v949
  %v4870 = vpop.f32.mrf.mxu0
  %v4871 = vadd.f32 %v4858, %v4870
  %v4872 = vpop.f32.mrf.mxu0
  %4873 = vdwg.mxu0
  %4874 = vmatpush.bf16.msra.mxu0 %v3793
  %4875 = vmatpush.bf16.msra.mxu0 %v3788
  %4876 = vmatpush.bf16.msra.mxu0 %v3783
  %4877 = vmatpush.bf16.msra.mxu0 %v3778
  %4878 = vmatpush.bf16.msra.mxu0 %v3773
  %4879 = vmatpush.bf16.msra.mxu0 %v3768
  %4880 = vmatpush.bf16.msra.mxu0 %v3763
  %4881 = vmatpush.bf16.msra.mxu0 %v3758
  %4882 = vmatmul.bf16.gmra.mxu0 %v950
  %v4883 = vpop.f32.mrf.mxu0
  %v4884 = vadd.f32 %v4871, %v4883
  %v4885 = vpop.f32.mrf.mxu0
  %4886 = vdwg.mxu0
  %4887 = vmatpush.bf16.msra.mxu0 %v3833
  %4888 = vmatpush.bf16.msra.mxu0 %v3828
  %4889 = vmatpush.bf16.msra.mxu0 %v3823
  %4890 = vmatpush.bf16.msra.mxu0 %v3818
  %4891 = vmatpush.bf16.msra.mxu0 %v3813
  %4892 = vmatpush.bf16.msra.mxu0 %v3808
  %4893 = vmatpush.bf16.msra.mxu0 %v3803
  %4894 = vmatpush.bf16.msra.mxu0 %v3798
  %4895 = vmatmul.bf16.gmra.mxu0 %v951
  %v4896 = vpop.f32.mrf.mxu0
  %v4897 = vadd.f32 %v4884, %v4896
  %v4898 = vpop.f32.mrf.mxu0
  %4899 = vdwg.mxu0
  %4900 = vmatpush.bf16.msra.mxu0 %v3873
  %4901 = vmatpush.bf16.msra.mxu0 %v3868
  %4902 = vmatpush.bf16.msra.mxu0 %v3863
  %4903 = vmatpush.bf16.msra.mxu0 %v3858
  %4904 = vmatpush.bf16.msra.mxu0 %v3853
  %4905 = vmatpush.bf16.msra.mxu0 %v3848
  %4906 = vmatpush.bf16.msra.mxu0 %v3843
  %4907 = vmatpush.bf16.msra.mxu0 %v3838
  %4908 = vmatmul.bf16.gmra.mxu0 %v952
  %v4909 = vpop.f32.mrf.mxu0
  %v4910 = vadd.f32 %v4897, %v4909
  %v4911 = vpop.f32.mrf.mxu0
  %4912 = vdwg.mxu0
  %4913 = vmatpush.bf16.msra.mxu0 %v3913
  %4914 = vmatpush.bf16.msra.mxu0 %v3908
  %4915 = vmatpush.bf16.msra.mxu0 %v3903
  %4916 = vmatpush.bf16.msra.mxu0 %v3898
  %4917 = vmatpush.bf16.msra.mxu0 %v3893
  %4918 = vmatpush.bf16.msra.mxu0 %v3888
  %4919 = vmatpush.bf16.msra.mxu0 %v3883
  %4920 = vmatpush.bf16.msra.mxu0 %v3878
  %4921 = vmatmul.bf16.gmra.mxu0 %v953
  %v4922 = vpop.f32.mrf.mxu0
  %v4923 = vadd.f32 %v4910, %v4922
  %v4924 = vpop.f32.mrf.mxu0
  %4925 = vdwg.mxu0
  %4926 = vmatpush.bf16.msra.mxu0 %v3953
  %4927 = vmatpush.bf16.msra.mxu0 %v3948
  %4928 = vmatpush.bf16.msra.mxu0 %v3943
  %4929 = vmatpush.bf16.msra.mxu0 %v3938
  %4930 = vmatpush.bf16.msra.mxu0 %v3933
  %4931 = vmatpush.bf16.msra.mxu0 %v3928
  %4932 = vmatpush.bf16.msra.mxu0 %v3923
  %4933 = vmatpush.bf16.msra.mxu0 %v3918
  %4934 = vmatmul.bf16.gmra.mxu0 %v954
  %v4935 = vpop.f32.mrf.mxu0
  %v4936 = vadd.f32 %v4923, %v4935
  %v4937 = vpop.f32.mrf.mxu0
  %4938 = vdwg.mxu0
  %4939 = vmatpush.bf16.msra.mxu0 %v3993
  %4940 = vmatpush.bf16.msra.mxu0 %v3988
  %4941 = vmatpush.bf16.msra.mxu0 %v3983
  %4942 = vmatpush.bf16.msra.mxu0 %v3978
  %4943 = vmatpush.bf16.msra.mxu0 %v3973
  %4944 = vmatpush.bf16.msra.mxu0 %v3968
  %4945 = vmatpush.bf16.msra.mxu0 %v3963
  %4946 = vmatpush.bf16.msra.mxu0 %v3958
  %4947 = vmatmul.bf16.gmra.mxu0 %v955
  %v4948 = vpop.f32.mrf.mxu0
  %v4949 = vadd.f32 %v4936, %v4948
  %v4950 = vpop.f32.mrf.mxu0
  %4951 = vdwg.mxu0
  %4952 = vmatpush.bf16.msra.mxu0 %v3314
  %4953 = vmatpush.bf16.msra.mxu0 %v3309
  %4954 = vmatpush.bf16.msra.mxu0 %v3304
  %4955 = vmatpush.bf16.msra.mxu0 %v3299
  %4956 = vmatpush.bf16.msra.mxu0 %v3294
  %4957 = vmatpush.bf16.msra.mxu0 %v3289
  %4958 = vmatpush.bf16.msra.mxu0 %v3284
  %4959 = vmatpush.bf16.msra.mxu0 %v3279
  %4960 = vmatmul.bf16.gmra.mxu0 %v938
  %v4961 = vpop.f32.mrf.mxu0
  %v4962 = vadd.f32 %v902, %v4961
  %v4963 = vpop.f32.mrf.mxu0
  %4964 = vdwg.mxu0
  %4965 = vmatpush.bf16.msra.mxu0 %v3354
  %4966 = vmatpush.bf16.msra.mxu0 %v3349
  %4967 = vmatpush.bf16.msra.mxu0 %v3344
  %4968 = vmatpush.bf16.msra.mxu0 %v3339
  %4969 = vmatpush.bf16.msra.mxu0 %v3334
  %4970 = vmatpush.bf16.msra.mxu0 %v3329
  %4971 = vmatpush.bf16.msra.mxu0 %v3324
  %4972 = vmatpush.bf16.msra.mxu0 %v3319
  %4973 = vmatmul.bf16.gmra.mxu0 %v939
  %v4974 = vpop.f32.mrf.mxu0
  %v4975 = vadd.f32 %v4962, %v4974
  %v4976 = vpop.f32.mrf.mxu0
  %4977 = vdwg.mxu0
  %4978 = vmatpush.bf16.msra.mxu0 %v3394
  %4979 = vmatpush.bf16.msra.mxu0 %v3389
  %4980 = vmatpush.bf16.msra.mxu0 %v3384
  %4981 = vmatpush.bf16.msra.mxu0 %v3379
  %4982 = vmatpush.bf16.msra.mxu0 %v3374
  %4983 = vmatpush.bf16.msra.mxu0 %v3369
  %4984 = vmatpush.bf16.msra.mxu0 %v3364
  %4985 = vmatpush.bf16.msra.mxu0 %v3359
  %4986 = vmatmul.bf16.gmra.mxu0 %v940
  %v4987 = vpop.f32.mrf.mxu0
  %v4988 = vadd.f32 %v4975, %v4987
  %v4989 = vpop.f32.mrf.mxu0
  %4990 = vdwg.mxu0
  %4991 = vmatpush.bf16.msra.mxu0 %v3434
  %4992 = vmatpush.bf16.msra.mxu0 %v3429
  %4993 = vmatpush.bf16.msra.mxu0 %v3424
  %4994 = vmatpush.bf16.msra.mxu0 %v3419
  %4995 = vmatpush.bf16.msra.mxu0 %v3414
  %4996 = vmatpush.bf16.msra.mxu0 %v3409
  %4997 = vmatpush.bf16.msra.mxu0 %v3404
  %4998 = vmatpush.bf16.msra.mxu0 %v3399
  %4999 = vmatmul.bf16.gmra.mxu0 %v941
  %v5000 = vpop.f32.mrf.mxu0
  %v5001 = vadd.f32 %v4988, %v5000
  %v5002 = vpop.f32.mrf.mxu0
  %5003 = vdwg.mxu0
  %5004 = vmatpush.bf16.msra.mxu0 %v3474
  %5005 = vmatpush.bf16.msra.mxu0 %v3469
  %5006 = vmatpush.bf16.msra.mxu0 %v3464
  %5007 = vmatpush.bf16.msra.mxu0 %v3459
  %5008 = vmatpush.bf16.msra.mxu0 %v3454
  %5009 = vmatpush.bf16.msra.mxu0 %v3449
  %5010 = vmatpush.bf16.msra.mxu0 %v3444
  %5011 = vmatpush.bf16.msra.mxu0 %v3439
  %5012 = vmatmul.bf16.gmra.mxu0 %v942
  %v5013 = vpop.f32.mrf.mxu0
  %v5014 = vadd.f32 %v5001, %v5013
  %v5015 = vpop.f32.mrf.mxu0
  %5016 = vdwg.mxu0
  %5017 = vmatpush.bf16.msra.mxu0 %v3514
  %5018 = vmatpush.bf16.msra.mxu0 %v3509
  %5019 = vmatpush.bf16.msra.mxu0 %v3504
  %5020 = vmatpush.bf16.msra.mxu0 %v3499
  %5021 = vmatpush.bf16.msra.mxu0 %v3494
  %5022 = vmatpush.bf16.msra.mxu0 %v3489
  %5023 = vmatpush.bf16.msra.mxu0 %v3484
  %5024 = vmatpush.bf16.msra.mxu0 %v3479
  %5025 = vmatmul.bf16.gmra.mxu0 %v943
  %v5026 = vpop.f32.mrf.mxu0
  %v5027 = vadd.f32 %v5014, %v5026
  %v5028 = vpop.f32.mrf.mxu0
  %5029 = vdwg.mxu0
  %5030 = vmatpush.bf16.msra.mxu0 %v3554
  %5031 = vmatpush.bf16.msra.mxu0 %v3549
  %5032 = vmatpush.bf16.msra.mxu0 %v3544
  %5033 = vmatpush.bf16.msra.mxu0 %v3539
  %5034 = vmatpush.bf16.msra.mxu0 %v3534
  %5035 = vmatpush.bf16.msra.mxu0 %v3529
  %5036 = vmatpush.bf16.msra.mxu0 %v3524
  %5037 = vmatpush.bf16.msra.mxu0 %v3519
  %5038 = vmatmul.bf16.gmra.mxu0 %v944
  %v5039 = vpop.f32.mrf.mxu0
  %v5040 = vadd.f32 %v5027, %v5039
  %v5041 = vpop.f32.mrf.mxu0
  %5042 = vdwg.mxu0
  %5043 = vmatpush.bf16.msra.mxu0 %v3594
  %5044 = vmatpush.bf16.msra.mxu0 %v3589
  %5045 = vmatpush.bf16.msra.mxu0 %v3584
  %5046 = vmatpush.bf16.msra.mxu0 %v3579
  %5047 = vmatpush.bf16.msra.mxu0 %v3574
  %5048 = vmatpush.bf16.msra.mxu0 %v3569
  %5049 = vmatpush.bf16.msra.mxu0 %v3564
  %5050 = vmatpush.bf16.msra.mxu0 %v3559
  %5051 = vmatmul.bf16.gmra.mxu0 %v945
  %v5052 = vpop.f32.mrf.mxu0
  %v5053 = vadd.f32 %v5040, %v5052
  %v5054 = vpop.f32.mrf.mxu0
  %5055 = vdwg.mxu0
  %5056 = vmatpush.bf16.msra.mxu0 %v3634
  %5057 = vmatpush.bf16.msra.mxu0 %v3629
  %5058 = vmatpush.bf16.msra.mxu0 %v3624
  %5059 = vmatpush.bf16.msra.mxu0 %v3619
  %5060 = vmatpush.bf16.msra.mxu0 %v3614
  %5061 = vmatpush.bf16.msra.mxu0 %v3609
  %5062 = vmatpush.bf16.msra.mxu0 %v3604
  %5063 = vmatpush.bf16.msra.mxu0 %v3599
  %5064 = vmatmul.bf16.gmra.mxu0 %v946
  %v5065 = vpop.f32.mrf.mxu0
  %v5066 = vadd.f32 %v5053, %v5065
  %v5067 = vpop.f32.mrf.mxu0
  %5068 = vdwg.mxu0
  %5069 = vmatpush.bf16.msra.mxu0 %v3674
  %5070 = vmatpush.bf16.msra.mxu0 %v3669
  %5071 = vmatpush.bf16.msra.mxu0 %v3664
  %5072 = vmatpush.bf16.msra.mxu0 %v3659
  %5073 = vmatpush.bf16.msra.mxu0 %v3654
  %5074 = vmatpush.bf16.msra.mxu0 %v3649
  %5075 = vmatpush.bf16.msra.mxu0 %v3644
  %5076 = vmatpush.bf16.msra.mxu0 %v3639
  %5077 = vmatmul.bf16.gmra.mxu0 %v947
  %v5078 = vpop.f32.mrf.mxu0
  %v5079 = vadd.f32 %v5066, %v5078
  %v5080 = vpop.f32.mrf.mxu0
  %5081 = vdwg.mxu0
  %5082 = vmatpush.bf16.msra.mxu0 %v3714
  %5083 = vmatpush.bf16.msra.mxu0 %v3709
  %5084 = vmatpush.bf16.msra.mxu0 %v3704
  %5085 = vmatpush.bf16.msra.mxu0 %v3699
  %5086 = vmatpush.bf16.msra.mxu0 %v3694
  %5087 = vmatpush.bf16.msra.mxu0 %v3689
  %5088 = vmatpush.bf16.msra.mxu0 %v3684
  %5089 = vmatpush.bf16.msra.mxu0 %v3679
  %5090 = vmatmul.bf16.gmra.mxu0 %v948
  %v5091 = vpop.f32.mrf.mxu0
  %v5092 = vadd.f32 %v5079, %v5091
  %v5093 = vpop.f32.mrf.mxu0
  %5094 = vdwg.mxu0
  %5095 = vmatpush.bf16.msra.mxu0 %v3754
  %5096 = vmatpush.bf16.msra.mxu0 %v3749
  %5097 = vmatpush.bf16.msra.mxu0 %v3744
  %5098 = vmatpush.bf16.msra.mxu0 %v3739
  %5099 = vmatpush.bf16.msra.mxu0 %v3734
  %5100 = vmatpush.bf16.msra.mxu0 %v3729
  %5101 = vmatpush.bf16.msra.mxu0 %v3724
  %5102 = vmatpush.bf16.msra.mxu0 %v3719
  %5103 = vmatmul.bf16.gmra.mxu0 %v949
  %v5104 = vpop.f32.mrf.mxu0
  %v5105 = vadd.f32 %v5092, %v5104
  %v5106 = vpop.f32.mrf.mxu0
  %5107 = vdwg.mxu0
  %5108 = vmatpush.bf16.msra.mxu0 %v3794
  %5109 = vmatpush.bf16.msra.mxu0 %v3789
  %5110 = vmatpush.bf16.msra.mxu0 %v3784
  %5111 = vmatpush.bf16.msra.mxu0 %v3779
  %5112 = vmatpush.bf16.msra.mxu0 %v3774
  %5113 = vmatpush.bf16.msra.mxu0 %v3769
  %5114 = vmatpush.bf16.msra.mxu0 %v3764
  %5115 = vmatpush.bf16.msra.mxu0 %v3759
  %5116 = vmatmul.bf16.gmra.mxu0 %v950
  %v5117 = vpop.f32.mrf.mxu0
  %v5118 = vadd.f32 %v5105, %v5117
  %v5119 = vpop.f32.mrf.mxu0
  %5120 = vdwg.mxu0
  %5121 = vmatpush.bf16.msra.mxu0 %v3834
  %5122 = vmatpush.bf16.msra.mxu0 %v3829
  %5123 = vmatpush.bf16.msra.mxu0 %v3824
  %5124 = vmatpush.bf16.msra.mxu0 %v3819
  %5125 = vmatpush.bf16.msra.mxu0 %v3814
  %5126 = vmatpush.bf16.msra.mxu0 %v3809
  %5127 = vmatpush.bf16.msra.mxu0 %v3804
  %5128 = vmatpush.bf16.msra.mxu0 %v3799
  %5129 = vmatmul.bf16.gmra.mxu0 %v951
  %v5130 = vpop.f32.mrf.mxu0
  %v5131 = vadd.f32 %v5118, %v5130
  %v5132 = vpop.f32.mrf.mxu0
  %5133 = vdwg.mxu0
  %5134 = vmatpush.bf16.msra.mxu0 %v3874
  %5135 = vmatpush.bf16.msra.mxu0 %v3869
  %5136 = vmatpush.bf16.msra.mxu0 %v3864
  %5137 = vmatpush.bf16.msra.mxu0 %v3859
  %5138 = vmatpush.bf16.msra.mxu0 %v3854
  %5139 = vmatpush.bf16.msra.mxu0 %v3849
  %5140 = vmatpush.bf16.msra.mxu0 %v3844
  %5141 = vmatpush.bf16.msra.mxu0 %v3839
  %5142 = vmatmul.bf16.gmra.mxu0 %v952
  %v5143 = vpop.f32.mrf.mxu0
  %v5144 = vadd.f32 %v5131, %v5143
  %v5145 = vpop.f32.mrf.mxu0
  %5146 = vdwg.mxu0
  %5147 = vmatpush.bf16.msra.mxu0 %v3914
  %5148 = vmatpush.bf16.msra.mxu0 %v3909
  %5149 = vmatpush.bf16.msra.mxu0 %v3904
  %5150 = vmatpush.bf16.msra.mxu0 %v3899
  %5151 = vmatpush.bf16.msra.mxu0 %v3894
  %5152 = vmatpush.bf16.msra.mxu0 %v3889
  %5153 = vmatpush.bf16.msra.mxu0 %v3884
  %5154 = vmatpush.bf16.msra.mxu0 %v3879
  %5155 = vmatmul.bf16.gmra.mxu0 %v953
  %v5156 = vpop.f32.mrf.mxu0
  %v5157 = vadd.f32 %v5144, %v5156
  %v5158 = vpop.f32.mrf.mxu0
  %5159 = vdwg.mxu0
  %5160 = vmatpush.bf16.msra.mxu0 %v3954
  %5161 = vmatpush.bf16.msra.mxu0 %v3949
  %5162 = vmatpush.bf16.msra.mxu0 %v3944
  %5163 = vmatpush.bf16.msra.mxu0 %v3939
  %5164 = vmatpush.bf16.msra.mxu0 %v3934
  %5165 = vmatpush.bf16.msra.mxu0 %v3929
  %5166 = vmatpush.bf16.msra.mxu0 %v3924
  %5167 = vmatpush.bf16.msra.mxu0 %v3919
  %5168 = vmatmul.bf16.gmra.mxu0 %v954
  %v5169 = vpop.f32.mrf.mxu0
  %v5170 = vadd.f32 %v5157, %v5169
  %v5171 = vpop.f32.mrf.mxu0
  %5172 = vdwg.mxu0
  %5173 = vmatpush.bf16.msra.mxu0 %v3994
  %5174 = vmatpush.bf16.msra.mxu0 %v3989
  %5175 = vmatpush.bf16.msra.mxu0 %v3984
  %5176 = vmatpush.bf16.msra.mxu0 %v3979
  %5177 = vmatpush.bf16.msra.mxu0 %v3974
  %5178 = vmatpush.bf16.msra.mxu0 %v3969
  %5179 = vmatpush.bf16.msra.mxu0 %v3964
  %5180 = vmatpush.bf16.msra.mxu0 %v3959
  %5181 = vmatmul.bf16.gmra.mxu0 %v955
  %v5182 = vpop.f32.mrf.mxu0
  %v5183 = vadd.f32 %v5170, %v5182
  %v5184 = vpop.f32.mrf.mxu0
  %5185 = vdwg.mxu0
  %5186 = vmatpush.bf16.msra.mxu0 %v3315
  %5187 = vmatpush.bf16.msra.mxu0 %v3310
  %5188 = vmatpush.bf16.msra.mxu0 %v3305
  %5189 = vmatpush.bf16.msra.mxu0 %v3300
  %5190 = vmatpush.bf16.msra.mxu0 %v3295
  %5191 = vmatpush.bf16.msra.mxu0 %v3290
  %5192 = vmatpush.bf16.msra.mxu0 %v3285
  %5193 = vmatpush.bf16.msra.mxu0 %v3280
  %5194 = vmatmul.bf16.gmra.mxu0 %v938
  %v5195 = vpop.f32.mrf.mxu0
  %v5196 = vadd.f32 %v903, %v5195
  %v5197 = vpop.f32.mrf.mxu0
  %5198 = vdwg.mxu0
  %5199 = vmatpush.bf16.msra.mxu0 %v3355
  %5200 = vmatpush.bf16.msra.mxu0 %v3350
  %5201 = vmatpush.bf16.msra.mxu0 %v3345
  %5202 = vmatpush.bf16.msra.mxu0 %v3340
  %5203 = vmatpush.bf16.msra.mxu0 %v3335
  %5204 = vmatpush.bf16.msra.mxu0 %v3330
  %5205 = vmatpush.bf16.msra.mxu0 %v3325
  %5206 = vmatpush.bf16.msra.mxu0 %v3320
  %5207 = vmatmul.bf16.gmra.mxu0 %v939
  %v5208 = vpop.f32.mrf.mxu0
  %v5209 = vadd.f32 %v5196, %v5208
  %v5210 = vpop.f32.mrf.mxu0
  %5211 = vdwg.mxu0
  %5212 = vmatpush.bf16.msra.mxu0 %v3395
  %5213 = vmatpush.bf16.msra.mxu0 %v3390
  %5214 = vmatpush.bf16.msra.mxu0 %v3385
  %5215 = vmatpush.bf16.msra.mxu0 %v3380
  %5216 = vmatpush.bf16.msra.mxu0 %v3375
  %5217 = vmatpush.bf16.msra.mxu0 %v3370
  %5218 = vmatpush.bf16.msra.mxu0 %v3365
  %5219 = vmatpush.bf16.msra.mxu0 %v3360
  %5220 = vmatmul.bf16.gmra.mxu0 %v940
  %v5221 = vpop.f32.mrf.mxu0
  %v5222 = vadd.f32 %v5209, %v5221
  %v5223 = vpop.f32.mrf.mxu0
  %5224 = vdwg.mxu0
  %5225 = vmatpush.bf16.msra.mxu0 %v3435
  %5226 = vmatpush.bf16.msra.mxu0 %v3430
  %5227 = vmatpush.bf16.msra.mxu0 %v3425
  %5228 = vmatpush.bf16.msra.mxu0 %v3420
  %5229 = vmatpush.bf16.msra.mxu0 %v3415
  %5230 = vmatpush.bf16.msra.mxu0 %v3410
  %5231 = vmatpush.bf16.msra.mxu0 %v3405
  %5232 = vmatpush.bf16.msra.mxu0 %v3400
  %5233 = vmatmul.bf16.gmra.mxu0 %v941
  %v5234 = vpop.f32.mrf.mxu0
  %v5235 = vadd.f32 %v5222, %v5234
  %v5236 = vpop.f32.mrf.mxu0
  %5237 = vdwg.mxu0
  %5238 = vmatpush.bf16.msra.mxu0 %v3475
  %5239 = vmatpush.bf16.msra.mxu0 %v3470
  %5240 = vmatpush.bf16.msra.mxu0 %v3465
  %5241 = vmatpush.bf16.msra.mxu0 %v3460
  %5242 = vmatpush.bf16.msra.mxu0 %v3455
  %5243 = vmatpush.bf16.msra.mxu0 %v3450
  %5244 = vmatpush.bf16.msra.mxu0 %v3445
  %5245 = vmatpush.bf16.msra.mxu0 %v3440
  %5246 = vmatmul.bf16.gmra.mxu0 %v942
  %v5247 = vpop.f32.mrf.mxu0
  %v5248 = vadd.f32 %v5235, %v5247
  %v5249 = vpop.f32.mrf.mxu0
  %5250 = vdwg.mxu0
  %5251 = vmatpush.bf16.msra.mxu0 %v3515
  %5252 = vmatpush.bf16.msra.mxu0 %v3510
  %5253 = vmatpush.bf16.msra.mxu0 %v3505
  %5254 = vmatpush.bf16.msra.mxu0 %v3500
  %5255 = vmatpush.bf16.msra.mxu0 %v3495
  %5256 = vmatpush.bf16.msra.mxu0 %v3490
  %5257 = vmatpush.bf16.msra.mxu0 %v3485
  %5258 = vmatpush.bf16.msra.mxu0 %v3480
  %5259 = vmatmul.bf16.gmra.mxu0 %v943
  %v5260 = vpop.f32.mrf.mxu0
  %v5261 = vadd.f32 %v5248, %v5260
  %v5262 = vpop.f32.mrf.mxu0
  %5263 = vdwg.mxu0
  %5264 = vmatpush.bf16.msra.mxu0 %v3555
  %5265 = vmatpush.bf16.msra.mxu0 %v3550
  %5266 = vmatpush.bf16.msra.mxu0 %v3545
  %5267 = vmatpush.bf16.msra.mxu0 %v3540
  %5268 = vmatpush.bf16.msra.mxu0 %v3535
  %5269 = vmatpush.bf16.msra.mxu0 %v3530
  %5270 = vmatpush.bf16.msra.mxu0 %v3525
  %5271 = vmatpush.bf16.msra.mxu0 %v3520
  %5272 = vmatmul.bf16.gmra.mxu0 %v944
  %v5273 = vpop.f32.mrf.mxu0
  %v5274 = vadd.f32 %v5261, %v5273
  %v5275 = vpop.f32.mrf.mxu0
  %5276 = vdwg.mxu0
  %5277 = vmatpush.bf16.msra.mxu0 %v3595
  %5278 = vmatpush.bf16.msra.mxu0 %v3590
  %5279 = vmatpush.bf16.msra.mxu0 %v3585
  %5280 = vmatpush.bf16.msra.mxu0 %v3580
  %5281 = vmatpush.bf16.msra.mxu0 %v3575
  %5282 = vmatpush.bf16.msra.mxu0 %v3570
  %5283 = vmatpush.bf16.msra.mxu0 %v3565
  %5284 = vmatpush.bf16.msra.mxu0 %v3560
  %5285 = vmatmul.bf16.gmra.mxu0 %v945
  %v5286 = vpop.f32.mrf.mxu0
  %v5287 = vadd.f32 %v5274, %v5286
  %v5288 = vpop.f32.mrf.mxu0
  %5289 = vdwg.mxu0
  %5290 = vmatpush.bf16.msra.mxu0 %v3635
  %5291 = vmatpush.bf16.msra.mxu0 %v3630
  %5292 = vmatpush.bf16.msra.mxu0 %v3625
  %5293 = vmatpush.bf16.msra.mxu0 %v3620
  %5294 = vmatpush.bf16.msra.mxu0 %v3615
  %5295 = vmatpush.bf16.msra.mxu0 %v3610
  %5296 = vmatpush.bf16.msra.mxu0 %v3605
  %5297 = vmatpush.bf16.msra.mxu0 %v3600
  %5298 = vmatmul.bf16.gmra.mxu0 %v946
  %v5299 = vpop.f32.mrf.mxu0
  %v5300 = vadd.f32 %v5287, %v5299
  %v5301 = vpop.f32.mrf.mxu0
  %5302 = vdwg.mxu0
  %5303 = vmatpush.bf16.msra.mxu0 %v3675
  %5304 = vmatpush.bf16.msra.mxu0 %v3670
  %5305 = vmatpush.bf16.msra.mxu0 %v3665
  %5306 = vmatpush.bf16.msra.mxu0 %v3660
  %5307 = vmatpush.bf16.msra.mxu0 %v3655
  %5308 = vmatpush.bf16.msra.mxu0 %v3650
  %5309 = vmatpush.bf16.msra.mxu0 %v3645
  %5310 = vmatpush.bf16.msra.mxu0 %v3640
  %5311 = vmatmul.bf16.gmra.mxu0 %v947
  %v5312 = vpop.f32.mrf.mxu0
  %v5313 = vadd.f32 %v5300, %v5312
  %v5314 = vpop.f32.mrf.mxu0
  %5315 = vdwg.mxu0
  %5316 = vmatpush.bf16.msra.mxu0 %v3715
  %5317 = vmatpush.bf16.msra.mxu0 %v3710
  %5318 = vmatpush.bf16.msra.mxu0 %v3705
  %5319 = vmatpush.bf16.msra.mxu0 %v3700
  %5320 = vmatpush.bf16.msra.mxu0 %v3695
  %5321 = vmatpush.bf16.msra.mxu0 %v3690
  %5322 = vmatpush.bf16.msra.mxu0 %v3685
  %5323 = vmatpush.bf16.msra.mxu0 %v3680
  %5324 = vmatmul.bf16.gmra.mxu0 %v948
  %v5325 = vpop.f32.mrf.mxu0
  %v5326 = vadd.f32 %v5313, %v5325
  %v5327 = vpop.f32.mrf.mxu0
  %5328 = vdwg.mxu0
  %5329 = vmatpush.bf16.msra.mxu0 %v3755
  %5330 = vmatpush.bf16.msra.mxu0 %v3750
  %5331 = vmatpush.bf16.msra.mxu0 %v3745
  %5332 = vmatpush.bf16.msra.mxu0 %v3740
  %5333 = vmatpush.bf16.msra.mxu0 %v3735
  %5334 = vmatpush.bf16.msra.mxu0 %v3730
  %5335 = vmatpush.bf16.msra.mxu0 %v3725
  %5336 = vmatpush.bf16.msra.mxu0 %v3720
  %5337 = vmatmul.bf16.gmra.mxu0 %v949
  %v5338 = vpop.f32.mrf.mxu0
  %v5339 = vadd.f32 %v5326, %v5338
  %v5340 = vpop.f32.mrf.mxu0
  %5341 = vdwg.mxu0
  %5342 = vmatpush.bf16.msra.mxu0 %v3795
  %5343 = vmatpush.bf16.msra.mxu0 %v3790
  %5344 = vmatpush.bf16.msra.mxu0 %v3785
  %5345 = vmatpush.bf16.msra.mxu0 %v3780
  %5346 = vmatpush.bf16.msra.mxu0 %v3775
  %5347 = vmatpush.bf16.msra.mxu0 %v3770
  %5348 = vmatpush.bf16.msra.mxu0 %v3765
  %5349 = vmatpush.bf16.msra.mxu0 %v3760
  %5350 = vmatmul.bf16.gmra.mxu0 %v950
  %v5351 = vpop.f32.mrf.mxu0
  %v5352 = vadd.f32 %v5339, %v5351
  %v5353 = vpop.f32.mrf.mxu0
  %5354 = vdwg.mxu0
  %5355 = vmatpush.bf16.msra.mxu0 %v3835
  %5356 = vmatpush.bf16.msra.mxu0 %v3830
  %5357 = vmatpush.bf16.msra.mxu0 %v3825
  %5358 = vmatpush.bf16.msra.mxu0 %v3820
  %5359 = vmatpush.bf16.msra.mxu0 %v3815
  %5360 = vmatpush.bf16.msra.mxu0 %v3810
  %5361 = vmatpush.bf16.msra.mxu0 %v3805
  %5362 = vmatpush.bf16.msra.mxu0 %v3800
  %5363 = vmatmul.bf16.gmra.mxu0 %v951
  %v5364 = vpop.f32.mrf.mxu0
  %v5365 = vadd.f32 %v5352, %v5364
  %v5366 = vpop.f32.mrf.mxu0
  %5367 = vdwg.mxu0
  %5368 = vmatpush.bf16.msra.mxu0 %v3875
  %5369 = vmatpush.bf16.msra.mxu0 %v3870
  %5370 = vmatpush.bf16.msra.mxu0 %v3865
  %5371 = vmatpush.bf16.msra.mxu0 %v3860
  %5372 = vmatpush.bf16.msra.mxu0 %v3855
  %5373 = vmatpush.bf16.msra.mxu0 %v3850
  %5374 = vmatpush.bf16.msra.mxu0 %v3845
  %5375 = vmatpush.bf16.msra.mxu0 %v3840
  %5376 = vmatmul.bf16.gmra.mxu0 %v952
  %v5377 = vpop.f32.mrf.mxu0
  %v5378 = vadd.f32 %v5365, %v5377
  %v5379 = vpop.f32.mrf.mxu0
  %5380 = vdwg.mxu0
  %5381 = vmatpush.bf16.msra.mxu0 %v3915
  %5382 = vmatpush.bf16.msra.mxu0 %v3910
  %5383 = vmatpush.bf16.msra.mxu0 %v3905
  %5384 = vmatpush.bf16.msra.mxu0 %v3900
  %5385 = vmatpush.bf16.msra.mxu0 %v3895
  %5386 = vmatpush.bf16.msra.mxu0 %v3890
  %5387 = vmatpush.bf16.msra.mxu0 %v3885
  %5388 = vmatpush.bf16.msra.mxu0 %v3880
  %5389 = vmatmul.bf16.gmra.mxu0 %v953
  %v5390 = vpop.f32.mrf.mxu0
  %v5391 = vadd.f32 %v5378, %v5390
  %v5392 = vpop.f32.mrf.mxu0
  %5393 = vdwg.mxu0
  %5394 = vmatpush.bf16.msra.mxu0 %v3955
  %5395 = vmatpush.bf16.msra.mxu0 %v3950
  %5396 = vmatpush.bf16.msra.mxu0 %v3945
  %5397 = vmatpush.bf16.msra.mxu0 %v3940
  %5398 = vmatpush.bf16.msra.mxu0 %v3935
  %5399 = vmatpush.bf16.msra.mxu0 %v3930
  %5400 = vmatpush.bf16.msra.mxu0 %v3925
  %5401 = vmatpush.bf16.msra.mxu0 %v3920
  %5402 = vmatmul.bf16.gmra.mxu0 %v954
  %v5403 = vpop.f32.mrf.mxu0
  %v5404 = vadd.f32 %v5391, %v5403
  %v5405 = vpop.f32.mrf.mxu0
  %5406 = vdwg.mxu0
  %5407 = vmatpush.bf16.msra.mxu0 %v3995
  %5408 = vmatpush.bf16.msra.mxu0 %v3990
  %5409 = vmatpush.bf16.msra.mxu0 %v3985
  %5410 = vmatpush.bf16.msra.mxu0 %v3980
  %5411 = vmatpush.bf16.msra.mxu0 %v3975
  %5412 = vmatpush.bf16.msra.mxu0 %v3970
  %5413 = vmatpush.bf16.msra.mxu0 %v3965
  %5414 = vmatpush.bf16.msra.mxu0 %v3960
  %5415 = vmatmul.bf16.gmra.mxu0 %v955
  %v5416 = vpop.f32.mrf.mxu0
  %v5417 = vadd.f32 %v5404, %v5416
  %v5418 = vpop.f32.mrf.mxu0
  %5419 = vdwg.mxu0
  %5420 = vmatpush.bf16.msra.mxu0 %v3316
  %5421 = vmatpush.bf16.msra.mxu0 %v3311
  %5422 = vmatpush.bf16.msra.mxu0 %v3306
  %5423 = vmatpush.bf16.msra.mxu0 %v3301
  %5424 = vmatpush.bf16.msra.mxu0 %v3296
  %5425 = vmatpush.bf16.msra.mxu0 %v3291
  %5426 = vmatpush.bf16.msra.mxu0 %v3286
  %5427 = vmatpush.bf16.msra.mxu0 %v3281
  %5428 = vmatmul.bf16.gmra.mxu0 %v938
  %v5429 = vpop.f32.mrf.mxu0
  %v5430 = vadd.f32 %v904, %v5429
  %v5431 = vpop.f32.mrf.mxu0
  %5432 = vdwg.mxu0
  %5433 = vmatpush.bf16.msra.mxu0 %v3356
  %5434 = vmatpush.bf16.msra.mxu0 %v3351
  %5435 = vmatpush.bf16.msra.mxu0 %v3346
  %5436 = vmatpush.bf16.msra.mxu0 %v3341
  %5437 = vmatpush.bf16.msra.mxu0 %v3336
  %5438 = vmatpush.bf16.msra.mxu0 %v3331
  %5439 = vmatpush.bf16.msra.mxu0 %v3326
  %5440 = vmatpush.bf16.msra.mxu0 %v3321
  %5441 = vmatmul.bf16.gmra.mxu0 %v939
  %v5442 = vpop.f32.mrf.mxu0
  %v5443 = vadd.f32 %v5430, %v5442
  %v5444 = vpop.f32.mrf.mxu0
  %5445 = vdwg.mxu0
  %5446 = vmatpush.bf16.msra.mxu0 %v3396
  %5447 = vmatpush.bf16.msra.mxu0 %v3391
  %5448 = vmatpush.bf16.msra.mxu0 %v3386
  %5449 = vmatpush.bf16.msra.mxu0 %v3381
  %5450 = vmatpush.bf16.msra.mxu0 %v3376
  %5451 = vmatpush.bf16.msra.mxu0 %v3371
  %5452 = vmatpush.bf16.msra.mxu0 %v3366
  %5453 = vmatpush.bf16.msra.mxu0 %v3361
  %5454 = vmatmul.bf16.gmra.mxu0 %v940
  %v5455 = vpop.f32.mrf.mxu0
  %v5456 = vadd.f32 %v5443, %v5455
  %v5457 = vpop.f32.mrf.mxu0
  %5458 = vdwg.mxu0
  %5459 = vmatpush.bf16.msra.mxu0 %v3436
  %5460 = vmatpush.bf16.msra.mxu0 %v3431
  %5461 = vmatpush.bf16.msra.mxu0 %v3426
  %5462 = vmatpush.bf16.msra.mxu0 %v3421
  %5463 = vmatpush.bf16.msra.mxu0 %v3416
  %5464 = vmatpush.bf16.msra.mxu0 %v3411
  %5465 = vmatpush.bf16.msra.mxu0 %v3406
  %5466 = vmatpush.bf16.msra.mxu0 %v3401
  %5467 = vmatmul.bf16.gmra.mxu0 %v941
  %v5468 = vpop.f32.mrf.mxu0
  %v5469 = vadd.f32 %v5456, %v5468
  %v5470 = vpop.f32.mrf.mxu0
  %5471 = vdwg.mxu0
  %5472 = vmatpush.bf16.msra.mxu0 %v3476
  %5473 = vmatpush.bf16.msra.mxu0 %v3471
  %5474 = vmatpush.bf16.msra.mxu0 %v3466
  %5475 = vmatpush.bf16.msra.mxu0 %v3461
  %5476 = vmatpush.bf16.msra.mxu0 %v3456
  %5477 = vmatpush.bf16.msra.mxu0 %v3451
  %5478 = vmatpush.bf16.msra.mxu0 %v3446
  %5479 = vmatpush.bf16.msra.mxu0 %v3441
  %5480 = vmatmul.bf16.gmra.mxu0 %v942
  %v5481 = vpop.f32.mrf.mxu0
  %v5482 = vadd.f32 %v5469, %v5481
  %v5483 = vpop.f32.mrf.mxu0
  %5484 = vdwg.mxu0
  %5485 = vmatpush.bf16.msra.mxu0 %v3516
  %5486 = vmatpush.bf16.msra.mxu0 %v3511
  %5487 = vmatpush.bf16.msra.mxu0 %v3506
  %5488 = vmatpush.bf16.msra.mxu0 %v3501
  %5489 = vmatpush.bf16.msra.mxu0 %v3496
  %5490 = vmatpush.bf16.msra.mxu0 %v3491
  %5491 = vmatpush.bf16.msra.mxu0 %v3486
  %5492 = vmatpush.bf16.msra.mxu0 %v3481
  %5493 = vmatmul.bf16.gmra.mxu0 %v943
  %v5494 = vpop.f32.mrf.mxu0
  %v5495 = vadd.f32 %v5482, %v5494
  %v5496 = vpop.f32.mrf.mxu0
  %5497 = vdwg.mxu0
  %5498 = vmatpush.bf16.msra.mxu0 %v3556
  %5499 = vmatpush.bf16.msra.mxu0 %v3551
  %5500 = vmatpush.bf16.msra.mxu0 %v3546
  %5501 = vmatpush.bf16.msra.mxu0 %v3541
  %5502 = vmatpush.bf16.msra.mxu0 %v3536
  %5503 = vmatpush.bf16.msra.mxu0 %v3531
  %5504 = vmatpush.bf16.msra.mxu0 %v3526
  %5505 = vmatpush.bf16.msra.mxu0 %v3521
  %5506 = vmatmul.bf16.gmra.mxu0 %v944
  %v5507 = vpop.f32.mrf.mxu0
  %v5508 = vadd.f32 %v5495, %v5507
  %v5509 = vpop.f32.mrf.mxu0
  %5510 = vdwg.mxu0
  %5511 = vmatpush.bf16.msra.mxu0 %v3596
  %5512 = vmatpush.bf16.msra.mxu0 %v3591
  %5513 = vmatpush.bf16.msra.mxu0 %v3586
  %5514 = vmatpush.bf16.msra.mxu0 %v3581
  %5515 = vmatpush.bf16.msra.mxu0 %v3576
  %5516 = vmatpush.bf16.msra.mxu0 %v3571
  %5517 = vmatpush.bf16.msra.mxu0 %v3566
  %5518 = vmatpush.bf16.msra.mxu0 %v3561
  %5519 = vmatmul.bf16.gmra.mxu0 %v945
  %v5520 = vpop.f32.mrf.mxu0
  %v5521 = vadd.f32 %v5508, %v5520
  %v5522 = vpop.f32.mrf.mxu0
  %5523 = vdwg.mxu0
  %5524 = vmatpush.bf16.msra.mxu0 %v3636
  %5525 = vmatpush.bf16.msra.mxu0 %v3631
  %5526 = vmatpush.bf16.msra.mxu0 %v3626
  %5527 = vmatpush.bf16.msra.mxu0 %v3621
  %5528 = vmatpush.bf16.msra.mxu0 %v3616
  %5529 = vmatpush.bf16.msra.mxu0 %v3611
  %5530 = vmatpush.bf16.msra.mxu0 %v3606
  %5531 = vmatpush.bf16.msra.mxu0 %v3601
  %5532 = vmatmul.bf16.gmra.mxu0 %v946
  %v5533 = vpop.f32.mrf.mxu0
  %v5534 = vadd.f32 %v5521, %v5533
  %v5535 = vpop.f32.mrf.mxu0
  %5536 = vdwg.mxu0
  %5537 = vmatpush.bf16.msra.mxu0 %v3676
  %5538 = vmatpush.bf16.msra.mxu0 %v3671
  %5539 = vmatpush.bf16.msra.mxu0 %v3666
  %5540 = vmatpush.bf16.msra.mxu0 %v3661
  %5541 = vmatpush.bf16.msra.mxu0 %v3656
  %5542 = vmatpush.bf16.msra.mxu0 %v3651
  %5543 = vmatpush.bf16.msra.mxu0 %v3646
  %5544 = vmatpush.bf16.msra.mxu0 %v3641
  %5545 = vmatmul.bf16.gmra.mxu0 %v947
  %v5546 = vpop.f32.mrf.mxu0
  %v5547 = vadd.f32 %v5534, %v5546
  %v5548 = vpop.f32.mrf.mxu0
  %5549 = vdwg.mxu0
  %5550 = vmatpush.bf16.msra.mxu0 %v3716
  %5551 = vmatpush.bf16.msra.mxu0 %v3711
  %5552 = vmatpush.bf16.msra.mxu0 %v3706
  %5553 = vmatpush.bf16.msra.mxu0 %v3701
  %5554 = vmatpush.bf16.msra.mxu0 %v3696
  %5555 = vmatpush.bf16.msra.mxu0 %v3691
  %5556 = vmatpush.bf16.msra.mxu0 %v3686
  %5557 = vmatpush.bf16.msra.mxu0 %v3681
  %5558 = vmatmul.bf16.gmra.mxu0 %v948
  %v5559 = vpop.f32.mrf.mxu0
  %v5560 = vadd.f32 %v5547, %v5559
  %v5561 = vpop.f32.mrf.mxu0
  %5562 = vdwg.mxu0
  %5563 = vmatpush.bf16.msra.mxu0 %v3756
  %5564 = vmatpush.bf16.msra.mxu0 %v3751
  %5565 = vmatpush.bf16.msra.mxu0 %v3746
  %5566 = vmatpush.bf16.msra.mxu0 %v3741
  %5567 = vmatpush.bf16.msra.mxu0 %v3736
  %5568 = vmatpush.bf16.msra.mxu0 %v3731
  %5569 = vmatpush.bf16.msra.mxu0 %v3726
  %5570 = vmatpush.bf16.msra.mxu0 %v3721
  %5571 = vmatmul.bf16.gmra.mxu0 %v949
  %v5572 = vpop.f32.mrf.mxu0
  %v5573 = vadd.f32 %v5560, %v5572
  %v5574 = vpop.f32.mrf.mxu0
  %5575 = vdwg.mxu0
  %5576 = vmatpush.bf16.msra.mxu0 %v3796
  %5577 = vmatpush.bf16.msra.mxu0 %v3791
  %5578 = vmatpush.bf16.msra.mxu0 %v3786
  %5579 = vmatpush.bf16.msra.mxu0 %v3781
  %5580 = vmatpush.bf16.msra.mxu0 %v3776
  %5581 = vmatpush.bf16.msra.mxu0 %v3771
  %5582 = vmatpush.bf16.msra.mxu0 %v3766
  %5583 = vmatpush.bf16.msra.mxu0 %v3761
  %5584 = vmatmul.bf16.gmra.mxu0 %v950
  %v5585 = vpop.f32.mrf.mxu0
  %v5586 = vadd.f32 %v5573, %v5585
  %v5587 = vpop.f32.mrf.mxu0
  %5588 = vdwg.mxu0
  %5589 = vmatpush.bf16.msra.mxu0 %v3836
  %5590 = vmatpush.bf16.msra.mxu0 %v3831
  %5591 = vmatpush.bf16.msra.mxu0 %v3826
  %5592 = vmatpush.bf16.msra.mxu0 %v3821
  %5593 = vmatpush.bf16.msra.mxu0 %v3816
  %5594 = vmatpush.bf16.msra.mxu0 %v3811
  %5595 = vmatpush.bf16.msra.mxu0 %v3806
  %5596 = vmatpush.bf16.msra.mxu0 %v3801
  %5597 = vmatmul.bf16.gmra.mxu0 %v951
  %v5598 = vpop.f32.mrf.mxu0
  %v5599 = vadd.f32 %v5586, %v5598
  %v5600 = vpop.f32.mrf.mxu0
  %5601 = vdwg.mxu0
  %5602 = vmatpush.bf16.msra.mxu0 %v3876
  %5603 = vmatpush.bf16.msra.mxu0 %v3871
  %5604 = vmatpush.bf16.msra.mxu0 %v3866
  %5605 = vmatpush.bf16.msra.mxu0 %v3861
  %5606 = vmatpush.bf16.msra.mxu0 %v3856
  %5607 = vmatpush.bf16.msra.mxu0 %v3851
  %5608 = vmatpush.bf16.msra.mxu0 %v3846
  %5609 = vmatpush.bf16.msra.mxu0 %v3841
  %5610 = vmatmul.bf16.gmra.mxu0 %v952
  %v5611 = vpop.f32.mrf.mxu0
  %v5612 = vadd.f32 %v5599, %v5611
  %v5613 = vpop.f32.mrf.mxu0
  %5614 = vdwg.mxu0
  %5615 = vmatpush.bf16.msra.mxu0 %v3916
  %5616 = vmatpush.bf16.msra.mxu0 %v3911
  %5617 = vmatpush.bf16.msra.mxu0 %v3906
  %5618 = vmatpush.bf16.msra.mxu0 %v3901
  %5619 = vmatpush.bf16.msra.mxu0 %v3896
  %5620 = vmatpush.bf16.msra.mxu0 %v3891
  %5621 = vmatpush.bf16.msra.mxu0 %v3886
  %5622 = vmatpush.bf16.msra.mxu0 %v3881
  %5623 = vmatmul.bf16.gmra.mxu0 %v953
  %v5624 = vpop.f32.mrf.mxu0
  %v5625 = vadd.f32 %v5612, %v5624
  %v5626 = vpop.f32.mrf.mxu0
  %5627 = vdwg.mxu0
  %5628 = vmatpush.bf16.msra.mxu0 %v3956
  %5629 = vmatpush.bf16.msra.mxu0 %v3951
  %5630 = vmatpush.bf16.msra.mxu0 %v3946
  %5631 = vmatpush.bf16.msra.mxu0 %v3941
  %5632 = vmatpush.bf16.msra.mxu0 %v3936
  %5633 = vmatpush.bf16.msra.mxu0 %v3931
  %5634 = vmatpush.bf16.msra.mxu0 %v3926
  %5635 = vmatpush.bf16.msra.mxu0 %v3921
  %5636 = vmatmul.bf16.gmra.mxu0 %v954
  %v5637 = vpop.f32.mrf.mxu0
  %v5638 = vadd.f32 %v5625, %v5637
  %v5639 = vpop.f32.mrf.mxu0
  %5640 = vdwg.mxu0
  %5641 = vmatpush.bf16.msra.mxu0 %v3996
  %5642 = vmatpush.bf16.msra.mxu0 %v3991
  %5643 = vmatpush.bf16.msra.mxu0 %v3986
  %5644 = vmatpush.bf16.msra.mxu0 %v3981
  %5645 = vmatpush.bf16.msra.mxu0 %v3976
  %5646 = vmatpush.bf16.msra.mxu0 %v3971
  %5647 = vmatpush.bf16.msra.mxu0 %v3966
  %5648 = vmatpush.bf16.msra.mxu0 %v3961
  %5649 = vmatmul.bf16.gmra.mxu0 %v955
  %v5650 = vpop.f32.mrf.mxu0
  %v5651 = vadd.f32 %v5638, %v5650
  %v5652 = vpop.f32.mrf.mxu0
  %5653 = vdwg.mxu0
  %5654 = vmatpush.bf16.msra.mxu0 %v3317
  %5655 = vmatpush.bf16.msra.mxu0 %v3312
  %5656 = vmatpush.bf16.msra.mxu0 %v3307
  %5657 = vmatpush.bf16.msra.mxu0 %v3302
  %5658 = vmatpush.bf16.msra.mxu0 %v3297
  %5659 = vmatpush.bf16.msra.mxu0 %v3292
  %5660 = vmatpush.bf16.msra.mxu0 %v3287
  %5661 = vmatpush.bf16.msra.mxu0 %v3282
  %5662 = vmatmul.bf16.gmra.mxu0 %v938
  %v5663 = vpop.f32.mrf.mxu0
  %v5664 = vadd.f32 %v905, %v5663
  %v5665 = vpop.f32.mrf.mxu0
  %5666 = vdwg.mxu0
  %5667 = vmatpush.bf16.msra.mxu0 %v3357
  %5668 = vmatpush.bf16.msra.mxu0 %v3352
  %5669 = vmatpush.bf16.msra.mxu0 %v3347
  %5670 = vmatpush.bf16.msra.mxu0 %v3342
  %5671 = vmatpush.bf16.msra.mxu0 %v3337
  %5672 = vmatpush.bf16.msra.mxu0 %v3332
  %5673 = vmatpush.bf16.msra.mxu0 %v3327
  %5674 = vmatpush.bf16.msra.mxu0 %v3322
  %5675 = vmatmul.bf16.gmra.mxu0 %v939
  %v5676 = vpop.f32.mrf.mxu0
  %v5677 = vadd.f32 %v5664, %v5676
  %v5678 = vpop.f32.mrf.mxu0
  %5679 = vdwg.mxu0
  %5680 = vmatpush.bf16.msra.mxu0 %v3397
  %5681 = vmatpush.bf16.msra.mxu0 %v3392
  %5682 = vmatpush.bf16.msra.mxu0 %v3387
  %5683 = vmatpush.bf16.msra.mxu0 %v3382
  %5684 = vmatpush.bf16.msra.mxu0 %v3377
  %5685 = vmatpush.bf16.msra.mxu0 %v3372
  %5686 = vmatpush.bf16.msra.mxu0 %v3367
  %5687 = vmatpush.bf16.msra.mxu0 %v3362
  %5688 = vmatmul.bf16.gmra.mxu0 %v940
  %v5689 = vpop.f32.mrf.mxu0
  %v5690 = vadd.f32 %v5677, %v5689
  %v5691 = vpop.f32.mrf.mxu0
  %5692 = vdwg.mxu0
  %5693 = vmatpush.bf16.msra.mxu0 %v3437
  %5694 = vmatpush.bf16.msra.mxu0 %v3432
  %5695 = vmatpush.bf16.msra.mxu0 %v3427
  %5696 = vmatpush.bf16.msra.mxu0 %v3422
  %5697 = vmatpush.bf16.msra.mxu0 %v3417
  %5698 = vmatpush.bf16.msra.mxu0 %v3412
  %5699 = vmatpush.bf16.msra.mxu0 %v3407
  %5700 = vmatpush.bf16.msra.mxu0 %v3402
  %5701 = vmatmul.bf16.gmra.mxu0 %v941
  %v5702 = vpop.f32.mrf.mxu0
  %v5703 = vadd.f32 %v5690, %v5702
  %v5704 = vpop.f32.mrf.mxu0
  %5705 = vdwg.mxu0
  %5706 = vmatpush.bf16.msra.mxu0 %v3477
  %5707 = vmatpush.bf16.msra.mxu0 %v3472
  %5708 = vmatpush.bf16.msra.mxu0 %v3467
  %5709 = vmatpush.bf16.msra.mxu0 %v3462
  %5710 = vmatpush.bf16.msra.mxu0 %v3457
  %5711 = vmatpush.bf16.msra.mxu0 %v3452
  %5712 = vmatpush.bf16.msra.mxu0 %v3447
  %5713 = vmatpush.bf16.msra.mxu0 %v3442
  %5714 = vmatmul.bf16.gmra.mxu0 %v942
  %v5715 = vpop.f32.mrf.mxu0
  %v5716 = vadd.f32 %v5703, %v5715
  %v5717 = vpop.f32.mrf.mxu0
  %5718 = vdwg.mxu0
  %5719 = vmatpush.bf16.msra.mxu0 %v3517
  %5720 = vmatpush.bf16.msra.mxu0 %v3512
  %5721 = vmatpush.bf16.msra.mxu0 %v3507
  %5722 = vmatpush.bf16.msra.mxu0 %v3502
  %5723 = vmatpush.bf16.msra.mxu0 %v3497
  %5724 = vmatpush.bf16.msra.mxu0 %v3492
  %5725 = vmatpush.bf16.msra.mxu0 %v3487
  %5726 = vmatpush.bf16.msra.mxu0 %v3482
  %5727 = vmatmul.bf16.gmra.mxu0 %v943
  %v5728 = vpop.f32.mrf.mxu0
  %v5729 = vadd.f32 %v5716, %v5728
  %v5730 = vpop.f32.mrf.mxu0
  %5731 = vdwg.mxu0
  %5732 = vmatpush.bf16.msra.mxu0 %v3557
  %5733 = vmatpush.bf16.msra.mxu0 %v3552
  %5734 = vmatpush.bf16.msra.mxu0 %v3547
  %5735 = vmatpush.bf16.msra.mxu0 %v3542
  %5736 = vmatpush.bf16.msra.mxu0 %v3537
  %5737 = vmatpush.bf16.msra.mxu0 %v3532
  %5738 = vmatpush.bf16.msra.mxu0 %v3527
  %5739 = vmatpush.bf16.msra.mxu0 %v3522
  %5740 = vmatmul.bf16.gmra.mxu0 %v944
  %v5741 = vpop.f32.mrf.mxu0
  %v5742 = vadd.f32 %v5729, %v5741
  %v5743 = vpop.f32.mrf.mxu0
  %5744 = vdwg.mxu0
  %5745 = vmatpush.bf16.msra.mxu0 %v3597
  %5746 = vmatpush.bf16.msra.mxu0 %v3592
  %5747 = vmatpush.bf16.msra.mxu0 %v3587
  %5748 = vmatpush.bf16.msra.mxu0 %v3582
  %5749 = vmatpush.bf16.msra.mxu0 %v3577
  %5750 = vmatpush.bf16.msra.mxu0 %v3572
  %5751 = vmatpush.bf16.msra.mxu0 %v3567
  %5752 = vmatpush.bf16.msra.mxu0 %v3562
  %5753 = vmatmul.bf16.gmra.mxu0 %v945
  %v5754 = vpop.f32.mrf.mxu0
  %v5755 = vadd.f32 %v5742, %v5754
  %v5756 = vpop.f32.mrf.mxu0
  %5757 = vdwg.mxu0
  %5758 = vmatpush.bf16.msra.mxu0 %v3637
  %5759 = vmatpush.bf16.msra.mxu0 %v3632
  %5760 = vmatpush.bf16.msra.mxu0 %v3627
  %5761 = vmatpush.bf16.msra.mxu0 %v3622
  %5762 = vmatpush.bf16.msra.mxu0 %v3617
  %5763 = vmatpush.bf16.msra.mxu0 %v3612
  %5764 = vmatpush.bf16.msra.mxu0 %v3607
  %5765 = vmatpush.bf16.msra.mxu0 %v3602
  %5766 = vmatmul.bf16.gmra.mxu0 %v946
  %v5767 = vpop.f32.mrf.mxu0
  %v5768 = vadd.f32 %v5755, %v5767
  %v5769 = vpop.f32.mrf.mxu0
  %5770 = vdwg.mxu0
  %5771 = vmatpush.bf16.msra.mxu0 %v3677
  %5772 = vmatpush.bf16.msra.mxu0 %v3672
  %5773 = vmatpush.bf16.msra.mxu0 %v3667
  %5774 = vmatpush.bf16.msra.mxu0 %v3662
  %5775 = vmatpush.bf16.msra.mxu0 %v3657
  %5776 = vmatpush.bf16.msra.mxu0 %v3652
  %5777 = vmatpush.bf16.msra.mxu0 %v3647
  %5778 = vmatpush.bf16.msra.mxu0 %v3642
  %5779 = vmatmul.bf16.gmra.mxu0 %v947
  %v5780 = vpop.f32.mrf.mxu0
  %v5781 = vadd.f32 %v5768, %v5780
  %v5782 = vpop.f32.mrf.mxu0
  %5783 = vdwg.mxu0
  %5784 = vmatpush.bf16.msra.mxu0 %v3717
  %5785 = vmatpush.bf16.msra.mxu0 %v3712
  %5786 = vmatpush.bf16.msra.mxu0 %v3707
  %5787 = vmatpush.bf16.msra.mxu0 %v3702
  %5788 = vmatpush.bf16.msra.mxu0 %v3697
  %5789 = vmatpush.bf16.msra.mxu0 %v3692
  %5790 = vmatpush.bf16.msra.mxu0 %v3687
  %5791 = vmatpush.bf16.msra.mxu0 %v3682
  %5792 = vmatmul.bf16.gmra.mxu0 %v948
  %v5793 = vpop.f32.mrf.mxu0
  %v5794 = vadd.f32 %v5781, %v5793
  %v5795 = vpop.f32.mrf.mxu0
  %5796 = vdwg.mxu0
  %5797 = vmatpush.bf16.msra.mxu0 %v3757
  %5798 = vmatpush.bf16.msra.mxu0 %v3752
  %5799 = vmatpush.bf16.msra.mxu0 %v3747
  %5800 = vmatpush.bf16.msra.mxu0 %v3742
  %5801 = vmatpush.bf16.msra.mxu0 %v3737
  %5802 = vmatpush.bf16.msra.mxu0 %v3732
  %5803 = vmatpush.bf16.msra.mxu0 %v3727
  %5804 = vmatpush.bf16.msra.mxu0 %v3722
  %5805 = vmatmul.bf16.gmra.mxu0 %v949
  %v5806 = vpop.f32.mrf.mxu0
  %v5807 = vadd.f32 %v5794, %v5806
  %v5808 = vpop.f32.mrf.mxu0
  %5809 = vdwg.mxu0
  %5810 = vmatpush.bf16.msra.mxu0 %v3797
  %5811 = vmatpush.bf16.msra.mxu0 %v3792
  %5812 = vmatpush.bf16.msra.mxu0 %v3787
  %5813 = vmatpush.bf16.msra.mxu0 %v3782
  %5814 = vmatpush.bf16.msra.mxu0 %v3777
  %5815 = vmatpush.bf16.msra.mxu0 %v3772
  %5816 = vmatpush.bf16.msra.mxu0 %v3767
  %5817 = vmatpush.bf16.msra.mxu0 %v3762
  %5818 = vmatmul.bf16.gmra.mxu0 %v950
  %v5819 = vpop.f32.mrf.mxu0
  %v5820 = vadd.f32 %v5807, %v5819
  %v5821 = vpop.f32.mrf.mxu0
  %5822 = vdwg.mxu0
  %5823 = vmatpush.bf16.msra.mxu0 %v3837
  %5824 = vmatpush.bf16.msra.mxu0 %v3832
  %5825 = vmatpush.bf16.msra.mxu0 %v3827
  %5826 = vmatpush.bf16.msra.mxu0 %v3822
  %5827 = vmatpush.bf16.msra.mxu0 %v3817
  %5828 = vmatpush.bf16.msra.mxu0 %v3812
  %5829 = vmatpush.bf16.msra.mxu0 %v3807
  %5830 = vmatpush.bf16.msra.mxu0 %v3802
  %5831 = vmatmul.bf16.gmra.mxu0 %v951
  %v5832 = vpop.f32.mrf.mxu0
  %v5833 = vadd.f32 %v5820, %v5832
  %v5834 = vpop.f32.mrf.mxu0
  %5835 = vdwg.mxu0
  %5836 = vmatpush.bf16.msra.mxu0 %v3877
  %5837 = vmatpush.bf16.msra.mxu0 %v3872
  %5838 = vmatpush.bf16.msra.mxu0 %v3867
  %5839 = vmatpush.bf16.msra.mxu0 %v3862
  %5840 = vmatpush.bf16.msra.mxu0 %v3857
  %5841 = vmatpush.bf16.msra.mxu0 %v3852
  %5842 = vmatpush.bf16.msra.mxu0 %v3847
  %5843 = vmatpush.bf16.msra.mxu0 %v3842
  %5844 = vmatmul.bf16.gmra.mxu0 %v952
  %v5845 = vpop.f32.mrf.mxu0
  %v5846 = vadd.f32 %v5833, %v5845
  %v5847 = vpop.f32.mrf.mxu0
  %5848 = vdwg.mxu0
  %5849 = vmatpush.bf16.msra.mxu0 %v3917
  %5850 = vmatpush.bf16.msra.mxu0 %v3912
  %5851 = vmatpush.bf16.msra.mxu0 %v3907
  %5852 = vmatpush.bf16.msra.mxu0 %v3902
  %5853 = vmatpush.bf16.msra.mxu0 %v3897
  %5854 = vmatpush.bf16.msra.mxu0 %v3892
  %5855 = vmatpush.bf16.msra.mxu0 %v3887
  %5856 = vmatpush.bf16.msra.mxu0 %v3882
  %5857 = vmatmul.bf16.gmra.mxu0 %v953
  %v5858 = vpop.f32.mrf.mxu0
  %v5859 = vadd.f32 %v5846, %v5858
  %v5860 = vpop.f32.mrf.mxu0
  %5861 = vdwg.mxu0
  %5862 = vmatpush.bf16.msra.mxu0 %v3957
  %5863 = vmatpush.bf16.msra.mxu0 %v3952
  %5864 = vmatpush.bf16.msra.mxu0 %v3947
  %5865 = vmatpush.bf16.msra.mxu0 %v3942
  %5866 = vmatpush.bf16.msra.mxu0 %v3937
  %5867 = vmatpush.bf16.msra.mxu0 %v3932
  %5868 = vmatpush.bf16.msra.mxu0 %v3927
  %5869 = vmatpush.bf16.msra.mxu0 %v3922
  %5870 = vmatmul.bf16.gmra.mxu0 %v954
  %v5871 = vpop.f32.mrf.mxu0
  %v5872 = vadd.f32 %v5859, %v5871
  %v5873 = vpop.f32.mrf.mxu0
  %5874 = vdwg.mxu0
  %5875 = vmatpush.bf16.msra.mxu0 %v3997
  %5876 = vmatpush.bf16.msra.mxu0 %v3992
  %5877 = vmatpush.bf16.msra.mxu0 %v3987
  %5878 = vmatpush.bf16.msra.mxu0 %v3982
  %5879 = vmatpush.bf16.msra.mxu0 %v3977
  %5880 = vmatpush.bf16.msra.mxu0 %v3972
  %5881 = vmatpush.bf16.msra.mxu0 %v3967
  %5882 = vmatpush.bf16.msra.mxu0 %v3962
  %5883 = vmatmul.bf16.gmra.mxu0 %v955
  %v5884 = vpop.f32.mrf.mxu0
  %v5885 = vadd.f32 %v5872, %v5884
  %v5886 = vpop.f32.mrf.mxu0
  %5887 = vdwg.mxu0
  %v5888 = vpack.c.bf16 %v4949, %v4949
  %v5889 = vpack.c.bf16 %v5183, %v5183
  %v5890 = vpack.c.bf16 %v5417, %v5417
  %v5891 = vpack.c.bf16 %v5651, %v5651
  %v5892 = vpack.c.bf16 %v5885, %v5885
  %v5893 = vld [vmem:[%s3] sm:$0xf]
  %v5894 = vld [vmem:[%s3 + $0x4] sm:$0xf]
  %v5895 = vld [vmem:[%s3 + $0x8] sm:$0xf]
  %v5896 = vld [vmem:[%s3 + $0xc] sm:$0xf]
  %v5897 = vld [vmem:[%s3 + $0x10] sm:$0xf]
  %v5898 = vld [vmem:[%s3 + $0x14] sm:$0xf]
  %v5899 = vld [vmem:[%s3 + $0x18] sm:$0xf]
  %v5900 = vld [vmem:[%s3 + $0x1c] sm:$0xf]
  %v5901 = vld [vmem:[%s3 + $0x20] sm:$0xf]
  %v5902 = vld [vmem:[%s3 + $0x24] sm:$0xf]
  %v5903 = vld [vmem:[%s3 + $0x28] sm:$0xf]
  %v5904 = vld [vmem:[%s3 + $0x2c] sm:$0xf]
  %v5905 = vld [vmem:[%s3 + $0x30] sm:$0xf]
  %v5906 = vld [vmem:[%s3 + $0x34] sm:$0xf]
  %v5907 = vld [vmem:[%s3 + $0x38] sm:$0xf]
  %v5908 = vld [vmem:[%s3 + $0x3c] sm:$0xf]
  %v5909 = vld [vmem:[%s3 + $0x40] sm:$0xf]
  %v5910 = vld [vmem:[%s3 + $0x44] sm:$0xf]
  %v5911 = vld [vmem:[%s3 + $0x48] sm:$0xf]
  %v5912 = vld [vmem:[%s3 + $0x4c] sm:$0xf]
  %v5913 = vld [vmem:[%s3 + $0x50] sm:$0xf]
  %v5914 = vld [vmem:[%s3 + $0x54] sm:$0xf]
  %v5915 = vld [vmem:[%s3 + $0x58] sm:$0xf]
  %v5916 = vld [vmem:[%s3 + $0x5c] sm:$0xf]
  %v5917 = vld [vmem:[%s3 + $0x60] sm:$0xf]
  %v5918 = vld [vmem:[%s3 + $0x64] sm:$0xf]
  %v5919 = vld [vmem:[%s3 + $0x68] sm:$0xf]
  %v5920 = vld [vmem:[%s3 + $0x6c] sm:$0xf]
  %v5921 = vld [vmem:[%s3 + $0x70] sm:$0xf]
  %v5922 = vld [vmem:[%s3 + $0x74] sm:$0xf]
  %v5923 = vld [vmem:[%s3 + $0x78] sm:$0xf]
  %v5924 = vld [vmem:[%s3 + $0x7c] sm:$0xf]
  %v5925 = vld [vmem:[%s3 + $0x80] sm:$0xf]
  %v5926 = vld [vmem:[%s3 + $0x84] sm:$0xf]
  %v5927 = vld [vmem:[%s3 + $0x88] sm:$0xf]
  %v5928 = vld [vmem:[%s3 + $0x8c] sm:$0xf]
  %v5929 = vld [vmem:[%s3 + $0x90] sm:$0xf]
  %v5930 = vld [vmem:[%s3 + $0x94] sm:$0xf]
  %v5931 = vld [vmem:[%s3 + $0x98] sm:$0xf]
  %v5932 = vld [vmem:[%s3 + $0x9c] sm:$0xf]
  %v5933 = vld [vmem:[%s3 + $0xa0] sm:$0xf]
  %v5934 = vld [vmem:[%s3 + $0xa4] sm:$0xf]
  %v5935 = vld [vmem:[%s3 + $0xa8] sm:$0xf]
  %v5936 = vld [vmem:[%s3 + $0xac] sm:$0xf]
  %v5937 = vld [vmem:[%s3 + $0xb0] sm:$0xf]
  %v5938 = vld [vmem:[%s3 + $0xb4] sm:$0xf]
  %v5939 = vld [vmem:[%s3 + $0xb8] sm:$0xf]
  %v5940 = vld [vmem:[%s3 + $0xbc] sm:$0xf]
  %v5941 = vld [vmem:[%s3 + $0xc0] sm:$0xf]
  %v5942 = vld [vmem:[%s3 + $0xc4] sm:$0xf]
  %v5943 = vld [vmem:[%s3 + $0xc8] sm:$0xf]
  %v5944 = vld [vmem:[%s3 + $0xcc] sm:$0xf]
  %v5945 = vld [vmem:[%s3 + $0xd0] sm:$0xf]
  %v5946 = vld [vmem:[%s3 + $0xd4] sm:$0xf]
  %v5947 = vld [vmem:[%s3 + $0xd8] sm:$0xf]
  %v5948 = vld [vmem:[%s3 + $0xdc] sm:$0xf]
  %v5949 = vld [vmem:[%s3 + $0xe0] sm:$0xf]
  %v5950 = vld [vmem:[%s3 + $0xe4] sm:$0xf]
  %v5951 = vld [vmem:[%s3 + $0xe8] sm:$0xf]
  %v5952 = vld [vmem:[%s3 + $0xec] sm:$0xf]
  %v5953 = vld [vmem:[%s3 + $0xf0] sm:$0xf]
  %v5954 = vld [vmem:[%s3 + $0xf4] sm:$0xf]
  %v5955 = vld [vmem:[%s3 + $0xf8] sm:$0xf]
  %v5956 = vld [vmem:[%s3 + $0xfc] sm:$0xf]
  %v5957 = vld [vmem:[%s3 + $0x100] sm:$0xf]
  %v5958 = vld [vmem:[%s3 + $0x104] sm:$0xf]
  %v5959 = vld [vmem:[%s3 + $0x108] sm:$0xf]
  %v5960 = vld [vmem:[%s3 + $0x10c] sm:$0xf]
  %v5961 = vld [vmem:[%s3 + $0x110] sm:$0xf]
  %v5962 = vld [vmem:[%s3 + $0x114] sm:$0xf]
  %v5963 = vld [vmem:[%s3 + $0x118] sm:$0xf]
  %v5964 = vld [vmem:[%s3 + $0x11c] sm:$0xf]
  %v5965 = vld [vmem:[%s3 + $0x120] sm:$0xf]
  %v5966 = vld [vmem:[%s3 + $0x124] sm:$0xf]
  %v5967 = vld [vmem:[%s3 + $0x128] sm:$0xf]
  %v5968 = vld [vmem:[%s3 + $0x12c] sm:$0xf]
  %v5969 = vld [vmem:[%s3 + $0x130] sm:$0xf]
  %v5970 = vld [vmem:[%s3 + $0x134] sm:$0xf]
  %v5971 = vld [vmem:[%s3 + $0x138] sm:$0xf]
  %v5972 = vld [vmem:[%s3 + $0x13c] sm:$0xf]
  %v5973 = vld [vmem:[%s4] sm:$0x1]
  %v5975 = vperm.slane %v5973, 0
  %v6057 = vunpack.c.l.b16 %v5893
  %v6058 = vunpack.c.l.b16 %v5894
  %v6059 = vunpack.c.l.b16 %v5895
  %v6060 = vunpack.c.l.b16 %v5896
  %v6061 = vunpack.c.l.b16 %v5897
  %v6062 = vunpack.c.l.b16 %v5898
  %v6063 = vunpack.c.l.b16 %v5899
  %v6064 = vunpack.c.l.b16 %v5900
  %v6065 = vunpack.c.l.b16 %v5901
  %v6066 = vunpack.c.l.b16 %v5902
  %v6067 = vunpack.c.l.b16 %v5903
  %v6068 = vunpack.c.l.b16 %v5904
  %v6069 = vunpack.c.l.b16 %v5905
  %v6070 = vunpack.c.l.b16 %v5906
  %v6071 = vunpack.c.l.b16 %v5907
  %v6072 = vunpack.c.l.b16 %v5908
  %v6073 = vunpack.c.l.b16 %v5909
  %v6074 = vunpack.c.l.b16 %v5910
  %v6075 = vunpack.c.l.b16 %v5911
  %v6076 = vunpack.c.l.b16 %v5912
  %v6077 = vunpack.c.l.b16 %v5913
  %v6078 = vunpack.c.l.b16 %v5914
  %v6079 = vunpack.c.l.b16 %v5915
  %v6080 = vunpack.c.l.b16 %v5916
  %v6081 = vunpack.c.l.b16 %v5917
  %v6082 = vunpack.c.l.b16 %v5918
  %v6083 = vunpack.c.l.b16 %v5919
  %v6084 = vunpack.c.l.b16 %v5920
  %v6085 = vunpack.c.l.b16 %v5921
  %v6086 = vunpack.c.l.b16 %v5922
  %v6087 = vunpack.c.l.b16 %v5923
  %v6088 = vunpack.c.l.b16 %v5924
  %v6089 = vunpack.c.l.b16 %v5925
  %v6090 = vunpack.c.l.b16 %v5926
  %v6091 = vunpack.c.l.b16 %v5927
  %v6092 = vunpack.c.l.b16 %v5928
  %v6093 = vunpack.c.l.b16 %v5929
  %v6094 = vunpack.c.l.b16 %v5930
  %v6095 = vunpack.c.l.b16 %v5931
  %v6096 = vunpack.c.l.b16 %v5932
  %v6097 = vunpack.c.l.b16 %v5933
  %v6098 = vunpack.c.l.b16 %v5934
  %v6099 = vunpack.c.l.b16 %v5935
  %v6100 = vunpack.c.l.b16 %v5936
  %v6101 = vunpack.c.l.b16 %v5937
  %v6102 = vunpack.c.l.b16 %v5938
  %v6103 = vunpack.c.l.b16 %v5939
  %v6104 = vunpack.c.l.b16 %v5940
  %v6105 = vunpack.c.l.b16 %v5941
  %v6106 = vunpack.c.l.b16 %v5942
  %v6107 = vunpack.c.l.b16 %v5943
  %v6108 = vunpack.c.l.b16 %v5944
  %v6109 = vunpack.c.l.b16 %v5945
  %v6110 = vunpack.c.l.b16 %v5946
  %v6111 = vunpack.c.l.b16 %v5947
  %v6112 = vunpack.c.l.b16 %v5948
  %v6113 = vunpack.c.l.b16 %v5949
  %v6114 = vunpack.c.l.b16 %v5950
  %v6115 = vunpack.c.l.b16 %v5951
  %v6116 = vunpack.c.l.b16 %v5952
  %v6117 = vunpack.c.l.b16 %v5953
  %v6118 = vunpack.c.l.b16 %v5954
  %v6119 = vunpack.c.l.b16 %v5955
  %v6120 = vunpack.c.l.b16 %v5956
  %v6121 = vunpack.c.l.b16 %v5957
  %v6122 = vunpack.c.l.b16 %v5958
  %v6123 = vunpack.c.l.b16 %v5959
  %v6124 = vunpack.c.l.b16 %v5960
  %v6125 = vunpack.c.l.b16 %v5961
  %v6126 = vunpack.c.l.b16 %v5962
  %v6127 = vunpack.c.l.b16 %v5963
  %v6128 = vunpack.c.l.b16 %v5964
  %v6129 = vunpack.c.l.b16 %v5965
  %v6130 = vunpack.c.l.b16 %v5966
  %v6131 = vunpack.c.l.b16 %v5967
  %v6132 = vunpack.c.l.b16 %v5968
  %v6133 = vunpack.c.l.b16 %v5969
  %v6134 = vunpack.c.l.b16 %v5970
  %v6135 = vunpack.c.l.b16 %v5971
  %v6136 = vunpack.c.l.b16 %v5972
  %v6137 = vpack.c.b16 %v6058, %v6057
  %v6138 = vpack.c.b16 %v6060, %v6059
  %v6139 = vpack.c.b16 %v6062, %v6061
  %v6140 = vpack.c.b16 %v6064, %v6063
  %v6141 = vpack.c.b16 %v6066, %v6065
  %v6142 = vpack.c.b16 %v6068, %v6067
  %v6143 = vpack.c.b16 %v6070, %v6069
  %v6144 = vpack.c.b16 %v6072, %v6071
  %v6145 = vpack.c.b16 %v6074, %v6073
  %v6146 = vpack.c.b16 %v6076, %v6075
  %v6147 = vpack.c.b16 %v6078, %v6077
  %v6148 = vpack.c.b16 %v6080, %v6079
  %v6149 = vpack.c.b16 %v6082, %v6081
  %v6150 = vpack.c.b16 %v6084, %v6083
  %v6151 = vpack.c.b16 %v6086, %v6085
  %v6152 = vpack.c.b16 %v6088, %v6087
  %v6153 = vpack.c.b16 %v6090, %v6089
  %v6154 = vpack.c.b16 %v6092, %v6091
  %v6155 = vpack.c.b16 %v6094, %v6093
  %v6156 = vpack.c.b16 %v6096, %v6095
  %v6157 = vpack.c.b16 %v6098, %v6097
  %v6158 = vpack.c.b16 %v6100, %v6099
  %v6159 = vpack.c.b16 %v6102, %v6101
  %v6160 = vpack.c.b16 %v6104, %v6103
  %v6161 = vpack.c.b16 %v6106, %v6105
  %v6162 = vpack.c.b16 %v6108, %v6107
  %v6163 = vpack.c.b16 %v6110, %v6109
  %v6164 = vpack.c.b16 %v6112, %v6111
  %v6165 = vpack.c.b16 %v6114, %v6113
  %v6166 = vpack.c.b16 %v6116, %v6115
  %v6167 = vpack.c.b16 %v6118, %v6117
  %v6168 = vpack.c.b16 %v6120, %v6119
  %v6169 = vpack.c.b16 %v6122, %v6121
  %v6170 = vpack.c.b16 %v6124, %v6123
  %v6171 = vpack.c.b16 %v6126, %v6125
  %v6172 = vpack.c.b16 %v6128, %v6127
  %v6173 = vpack.c.b16 %v6130, %v6129
  %v6174 = vpack.c.b16 %v6132, %v6131
  %v6175 = vpack.c.b16 %v6134, %v6133
  %v6176 = vpack.c.b16 %v6136, %v6135
  %6217 = vmatpush.bf16.msra.mxu0 %v6144
  %6218 = vmatpush.bf16.msra.mxu0 %v6143
  %6219 = vmatpush.bf16.msra.mxu0 %v6142
  %6220 = vmatpush.bf16.msra.mxu0 %v6141
  %6221 = vmatpush.bf16.msra.mxu0 %v6140
  %6222 = vmatpush.bf16.msra.mxu0 %v6139
  %6223 = vmatpush.bf16.msra.mxu0 %v6138
  %6224 = vmatpush.bf16.msra.mxu0 %v6137
  %6225 = vmatmul.bf16.gmra.mxu0 %v5888
  %v6226 = vpop.f32.mrf.mxu0
  %v6227 = vadd.f32 %v5975, %v6226
  %v6228 = vpop.f32.mrf.mxu0
  %6229 = vdwg.mxu0
  %6230 = vmatpush.bf16.msra.mxu0 %v6152
  %6231 = vmatpush.bf16.msra.mxu0 %v6151
  %6232 = vmatpush.bf16.msra.mxu0 %v6150
  %6233 = vmatpush.bf16.msra.mxu0 %v6149
  %6234 = vmatpush.bf16.msra.mxu0 %v6148
  %6235 = vmatpush.bf16.msra.mxu0 %v6147
  %6236 = vmatpush.bf16.msra.mxu0 %v6146
  %6237 = vmatpush.bf16.msra.mxu0 %v6145
  %6238 = vmatmul.bf16.gmra.mxu0 %v5889
  %v6239 = vpop.f32.mrf.mxu0
  %v6240 = vadd.f32 %v6227, %v6239
  %v6241 = vpop.f32.mrf.mxu0
  %6242 = vdwg.mxu0
  %6243 = vmatpush.bf16.msra.mxu0 %v6160
  %6244 = vmatpush.bf16.msra.mxu0 %v6159
  %6245 = vmatpush.bf16.msra.mxu0 %v6158
  %6246 = vmatpush.bf16.msra.mxu0 %v6157
  %6247 = vmatpush.bf16.msra.mxu0 %v6156
  %6248 = vmatpush.bf16.msra.mxu0 %v6155
  %6249 = vmatpush.bf16.msra.mxu0 %v6154
  %6250 = vmatpush.bf16.msra.mxu0 %v6153
  %6251 = vmatmul.bf16.gmra.mxu0 %v5890
  %v6252 = vpop.f32.mrf.mxu0
  %v6253 = vadd.f32 %v6240, %v6252
  %v6254 = vpop.f32.mrf.mxu0
  %6255 = vdwg.mxu0
  %6256 = vmatpush.bf16.msra.mxu0 %v6168
  %6257 = vmatpush.bf16.msra.mxu0 %v6167
  %6258 = vmatpush.bf16.msra.mxu0 %v6166
  %6259 = vmatpush.bf16.msra.mxu0 %v6165
  %6260 = vmatpush.bf16.msra.mxu0 %v6164
  %6261 = vmatpush.bf16.msra.mxu0 %v6163
  %6262 = vmatpush.bf16.msra.mxu0 %v6162
  %6263 = vmatpush.bf16.msra.mxu0 %v6161
  %6264 = vmatmul.bf16.gmra.mxu0 %v5891
  %v6265 = vpop.f32.mrf.mxu0
  %v6266 = vadd.f32 %v6253, %v6265
  %v6267 = vpop.f32.mrf.mxu0
  %6268 = vdwg.mxu0
  %6269 = vmatpush.bf16.msra.mxu0 %v6176
  %6270 = vmatpush.bf16.msra.mxu0 %v6175
  %6271 = vmatpush.bf16.msra.mxu0 %v6174
  %6272 = vmatpush.bf16.msra.mxu0 %v6173
  %6273 = vmatpush.bf16.msra.mxu0 %v6172
  %6274 = vmatpush.bf16.msra.mxu0 %v6171
  %6275 = vmatpush.bf16.msra.mxu0 %v6170
  %6276 = vmatpush.bf16.msra.mxu0 %v6169
  %6277 = vmatmul.bf16.gmra.mxu0 %v5892
  %v6278 = vpop.f32.mrf.mxu0
  %v6279 = vadd.f32 %v6266, %v6278
  %v6280 = vpop.f32.mrf.mxu0
  %6281 = vdwg.mxu0
  %v6282 = vpack.c.bf16 %v6279, %v6279
  %v6283 = vld [vmem:[%s5] sm:$0xf]
  %v6284 = vld [vmem:[%s5 + $0x4] sm:$0xf]
  %v6285 = vld [vmem:[%s5 + $0x8] sm:$0xf]
  %v6286 = vld [vmem:[%s5 + $0xc] sm:$0xf]
  %v6287 = vld [vmem:[%s5 + $0x10] sm:$0xf]
  %v6288 = vld [vmem:[%s5 + $0x14] sm:$0xf]
  %v6289 = vld [vmem:[%s5 + $0x18] sm:$0xf]
  %v6290 = vld [vmem:[%s5 + $0x1c] sm:$0xf]
  %v6291 = vld [vmem:[%s5 + $0x20] sm:$0xf]
  %v6292 = vld [vmem:[%s5 + $0x24] sm:$0xf]
  %v6293 = vld [vmem:[%s5 + $0x28] sm:$0xf]
  %v6294 = vld [vmem:[%s5 + $0x2c] sm:$0xf]
  %v6295 = vld [vmem:[%s5 + $0x30] sm:$0xf]
  %v6296 = vld [vmem:[%s5 + $0x34] sm:$0xf]
  %v6297 = vld [vmem:[%s5 + $0x38] sm:$0xf]
  %v6298 = vld [vmem:[%s5 + $0x3c] sm:$0xf]
  %v6299 = vld [vmem:[%s6] sm:$0x1]
  %v6301 = vperm.slane %v6299, 0
  %v6319 = vunpack.c.l.b16 %v6283
  %v6320 = vunpack.c.l.b16 %v6284
  %v6321 = vunpack.c.l.b16 %v6285
  %v6322 = vunpack.c.l.b16 %v6286
  %v6323 = vunpack.c.l.b16 %v6287
  %v6324 = vunpack.c.l.b16 %v6288
  %v6325 = vunpack.c.l.b16 %v6289
  %v6326 = vunpack.c.l.b16 %v6290
  %v6327 = vunpack.c.l.b16 %v6291
  %v6328 = vunpack.c.l.b16 %v6292
  %v6329 = vunpack.c.l.b16 %v6293
  %v6330 = vunpack.c.l.b16 %v6294
  %v6331 = vunpack.c.l.b16 %v6295
  %v6332 = vunpack.c.l.b16 %v6296
  %v6333 = vunpack.c.l.b16 %v6297
  %v6334 = vunpack.c.l.b16 %v6298
  %v6335 = vpack.c.b16 %v6320, %v6319
  %v6336 = vpack.c.b16 %v6322, %v6321
  %v6337 = vpack.c.b16 %v6324, %v6323
  %v6338 = vpack.c.b16 %v6326, %v6325
  %v6339 = vpack.c.b16 %v6328, %v6327
  %v6340 = vpack.c.b16 %v6330, %v6329
  %v6341 = vpack.c.b16 %v6332, %v6331
  %v6342 = vpack.c.b16 %v6334, %v6333
  %6351 = vmatpush.bf16.msra.mxu0 %v6342
  %6352 = vmatpush.bf16.msra.mxu0 %v6341
  %6353 = vmatpush.bf16.msra.mxu0 %v6340
  %6354 = vmatpush.bf16.msra.mxu0 %v6339
  %6355 = vmatpush.bf16.msra.mxu0 %v6338
  %6356 = vmatpush.bf16.msra.mxu0 %v6337
  %6357 = vmatpush.bf16.msra.mxu0 %v6336
  %6358 = vmatpush.bf16.msra.mxu0 %v6335
  %6359 = vmatmul.bf16.gmra.mxu0 %v6282
  %v6360 = vpop.f32.mrf.mxu0
  %v6361 = vadd.f32 %v6301, %v6360
  %v6362 = vpop.f32.mrf.mxu0
  %6363 = vdwg.mxu0
  %6364 = vst [vmem:[%s7] sm:$0xff] %v6361
  // Predicated region
  $region30: #{fashion_cnn_forward.5} parent=0 // pred_check
    _
  $region31: #{fashion_cnn_forward.5} parent=0 // pred_check_branch
    %6366 = sbr.rel (0) target = $region33
  $region32: #{fashion_cnn_forward.5} parent=0 // pred_region
    _
  $region33: #{fashion_cnn_forward.5} parent=0 // pred_fallthru
    _
  // Predicated region
  $region34: #{fashion_cnn_forward.5} parent=0 // pred_check
    _
  $region35: #{fashion_cnn_forward.5} parent=0 // pred_check_branch
    %6368 = sbr.rel (0) target = $region37
  $region36: #{fashion_cnn_forward.5} parent=0 // pred_region
    _
  $region37: #{fashion_cnn_forward.5} parent=0 // pred_fallthru
    _

</llo_original>
